<compile_context>
chip_gen: v6e
topology: v6e:2x2x1
jax: 0.10.0
libtpu: 0.0.40
codegen_flags: <defaults>
</compile_context>

<pallas_src>
import functools

import jax
import jax.numpy as jnp
from jax.experimental import pallas as pl
from jax.experimental.pallas import tpu as pltpu

EPS = 1e-5
LANE = 128


def _round_up(x, m):
    return ((x + m - 1) // m) * m


# --------------------------------------------------------------------------- kernels


def _conv_stage_kernel(xc_ref, xt_ref, xb_ref, prm_ref, w_ref, y_ref, st_ref, xbuf_ref,
                       *, fuse_bn_relu):
    """One grid step = one (image, row-tile).

    xc_ref  : (1, TH, W, Cin)    bf16 center rows of this stage's input
    xt_ref  : (1, 1, W, Cin)     bf16 row just above the tile (clamped row index)
    xb_ref  : (1, 1, W, Cin)     bf16 row just below the tile (clamped row index)
    prm_ref : (2, Cin)           f32 BN scale/shift of the *previous* stage
                                 (read only when fuse_bn_relu=True)
    w_ref   : (9, Cin, Cout_p)   bf16 3x3 conv weights, one (Cin, Cout_p) matrix per tap
    y_ref   : (1, TH, W, Cout_p) bf16 raw conv output (pre-BN)
    st_ref  : (1, 1, 2, Cout_p)  f32 partial [sum, sum-of-squares] for this tile
    xbuf_ref: (TH+2, W+2, Cin)   bf16 VMEM scratch holding the zero-padded input tile
    """
    i = pl.program_id(1)
    n_tiles = pl.num_programs(1)

    xc = xc_ref[0]                                   # (TH, W, Cin)
    xt = xt_ref[0]                                   # (1, W, Cin)
    xb = xb_ref[0]                                   # (1, W, Cin)
    TH, W, cin = xc.shape

    if fuse_bn_relu:
        # Fused BatchNorm of the previous stage (precomputed global scale/shift) + ReLU.
        p = prm_ref[...]
        scale = p[0:1, :].reshape(1, 1, cin)
        shift = p[1:2, :].reshape(1, 1, cin)

        def bn_relu(v):
            return jnp.maximum(v.astype(jnp.float32) * scale + shift, 0.0)

        xc, xt, xb = bn_relu(xc), bn_relu(xt), bn_relu(xb)

    xc = xc.astype(jnp.bfloat16)
    xt = xt.astype(jnp.bfloat16)
    xb = xb.astype(jnp.bfloat16)

    # Halo rows whose true position is outside the image must be literal zeros (the conv
    # pads the *post*-BN/ReLU tensor with zeros); the index map only clamped them to a
    # valid in-image row, so overwrite them here at the borders.
    xt = jnp.where(i > 0, xt, jnp.zeros_like(xt))
    xb = jnp.where(i < n_tiles - 1, xb, jnp.zeros_like(xb))

    # Assemble the zero-padded (TH+2, W+2, Cin) tile in VMEM scratch
    # (no concat-built slab, no second resident copy of the tile).
    zcol = jnp.zeros((TH + 2, 1, cin), jnp.bfloat16)
    xbuf_ref[:, 0:1, :] = zcol
    xbuf_ref[:, W + 1:W + 2, :] = zcol
    xbuf_ref[0:1, 1:W + 1, :] = xt
    xbuf_ref[TH + 1:TH + 2, 1:W + 1, :] = xb
    xbuf_ref[1:TH + 1, 1:W + 1, :] = xc

    # 3x3 conv as 9 accumulating MXU dots (K = Cin each) with f32 accumulation. Keeps
    # live VMEM at ~1 tap instead of a 9x im2col slab, enabling larger spatial tiles.
    cout_p = w_ref.shape[2]
    acc = jnp.zeros((TH * W, cout_p), jnp.float32)
    t = 0
    for ky in range(3):
        for kx in range(3):
            tap = xbuf_ref[ky:ky + TH, kx:kx + W, :].reshape(TH * W, cin)
            acc = acc + jnp.dot(tap, w_ref[t], preferred_element_type=jnp.float32)
            t += 1

    # bf16 intermediate store: halves HBM traffic of the largest tensors in the pipeline.
    y_ref[0] = acc.reshape(TH, W, cout_p).astype(jnp.bfloat16)

    # Single-pass partial BN statistics from the exact f32 accumulator; combined globally
    # in the wrapper so tiling does not change PyTorch train-mode BN numerics.
    s = jnp.sum(acc, axis=0, keepdims=True)                  # (1, Cout_p)
    sq = jnp.sum(acc * acc, axis=0, keepdims=True)           # (1, Cout_p)
    st_ref[0, 0] = jnp.concatenate([s, sq], axis=0)          # (2, Cout_p)


def _bn_relu_out_kernel(y_ref, prm_ref, o_ref, *, cout):
    """Final BatchNorm (fused scale/shift) + ReLU + in-kernel channel un-padding."""
    y = y_ref[0].astype(jnp.float32)                         # (TH, W, Cout_p)
    cp = y.shape[-1]
    p = prm_ref[...]
    scale = p[0:1, :].reshape(1, 1, cp)
    shift = p[1:2, :].reshape(1, 1, cp)
    z = jnp.maximum(y * scale + shift, 0.0)
    o_ref[0] = z[:, :, :cout]                                # drop channel padding here


# --------------------------------------------------------------------------- wrappers


def _compiler_params():
    return pltpu.CompilerParams(
        # Batch and row-tile axes are independent -> both TensorCores stay busy even
        # for N=1 (inference) calls.
        dimension_semantics=("parallel", "parallel"),
        # <= ~48 MiB keeps double-buffered blocks within v7x's 64 MiB physical VMEM
        # while still allowing far larger tiles than a 32 MiB budget on v5e/v6e.
        vmem_limit_bytes=48 * 1024 * 1024,
    )


def _pick_tile_rows(H, W, cin_p, cout_p):
    """Largest row-tile that divides H and keeps the per-step working set ~<= 12 MiB."""
    per_row = (2 * W * cin_p * 2          # double-buffered bf16 input block
               + 2 * W * cout_p * 2       # double-buffered bf16 output block
               + (W + 2) * cin_p * 2      # padded scratch row
               + 2 * W * cout_p * 4)      # f32 accumulator (+ tap headroom)
    target = max(1, (12 * 1024 * 1024) // max(per_row, 1))
    if target >= H:
        return H
    divs = [d for d in range(1, H + 1) if H % d == 0 and d <= target]
    mult8 = [d for d in divs if d % 8 == 0]
    return max(mult8) if mult8 else max(divs)


def _conv_stage(x_nhwc, w_mat, prm, tile_rows, *, fuse_bn_relu):
    N, H, W, cin = x_nhwc.shape
    cout_p = w_mat.shape[2]
    TH = tile_rows
    assert H % TH == 0
    T = H // TH
    kernel = functools.partial(_conv_stage_kernel, fuse_bn_relu=fuse_bn_relu)
    return pl.pallas_call(
        kernel,
        grid=(N, T),
        out_shape=(
            jax.ShapeDtypeStruct((N, H, W, cout_p), jnp.bfloat16),
            jax.ShapeDtypeStruct((N, T, 2, cout_p), jnp.float32),
        ),
        in_specs=[
            pl.BlockSpec((1, TH, W, cin), lambda n, i: (n, i, 0, 0)),
            # 1-row halos: same array, clamped row index; zeroed in-kernel at borders.
            pl.BlockSpec((1, 1, W, cin),
                         lambda n, i: (n, jnp.maximum(i * TH - 1, 0), 0, 0)),
            pl.BlockSpec((1, 1, W, cin),
                         lambda n, i: (n, jnp.minimum(i * TH + TH, H - 1), 0, 0)),
            pl.BlockSpec(prm.shape, lambda n, i: (0, 0)),
            pl.BlockSpec(w_mat.shape, lambda n, i: (0, 0, 0)),
        ],
        out_specs=[
            pl.BlockSpec((1, TH, W, cout_p), lambda n, i: (n, i, 0, 0)),
            pl.BlockSpec((1, 1, 2, cout_p), lambda n, i: (n, i, 0, 0)),
        ],
        scratch_shapes=[pltpu.VMEM((TH + 2, W + 2, cin), jnp.bfloat16)],
        compiler_params=_compiler_params(),
    )(x_nhwc, x_nhwc, x_nhwc, prm, w_mat)


def _bn_relu_out(y_raw, prm, tile_rows, cout):
    N, H, W, cp = y_raw.shape
    TH = tile_rows
    T = H // TH
    kernel = functools.partial(_bn_relu_out_kernel, cout=cout)
    return pl.pallas_call(
        kernel,
        grid=(N, T),
        out_shape=jax.ShapeDtypeStruct((N, H, W, cout), jnp.float32),
        in_specs=[
            pl.BlockSpec((1, TH, W, cp), lambda n, i: (n, i, 0, 0)),
            pl.BlockSpec(prm.shape, lambda n, i: (0, 0)),
        ],
        out_specs=pl.BlockSpec((1, TH, W, cout), lambda n, i: (n, i, 0, 0)),
        compiler_params=_compiler_params(),
    )(y_raw, prm)


def _finalize_bn(stats, gamma, beta, c_pad, count):
    """Combine per-tile partial sums into global fused BN scale/shift (tiny, f32)."""
    g = jnp.pad(gamma.astype(jnp.float32), (0, c_pad - gamma.shape[0]))
    b = jnp.pad(beta.astype(jnp.float32), (0, c_pad - beta.shape[0]))
    tot = jnp.sum(stats, axis=(0, 1))                        # (2, C)
    mean = tot[0] / count
    var = jnp.maximum(tot[1] / count - mean * mean, 0.0)     # biased variance (train-mode)
    inv_std = jax.lax.rsqrt(var + EPS)
    scale = g * inv_std
    shift = b - mean * scale
    return jnp.stack([scale, shift], axis=0)                 # (2, C)


def _prep_weight(w_pt, cin_pad, cout_pad):
    """(Cout, Cin, 3, 3) PyTorch conv weight -> (9, cin_pad, cout_pad) bf16 tap matrices."""
    cout, cin, kh, kw = w_pt.shape
    w = jnp.transpose(w_pt, (2, 3, 1, 0))                    # (3, 3, Cin, Cout)
    w = jnp.pad(w, ((0, 0), (0, 0), (0, cin_pad - cin), (0, cout_pad - cout)))
    return w.reshape(kh * kw, cin_pad, cout_pad).astype(jnp.bfloat16)


@functools.partial(jax.jit, static_argnames=("tile_rows",))
def double_conv(x_nchw, params, tile_rows=None):
    """DoubleConv forward (training-mode BN). x: (N, Cin, H, W) -> (N, Cout, H, W)."""
    # TODO(synk): BatchNorm running_mean/running_var buffers are not updated
    # (forward output uses batch statistics only, matching PyTorch train-mode forward).
    w1_pt, g1, b1 = params["w1"], params["g1"], params["b1"]
    w2_pt, g2, b2 = params["w2"], params["g2"], params["b2"]
    cmid, cin = w1_pt.shape[0], w1_pt.shape[1]
    cout = w2_pt.shape[0]
    cmid_p = _round_up(cmid, LANE)
    cout_p = _round_up(cout, LANE)

    N, _, H, W = x_nchw.shape
    count = N * H * W

    if tile_rows is None:
        tile_rows = _pick_tile_rows(H, W, max(cin, cmid_p), max(cmid_p, cout_p))

    w1m = _prep_weight(w1_pt, cin_pad=cin, cout_pad=cmid_p)
    w2m = _prep_weight(w2_pt, cin_pad=cmid_p, cout_pad=cout_p)

    # One NCHW->NHWC(+bf16) pass on the original input (the smallest tensor in the
    # pipeline); everything downstream stays channels-last inside the kernels.
    x = jnp.transpose(x_nchw, (0, 2, 3, 1)).astype(jnp.bfloat16)

    # Stage 1: conv1 + per-tile BN1 partial stats.
    dummy_prm = jnp.zeros((2, cin), jnp.float32)
    y1, st1 = _conv_stage(x, w1m, dummy_prm, tile_rows, fuse_bn_relu=False)
    prm1 = _finalize_bn(st1, g1, b1, cmid_p, count)

    # Stage 2: BN1 + ReLU fused with conv2 + per-tile BN2 partial stats.
    y2, st2 = _conv_stage(y1, w2m, prm1, tile_rows, fuse_bn_relu=True)
    prm2 = _finalize_bn(st2, g2, b2, cout_p, count)

    # Stage 3: BN2 + ReLU; channel padding is sliced away in-kernel.
    out_nhwc = _bn_relu_out(y2, prm2, tile_rows, cout)       # (N, H, W, Cout) f32
    # Final NHWC -> NCHW relayout of the un-padded result stays in XLA; folding this 3-D
    # rotation into the kernel store is a possible further optimization.
    return jnp.transpose(out_nhwc, (0, 3, 1, 2)).astype(x_nchw.dtype)


# ------------------------------------------------------------------- params / reference


def init_double_conv_params(key, in_channels, out_channels, mid_channels=None):
    """PyTorch-layout parameters: Conv2d weights (Cout, Cin, 3, 3), BN gamma/beta."""
    if not mid_channels:
        mid_channels = out_channels
    k1, k2 = jax.random.split(key)
    return {
        "w1": jax.random.normal(k1, (mid_channels, in_channels, 3, 3), jnp.float32) * 0.1,
        "g1": jnp.ones((mid_channels,), jnp.float32),
        "b1": jnp.zeros((mid_channels,), jnp.float32),
        "w2": jax.random.normal(k2, (out_channels, mid_channels, 3, 3), jnp.float32) * 0.1,
        "g2": jnp.ones((out_channels,), jnp.float32),
        "b2": jnp.zeros((out_channels,), jnp.float32),
    }


def _reference_double_conv(x_nchw, params):
    """Pure-JAX f32 reference matching PyTorch training-mode DoubleConv."""
    def conv_bn_relu(x, w, g, b):
        y = jax.lax.conv_general_dilated(
            x, w, window_strides=(1, 1), padding=((1, 1), (1, 1)),
            dimension_numbers=("NCHW", "OIHW", "NCHW"))
        mean = jnp.mean(y, axis=(0, 2, 3), keepdims=True)
        var = jnp.mean((y - mean) ** 2, axis=(0, 2, 3), keepdims=True)
        yhat = (y - mean) * jax.lax.rsqrt(var + EPS)
        return jnp.maximum(yhat * g.reshape(1, -1, 1, 1) + b.reshape(1, -1, 1, 1), 0.0)

    y = conv_bn_relu(x_nchw, params["w1"], params["g1"], params["b1"])
    return conv_bn_relu(y, params["w2"], params["g2"], params["b2"])


if __name__ == "__main__":
    key = jax.random.PRNGKey(0)
    kx, kp = jax.random.split(key)

    N, Cin, H, W = 2, 4, 16, 16
    Cout = 8
    x = jax.random.normal(kx, (N, Cin, H, W), jnp.float32)
    params = init_double_conv_params(kp, Cin, Cout)

    # tile_rows=8 exercises the multi-row-tile path (grid=(2, 2)) at this small size.
    out = jax.block_until_ready(double_conv(x, params, tile_rows=8))
    assert out.shape == (N, Cout, H, W), out.shape

    ref = _reference_double_conv(x, params)
    err = float(jnp.max(jnp.abs(out - ref)))
    assert err < 0.35, f"max abs error vs f32 reference too large: {err}"

    print("KERNEL_OK")
</pallas_src>

<mosaic_0001>
module attributes {stable_mosaic.version = 11 : i64} {
  func.func @_conv_stage_kernel(%arg0: i32, %arg1: i32, %arg2: memref<1x8x16x4xbf16, #tpu.memory_space<vmem>>, %arg3: memref<1x1x16x4xbf16, #tpu.memory_space<vmem>>, %arg4: memref<1x1x16x4xbf16, #tpu.memory_space<vmem>>, %arg5: memref<2x4xf32, #tpu.memory_space<vmem>>, %arg6: memref<9x4x128xbf16, #tpu.memory_space<vmem>>, %arg7: memref<1x8x16x128xbf16, #tpu.memory_space<vmem>>, %arg8: memref<1x1x2x128xf32, #tpu.memory_space<vmem>>, %arg9: memref<10x18x4xbf16, #tpu.memory_space<vmem>>) attributes {dimension_semantics = [#tpu.dimension_semantics<parallel>, #tpu.dimension_semantics<parallel>], iteration_bounds = array<i64: 2, 2>, scalar_prefetch = 0 : i64, scratch_operands = 1 : i64, tpu.core_type = #tpu.core_type<tc>, window_params = [{transform_indices = @transform_0, window_bounds = array<i64: 1, 8, 16, 4>}, {transform_indices = @transform_1, window_bounds = array<i64: 1, 1, 16, 4>}, {transform_indices = @transform_2, window_bounds = array<i64: 1, 1, 16, 4>}, {pipeline_mode = #tpu.pipeline_mode<synchronous>, transform_indices = @transform_3, window_bounds = array<i64: 2, 4>}, {pipeline_mode = #tpu.pipeline_mode<synchronous>, transform_indices = @transform_4, window_bounds = array<i64: 9, 4, 128>}, {transform_indices = @transform_5, window_bounds = array<i64: 1, 8, 16, 128>}, {transform_indices = @transform_6, window_bounds = array<i64: 1, 1, 2, 128>}]} {
    %c0 = arith.constant 0 : index
    %c0_0 = arith.constant 0 : index
    %c0_1 = arith.constant 0 : index
    %c0_2 = arith.constant 0 : index
    %0 = vector.load %arg2[%c0, %c0_0, %c0_1, %c0_2] : memref<1x8x16x4xbf16, #tpu.memory_space<vmem>>, vector<1x8x16x4xbf16>
    %1 = vector.shape_cast %0 : vector<1x8x16x4xbf16> to vector<8x16x4xbf16>
    %c0_3 = arith.constant 0 : index
    %c0_4 = arith.constant 0 : index
    %c0_5 = arith.constant 0 : index
    %c0_6 = arith.constant 0 : index
    %2 = vector.load %arg3[%c0_3, %c0_4, %c0_5, %c0_6] : memref<1x1x16x4xbf16, #tpu.memory_space<vmem>>, vector<1x1x16x4xbf16>
    %3 = vector.shape_cast %2 : vector<1x1x16x4xbf16> to vector<1x16x4xbf16>
    %c0_7 = arith.constant 0 : index
    %c0_8 = arith.constant 0 : index
    %c0_9 = arith.constant 0 : index
    %c0_10 = arith.constant 0 : index
    %4 = vector.load %arg4[%c0_7, %c0_8, %c0_9, %c0_10] : memref<1x1x16x4xbf16, #tpu.memory_space<vmem>>, vector<1x1x16x4xbf16>
    %5 = vector.shape_cast %4 : vector<1x1x16x4xbf16> to vector<1x16x4xbf16>
    %c0_i32 = arith.constant 0 : i32
    %6 = arith.cmpi sgt, %arg1, %c0_i32 : i32
    %cst = arith.constant 0.000000e+00 : bf16
    %7 = vector.broadcast %cst : bf16 to vector<1x16x4xbf16>
    %8 = arith.select %6, %3, %7 : vector<1x16x4xbf16>
    %c1_i32 = arith.constant 1 : i32
    %9 = arith.cmpi slt, %arg1, %c1_i32 : i32
    %cst_11 = arith.constant 0.000000e+00 : bf16
    %10 = vector.broadcast %cst_11 : bf16 to vector<1x16x4xbf16>
    %11 = arith.select %9, %5, %10 : vector<1x16x4xbf16>
    %cst_12 = arith.constant 0.000000e+00 : bf16
    %12 = vector.broadcast %cst_12 : bf16 to vector<10x1x4xbf16>
    %c0_13 = arith.constant 0 : index
    %c0_14 = arith.constant 0 : index
    %c0_15 = arith.constant 0 : index
    %13 = vector.load %arg9[%c0_13, %c0_14, %c0_15] : memref<10x18x4xbf16, #tpu.memory_space<vmem>>, vector<10x1x4xbf16>
    tpu.vector_store %arg9[%c0_13, %c0_14, %c0_15], %12 {strides = array<i32>} : memref<10x18x4xbf16, #tpu.memory_space<vmem>>, vector<10x1x4xbf16>,
    %c0_16 = arith.constant 0 : index
    %c17 = arith.constant 17 : index
    %c0_17 = arith.constant 0 : index
    %14 = vector.load %arg9[%c0_16, %c17, %c0_17] : memref<10x18x4xbf16, #tpu.memory_space<vmem>>, vector<10x1x4xbf16>
    tpu.vector_store %arg9[%c0_16, %c17, %c0_17], %12 {strides = array<i32>} : memref<10x18x4xbf16, #tpu.memory_space<vmem>>, vector<10x1x4xbf16>,
    %c0_18 = arith.constant 0 : index
    %c1 = arith.constant 1 : index
    %c0_19 = arith.constant 0 : index
    %15 = vector.load %arg9[%c0_18, %c1, %c0_19] : memref<10x18x4xbf16, #tpu.memory_space<vmem>>, vector<1x16x4xbf16>
    tpu.vector_store %arg9[%c0_18, %c1, %c0_19], %8 {strides = array<i32>} : memref<10x18x4xbf16, #tpu.memory_space<vmem>>, vector<1x16x4xbf16>,
    %c9 = arith.constant 9 : index
    %c1_20 = arith.constant 1 : index
    %c0_21 = arith.constant 0 : index
    %16 = vector.load %arg9[%c9, %c1_20, %c0_21] : memref<10x18x4xbf16, #tpu.memory_space<vmem>>, vector<1x16x4xbf16>
    tpu.vector_store %arg9[%c9, %c1_20, %c0_21], %11 {strides = array<i32>} : memref<10x18x4xbf16, #tpu.memory_space<vmem>>, vector<1x16x4xbf16>,
    %c1_22 = arith.constant 1 : index
    %c1_23 = arith.constant 1 : index
    %c0_24 = arith.constant 0 : index
    %17 = vector.load %arg9[%c1_22, %c1_23, %c0_24] : memref<10x18x4xbf16, #tpu.memory_space<vmem>>, vector<8x16x4xbf16>
    tpu.vector_store %arg9[%c1_22, %c1_23, %c0_24], %1 {strides = array<i32>} : memref<10x18x4xbf16, #tpu.memory_space<vmem>>, vector<8x16x4xbf16>,
    %cst_25 = arith.constant 0.000000e+00 : f32
    %18 = vector.broadcast %cst_25 : f32 to vector<128x128xf32>
    %c0_26 = arith.constant 0 : index
    %c0_27 = arith.constant 0 : index
    %c0_28 = arith.constant 0 : index
    %19 = vector.load %arg9[%c0_26, %c0_27, %c0_28] : memref<10x18x4xbf16, #tpu.memory_space<vmem>>, vector<8x16x4xbf16>
    %20 = vector.shape_cast %19 : vector<8x16x4xbf16> to vector<128x4xbf16>
    %c0_29 = arith.constant 0 : index
    %c0_30 = arith.constant 0 : index
    %c0_31 = arith.constant 0 : index
    %21 = vector.load %arg6[%c0_29, %c0_30, %c0_31] : memref<9x4x128xbf16, #tpu.memory_space<vmem>>, vector<1x4x128xbf16>
    %22 = vector.shape_cast %21 : vector<1x4x128xbf16> to vector<4x128xbf16>
    %cst_32 = arith.constant dense<0.000000e+00> : vector<128x128xf32>
    %23 = tpu.matmul %20, %22, %cst_32 {dimension_numbers = #tpu.dot_dimension_numbers<[1], [0], [0], [1], [0, 0, 1, 1], [], []>} : vector<128x4xbf16>, vector<4x128xbf16>, vector<128x128xf32> -> vector<128x128xf32>
    %24 = arith.addf %18, %23 : vector<128x128xf32>
    %c0_33 = arith.constant 0 : index
    %c1_34 = arith.constant 1 : index
    %c0_35 = arith.constant 0 : index
    %25 = vector.load %arg9[%c0_33, %c1_34, %c0_35] : memref<10x18x4xbf16, #tpu.memory_space<vmem>>, vector<8x16x4xbf16>
    %26 = vector.shape_cast %25 : vector<8x16x4xbf16> to vector<128x4xbf16>
    %c1_36 = arith.constant 1 : index
    %c0_37 = arith.constant 0 : index
    %c0_38 = arith.constant 0 : index
    %27 = vector.load %arg6[%c1_36, %c0_37, %c0_38] : memref<9x4x128xbf16, #tpu.memory_space<vmem>>, vector<1x4x128xbf16>
    %28 = vector.shape_cast %27 : vector<1x4x128xbf16> to vector<4x128xbf16>
    %cst_39 = arith.constant dense<0.000000e+00> : vector<128x128xf32>
    %29 = tpu.matmul %26, %28, %cst_39 {dimension_numbers = #tpu.dot_dimension_numbers<[1], [0], [0], [1], [0, 0, 1, 1], [], []>} : vector<128x4xbf16>, vector<4x128xbf16>, vector<128x128xf32> -> vector<128x128xf32>
    %30 = arith.addf %24, %29 : vector<128x128xf32>
    %c0_40 = arith.constant 0 : index
    %c2 = arith.constant 2 : index
    %c0_41 = arith.constant 0 : index
    %31 = vector.load %arg9[%c0_40, %c2, %c0_41] : memref<10x18x4xbf16, #tpu.memory_space<vmem>>, vector<8x16x4xbf16>
    %32 = vector.shape_cast %31 : vector<8x16x4xbf16> to vector<128x4xbf16>
    %c2_42 = arith.constant 2 : index
    %c0_43 = arith.constant 0 : index
    %c0_44 = arith.constant 0 : index
    %33 = vector.load %arg6[%c2_42, %c0_43, %c0_44] : memref<9x4x128xbf16, #tpu.memory_space<vmem>>, vector<1x4x128xbf16>
    %34 = vector.shape_cast %33 : vector<1x4x128xbf16> to vector<4x128xbf16>
    %cst_45 = arith.constant dense<0.000000e+00> : vector<128x128xf32>
    %35 = tpu.matmul %32, %34, %cst_45 {dimension_numbers = #tpu.dot_dimension_numbers<[1], [0], [0], [1], [0, 0, 1, 1], [], []>} : vector<128x4xbf16>, vector<4x128xbf16>, vector<128x128xf32> -> vector<128x128xf32>
    %36 = arith.addf %30, %35 : vector<128x128xf32>
    %c1_46 = arith.constant 1 : index
    %c0_47 = arith.constant 0 : index
    %c0_48 = arith.constant 0 : index
    %37 = vector.load %arg9[%c1_46, %c0_47, %c0_48] : memref<10x18x4xbf16, #tpu.memory_space<vmem>>, vector<8x16x4xbf16>
    %38 = vector.shape_cast %37 : vector<8x16x4xbf16> to vector<128x4xbf16>
    %c3 = arith.constant 3 : index
    %c0_49 = arith.constant 0 : index
    %c0_50 = arith.constant 0 : index
    %39 = vector.load %arg6[%c3, %c0_49, %c0_50] : memref<9x4x128xbf16, #tpu.memory_space<vmem>>, vector<1x4x128xbf16>
    %40 = vector.shape_cast %39 : vector<1x4x128xbf16> to vector<4x128xbf16>
    %cst_51 = arith.constant dense<0.000000e+00> : vector<128x128xf32>
    %41 = tpu.matmul %38, %40, %cst_51 {dimension_numbers = #tpu.dot_dimension_numbers<[1], [0], [0], [1], [0, 0, 1, 1], [], []>} : vector<128x4xbf16>, vector<4x128xbf16>, vector<128x128xf32> -> vector<128x128xf32>
    %42 = arith.addf %36, %41 : vector<128x128xf32>
    %c1_52 = arith.constant 1 : index
    %c1_53 = arith.constant 1 : index
    %c0_54 = arith.constant 0 : index
    %43 = vector.load %arg9[%c1_52, %c1_53, %c0_54] : memref<10x18x4xbf16, #tpu.memory_space<vmem>>, vector<8x16x4xbf16>
    %44 = vector.shape_cast %43 : vector<8x16x4xbf16> to vector<128x4xbf16>
    %c4 = arith.constant 4 : index
    %c0_55 = arith.constant 0 : index
    %c0_56 = arith.constant 0 : index
    %45 = vector.load %arg6[%c4, %c0_55, %c0_56] : memref<9x4x128xbf16, #tpu.memory_space<vmem>>, vector<1x4x128xbf16>
    %46 = vector.shape_cast %45 : vector<1x4x128xbf16> to vector<4x128xbf16>
    %cst_57 = arith.constant dense<0.000000e+00> : vector<128x128xf32>
    %47 = tpu.matmul %44, %46, %cst_57 {dimension_numbers = #tpu.dot_dimension_numbers<[1], [0], [0], [1], [0, 0, 1, 1], [], []>} : vector<128x4xbf16>, vector<4x128xbf16>, vector<128x128xf32> -> vector<128x128xf32>
    %48 = arith.addf %42, %47 : vector<128x128xf32>
    %c1_58 = arith.constant 1 : index
    %c2_59 = arith.constant 2 : index
    %c0_60 = arith.constant 0 : index
    %49 = vector.load %arg9[%c1_58, %c2_59, %c0_60] : memref<10x18x4xbf16, #tpu.memory_space<vmem>>, vector<8x16x4xbf16>
    %50 = vector.shape_cast %49 : vector<8x16x4xbf16> to vector<128x4xbf16>
    %c5 = arith.constant 5 : index
    %c0_61 = arith.constant 0 : index
    %c0_62 = arith.constant 0 : index
    %51 = vector.load %arg6[%c5, %c0_61, %c0_62] : memref<9x4x128xbf16, #tpu.memory_space<vmem>>, vector<1x4x128xbf16>
    %52 = vector.shape_cast %51 : vector<1x4x128xbf16> to vector<4x128xbf16>
    %cst_63 = arith.constant dense<0.000000e+00> : vector<128x128xf32>
    %53 = tpu.matmul %50, %52, %cst_63 {dimension_numbers = #tpu.dot_dimension_numbers<[1], [0], [0], [1], [0, 0, 1, 1], [], []>} : vector<128x4xbf16>, vector<4x128xbf16>, vector<128x128xf32> -> vector<128x128xf32>
    %54 = arith.addf %48, %53 : vector<128x128xf32>
    %c2_64 = arith.constant 2 : index
    %c0_65 = arith.constant 0 : index
    %c0_66 = arith.constant 0 : index
    %55 = vector.load %arg9[%c2_64, %c0_65, %c0_66] : memref<10x18x4xbf16, #tpu.memory_space<vmem>>, vector<8x16x4xbf16>
    %56 = vector.shape_cast %55 : vector<8x16x4xbf16> to vector<128x4xbf16>
    %c6 = arith.constant 6 : index
    %c0_67 = arith.constant 0 : index
    %c0_68 = arith.constant 0 : index
    %57 = vector.load %arg6[%c6, %c0_67, %c0_68] : memref<9x4x128xbf16, #tpu.memory_space<vmem>>, vector<1x4x128xbf16>
    %58 = vector.shape_cast %57 : vector<1x4x128xbf16> to vector<4x128xbf16>
    %cst_69 = arith.constant dense<0.000000e+00> : vector<128x128xf32>
    %59 = tpu.matmul %56, %58, %cst_69 {dimension_numbers = #tpu.dot_dimension_numbers<[1], [0], [0], [1], [0, 0, 1, 1], [], []>} : vector<128x4xbf16>, vector<4x128xbf16>, vector<128x128xf32> -> vector<128x128xf32>
    %60 = arith.addf %54, %59 : vector<128x128xf32>
    %c2_70 = arith.constant 2 : index
    %c1_71 = arith.constant 1 : index
    %c0_72 = arith.constant 0 : index
    %61 = vector.load %arg9[%c2_70, %c1_71, %c0_72] : memref<10x18x4xbf16, #tpu.memory_space<vmem>>, vector<8x16x4xbf16>
    %62 = vector.shape_cast %61 : vector<8x16x4xbf16> to vector<128x4xbf16>
    %c7 = arith.constant 7 : index
    %c0_73 = arith.constant 0 : index
    %c0_74 = arith.constant 0 : index
    %63 = vector.load %arg6[%c7, %c0_73, %c0_74] : memref<9x4x128xbf16, #tpu.memory_space<vmem>>, vector<1x4x128xbf16>
    %64 = vector.shape_cast %63 : vector<1x4x128xbf16> to vector<4x128xbf16>
    %cst_75 = arith.constant dense<0.000000e+00> : vector<128x128xf32>
    %65 = tpu.matmul %62, %64, %cst_75 {dimension_numbers = #tpu.dot_dimension_numbers<[1], [0], [0], [1], [0, 0, 1, 1], [], []>} : vector<128x4xbf16>, vector<4x128xbf16>, vector<128x128xf32> -> vector<128x128xf32>
    %66 = arith.addf %60, %65 : vector<128x128xf32>
    %c2_76 = arith.constant 2 : index
    %c2_77 = arith.constant 2 : index
    %c0_78 = arith.constant 0 : index
    %67 = vector.load %arg9[%c2_76, %c2_77, %c0_78] : memref<10x18x4xbf16, #tpu.memory_space<vmem>>, vector<8x16x4xbf16>
    %68 = vector.shape_cast %67 : vector<8x16x4xbf16> to vector<128x4xbf16>
    %c8 = arith.constant 8 : index
    %c0_79 = arith.constant 0 : index
    %c0_80 = arith.constant 0 : index
    %69 = vector.load %arg6[%c8, %c0_79, %c0_80] : memref<9x4x128xbf16, #tpu.memory_space<vmem>>, vector<1x4x128xbf16>
    %70 = vector.shape_cast %69 : vector<1x4x128xbf16> to vector<4x128xbf16>
    %cst_81 = arith.constant dense<0.000000e+00> : vector<128x128xf32>
    %71 = tpu.matmul %68, %70, %cst_81 {dimension_numbers = #tpu.dot_dimension_numbers<[1], [0], [0], [1], [0, 0, 1, 1], [], []>} : vector<128x4xbf16>, vector<4x128xbf16>, vector<128x128xf32> -> vector<128x128xf32>
    %72 = arith.addf %66, %71 : vector<128x128xf32>
    %73 = vector.shape_cast %72 : vector<128x128xf32> to vector<8x16x128xf32>
    %74 = arith.truncf %73 : vector<8x16x128xf32> to vector<8x16x128xbf16>
    %c0_82 = arith.constant 0 : index
    %c0_83 = arith.constant 0 : index
    %c0_84 = arith.constant 0 : index
    %c0_85 = arith.constant 0 : index
    %75 = vector.load %arg7[%c0_82, %c0_83, %c0_84, %c0_85] : memref<1x8x16x128xbf16, #tpu.memory_space<vmem>>, vector<1x8x16x128xbf16>
    %76 = vector.shape_cast %75 : vector<1x8x16x128xbf16> to vector<8x16x128xbf16>
    %77 = vector.shape_cast %74 : vector<8x16x128xbf16> to vector<1x8x16x128xbf16>
    tpu.vector_store %arg7[%c0_82, %c0_83, %c0_84, %c0_85], %77 {strides = array<i32>} : memref<1x8x16x128xbf16, #tpu.memory_space<vmem>>, vector<1x8x16x128xbf16>,
    %cst_86 = arith.constant dense<0.000000e+00> : vector<128xf32>
    %78 = vector.multi_reduction <add>, %72, %cst_86 [0] : vector<128x128xf32> to vector<128xf32>
    %79 = vector.shape_cast %78 : vector<128xf32> to vector<1x128xf32>
    %80 = arith.mulf %72, %72 : vector<128x128xf32>
    %cst_87 = arith.constant dense<0.000000e+00> : vector<128xf32>
    %81 = vector.multi_reduction <add>, %80, %cst_87 [0] : vector<128x128xf32> to vector<128xf32>
    %82 = vector.shape_cast %81 : vector<128xf32> to vector<1x128xf32>
    %83 = tpu.concatenate %79, %82 in 0 : vector<1x128xf32>, vector<1x128xf32> -> vector<2x128xf32>
    %c0_88 = arith.constant 0 : index
    %c0_89 = arith.constant 0 : index
    %c0_90 = arith.constant 0 : index
    %c0_91 = arith.constant 0 : index
    %84 = vector.load %arg8[%c0_88, %c0_89, %c0_90, %c0_91] : memref<1x1x2x128xf32, #tpu.memory_space<vmem>>, vector<1x1x2x128xf32>
    %85 = vector.shape_cast %84 : vector<1x1x2x128xf32> to vector<2x128xf32>
    %86 = vector.shape_cast %83 : vector<2x128xf32> to vector<1x1x2x128xf32>
    tpu.vector_store %arg8[%c0_88, %c0_89, %c0_90, %c0_91], %86 {strides = array<i32>} : memref<1x1x2x128xf32, #tpu.memory_space<vmem>>, vector<1x1x2x128xf32>,
    return
  }
  func.func @transform_0(%arg0: i32, %arg1: i32) -> (i32, i32, i32, i32) {
    %c0_i32 = arith.constant 0 : i32
    %c0_i32_0 = arith.constant 0 : i32
    %c0_i32_1 = arith.constant 0 : i32
    return %arg0, %arg1, %c0_i32, %c0_i32_0 : i32, i32, i32, i32
  }
  func.func @transform_1(%arg0: i32, %arg1: i32) -> (i32, i32, i32, i32) {
    %c8_i32 = arith.constant 8 : i32
    %0 = arith.muli %arg1, %c8_i32 : i32
    %c1_i32 = arith.constant 1 : i32
    %1 = arith.subi %0, %c1_i32 : i32
    %c0_i32 = arith.constant 0 : i32
    %2 = arith.maxsi %1, %c0_i32 : i32
    %c0_i32_0 = arith.constant 0 : i32
    %c0_i32_1 = arith.constant 0 : i32
    %c0_i32_2 = arith.constant 0 : i32
    return %arg0, %2, %c0_i32_0, %c0_i32_1 : i32, i32, i32, i32
  }
  func.func @transform_2(%arg0: i32, %arg1: i32) -> (i32, i32, i32, i32) {
    %c8_i32 = arith.constant 8 : i32
    %0 = arith.muli %arg1, %c8_i32 : i32
    %c8_i32_0 = arith.constant 8 : i32
    %1 = arith.addi %0, %c8_i32_0 : i32
    %c15_i32 = arith.constant 15 : i32
    %2 = arith.minsi %1, %c15_i32 : i32
    %c0_i32 = arith.constant 0 : i32
    %c0_i32_1 = arith.constant 0 : i32
    %c0_i32_2 = arith.constant 0 : i32
    return %arg0, %2, %c0_i32, %c0_i32_1 : i32, i32, i32, i32
  }
  func.func @transform_3(%arg0: i32, %arg1: i32) -> (i32, i32) {
    %c0_i32 = arith.constant 0 : i32
    %c0_i32_0 = arith.constant 0 : i32
    %c0_i32_1 = arith.constant 0 : i32
    return %c0_i32, %c0_i32_0 : i32, i32
  }
  func.func @transform_4(%arg0: i32, %arg1: i32) -> (i32, i32, i32) {
    %c0_i32 = arith.constant 0 : i32
    %c0_i32_0 = arith.constant 0 : i32
    %c0_i32_1 = arith.constant 0 : i32
    %c0_i32_2 = arith.constant 0 : i32
    return %c0_i32, %c0_i32_0, %c0_i32_1 : i32, i32, i32
  }
  func.func @transform_5(%arg0: i32, %arg1: i32) -> (i32, i32, i32, i32) {
    %c0_i32 = arith.constant 0 : i32
    %c0_i32_0 = arith.constant 0 : i32
    %c0_i32_1 = arith.constant 0 : i32
    return %arg0, %arg1, %c0_i32, %c0_i32_0 : i32, i32, i32, i32
  }
  func.func @transform_6(%arg0: i32, %arg1: i32) -> (i32, i32, i32, i32) {
    %c0_i32 = arith.constant 0 : i32
    %c0_i32_0 = arith.constant 0 : i32
    %c0_i32_1 = arith.constant 0 : i32
    return %arg0, %arg1, %c0_i32, %c0_i32_0 : i32, i32, i32, i32
  }
}

module attributes {stable_mosaic.version = 11 : i64} {
  func.func @_conv_stage_kernel(%arg0: i32, %arg1: i32, %arg2: memref<1x8x16x128xbf16, #tpu.memory_space<vmem>>, %arg3: memref<1x1x16x128xbf16, #tpu.memory_space<vmem>>, %arg4: memref<1x1x16x128xbf16, #tpu.memory_space<vmem>>, %arg5: memref<2x128xf32, #tpu.memory_space<vmem>>, %arg6: memref<9x128x128xbf16, #tpu.memory_space<vmem>>, %arg7: memref<1x8x16x128xbf16, #tpu.memory_space<vmem>>, %arg8: memref<1x1x2x128xf32, #tpu.memory_space<vmem>>, %arg9: memref<10x18x128xbf16, #tpu.memory_space<vmem>>) attributes {dimension_semantics = [#tpu.dimension_semantics<parallel>, #tpu.dimension_semantics<parallel>], iteration_bounds = array<i64: 2, 2>, scalar_prefetch = 0 : i64, scratch_operands = 1 : i64, tpu.core_type = #tpu.core_type<tc>, window_params = [{transform_indices = @transform_0, window_bounds = array<i64: 1, 8, 16, 128>}, {transform_indices = @transform_1, window_bounds = array<i64: 1, 1, 16, 128>}, {transform_indices = @transform_2, window_bounds = array<i64: 1, 1, 16, 128>}, {pipeline_mode = #tpu.pipeline_mode<synchronous>, transform_indices = @transform_3, window_bounds = array<i64: 2, 128>}, {pipeline_mode = #tpu.pipeline_mode<synchronous>, transform_indices = @transform_4, window_bounds = array<i64: 9, 128, 128>}, {transform_indices = @transform_5, window_bounds = array<i64: 1, 8, 16, 128>}, {transform_indices = @transform_6, window_bounds = array<i64: 1, 1, 2, 128>}]} {
    %c0 = arith.constant 0 : index
    %c0_0 = arith.constant 0 : index
    %c0_1 = arith.constant 0 : index
    %c0_2 = arith.constant 0 : index
    %0 = vector.load %arg2[%c0, %c0_0, %c0_1, %c0_2] : memref<1x8x16x128xbf16, #tpu.memory_space<vmem>>, vector<1x8x16x128xbf16>
    %1 = vector.shape_cast %0 : vector<1x8x16x128xbf16> to vector<8x16x128xbf16>
    %c0_3 = arith.constant 0 : index
    %c0_4 = arith.constant 0 : index
    %c0_5 = arith.constant 0 : index
    %c0_6 = arith.constant 0 : index
    %2 = vector.load %arg3[%c0_3, %c0_4, %c0_5, %c0_6] : memref<1x1x16x128xbf16, #tpu.memory_space<vmem>>, vector<1x1x16x128xbf16>
    %3 = vector.shape_cast %2 : vector<1x1x16x128xbf16> to vector<1x16x128xbf16>
    %c0_7 = arith.constant 0 : index
    %c0_8 = arith.constant 0 : index
    %c0_9 = arith.constant 0 : index
    %c0_10 = arith.constant 0 : index
    %4 = vector.load %arg4[%c0_7, %c0_8, %c0_9, %c0_10] : memref<1x1x16x128xbf16, #tpu.memory_space<vmem>>, vector<1x1x16x128xbf16>
    %5 = vector.shape_cast %4 : vector<1x1x16x128xbf16> to vector<1x16x128xbf16>
    %c0_11 = arith.constant 0 : index
    %c0_12 = arith.constant 0 : index
    %6 = vector.load %arg5[%c0_11, %c0_12] : memref<2x128xf32, #tpu.memory_space<vmem>>, vector<2x128xf32>
    %7 = vector.extract_strided_slice %6 {offsets = [0, 0], sizes = [1, 128], strides = [1, 1]} : vector<2x128xf32> to vector<1x128xf32>
    %8 = vector.shape_cast %7 : vector<1x128xf32> to vector<1x1x128xf32>
    %9 = vector.extract_strided_slice %6 {offsets = [1, 0], sizes = [1, 128], strides = [1, 1]} : vector<2x128xf32> to vector<1x128xf32>
    %10 = vector.shape_cast %9 : vector<1x128xf32> to vector<1x1x128xf32>
    %11 = arith.extf %1 : vector<8x16x128xbf16> to vector<8x16x128xf32>
    %12 = vector.broadcast %8 : vector<1x1x128xf32> to vector<8x16x128xf32>
    %13 = arith.mulf %11, %12 : vector<8x16x128xf32>
    %14 = vector.broadcast %10 : vector<1x1x128xf32> to vector<8x16x128xf32>
    %15 = arith.addf %13, %14 : vector<8x16x128xf32>
    %cst = arith.constant 0.000000e+00 : f32
    %16 = vector.broadcast %cst : f32 to vector<8x16x128xf32>
    %17 = arith.maximumf %15, %16 : vector<8x16x128xf32>
    %18 = arith.extf %3 : vector<1x16x128xbf16> to vector<1x16x128xf32>
    %19 = vector.broadcast %8 : vector<1x1x128xf32> to vector<1x16x128xf32>
    %20 = arith.mulf %18, %19 : vector<1x16x128xf32>
    %21 = vector.broadcast %10 : vector<1x1x128xf32> to vector<1x16x128xf32>
    %22 = arith.addf %20, %21 : vector<1x16x128xf32>
    %cst_13 = arith.constant 0.000000e+00 : f32
    %23 = vector.broadcast %cst_13 : f32 to vector<1x16x128xf32>
    %24 = arith.maximumf %22, %23 : vector<1x16x128xf32>
    %25 = arith.extf %5 : vector<1x16x128xbf16> to vector<1x16x128xf32>
    %26 = vector.broadcast %8 : vector<1x1x128xf32> to vector<1x16x128xf32>
    %27 = arith.mulf %25, %26 : vector<1x16x128xf32>
    %28 = vector.broadcast %10 : vector<1x1x128xf32> to vector<1x16x128xf32>
    %29 = arith.addf %27, %28 : vector<1x16x128xf32>
    %cst_14 = arith.constant 0.000000e+00 : f32
    %30 = vector.broadcast %cst_14 : f32 to vector<1x16x128xf32>
    %31 = arith.maximumf %29, %30 : vector<1x16x128xf32>
    %32 = arith.truncf %17 : vector<8x16x128xf32> to vector<8x16x128xbf16>
    %33 = arith.truncf %24 : vector<1x16x128xf32> to vector<1x16x128xbf16>
    %34 = arith.truncf %31 : vector<1x16x128xf32> to vector<1x16x128xbf16>
    %c0_i32 = arith.constant 0 : i32
    %35 = arith.cmpi sgt, %arg1, %c0_i32 : i32
    %cst_15 = arith.constant 0.000000e+00 : bf16
    %36 = vector.broadcast %cst_15 : bf16 to vector<1x16x128xbf16>
    %37 = arith.select %35, %33, %36 : vector<1x16x128xbf16>
    %c1_i32 = arith.constant 1 : i32
    %38 = arith.cmpi slt, %arg1, %c1_i32 : i32
    %cst_16 = arith.constant 0.000000e+00 : bf16
    %39 = vector.broadcast %cst_16 : bf16 to vector<1x16x128xbf16>
    %40 = arith.select %38, %34, %39 : vector<1x16x128xbf16>
    %cst_17 = arith.constant 0.000000e+00 : bf16
    %41 = vector.broadcast %cst_17 : bf16 to vector<10x1x128xbf16>
    %c0_18 = arith.constant 0 : index
    %c0_19 = arith.constant 0 : index
    %c0_20 = arith.constant 0 : index
    %42 = vector.load %arg9[%c0_18, %c0_19, %c0_20] : memref<10x18x128xbf16, #tpu.memory_space<vmem>>, vector<10x1x128xbf16>
    tpu.vector_store %arg9[%c0_18, %c0_19, %c0_20], %41 {strides = array<i32>} : memref<10x18x128xbf16, #tpu.memory_space<vmem>>, vector<10x1x128xbf16>,
    %c0_21 = arith.constant 0 : index
    %c17 = arith.constant 17 : index
    %c0_22 = arith.constant 0 : index
    %43 = vector.load %arg9[%c0_21, %c17, %c0_22] : memref<10x18x128xbf16, #tpu.memory_space<vmem>>, vector<10x1x128xbf16>
    tpu.vector_store %arg9[%c0_21, %c17, %c0_22], %41 {strides = array<i32>} : memref<10x18x128xbf16, #tpu.memory_space<vmem>>, vector<10x1x128xbf16>,
    %c0_23 = arith.constant 0 : index
    %c1 = arith.constant 1 : index
    %c0_24 = arith.constant 0 : index
    %44 = vector.load %arg9[%c0_23, %c1, %c0_24] : memref<10x18x128xbf16, #tpu.memory_space<vmem>>, vector<1x16x128xbf16>
    tpu.vector_store %arg9[%c0_23, %c1, %c0_24], %37 {strides = array<i32>} : memref<10x18x128xbf16, #tpu.memory_space<vmem>>, vector<1x16x128xbf16>,
    %c9 = arith.constant 9 : index
    %c1_25 = arith.constant 1 : index
    %c0_26 = arith.constant 0 : index
    %45 = vector.load %arg9[%c9, %c1_25, %c0_26] : memref<10x18x128xbf16, #tpu.memory_space<vmem>>, vector<1x16x128xbf16>
    tpu.vector_store %arg9[%c9, %c1_25, %c0_26], %40 {strides = array<i32>} : memref<10x18x128xbf16, #tpu.memory_space<vmem>>, vector<1x16x128xbf16>,
    %c1_27 = arith.constant 1 : index
    %c1_28 = arith.constant 1 : index
    %c0_29 = arith.constant 0 : index
    %46 = vector.load %arg9[%c1_27, %c1_28, %c0_29] : memref<10x18x128xbf16, #tpu.memory_space<vmem>>, vector<8x16x128xbf16>
    tpu.vector_store %arg9[%c1_27, %c1_28, %c0_29], %32 {strides = array<i32>} : memref<10x18x128xbf16, #tpu.memory_space<vmem>>, vector<8x16x128xbf16>,
    %cst_30 = arith.constant 0.000000e+00 : f32
    %47 = vector.broadcast %cst_30 : f32 to vector<128x128xf32>
    %c0_31 = arith.constant 0 : index
    %c0_32 = arith.constant 0 : index
    %c0_33 = arith.constant 0 : index
    %48 = vector.load %arg9[%c0_31, %c0_32, %c0_33] : memref<10x18x128xbf16, #tpu.memory_space<vmem>>, vector<8x16x128xbf16>
    %49 = vector.shape_cast %48 : vector<8x16x128xbf16> to vector<128x128xbf16>
    %c0_34 = arith.constant 0 : index
    %c0_35 = arith.constant 0 : index
    %c0_36 = arith.constant 0 : index
    %50 = vector.load %arg6[%c0_34, %c0_35, %c0_36] : memref<9x128x128xbf16, #tpu.memory_space<vmem>>, vector<1x128x128xbf16>
    %51 = vector.shape_cast %50 : vector<1x128x128xbf16> to vector<128x128xbf16>
    %cst_37 = arith.constant dense<0.000000e+00> : vector<128x128xf32>
    %52 = tpu.matmul %49, %51, %cst_37 {dimension_numbers = #tpu.dot_dimension_numbers<[1], [0], [0], [1], [0, 0, 1, 1], [], []>} : vector<128x128xbf16>, vector<128x128xbf16>, vector<128x128xf32> -> vector<128x128xf32>
    %53 = arith.addf %47, %52 : vector<128x128xf32>
    %c0_38 = arith.constant 0 : index
    %c1_39 = arith.constant 1 : index
    %c0_40 = arith.constant 0 : index
    %54 = vector.load %arg9[%c0_38, %c1_39, %c0_40] : memref<10x18x128xbf16, #tpu.memory_space<vmem>>, vector<8x16x128xbf16>
    %55 = vector.shape_cast %54 : vector<8x16x128xbf16> to vector<128x128xbf16>
    %c1_41 = arith.constant 1 : index
    %c0_42 = arith.constant 0 : index
    %c0_43 = arith.constant 0 : index
    %56 = vector.load %arg6[%c1_41, %c0_42, %c0_43] : memref<9x128x128xbf16, #tpu.memory_space<vmem>>, vector<1x128x128xbf16>
    %57 = vector.shape_cast %56 : vector<1x128x128xbf16> to vector<128x128xbf16>
    %cst_44 = arith.constant dense<0.000000e+00> : vector<128x128xf32>
    %58 = tpu.matmul %55, %57, %cst_44 {dimension_numbers = #tpu.dot_dimension_numbers<[1], [0], [0], [1], [0, 0, 1, 1], [], []>} : vector<128x128xbf16>, vector<128x128xbf16>, vector<128x128xf32> -> vector<128x128xf32>
    %59 = arith.addf %53, %58 : vector<128x128xf32>
    %c0_45 = arith.constant 0 : index
    %c2 = arith.constant 2 : index
    %c0_46 = arith.constant 0 : index
    %60 = vector.load %arg9[%c0_45, %c2, %c0_46] : memref<10x18x128xbf16, #tpu.memory_space<vmem>>, vector<8x16x128xbf16>
    %61 = vector.shape_cast %60 : vector<8x16x128xbf16> to vector<128x128xbf16>
    %c2_47 = arith.constant 2 : index
    %c0_48 = arith.constant 0 : index
    %c0_49 = arith.constant 0 : index
    %62 = vector.load %arg6[%c2_47, %c0_48, %c0_49] : memref<9x128x128xbf16, #tpu.memory_space<vmem>>, vector<1x128x128xbf16>
    %63 = vector.shape_cast %62 : vector<1x128x128xbf16> to vector<128x128xbf16>
    %cst_50 = arith.constant dense<0.000000e+00> : vector<128x128xf32>
    %64 = tpu.matmul %61, %63, %cst_50 {dimension_numbers = #tpu.dot_dimension_numbers<[1], [0], [0], [1], [0, 0, 1, 1], [], []>} : vector<128x128xbf16>, vector<128x128xbf16>, vector<128x128xf32> -> vector<128x128xf32>
    %65 = arith.addf %59, %64 : vector<128x128xf32>
    %c1_51 = arith.constant 1 : index
    %c0_52 = arith.constant 0 : index
    %c0_53 = arith.constant 0 : index
    %66 = vector.load %arg9[%c1_51, %c0_52, %c0_53] : memref<10x18x128xbf16, #tpu.memory_space<vmem>>, vector<8x16x128xbf16>
    %67 = vector.shape_cast %66 : vector<8x16x128xbf16> to vector<128x128xbf16>
    %c3 = arith.constant 3 : index
    %c0_54 = arith.constant 0 : index
    %c0_55 = arith.constant 0 : index
    %68 = vector.load %arg6[%c3, %c0_54, %c0_55] : memref<9x128x128xbf16, #tpu.memory_space<vmem>>, vector<1x128x128xbf16>
    %69 = vector.shape_cast %68 : vector<1x128x128xbf16> to vector<128x128xbf16>
    %cst_56 = arith.constant dense<0.000000e+00> : vector<128x128xf32>
    %70 = tpu.matmul %67, %69, %cst_56 {dimension_numbers = #tpu.dot_dimension_numbers<[1], [0], [0], [1], [0, 0, 1, 1], [], []>} : vector<128x128xbf16>, vector<128x128xbf16>, vector<128x128xf32> -> vector<128x128xf32>
    %71 = arith.addf %65, %70 : vector<128x128xf32>
    %c1_57 = arith.constant 1 : index
    %c1_58 = arith.constant 1 : index
    %c0_59 = arith.constant 0 : index
    %72 = vector.load %arg9[%c1_57, %c1_58, %c0_59] : memref<10x18x128xbf16, #tpu.memory_space<vmem>>, vector<8x16x128xbf16>
    %73 = vector.shape_cast %72 : vector<8x16x128xbf16> to vector<128x128xbf16>
    %c4 = arith.constant 4 : index
    %c0_60 = arith.constant 0 : index
    %c0_61 = arith.constant 0 : index
    %74 = vector.load %arg6[%c4, %c0_60, %c0_61] : memref<9x128x128xbf16, #tpu.memory_space<vmem>>, vector<1x128x128xbf16>
    %75 = vector.shape_cast %74 : vector<1x128x128xbf16> to vector<128x128xbf16>
    %cst_62 = arith.constant dense<0.000000e+00> : vector<128x128xf32>
    %76 = tpu.matmul %73, %75, %cst_62 {dimension_numbers = #tpu.dot_dimension_numbers<[1], [0], [0], [1], [0, 0, 1, 1], [], []>} : vector<128x128xbf16>, vector<128x128xbf16>, vector<128x128xf32> -> vector<128x128xf32>
    %77 = arith.addf %71, %76 : vector<128x128xf32>
    %c1_63 = arith.constant 1 : index
    %c2_64 = arith.constant 2 : index
    %c0_65 = arith.constant 0 : index
    %78 = vector.load %arg9[%c1_63, %c2_64, %c0_65] : memref<10x18x128xbf16, #tpu.memory_space<vmem>>, vector<8x16x128xbf16>
    %79 = vector.shape_cast %78 : vector<8x16x128xbf16> to vector<128x128xbf16>
    %c5 = arith.constant 5 : index
    %c0_66 = arith.constant 0 : index
    %c0_67 = arith.constant 0 : index
    %80 = vector.load %arg6[%c5, %c0_66, %c0_67] : memref<9x128x128xbf16, #tpu.memory_space<vmem>>, vector<1x128x128xbf16>
    %81 = vector.shape_cast %80 : vector<1x128x128xbf16> to vector<128x128xbf16>
    %cst_68 = arith.constant dense<0.000000e+00> : vector<128x128xf32>
    %82 = tpu.matmul %79, %81, %cst_68 {dimension_numbers = #tpu.dot_dimension_numbers<[1], [0], [0], [1], [0, 0, 1, 1], [], []>} : vector<128x128xbf16>, vector<128x128xbf16>, vector<128x128xf32> -> vector<128x128xf32>
    %83 = arith.addf %77, %82 : vector<128x128xf32>
    %c2_69 = arith.constant 2 : index
    %c0_70 = arith.constant 0 : index
    %c0_71 = arith.constant 0 : index
    %84 = vector.load %arg9[%c2_69, %c0_70, %c0_71] : memref<10x18x128xbf16, #tpu.memory_space<vmem>>, vector<8x16x128xbf16>
    %85 = vector.shape_cast %84 : vector<8x16x128xbf16> to vector<128x128xbf16>
    %c6 = arith.constant 6 : index
    %c0_72 = arith.constant 0 : index
    %c0_73 = arith.constant 0 : index
    %86 = vector.load %arg6[%c6, %c0_72, %c0_73] : memref<9x128x128xbf16, #tpu.memory_space<vmem>>, vector<1x128x128xbf16>
    %87 = vector.shape_cast %86 : vector<1x128x128xbf16> to vector<128x128xbf16>
    %cst_74 = arith.constant dense<0.000000e+00> : vector<128x128xf32>
    %88 = tpu.matmul %85, %87, %cst_74 {dimension_numbers = #tpu.dot_dimension_numbers<[1], [0], [0], [1], [0, 0, 1, 1], [], []>} : vector<128x128xbf16>, vector<128x128xbf16>, vector<128x128xf32> -> vector<128x128xf32>
    %89 = arith.addf %83, %88 : vector<128x128xf32>
    %c2_75 = arith.constant 2 : index
    %c1_76 = arith.constant 1 : index
    %c0_77 = arith.constant 0 : index
    %90 = vector.load %arg9[%c2_75, %c1_76, %c0_77] : memref<10x18x128xbf16, #tpu.memory_space<vmem>>, vector<8x16x128xbf16>
    %91 = vector.shape_cast %90 : vector<8x16x128xbf16> to vector<128x128xbf16>
    %c7 = arith.constant 7 : index
    %c0_78 = arith.constant 0 : index
    %c0_79 = arith.constant 0 : index
    %92 = vector.load %arg6[%c7, %c0_78, %c0_79] : memref<9x128x128xbf16, #tpu.memory_space<vmem>>, vector<1x128x128xbf16>
    %93 = vector.shape_cast %92 : vector<1x128x128xbf16> to vector<128x128xbf16>
    %cst_80 = arith.constant dense<0.000000e+00> : vector<128x128xf32>
    %94 = tpu.matmul %91, %93, %cst_80 {dimension_numbers = #tpu.dot_dimension_numbers<[1], [0], [0], [1], [0, 0, 1, 1], [], []>} : vector<128x128xbf16>, vector<128x128xbf16>, vector<128x128xf32> -> vector<128x128xf32>
    %95 = arith.addf %89, %94 : vector<128x128xf32>
    %c2_81 = arith.constant 2 : index
    %c2_82 = arith.constant 2 : index
    %c0_83 = arith.constant 0 : index
    %96 = vector.load %arg9[%c2_81, %c2_82, %c0_83] : memref<10x18x128xbf16, #tpu.memory_space<vmem>>, vector<8x16x128xbf16>
    %97 = vector.shape_cast %96 : vector<8x16x128xbf16> to vector<128x128xbf16>
    %c8 = arith.constant 8 : index
    %c0_84 = arith.constant 0 : index
    %c0_85 = arith.constant 0 : index
    %98 = vector.load %arg6[%c8, %c0_84, %c0_85] : memref<9x128x128xbf16, #tpu.memory_space<vmem>>, vector<1x128x128xbf16>
    %99 = vector.shape_cast %98 : vector<1x128x128xbf16> to vector<128x128xbf16>
    %cst_86 = arith.constant dense<0.000000e+00> : vector<128x128xf32>
    %100 = tpu.matmul %97, %99, %cst_86 {dimension_numbers = #tpu.dot_dimension_numbers<[1], [0], [0], [1], [0, 0, 1, 1], [], []>} : vector<128x128xbf16>, vector<128x128xbf16>, vector<128x128xf32> -> vector<128x128xf32>
    %101 = arith.addf %95, %100 : vector<128x128xf32>
    %102 = vector.shape_cast %101 : vector<128x128xf32> to vector<8x16x128xf32>
    %103 = arith.truncf %102 : vector<8x16x128xf32> to vector<8x16x128xbf16>
    %c0_87 = arith.constant 0 : index
    %c0_88 = arith.constant 0 : index
    %c0_89 = arith.constant 0 : index
    %c0_90 = arith.constant 0 : index
    %104 = vector.load %arg7[%c0_87, %c0_88, %c0_89, %c0_90] : memref<1x8x16x128xbf16, #tpu.memory_space<vmem>>, vector<1x8x16x128xbf16>
    %105 = vector.shape_cast %104 : vector<1x8x16x128xbf16> to vector<8x16x128xbf16>
    %106 = vector.shape_cast %103 : vector<8x16x128xbf16> to vector<1x8x16x128xbf16>
    tpu.vector_store %arg7[%c0_87, %c0_88, %c0_89, %c0_90], %106 {strides = array<i32>} : memref<1x8x16x128xbf16, #tpu.memory_space<vmem>>, vector<1x8x16x128xbf16>,
    %cst_91 = arith.constant dense<0.000000e+00> : vector<128xf32>
    %107 = vector.multi_reduction <add>, %101, %cst_91 [0] : vector<128x128xf32> to vector<128xf32>
    %108 = vector.shape_cast %107 : vector<128xf32> to vector<1x128xf32>
    %109 = arith.mulf %101, %101 : vector<128x128xf32>
    %cst_92 = arith.constant dense<0.000000e+00> : vector<128xf32>
    %110 = vector.multi_reduction <add>, %109, %cst_92 [0] : vector<128x128xf32> to vector<128xf32>
    %111 = vector.shape_cast %110 : vector<128xf32> to vector<1x128xf32>
    %112 = tpu.concatenate %108, %111 in 0 : vector<1x128xf32>, vector<1x128xf32> -> vector<2x128xf32>
    %c0_93 = arith.constant 0 : index
    %c0_94 = arith.constant 0 : index
    %c0_95 = arith.constant 0 : index
    %c0_96 = arith.constant 0 : index
    %113 = vector.load %arg8[%c0_93, %c0_94, %c0_95, %c0_96] : memref<1x1x2x128xf32, #tpu.memory_space<vmem>>, vector<1x1x2x128xf32>
    %114 = vector.shape_cast %113 : vector<1x1x2x128xf32> to vector<2x128xf32>
    %115 = vector.shape_cast %112 : vector<2x128xf32> to vector<1x1x2x128xf32>
    tpu.vector_store %arg8[%c0_93, %c0_94, %c0_95, %c0_96], %115 {strides = array<i32>} : memref<1x1x2x128xf32, #tpu.memory_space<vmem>>, vector<1x1x2x128xf32>,
    return
  }
  func.func @transform_0(%arg0: i32, %arg1: i32) -> (i32, i32, i32, i32) {
    %c0_i32 = arith.constant 0 : i32
    %c0_i32_0 = arith.constant 0 : i32
    %c0_i32_1 = arith.constant 0 : i32
    return %arg0, %arg1, %c0_i32, %c0_i32_0 : i32, i32, i32, i32
  }
  func.func @transform_1(%arg0: i32, %arg1: i32) -> (i32, i32, i32, i32) {
    %c8_i32 = arith.constant 8 : i32
    %0 = arith.muli %arg1, %c8_i32 : i32
    %c1_i32 = arith.constant 1 : i32
    %1 = arith.subi %0, %c1_i32 : i32
    %c0_i32 = arith.constant 0 : i32
    %2 = arith.maxsi %1, %c0_i32 : i32
    %c0_i32_0 = arith.constant 0 : i32
    %c0_i32_1 = arith.constant 0 : i32
    %c0_i32_2 = arith.constant 0 : i32
    return %arg0, %2, %c0_i32_0, %c0_i32_1 : i32, i32, i32, i32
  }
  func.func @transform_2(%arg0: i32, %arg1: i32) -> (i32, i32, i32, i32) {
    %c8_i32 = arith.constant 8 : i32
    %0 = arith.muli %arg1, %c8_i32 : i32
    %c8_i32_0 = arith.constant 8 : i32
    %1 = arith.addi %0, %c8_i32_0 : i32
    %c15_i32 = arith.constant 15 : i32
    %2 = arith.minsi %1, %c15_i32 : i32
    %c0_i32 = arith.constant 0 : i32
    %c0_i32_1 = arith.constant 0 : i32
    %c0_i32_2 = arith.constant 0 : i32
    return %arg0, %2, %c0_i32, %c0_i32_1 : i32, i32, i32, i32
  }
  func.func @transform_3(%arg0: i32, %arg1: i32) -> (i32, i32) {
    %c0_i32 = arith.constant 0 : i32
    %c0_i32_0 = arith.constant 0 : i32
    %c0_i32_1 = arith.constant 0 : i32
    return %c0_i32, %c0_i32_0 : i32, i32
  }
  func.func @transform_4(%arg0: i32, %arg1: i32) -> (i32, i32, i32) {
    %c0_i32 = arith.constant 0 : i32
    %c0_i32_0 = arith.constant 0 : i32
    %c0_i32_1 = arith.constant 0 : i32
    %c0_i32_2 = arith.constant 0 : i32
    return %c0_i32, %c0_i32_0, %c0_i32_1 : i32, i32, i32
  }
  func.func @transform_5(%arg0: i32, %arg1: i32) -> (i32, i32, i32, i32) {
    %c0_i32 = arith.constant 0 : i32
    %c0_i32_0 = arith.constant 0 : i32
    %c0_i32_1 = arith.constant 0 : i32
    return %arg0, %arg1, %c0_i32, %c0_i32_0 : i32, i32, i32, i32
  }
  func.func @transform_6(%arg0: i32, %arg1: i32) -> (i32, i32, i32, i32) {
    %c0_i32 = arith.constant 0 : i32
    %c0_i32_0 = arith.constant 0 : i32
    %c0_i32_1 = arith.constant 0 : i32
    return %arg0, %arg1, %c0_i32, %c0_i32_0 : i32, i32, i32, i32
  }
}

module attributes {stable_mosaic.version = 11 : i64} {
  func.func @_bn_relu_out_kernel(%arg0: i32, %arg1: i32, %arg2: memref<1x8x16x128xbf16, #tpu.memory_space<vmem>>, %arg3: memref<2x128xf32, #tpu.memory_space<vmem>>, %arg4: memref<1x8x16x8xf32, #tpu.memory_space<vmem>>) attributes {dimension_semantics = [#tpu.dimension_semantics<parallel>, #tpu.dimension_semantics<parallel>], iteration_bounds = array<i64: 2, 2>, scalar_prefetch = 0 : i64, scratch_operands = 0 : i64, tpu.core_type = #tpu.core_type<tc>, window_params = [{transform_indices = @transform_0, window_bounds = array<i64: 1, 8, 16, 128>}, {pipeline_mode = #tpu.pipeline_mode<synchronous>, transform_indices = @transform_1, window_bounds = array<i64: 2, 128>}, {transform_indices = @transform_2, window_bounds = array<i64: 1, 8, 16, 8>}]} {
    %c0 = arith.constant 0 : index
    %c0_0 = arith.constant 0 : index
    %c0_1 = arith.constant 0 : index
    %c0_2 = arith.constant 0 : index
    %0 = vector.load %arg2[%c0, %c0_0, %c0_1, %c0_2] : memref<1x8x16x128xbf16, #tpu.memory_space<vmem>>, vector<1x8x16x128xbf16>
    %1 = vector.shape_cast %0 : vector<1x8x16x128xbf16> to vector<8x16x128xbf16>
    %2 = arith.extf %1 : vector<8x16x128xbf16> to vector<8x16x128xf32>
    %c0_3 = arith.constant 0 : index
    %c0_4 = arith.constant 0 : index
    %3 = vector.load %arg3[%c0_3, %c0_4] : memref<2x128xf32, #tpu.memory_space<vmem>>, vector<2x128xf32>
    %4 = vector.extract_strided_slice %3 {offsets = [0, 0], sizes = [1, 128], strides = [1, 1]} : vector<2x128xf32> to vector<1x128xf32>
    %5 = vector.shape_cast %4 : vector<1x128xf32> to vector<1x1x128xf32>
    %6 = vector.extract_strided_slice %3 {offsets = [1, 0], sizes = [1, 128], strides = [1, 1]} : vector<2x128xf32> to vector<1x128xf32>
    %7 = vector.shape_cast %6 : vector<1x128xf32> to vector<1x1x128xf32>
    %8 = vector.broadcast %5 : vector<1x1x128xf32> to vector<8x16x128xf32>
    %9 = arith.mulf %2, %8 : vector<8x16x128xf32>
    %10 = vector.broadcast %7 : vector<1x1x128xf32> to vector<8x16x128xf32>
    %11 = arith.addf %9, %10 : vector<8x16x128xf32>
    %cst = arith.constant 0.000000e+00 : f32
    %12 = vector.broadcast %cst : f32 to vector<8x16x128xf32>
    %13 = arith.maximumf %11, %12 : vector<8x16x128xf32>
    %14 = vector.extract_strided_slice %13 {offsets = [0, 0, 0], sizes = [8, 16, 8], strides = [1, 1, 1]} : vector<8x16x128xf32> to vector<8x16x8xf32>
    %c0_5 = arith.constant 0 : index
    %c0_6 = arith.constant 0 : index
    %c0_7 = arith.constant 0 : index
    %c0_8 = arith.constant 0 : index
    %15 = vector.load %arg4[%c0_5, %c0_6, %c0_7, %c0_8] : memref<1x8x16x8xf32, #tpu.memory_space<vmem>>, vector<1x8x16x8xf32>
    %16 = vector.shape_cast %15 : vector<1x8x16x8xf32> to vector<8x16x8xf32>
    %17 = vector.shape_cast %14 : vector<8x16x8xf32> to vector<1x8x16x8xf32>
    tpu.vector_store %arg4[%c0_5, %c0_6, %c0_7, %c0_8], %17 {strides = array<i32>} : memref<1x8x16x8xf32, #tpu.memory_space<vmem>>, vector<1x8x16x8xf32>,
    return
  }
  func.func @transform_0(%arg0: i32, %arg1: i32) -> (i32, i32, i32, i32) {
    %c0_i32 = arith.constant 0 : i32
    %c0_i32_0 = arith.constant 0 : i32
    %c0_i32_1 = arith.constant 0 : i32
    return %arg0, %arg1, %c0_i32, %c0_i32_0 : i32, i32, i32, i32
  }
  func.func @transform_1(%arg0: i32, %arg1: i32) -> (i32, i32) {
    %c0_i32 = arith.constant 0 : i32
    %c0_i32_0 = arith.constant 0 : i32
    %c0_i32_1 = arith.constant 0 : i32
    return %c0_i32, %c0_i32_0 : i32, i32
  }
  func.func @transform_2(%arg0: i32, %arg1: i32) -> (i32, i32, i32, i32) {
    %c0_i32 = arith.constant 0 : i32
    %c0_i32_0 = arith.constant 0 : i32
    %c0_i32_1 = arith.constant 0 : i32
    return %arg0, %arg1, %c0_i32, %c0_i32_0 : i32, i32, i32, i32
  }
}

</mosaic_0001>

<llo_original>
// kernel: double_conv.5
$region0: #{double_conv.5}
  #allocation0 [shape = 'u32[]', space=smem, size = 0x4, offset = 0x4, fixed_abs, tag = 'smem constant byte address 0x4 - core index']
  #allocation1 [shape = 'u32[144,128]{1,0:T(1,128)}', space=vmem, size = 0x12000, scoped, tag = 'internal scratch']
  %s0 = inlined_call_operand.vmem [shape: bf16[2,16,16,128], index: 0, kind: input, shape index: {}]
  %s1 = inlined_call_operand.vmem [shape: f32[2,128], index: 1, kind: input, shape index: {}]
  %s2 = inlined_call_operand.vmem [shape: f32[2,16,16,8], index: 2, kind: output, shape index: {}]
  %s3 = sld [smem:[#allocation0]]
  $region41: #{double_conv.5} parent=0
    _
  %s5 = ssub.s32 1, %s3
  %s6 = scalar_select 0, %s5, %s3
  loop: start=0, step=1, limit=6
  $region2: #{double_conv.5} parent=0 // loop_pre_header
    _
  $region3: #{double_conv.5} parent=0 // loop_header
    %s8 = sphi 0, %s12
    %p9 = scmp.ge.s32.totalorder %s8, 6
    %s15 = sphi 0, %s27
    %s16 = sphi 0, %s23
    %s17 = sphi 0, %s15
    %s18 = sphi 0, %s16
    %s19 = sphi 0, %s17
    %s20 = sphi 0, %s18
    %s32 = sphi 0, %s34
    %s35 = sphi 0, %s32
    %s36 = sphi 0, %s35
    %s52 = sphi 0, %s36
    %s56 = sphi 0, %s56
    %s58 = sphi 0, %s56
    %s59 = sphi 0, %s58
    %s73 = sphi 0, %s59
    %s81 = sphi 0, %s83
    %s84 = sphi 0, %s81
    %s85 = sphi 0, %s84
    %s101 = sphi 0, %s85
  $region4: #{double_conv.5} parent=0 // loop_header_branch
    %11 = sbr.rel (%p9) target = $region8
  $region5: #{double_conv.5} parent=0 // loop_body
    %s13 = ssub.s32 %s8, 1
    %s14 = ssub.s32 %s8, 2
    %s21 = sadd.s32 1, %s16
    %p22 = scmp.ge.s32.totalorder %s21, 2
    %s23 = scalar_select %p22, 0, %s21
    %s24 = sadd.s32 1, %s15
    %s25 = scalar_select %p22, %s24, %s15
    %p26 = scmp.ge.s32.totalorder %s25, 2
    %s27 = scalar_select %p26, 0, %s25
    %s28 = ssub.s32 %s15, %s27
    %s29 = ssub.s32 %s16, %s23
    %s30 = sor.u32 %s28, %s29
    %p31 = scmp.eq.s32.totalorder %s30, 0
    %s33 = sadd.s32 %s32, 1
    %s34 = scalar_select %p31, %s32, %s33
    %p37 = pneg %p31
    %p38 = scmp.eq.s32.totalorder %s8, 3
    %p39 = por %p37, %p38
    %p40 = scmp.ne.s32.totalorder %s32, %s35
    %p41 = scmp.eq.s32.totalorder %s8, 0
    %p42 = por %p40, %p41
    %p43 = scmp.ne.s32.totalorder %s32, %s35
    %p44 = scmp.eq.s32.totalorder %s13, 3
    %p45 = por %p43, %p44
    %p46 = scmp.ne.s32.totalorder %s35, %s36
    %p47 = scmp.eq.s32.totalorder %s13, 0
    %p48 = por %p46, %p47
    %p49 = scmp.ne.s32.totalorder %s35, %s36
    %p50 = scmp.eq.s32.totalorder %s14, 3
    %p51 = por %p49, %p50
    %p53 = scmp.ne.s32.totalorder %s36, %s52
    %p54 = scmp.eq.s32.totalorder %s14, 0
    %p55 = por %p53, %p54
    %s57 = sadd.s32 %s56, 1
    %p60 = scmp.eq.s32.totalorder %s8, 3
    %p61 = scmp.ne.s32.totalorder %s56, %s58
    %p62 = scmp.eq.s32.totalorder %s8, 0
    %p63 = por %p61, %p62
    %p64 = scmp.ne.s32.totalorder %s56, %s58
    %p65 = scmp.eq.s32.totalorder %s13, 3
    %p66 = por %p64, %p65
    %p67 = scmp.ne.s32.totalorder %s58, %s59
    %p68 = scmp.eq.s32.totalorder %s13, 0
    %p69 = por %p67, %p68
    %p70 = scmp.ne.s32.totalorder %s58, %s59
    %p71 = scmp.eq.s32.totalorder %s14, 3
    %p72 = por %p70, %p71
    %p74 = scmp.ne.s32.totalorder %s59, %s73
    %p75 = scmp.eq.s32.totalorder %s14, 0
    %p76 = por %p74, %p75
    %s77 = ssub.s32 %s15, %s27
    %s78 = ssub.s32 %s16, %s23
    %s79 = sor.u32 %s77, %s78
    %p80 = scmp.eq.s32.totalorder %s79, 0
    %s82 = sadd.s32 %s81, 1
    %s83 = scalar_select %p80, %s81, %s82
    %p86 = pneg %p80
    %p87 = scmp.eq.s32.totalorder %s8, 3
    %p88 = por %p86, %p87
    %p89 = scmp.ne.s32.totalorder %s81, %s84
    %p90 = scmp.eq.s32.totalorder %s8, 0
    %p91 = por %p89, %p90
    %p92 = scmp.ne.s32.totalorder %s81, %s84
    %p93 = scmp.eq.s32.totalorder %s13, 3
    %p94 = por %p92, %p93
    %p95 = scmp.ne.s32.totalorder %s84, %s85
    %p96 = scmp.eq.s32.totalorder %s13, 0
    %p97 = por %p95, %p96
    %p98 = scmp.ne.s32.totalorder %s84, %s85
    %p99 = scmp.eq.s32.totalorder %s14, 3
    %p100 = por %p98, %p99
    %p102 = scmp.ne.s32.totalorder %s85, %s101
    %p103 = scmp.eq.s32.totalorder %s14, 0
    %p104 = por %p102, %p103
    %p105 = scmp.le.s32.totalorder 1, %s8
    %p106 = scmp.lt.s32.totalorder %s8, 5
    %p107 = pnand %p105, %p106
    %p108 = pneg %p107
    // Predicated region
    $region9: #{double_conv.5} parent=5 // pred_check
      _
    $region10: #{double_conv.5} parent=5 // pred_check_branch
      %110 = sbr.rel (%p107) target = $region12
    $region11: #{double_conv.5} parent=5 // pred_region
      %s111 = ssub.s32 %s8, 1
      // Predicated region
      $region13: #{double_conv.5} parent=11 // pred_check
        %p112 = pneg %p69
      $region14: #{double_conv.5} parent=11 // pred_check_branch
        %114 = sbr.rel (%p112) target = $region16
      $region15: #{double_conv.5} parent=11 // pred_region
        _
      $region16: #{double_conv.5} parent=11 // pred_fallthru
        _
    $region12: #{double_conv.5} parent=5 // pred_fallthru
      _
    %p115 = scmp.lt.s32.totalorder %s8, 4
    // Predicated region
    $region17: #{double_conv.5} parent=5 // pred_check
      %p116 = pneg %p115
    $region18: #{double_conv.5} parent=5 // pred_check_branch
      %118 = sbr.rel (%p116) target = $region20
    $region19: #{double_conv.5} parent=5 // pred_region
      // Predicated region
      $region21: #{double_conv.5} parent=19 // pred_check
        %p119 = pneg %p42
      $region22: #{double_conv.5} parent=19 // pred_check_branch
        %121 = sbr.rel (%p119) target = $region24
      $region23: #{double_conv.5} parent=19 // pred_region
        %s122 = smul.u32 8, %s16
        %p123 = scmp.lt.s32.totalorder %s15, 1
        %s124 = scalar_select %p123, %s15, 1
        %p125 = scmp.lt.s32.totalorder %s122, 15
        %s126 = scalar_select %p125, %s122, 15
        %s127 = smul.addr %s126, 2
        %s128 = smul.addr %s124, 32
        %s129 = sadd.s32 %s127, %s128
        %s130 = smul.addr %s129, 4
        %s131 = scalar_lea.vmem %s0, %s130
        %s132 = smul.u32 8, %s16
      $region24: #{double_conv.5} parent=19 // pred_fallthru
        _
    $region20: #{double_conv.5} parent=5 // pred_fallthru
      _
    %p133 = scmp.le.s32.totalorder 1, %s8
    %p134 = scmp.lt.s32.totalorder %s8, 5
    %p135 = pnand %p133, %p134
    %p136 = pneg %p135
    // Predicated region
    $region25: #{double_conv.5} parent=5 // pred_check
      _
    $region26: #{double_conv.5} parent=5 // pred_check_branch
      %138 = sbr.rel (%p135) target = $region28
    $region27: #{double_conv.5} parent=5 // pred_region
      %s139 = ssub.s32 %s8, 1
      %s140 = smul.u32 8, %s18
      %p141 = scmp.lt.s32.totalorder %s17, 1
      %s142 = scalar_select %p141, %s17, 1
      %p143 = scmp.lt.s32.totalorder %s140, 15
      %s144 = scalar_select %p143, %s140, 15
      %s145 = smul.addr %s144, 2
      %s146 = smul.addr %s142, 32
      %s147 = sadd.s32 %s145, %s146
      %s148 = smul.addr %s147, 4
      %s149 = scalar_lea.vmem %s0, %s148
      %p150 = pneg %p48
      %p151 = pneg %p45
      %p152 = pneg %p69
      %p153 = pneg %p66
      %p154 = pneg %p97
      %p155 = pneg %p94
      %s156 = smul.u32 8, %s18
      %p157 = scmp.lt.s32.totalorder %s17, 1
      %s158 = scalar_select %p157, %s17, 1
      %p159 = scmp.lt.s32.totalorder %s156, 15
      %s160 = scalar_select %p159, %s156, 15
      %s161 = smul.addr %s160, 2
      %s162 = smul.addr %s158, 32
      %s163 = sadd.s32 %s161, %s162
      %s164 = smul.addr %s163, 8
      %s165 = scalar_lea.vmem %s2, %s164
      %s166 = smul.u32 8, %s18
      %p167 = scmp.lt.s32.totalorder %s17, 1
      %s168 = scalar_select %p167, %s17, 1
      %p169 = scmp.lt.s32.totalorder %s166, 15
      %s170 = scalar_select %p169, %s166, 15
      %s171 = smul.addr %s170, 2
      %s172 = smul.addr %s168, 32
      %s173 = sadd.s32 %s171, %s172
      %s174 = smul.addr %s173, 4
      %s175 = scalar_lea.vmem %s0, %s174
      %s176 = smul.u32 8, %s18
      %s177 = smul.u32 8, %s18
      %p178 = scmp.lt.s32.totalorder %s17, 1
      %s179 = scalar_select %p178, %s17, 1
      %p180 = scmp.lt.s32.totalorder %s177, 15
      %s181 = scalar_select %p180, %s177, 15
      %s182 = smul.addr %s181, 2
      %s183 = smul.addr %s179, 32
      %s184 = sadd.s32 %s182, %s183
      %s185 = smul.addr %s184, 8
      %s186 = scalar_lea.vmem %s2, %s185
      %s187 = smul.u32 8, %s18
      %v188 = vld [vmem:[%s175] sm:$0xf]
      %v189 = vld [vmem:[%s175 + $0x4] sm:$0xf]
      %v190 = vld [vmem:[%s175 + $0x8] sm:$0xf]
      %v191 = vld [vmem:[%s175 + $0xc] sm:$0xf]
      %v192 = vld [vmem:[%s175 + $0x10] sm:$0xf]
      %v193 = vld [vmem:[%s175 + $0x14] sm:$0xf]
      %v194 = vld [vmem:[%s175 + $0x18] sm:$0xf]
      %v195 = vld [vmem:[%s175 + $0x1c] sm:$0xf]
      %v196 = vld [vmem:[%s175 + $0x20] sm:$0xf]
      %v197 = vld [vmem:[%s175 + $0x24] sm:$0xf]
      %v198 = vld [vmem:[%s175 + $0x28] sm:$0xf]
      %v199 = vld [vmem:[%s175 + $0x2c] sm:$0xf]
      %v200 = vld [vmem:[%s175 + $0x30] sm:$0xf]
      %v201 = vld [vmem:[%s175 + $0x34] sm:$0xf]
      %v202 = vld [vmem:[%s175 + $0x38] sm:$0xf]
      %v203 = vld [vmem:[%s175 + $0x3c] sm:$0xf]
      %v204 = vunpack.c.l.bf16 %v188
      %v205 = vunpack.c.l.bf16 %v189
      %v206 = vunpack.c.l.bf16 %v190
      %v207 = vunpack.c.l.bf16 %v191
      %v208 = vunpack.c.l.bf16 %v192
      %v209 = vunpack.c.l.bf16 %v193
      %v210 = vunpack.c.l.bf16 %v194
      %v211 = vunpack.c.l.bf16 %v195
      %v212 = vunpack.c.l.bf16 %v196
      %v213 = vunpack.c.l.bf16 %v197
      %v214 = vunpack.c.l.bf16 %v198
      %v215 = vunpack.c.l.bf16 %v199
      %v216 = vunpack.c.l.bf16 %v200
      %v217 = vunpack.c.l.bf16 %v201
      %v218 = vunpack.c.l.bf16 %v202
      %v219 = vunpack.c.l.bf16 %v203
      %v220 = vld [vmem:[%s1] sm:$0x3]
      %v221 = vlaneseq
      %v222 = vshrl.u32 %v221, 7
      %v223 = vsub.s32 0, %v222
      %v224 = vrot.slane %v220, %v223
      %v225 = vmul.f32 %v204, %v224
      %v226 = vmul.f32 %v205, %v224
      %v227 = vmul.f32 %v206, %v224
      %v228 = vmul.f32 %v207, %v224
      %v229 = vmul.f32 %v208, %v224
      %v230 = vmul.f32 %v209, %v224
      %v231 = vmul.f32 %v210, %v224
      %v232 = vmul.f32 %v211, %v224
      %v233 = vmul.f32 %v212, %v224
      %v234 = vmul.f32 %v213, %v224
      %v235 = vmul.f32 %v214, %v224
      %v236 = vmul.f32 %v215, %v224
      %v237 = vmul.f32 %v216, %v224
      %v238 = vmul.f32 %v217, %v224
      %v239 = vmul.f32 %v218, %v224
      %v240 = vmul.f32 %v219, %v224
      %v241 = vlaneseq
      %v242 = vshrl.u32 %v241, 7
      %v243 = vsub.s32 1, %v242
      %v244 = vrot.slane %v220, %v243
      %v245 = vadd.f32 %v225, %v244
      %v246 = vadd.f32 %v226, %v244
      %v247 = vadd.f32 %v227, %v244
      %v248 = vadd.f32 %v228, %v244
      %v249 = vadd.f32 %v229, %v244
      %v250 = vadd.f32 %v230, %v244
      %v251 = vadd.f32 %v231, %v244
      %v252 = vadd.f32 %v232, %v244
      %v253 = vadd.f32 %v233, %v244
      %v254 = vadd.f32 %v234, %v244
      %v255 = vadd.f32 %v235, %v244
      %v256 = vadd.f32 %v236, %v244
      %v257 = vadd.f32 %v237, %v244
      %v258 = vadd.f32 %v238, %v244
      %v259 = vadd.f32 %v239, %v244
      %v260 = vadd.f32 %v240, %v244
      %v261 = vmax.f32 %v245, 0.0
      %v262 = vmax.f32 %v246, 0.0
      %v263 = vmax.f32 %v247, 0.0
      %v264 = vmax.f32 %v248, 0.0
      %v265 = vmax.f32 %v249, 0.0
      %v266 = vmax.f32 %v250, 0.0
      %v267 = vmax.f32 %v251, 0.0
      %v268 = vmax.f32 %v252, 0.0
      %v269 = vmax.f32 %v253, 0.0
      %v270 = vmax.f32 %v254, 0.0
      %v271 = vmax.f32 %v255, 0.0
      %v272 = vmax.f32 %v256, 0.0
      %v273 = vmax.f32 %v257, 0.0
      %v274 = vmax.f32 %v258, 0.0
      %v275 = vmax.f32 %v259, 0.0
      %v276 = vmax.f32 %v260, 0.0
      %vm277 = vcmask 64512
      %278 = vst.msk [vmem:[%s186] sm:$0xff] %vm277, %v261
      %279 = vst.msk [vmem:[%s186 + $0x8] sm:$0xff] %vm277, %v262
      %280 = vst.msk [vmem:[%s186 + $0x10] sm:$0xff] %vm277, %v263
      %281 = vst.msk [vmem:[%s186 + $0x18] sm:$0xff] %vm277, %v264
      %282 = vst.msk [vmem:[%s186 + $0x20] sm:$0xff] %vm277, %v265
      %283 = vst.msk [vmem:[%s186 + $0x28] sm:$0xff] %vm277, %v266
      %284 = vst.msk [vmem:[%s186 + $0x30] sm:$0xff] %vm277, %v267
      %285 = vst.msk [vmem:[%s186 + $0x38] sm:$0xff] %vm277, %v268
      %286 = vst.msk [vmem:[%s186 + $0x40] sm:$0xff] %vm277, %v269
      %287 = vst.msk [vmem:[%s186 + $0x48] sm:$0xff] %vm277, %v270
      %288 = vst.msk [vmem:[%s186 + $0x50] sm:$0xff] %vm277, %v271
      %289 = vst.msk [vmem:[%s186 + $0x58] sm:$0xff] %vm277, %v272
      %290 = vst.msk [vmem:[%s186 + $0x60] sm:$0xff] %vm277, %v273
      %291 = vst.msk [vmem:[%s186 + $0x68] sm:$0xff] %vm277, %v274
      %292 = vst.msk [vmem:[%s186 + $0x70] sm:$0xff] %vm277, %v275
      %293 = vst.msk [vmem:[%s186 + $0x78] sm:$0xff] %vm277, %v276
      %s294 = smul.u32 8, %s18
      %p295 = scmp.lt.s32.totalorder %s17, 1
      %s296 = scalar_select %p295, %s17, 1
      %p297 = scmp.lt.s32.totalorder %s294, 15
      %s298 = scalar_select %p297, %s294, 15
      %s299 = smul.addr %s298, 2
      %s300 = smul.addr %s296, 32
      %s301 = sadd.s32 %s299, %s300
      %s302 = smul.addr %s301, 8
      %s303 = scalar_lea.vmem %s2, %s302
      // Predicated region
      $region29: #{double_conv.5} parent=27 // pred_check
        %p304 = pneg %p94
      $region30: #{double_conv.5} parent=27 // pred_check_branch
        %306 = sbr.rel (%p304) target = $region32
      $region31: #{double_conv.5} parent=27 // pred_region
        %s307 = smul.u32 8, %s18
      $region32: #{double_conv.5} parent=27 // pred_fallthru
        _
    $region28: #{double_conv.5} parent=5 // pred_fallthru
      _
    %p308 = scmp.le.s32.totalorder 2, %s8
    // Predicated region
    $region33: #{double_conv.5} parent=5 // pred_check
      %p309 = pneg %p308
    $region34: #{double_conv.5} parent=5 // pred_check_branch
      %311 = sbr.rel (%p309) target = $region36
    $region35: #{double_conv.5} parent=5 // pred_region
      %s312 = ssub.s32 %s8, 2
      // Predicated region
      $region37: #{double_conv.5} parent=35 // pred_check
        %p313 = pneg %p100
      $region38: #{double_conv.5} parent=35 // pred_check_branch
        %315 = sbr.rel (%p313) target = $region40
      $region39: #{double_conv.5} parent=35 // pred_region
        %s316 = smul.u32 8, %s20
        %p317 = scmp.lt.s32.totalorder %s19, 1
        %s318 = scalar_select %p317, %s19, 1
        %p319 = scmp.lt.s32.totalorder %s316, 15
        %s320 = scalar_select %p319, %s316, 15
        %s321 = smul.addr %s320, 2
        %s322 = smul.addr %s318, 32
        %s323 = sadd.s32 %s321, %s322
        %s324 = smul.addr %s323, 8
        %s325 = scalar_lea.vmem %s2, %s324
      $region40: #{double_conv.5} parent=35 // pred_fallthru
        _
    $region36: #{double_conv.5} parent=5 // pred_fallthru
      _
  $region6: #{double_conv.5} parent=0 // loop_footer
    %s12 = sadd.s32 1, %s8
  $region7: #{double_conv.5} parent=0 // loop_footer_branch
    %7 = sbr.rel target = $region3
  $region8: #{double_conv.5} parent=0 // loop_exit
    _

// kernel: double_conv.3
$region0: #{double_conv.3}
  #allocation0 [shape = 'u32[]', space=smem, size = 0x4, offset = 0x4, fixed_abs, tag = 'smem constant byte address 0x4 - core index']
  #allocation1 [shape = 'u32[144,128]{1,0:T(1,128)}', space=vmem, size = 0x12000, scoped, tag = 'internal scratch']
  #allocation2 [shape = 'bf16[10,18,4]{2,1,0:T(8,128)(2,1)}', space=vmem, size = 0xf000, scoped, tag = 'scratch operand']
  %s0 = inlined_call_operand.vmem [shape: bf16[2,16,16,4], index: 0, kind: input, shape index: {}, may-alias: {0,1,2}]
  %s1 = inlined_call_operand.vmem [shape: bf16[2,16,16,4], index: 1, kind: input, shape index: {}, may-alias: {0,1,2}]
  %s2 = inlined_call_operand.vmem [shape: bf16[2,16,16,4], index: 2, kind: input, shape index: {}, may-alias: {0,1,2}]
  %s3 = inlined_call_operand.vmem [shape: f32[2,4], index: 3, kind: input, shape index: {}]
  %s4 = inlined_call_operand.vmem [shape: bf16[9,4,128], index: 4, kind: input, shape index: {}]
  %s5 = inlined_call_operand.vmem [shape: bf16[2,16,16,128], index: 5, kind: output, shape index: {0}]
  %s6 = inlined_call_operand.vmem [shape: f32[2,2,2,128], index: 6, kind: output, shape index: {1}]
  %7 = xla_tuple %s5, %s6
  %s8 = sld [smem:[#allocation0]]
  $region61: #{double_conv.3} parent=0
    _
  %s10 = ssub.s32 1, %s8
  %s11 = scalar_select 0, %s10, %s8
  loop: start=0, step=1, limit=6
  $region2: #{double_conv.3} parent=0 // loop_pre_header
    _
  $region3: #{double_conv.3} parent=0 // loop_header
    %s13 = sphi 0, %s17
    %p14 = scmp.ge.s32.totalorder %s13, 6
    %s20 = sphi 0, %s32
    %s21 = sphi 0, %s28
    %s22 = sphi 0, %s20
    %s23 = sphi 0, %s21
    %s24 = sphi 0, %s22
    %s25 = sphi 0, %s23
    %s37 = sphi 0, %s39
    %s40 = sphi 0, %s37
    %s41 = sphi 0, %s40
    %s57 = sphi 0, %s41
    %s73 = sphi 0, %s75
    %s76 = sphi 0, %s73
    %s77 = sphi 0, %s76
    %s93 = sphi 0, %s77
    %s109 = sphi 0, %s111
    %s112 = sphi 0, %s109
    %s113 = sphi 0, %s112
    %s129 = sphi 0, %s113
    %s133 = sphi 0, %s133
    %s135 = sphi 0, %s133
    %s136 = sphi 0, %s135
    %s150 = sphi 0, %s136
    %s154 = sphi 0, %s154
    %s156 = sphi 0, %s154
    %s157 = sphi 0, %s156
    %s171 = sphi 0, %s157
    %s179 = sphi 0, %s181
    %s182 = sphi 0, %s179
    %s183 = sphi 0, %s182
    %s199 = sphi 0, %s183
    %s207 = sphi 0, %s209
    %s210 = sphi 0, %s207
    %s211 = sphi 0, %s210
    %s227 = sphi 0, %s211
  $region4: #{double_conv.3} parent=0 // loop_header_branch
    %16 = sbr.rel (%p14) target = $region8
  $region5: #{double_conv.3} parent=0 // loop_body
    %s18 = ssub.s32 %s13, 1
    %s19 = ssub.s32 %s13, 2
    %s26 = sadd.s32 1, %s21
    %p27 = scmp.ge.s32.totalorder %s26, 2
    %s28 = scalar_select %p27, 0, %s26
    %s29 = sadd.s32 1, %s20
    %s30 = scalar_select %p27, %s29, %s20
    %p31 = scmp.ge.s32.totalorder %s30, 2
    %s32 = scalar_select %p31, 0, %s30
    %s33 = ssub.s32 %s20, %s32
    %s34 = ssub.s32 %s21, %s28
    %s35 = sor.u32 %s33, %s34
    %p36 = scmp.eq.s32.totalorder %s35, 0
    %s38 = sadd.s32 %s37, 1
    %s39 = scalar_select %p36, %s37, %s38
    %p42 = pneg %p36
    %p43 = scmp.eq.s32.totalorder %s13, 3
    %p44 = por %p42, %p43
    %p45 = scmp.ne.s32.totalorder %s37, %s40
    %p46 = scmp.eq.s32.totalorder %s13, 0
    %p47 = por %p45, %p46
    %p48 = scmp.ne.s32.totalorder %s37, %s40
    %p49 = scmp.eq.s32.totalorder %s18, 3
    %p50 = por %p48, %p49
    %p51 = scmp.ne.s32.totalorder %s40, %s41
    %p52 = scmp.eq.s32.totalorder %s18, 0
    %p53 = por %p51, %p52
    %p54 = scmp.ne.s32.totalorder %s40, %s41
    %p55 = scmp.eq.s32.totalorder %s19, 3
    %p56 = por %p54, %p55
    %p58 = scmp.ne.s32.totalorder %s41, %s57
    %p59 = scmp.eq.s32.totalorder %s19, 0
    %p60 = por %p58, %p59
    %s61 = smul.u32 %s21, 8
    %s62 = ssub.s32 %s61, 1
    %p63 = scmp.gt.s32.totalorder %s62, 0
    %s64 = scalar_select %p63, %s62, 0
    %s65 = smul.u32 %s28, 8
    %s66 = ssub.s32 %s65, 1
    %p67 = scmp.gt.s32.totalorder %s66, 0
    %s68 = scalar_select %p67, %s66, 0
    %s69 = ssub.s32 %s20, %s32
    %s70 = ssub.s32 %s64, %s68
    %s71 = sor.u32 %s69, %s70
    %p72 = scmp.eq.s32.totalorder %s71, 0
    %s74 = sadd.s32 %s73, 1
    %s75 = scalar_select %p72, %s73, %s74
    %p78 = pneg %p72
    %p79 = scmp.eq.s32.totalorder %s13, 3
    %p80 = por %p78, %p79
    %p81 = scmp.ne.s32.totalorder %s73, %s76
    %p82 = scmp.eq.s32.totalorder %s13, 0
    %p83 = por %p81, %p82
    %p84 = scmp.ne.s32.totalorder %s73, %s76
    %p85 = scmp.eq.s32.totalorder %s18, 3
    %p86 = por %p84, %p85
    %p87 = scmp.ne.s32.totalorder %s76, %s77
    %p88 = scmp.eq.s32.totalorder %s18, 0
    %p89 = por %p87, %p88
    %p90 = scmp.ne.s32.totalorder %s76, %s77
    %p91 = scmp.eq.s32.totalorder %s19, 3
    %p92 = por %p90, %p91
    %p94 = scmp.ne.s32.totalorder %s77, %s93
    %p95 = scmp.eq.s32.totalorder %s19, 0
    %p96 = por %p94, %p95
    %s97 = smul.u32 %s21, 8
    %s98 = sadd.s32 %s97, 8
    %p99 = scmp.lt.s32.totalorder %s98, 15
    %s100 = scalar_select %p99, %s98, 15
    %s101 = smul.u32 %s28, 8
    %s102 = sadd.s32 %s101, 8
    %p103 = scmp.lt.s32.totalorder %s102, 15
    %s104 = scalar_select %p103, %s102, 15
    %s105 = ssub.s32 %s20, %s32
    %s106 = ssub.s32 %s100, %s104
    %s107 = sor.u32 %s105, %s106
    %p108 = scmp.eq.s32.totalorder %s107, 0
    %s110 = sadd.s32 %s109, 1
    %s111 = scalar_select %p108, %s109, %s110
    %p114 = pneg %p108
    %p115 = scmp.eq.s32.totalorder %s13, 3
    %p116 = por %p114, %p115
    %p117 = scmp.ne.s32.totalorder %s109, %s112
    %p118 = scmp.eq.s32.totalorder %s13, 0
    %p119 = por %p117, %p118
    %p120 = scmp.ne.s32.totalorder %s109, %s112
    %p121 = scmp.eq.s32.totalorder %s18, 3
    %p122 = por %p120, %p121
    %p123 = scmp.ne.s32.totalorder %s112, %s113
    %p124 = scmp.eq.s32.totalorder %s18, 0
    %p125 = por %p123, %p124
    %p126 = scmp.ne.s32.totalorder %s112, %s113
    %p127 = scmp.eq.s32.totalorder %s19, 3
    %p128 = por %p126, %p127
    %p130 = scmp.ne.s32.totalorder %s113, %s129
    %p131 = scmp.eq.s32.totalorder %s19, 0
    %p132 = por %p130, %p131
    %s134 = sadd.s32 %s133, 1
    %p137 = scmp.eq.s32.totalorder %s13, 3
    %p138 = scmp.ne.s32.totalorder %s133, %s135
    %p139 = scmp.eq.s32.totalorder %s13, 0
    %p140 = por %p138, %p139
    %p141 = scmp.ne.s32.totalorder %s133, %s135
    %p142 = scmp.eq.s32.totalorder %s18, 3
    %p143 = por %p141, %p142
    %p144 = scmp.ne.s32.totalorder %s135, %s136
    %p145 = scmp.eq.s32.totalorder %s18, 0
    %p146 = por %p144, %p145
    %p147 = scmp.ne.s32.totalorder %s135, %s136
    %p148 = scmp.eq.s32.totalorder %s19, 3
    %p149 = por %p147, %p148
    %p151 = scmp.ne.s32.totalorder %s136, %s150
    %p152 = scmp.eq.s32.totalorder %s19, 0
    %p153 = por %p151, %p152
    %s155 = sadd.s32 %s154, 1
    %p158 = scmp.eq.s32.totalorder %s13, 3
    %p159 = scmp.ne.s32.totalorder %s154, %s156
    %p160 = scmp.eq.s32.totalorder %s13, 0
    %p161 = por %p159, %p160
    %p162 = scmp.ne.s32.totalorder %s154, %s156
    %p163 = scmp.eq.s32.totalorder %s18, 3
    %p164 = por %p162, %p163
    %p165 = scmp.ne.s32.totalorder %s156, %s157
    %p166 = scmp.eq.s32.totalorder %s18, 0
    %p167 = por %p165, %p166
    %p168 = scmp.ne.s32.totalorder %s156, %s157
    %p169 = scmp.eq.s32.totalorder %s19, 3
    %p170 = por %p168, %p169
    %p172 = scmp.ne.s32.totalorder %s157, %s171
    %p173 = scmp.eq.s32.totalorder %s19, 0
    %p174 = por %p172, %p173
    %s175 = ssub.s32 %s20, %s32
    %s176 = ssub.s32 %s21, %s28
    %s177 = sor.u32 %s175, %s176
    %p178 = scmp.eq.s32.totalorder %s177, 0
    %s180 = sadd.s32 %s179, 1
    %s181 = scalar_select %p178, %s179, %s180
    %p184 = pneg %p178
    %p185 = scmp.eq.s32.totalorder %s13, 3
    %p186 = por %p184, %p185
    %p187 = scmp.ne.s32.totalorder %s179, %s182
    %p188 = scmp.eq.s32.totalorder %s13, 0
    %p189 = por %p187, %p188
    %p190 = scmp.ne.s32.totalorder %s179, %s182
    %p191 = scmp.eq.s32.totalorder %s18, 3
    %p192 = por %p190, %p191
    %p193 = scmp.ne.s32.totalorder %s182, %s183
    %p194 = scmp.eq.s32.totalorder %s18, 0
    %p195 = por %p193, %p194
    %p196 = scmp.ne.s32.totalorder %s182, %s183
    %p197 = scmp.eq.s32.totalorder %s19, 3
    %p198 = por %p196, %p197
    %p200 = scmp.ne.s32.totalorder %s183, %s199
    %p201 = scmp.eq.s32.totalorder %s19, 0
    %p202 = por %p200, %p201
    %s203 = ssub.s32 %s20, %s32
    %s204 = ssub.s32 %s21, %s28
    %s205 = sor.u32 %s203, %s204
    %p206 = scmp.eq.s32.totalorder %s205, 0
    %s208 = sadd.s32 %s207, 1
    %s209 = scalar_select %p206, %s207, %s208
    %p212 = pneg %p206
    %p213 = scmp.eq.s32.totalorder %s13, 3
    %p214 = por %p212, %p213
    %p215 = scmp.ne.s32.totalorder %s207, %s210
    %p216 = scmp.eq.s32.totalorder %s13, 0
    %p217 = por %p215, %p216
    %p218 = scmp.ne.s32.totalorder %s207, %s210
    %p219 = scmp.eq.s32.totalorder %s18, 3
    %p220 = por %p218, %p219
    %p221 = scmp.ne.s32.totalorder %s210, %s211
    %p222 = scmp.eq.s32.totalorder %s18, 0
    %p223 = por %p221, %p222
    %p224 = scmp.ne.s32.totalorder %s210, %s211
    %p225 = scmp.eq.s32.totalorder %s19, 3
    %p226 = por %p224, %p225
    %p228 = scmp.ne.s32.totalorder %s211, %s227
    %p229 = scmp.eq.s32.totalorder %s19, 0
    %p230 = por %p228, %p229
    %p231 = scmp.le.s32.totalorder 1, %s13
    %p232 = scmp.lt.s32.totalorder %s13, 5
    %p233 = pnand %p231, %p232
    %p234 = pneg %p233
    // Predicated region
    $region9: #{double_conv.3} parent=5 // pred_check
      _
    $region10: #{double_conv.3} parent=5 // pred_check_branch
      %236 = sbr.rel (%p233) target = $region12
    $region11: #{double_conv.3} parent=5 // pred_region
      %s237 = ssub.s32 %s13, 1
      // Predicated region
      $region13: #{double_conv.3} parent=11 // pred_check
        %p238 = pneg %p146
      $region14: #{double_conv.3} parent=11 // pred_check_branch
        %240 = sbr.rel (%p238) target = $region16
      $region15: #{double_conv.3} parent=11 // pred_region
        _
      $region16: #{double_conv.3} parent=11 // pred_fallthru
        _
      // Predicated region
      $region17: #{double_conv.3} parent=11 // pred_check
        %p241 = pneg %p167
      $region18: #{double_conv.3} parent=11 // pred_check_branch
        %243 = sbr.rel (%p241) target = $region20
      $region19: #{double_conv.3} parent=11 // pred_region
        _
      $region20: #{double_conv.3} parent=11 // pred_fallthru
        _
    $region12: #{double_conv.3} parent=5 // pred_fallthru
      _
    %p244 = scmp.lt.s32.totalorder %s13, 4
    // Predicated region
    $region21: #{double_conv.3} parent=5 // pred_check
      %p245 = pneg %p244
    $region22: #{double_conv.3} parent=5 // pred_check_branch
      %247 = sbr.rel (%p245) target = $region24
    $region23: #{double_conv.3} parent=5 // pred_region
      // Predicated region
      $region25: #{double_conv.3} parent=23 // pred_check
        %p248 = pneg %p47
      $region26: #{double_conv.3} parent=23 // pred_check_branch
        %250 = sbr.rel (%p248) target = $region28
      $region27: #{double_conv.3} parent=23 // pred_region
        %s251 = smul.u32 8, %s21
        %p252 = scmp.lt.s32.totalorder %s20, 1
        %s253 = scalar_select %p252, %s20, 1
        %p254 = scmp.lt.s32.totalorder %s251, 15
        %s255 = scalar_select %p254, %s251, 15
        %s256 = smul.addr %s255, 2
        %s257 = smul.addr %s253, 32
        %s258 = sadd.s32 %s256, %s257
        %s259 = smul.addr %s258, 4
        %s260 = scalar_lea.vmem %s0, %s259
        %s261 = smul.u32 8, %s21
      $region28: #{double_conv.3} parent=23 // pred_fallthru
        _
      // Predicated region
      $region29: #{double_conv.3} parent=23 // pred_check
        %p262 = pneg %p83
      $region30: #{double_conv.3} parent=23 // pred_check_branch
        %264 = sbr.rel (%p262) target = $region32
      $region31: #{double_conv.3} parent=23 // pred_region
        %s265 = smul.u32 %s21, 8
        %s266 = ssub.s32 %s265, 1
        %p267 = scmp.gt.s32.totalorder %s266, 0
        %s268 = scalar_select %p267, %s266, 0
        %p269 = scmp.lt.s32.totalorder %s20, 1
        %s270 = scalar_select %p269, %s20, 1
        %p271 = scmp.lt.s32.totalorder %s268, 15
        %s272 = scalar_select %p271, %s268, 15
        %s273 = smul.addr %s272, 2
        %s274 = smul.addr %s270, 32
        %s275 = sadd.s32 %s273, %s274
        %s276 = smul.addr %s275, 4
        %s277 = scalar_lea.vmem %s1, %s276
        %s278 = smul.u32 %s21, 8
        %s279 = ssub.s32 %s278, 1
        %p280 = scmp.gt.s32.totalorder %s279, 0
        %s281 = scalar_select %p280, %s279, 0
      $region32: #{double_conv.3} parent=23 // pred_fallthru
        _
      // Predicated region
      $region33: #{double_conv.3} parent=23 // pred_check
        %p282 = pneg %p119
      $region34: #{double_conv.3} parent=23 // pred_check_branch
        %284 = sbr.rel (%p282) target = $region36
      $region35: #{double_conv.3} parent=23 // pred_region
        %s285 = smul.u32 %s21, 8
        %s286 = sadd.s32 %s285, 8
        %p287 = scmp.lt.s32.totalorder %s286, 15
        %s288 = scalar_select %p287, %s286, 15
        %p289 = scmp.lt.s32.totalorder %s20, 1
        %s290 = scalar_select %p289, %s20, 1
        %p291 = scmp.lt.s32.totalorder %s288, 15
        %s292 = scalar_select %p291, %s288, 15
        %s293 = smul.addr %s292, 2
        %s294 = smul.addr %s290, 32
        %s295 = sadd.s32 %s293, %s294
        %s296 = smul.addr %s295, 4
        %s297 = scalar_lea.vmem %s2, %s296
        %s298 = smul.u32 %s21, 8
        %s299 = sadd.s32 %s298, 8
        %p300 = scmp.lt.s32.totalorder %s299, 15
        %s301 = scalar_select %p300, %s299, 15
      $region36: #{double_conv.3} parent=23 // pred_fallthru
        _
    $region24: #{double_conv.3} parent=5 // pred_fallthru
      _
    %p302 = scmp.le.s32.totalorder 1, %s13
    %p303 = scmp.lt.s32.totalorder %s13, 5
    %p304 = pnand %p302, %p303
    %p305 = pneg %p304
    // Predicated region
    $region37: #{double_conv.3} parent=5 // pred_check
      _
    $region38: #{double_conv.3} parent=5 // pred_check_branch
      %307 = sbr.rel (%p304) target = $region40
    $region39: #{double_conv.3} parent=5 // pred_region
      %s308 = ssub.s32 %s13, 1
      %s309 = smul.u32 8, %s23
      %p310 = scmp.lt.s32.totalorder %s22, 1
      %s311 = scalar_select %p310, %s22, 1
      %p312 = scmp.lt.s32.totalorder %s309, 15
      %s313 = scalar_select %p312, %s309, 15
      %s314 = smul.addr %s313, 2
      %s315 = smul.addr %s311, 32
      %s316 = sadd.s32 %s314, %s315
      %s317 = smul.addr %s316, 4
      %s318 = scalar_lea.vmem %s0, %s317
      %p319 = pneg %p53
      %p320 = pneg %p50
      %s321 = smul.u32 %s23, 8
      %s322 = ssub.s32 %s321, 1
      %p323 = scmp.gt.s32.totalorder %s322, 0
      %s324 = scalar_select %p323, %s322, 0
      %p325 = scmp.lt.s32.totalorder %s22, 1
      %s326 = scalar_select %p325, %s22, 1
      %p327 = scmp.lt.s32.totalorder %s324, 15
      %s328 = scalar_select %p327, %s324, 15
      %s329 = smul.addr %s328, 2
      %s330 = smul.addr %s326, 32
      %s331 = sadd.s32 %s329, %s330
      %s332 = smul.addr %s331, 4
      %s333 = scalar_lea.vmem %s1, %s332
      %p334 = pneg %p89
      %p335 = pneg %p86
      %s336 = smul.u32 %s23, 8
      %s337 = sadd.s32 %s336, 8
      %p338 = scmp.lt.s32.totalorder %s337, 15
      %s339 = scalar_select %p338, %s337, 15
      %p340 = scmp.lt.s32.totalorder %s22, 1
      %s341 = scalar_select %p340, %s22, 1
      %p342 = scmp.lt.s32.totalorder %s339, 15
      %s343 = scalar_select %p342, %s339, 15
      %s344 = smul.addr %s343, 2
      %s345 = smul.addr %s341, 32
      %s346 = sadd.s32 %s344, %s345
      %s347 = smul.addr %s346, 4
      %s348 = scalar_lea.vmem %s2, %s347
      %p349 = pneg %p125
      %p350 = pneg %p122
      %p351 = pneg %p146
      %p352 = pneg %p143
      %p353 = pneg %p167
      %p354 = pneg %p164
      %p355 = pneg %p195
      %p356 = pneg %p192
      %s357 = smul.u32 8, %s23
      %p358 = scmp.lt.s32.totalorder %s22, 1
      %s359 = scalar_select %p358, %s22, 1
      %p360 = scmp.lt.s32.totalorder %s357, 15
      %s361 = scalar_select %p360, %s357, 15
      %s362 = smul.addr %s361, 2
      %s363 = smul.addr %s359, 32
      %s364 = sadd.s32 %s362, %s363
      %s365 = smul.addr %s364, 4
      %s366 = scalar_lea.vmem %s5, %s365
      %p367 = pneg %p223
      %p368 = pneg %p220
      %p369 = scmp.lt.s32.totalorder %s22, 1
      %s370 = scalar_select %p369, %s22, 1
      %p371 = scmp.lt.s32.totalorder %s23, 1
      %s372 = scalar_select %p371, %s23, 1
      %s373 = smul.addr %s370, 2
      %s374 = sadd.s32 %s372, %s373
      %s375 = smul.addr %s374, 2
      %s376 = scalar_lea.vmem %s6, %s375
      %s377 = smul.u32 8, %s23
      %p378 = scmp.lt.s32.totalorder %s22, 1
      %s379 = scalar_select %p378, %s22, 1
      %p380 = scmp.lt.s32.totalorder %s377, 15
      %s381 = scalar_select %p380, %s377, 15
      %s382 = smul.addr %s381, 2
      %s383 = smul.addr %s379, 32
      %s384 = sadd.s32 %s382, %s383
      %s385 = smul.addr %s384, 4
      %s386 = scalar_lea.vmem %s0, %s385
      %s387 = smul.u32 8, %s23
      %s388 = smul.u32 %s23, 8
      %s389 = ssub.s32 %s388, 1
      %p390 = scmp.gt.s32.totalorder %s389, 0
      %s391 = scalar_select %p390, %s389, 0
      %p392 = scmp.lt.s32.totalorder %s22, 1
      %s393 = scalar_select %p392, %s22, 1
      %p394 = scmp.lt.s32.totalorder %s391, 15
      %s395 = scalar_select %p394, %s391, 15
      %s396 = smul.addr %s395, 2
      %s397 = smul.addr %s393, 32
      %s398 = sadd.s32 %s396, %s397
      %s399 = smul.addr %s398, 4
      %s400 = scalar_lea.vmem %s1, %s399
      %s401 = smul.u32 %s23, 8
      %s402 = ssub.s32 %s401, 1
      %p403 = scmp.gt.s32.totalorder %s402, 0
      %s404 = scalar_select %p403, %s402, 0
      %s405 = smul.u32 %s23, 8
      %s406 = sadd.s32 %s405, 8
      %p407 = scmp.lt.s32.totalorder %s406, 15
      %s408 = scalar_select %p407, %s406, 15
      %p409 = scmp.lt.s32.totalorder %s22, 1
      %s410 = scalar_select %p409, %s22, 1
      %p411 = scmp.lt.s32.totalorder %s408, 15
      %s412 = scalar_select %p411, %s408, 15
      %s413 = smul.addr %s412, 2
      %s414 = smul.addr %s410, 32
      %s415 = sadd.s32 %s413, %s414
      %s416 = smul.addr %s415, 4
      %s417 = scalar_lea.vmem %s2, %s416
      %s418 = smul.u32 %s23, 8
      %s419 = sadd.s32 %s418, 8
      %p420 = scmp.lt.s32.totalorder %s419, 15
      %s421 = scalar_select %p420, %s419, 15
      %s422 = smul.u32 8, %s23
      %p423 = scmp.lt.s32.totalorder %s22, 1
      %s424 = scalar_select %p423, %s22, 1
      %p425 = scmp.lt.s32.totalorder %s422, 15
      %s426 = scalar_select %p425, %s422, 15
      %s427 = smul.addr %s426, 2
      %s428 = smul.addr %s424, 32
      %s429 = sadd.s32 %s427, %s428
      %s430 = smul.addr %s429, 4
      %s431 = scalar_lea.vmem %s5, %s430
      %s432 = smul.u32 8, %s23
      %p433 = scmp.lt.s32.totalorder %s22, 1
      %s434 = scalar_select %p433, %s22, 1
      %p435 = scmp.lt.s32.totalorder %s23, 1
      %s436 = scalar_select %p435, %s23, 1
      %s437 = smul.addr %s434, 2
      %s438 = sadd.s32 %s436, %s437
      %s439 = smul.addr %s438, 2
      %s440 = scalar_lea.vmem %s6, %s439
      %v442 = vld [vmem:[%s386] sm:$0xf]
      %v443 = vld [vmem:[%s386 + $0x4] sm:$0xf]
      %v444 = vld [vmem:[%s386 + $0x8] sm:$0xf]
      %v445 = vld [vmem:[%s386 + $0xc] sm:$0xf]
      %v446 = vld [vmem:[%s386 + $0x10] sm:$0xf]
      %v447 = vld [vmem:[%s386 + $0x14] sm:$0xf]
      %v448 = vld [vmem:[%s386 + $0x18] sm:$0xf]
      %v449 = vld [vmem:[%s386 + $0x1c] sm:$0xf]
      %v450 = vld [vmem:[%s386 + $0x20] sm:$0xf]
      %v451 = vld [vmem:[%s386 + $0x24] sm:$0xf]
      %v452 = vld [vmem:[%s386 + $0x28] sm:$0xf]
      %v453 = vld [vmem:[%s386 + $0x2c] sm:$0xf]
      %v454 = vld [vmem:[%s386 + $0x30] sm:$0xf]
      %v455 = vld [vmem:[%s386 + $0x34] sm:$0xf]
      %v456 = vld [vmem:[%s386 + $0x38] sm:$0xf]
      %v457 = vld [vmem:[%s386 + $0x3c] sm:$0xf]
      %v458 = vld [vmem:[%s400] sm:$0xf]
      %v459 = vld [vmem:[%s400 + $0x4] sm:$0xf]
      %v460 = vld [vmem:[%s417] sm:$0xf]
      %v461 = vld [vmem:[%s417 + $0x4] sm:$0xf]
      %p462 = scmp.gt.s32.totalorder %s23, 0
      %s463 = scalar_select %p462, 1, 0
      %v464 = vstv %s463
      %vm465 = vcmp.eq.s32.totalorder %v464, 1
      %v466 = vsel %vm465, %v458, 0
      %v467 = vsel %vm465, %v459, 0
      %p468 = scmp.lt.s32.totalorder %s23, 1
      %s469 = scalar_select %p468, 1, 0
      %v470 = vstv %s469
      %vm471 = vcmp.eq.s32.totalorder %v470, 1
      %v472 = vsel %vm471, %v460, 0
      %v473 = vsel %vm471, %v461, 0
      %vm474 = vcmask 24576
      %vm475 = vsmask.f32 256
      %vm476 = vmand %vm474, %vm475
      %v477 = vld [vmem:[#allocation2] sm:$0x1]
      %v478 = vsel %vm476, 0, %v477
      %479 = vst [vmem:[#allocation2] sm:$0x1] %v478
      %v480 = vld [vmem:[#allocation2 + $0xc] sm:$0x1]
      %v481 = vsel %vm476, 0, %v480
      %482 = vst [vmem:[#allocation2 + $0xc] sm:$0x1] %v481
      %v483 = vld [vmem:[#allocation2 + $0x18] sm:$0x1]
      %v484 = vsel %vm476, 0, %v483
      %485 = vst [vmem:[#allocation2 + $0x18] sm:$0x1] %v484
      %v486 = vld [vmem:[#allocation2 + $0x24] sm:$0x1]
      %v487 = vsel %vm476, 0, %v486
      %488 = vst [vmem:[#allocation2 + $0x24] sm:$0x1] %v487
      %v489 = vld [vmem:[#allocation2 + $0x30] sm:$0x1]
      %v490 = vsel %vm476, 0, %v489
      %491 = vst [vmem:[#allocation2 + $0x30] sm:$0x1] %v490
      %v492 = vld [vmem:[#allocation2 + $0x3c] sm:$0x1]
      %v493 = vsel %vm476, 0, %v492
      %494 = vst [vmem:[#allocation2 + $0x3c] sm:$0x1] %v493
      %v495 = vld [vmem:[#allocation2 + $0x48] sm:$0x1]
      %v496 = vsel %vm476, 0, %v495
      %497 = vst [vmem:[#allocation2 + $0x48] sm:$0x1] %v496
      %v498 = vld [vmem:[#allocation2 + $0x54] sm:$0x1]
      %v499 = vsel %vm476, 0, %v498
      %500 = vst [vmem:[#allocation2 + $0x54] sm:$0x1] %v499
      %v501 = vld [vmem:[#allocation2 + $0x60] sm:$0x1]
      %v502 = vsel %vm476, 0, %v501
      %503 = vst [vmem:[#allocation2 + $0x60] sm:$0x1] %v502
      %v504 = vld [vmem:[#allocation2 + $0x6c] sm:$0x1]
      %v505 = vsel %vm476, 0, %v504
      %506 = vst [vmem:[#allocation2 + $0x6c] sm:$0x1] %v505
      %vm507 = vsmask.f32 7938
      %vm508 = vmand %vm474, %vm507
      %v509 = vld [vmem:[#allocation2 + $0x8] sm:$0x1]
      %v510 = vsel %vm508, 0, %v509
      %511 = vst [vmem:[#allocation2 + $0x8] sm:$0x1] %v510
      %v512 = vld [vmem:[#allocation2 + $0x14] sm:$0x1]
      %v513 = vsel %vm508, 0, %v512
      %514 = vst [vmem:[#allocation2 + $0x14] sm:$0x1] %v513
      %v515 = vld [vmem:[#allocation2 + $0x20] sm:$0x1]
      %v516 = vsel %vm508, 0, %v515
      %517 = vst [vmem:[#allocation2 + $0x20] sm:$0x1] %v516
      %v518 = vld [vmem:[#allocation2 + $0x2c] sm:$0x1]
      %v519 = vsel %vm508, 0, %v518
      %520 = vst [vmem:[#allocation2 + $0x2c] sm:$0x1] %v519
      %v521 = vld [vmem:[#allocation2 + $0x38] sm:$0x1]
      %v522 = vsel %vm508, 0, %v521
      %523 = vst [vmem:[#allocation2 + $0x38] sm:$0x1] %v522
      %v524 = vld [vmem:[#allocation2 + $0x44] sm:$0x1]
      %v525 = vsel %vm508, 0, %v524
      %526 = vst [vmem:[#allocation2 + $0x44] sm:$0x1] %v525
      %v527 = vld [vmem:[#allocation2 + $0x50] sm:$0x1]
      %v528 = vsel %vm508, 0, %v527
      %529 = vst [vmem:[#allocation2 + $0x50] sm:$0x1] %v528
      %v530 = vld [vmem:[#allocation2 + $0x5c] sm:$0x1]
      %v531 = vsel %vm508, 0, %v530
      %532 = vst [vmem:[#allocation2 + $0x5c] sm:$0x1] %v531
      %v533 = vld [vmem:[#allocation2 + $0x68] sm:$0x1]
      %v534 = vsel %vm508, 0, %v533
      %535 = vst [vmem:[#allocation2 + $0x68] sm:$0x1] %v534
      %v536 = vld [vmem:[#allocation2 + $0x74] sm:$0x1]
      %v537 = vsel %vm508, 0, %v536
      %538 = vst [vmem:[#allocation2 + $0x74] sm:$0x1] %v537
      %vm539 = vsmask.f32 4368
      %vm540 = vmor %vm475, %vm539
      %v542 = vshrl.u32 %v466, 16
      %v544 = vrot.slane %v542, 7
      %v545 = vshll.u32 %v466, 16
      %v547 = vor.u32 %v544, %v545
      %v548 = vrot.slane %v544, 4
      %v550 = vshrl.u32 %v467, 16
      %v552 = vrot.slane %v550, 7
      %v553 = vshll.u32 %v467, 16
      %v555 = vor.u32 %v552, %v553
      %v556 = vsel %vm540, %v548, %v555
      %v557 = vrot.slane %v552, 4
      %vm561 = vcmask 27648
      %vm562 = vmand %vm561, %vm507
      %v563 = vld [vmem:[#allocation2] sm:$0xf]
      %v564 = vsel %vm562, %v547, %v563
      %565 = vst [vmem:[#allocation2] sm:$0xf] %v564
      %vm566 = vcmask 27648
      %567 = vst.msk [vmem:[#allocation2 + $0x4] sm:$0xf] %vm566, %v556
      %v568 = vld [vmem:[#allocation2 + $0x8] sm:$0x1]
      %v569 = vsel %vm476, %v557, %v568
      %570 = vst [vmem:[#allocation2 + $0x8] sm:$0x1] %v569
      %v572 = vshrl.u32 %v472, 16
      %v574 = vrot.slane %v572, 7
      %v575 = vshll.u32 %v472, 16
      %v577 = vor.u32 %v574, %v575
      %v578 = vrot.slane %v574, 4
      %v580 = vshrl.u32 %v473, 16
      %v582 = vrot.slane %v580, 7
      %v583 = vshll.u32 %v473, 16
      %v585 = vor.u32 %v582, %v583
      %v586 = vsel %vm540, %v578, %v585
      %v587 = vrot.slane %v582, 4
      %s591 = scalar_lea.vmem [#allocation2], 108
      %v592 = vld [vmem:[%s591] sm:$0xf]
      %v593 = vsel %vm562, %v577, %v592
      %594 = vst [vmem:[%s591] sm:$0xf] %v593
      %595 = vst.msk [vmem:[%s591 + $0x4] sm:$0xf] %vm566, %v586
      %v596 = vld [vmem:[%s591 + $0x8] sm:$0x1]
      %v597 = vsel %vm476, %v587, %v596
      %598 = vst [vmem:[%s591 + $0x8] sm:$0x1] %v597
      %v600 = vshrl.u32 %v442, 16
      %v602 = vrot.slane %v600, 7
      %v603 = vshll.u32 %v442, 16
      %v605 = vor.u32 %v602, %v603
      %v606 = vrot.slane %v602, 4
      %v608 = vshrl.u32 %v443, 16
      %v610 = vrot.slane %v608, 7
      %v611 = vshll.u32 %v443, 16
      %v613 = vor.u32 %v610, %v611
      %v614 = vsel %vm540, %v606, %v613
      %v615 = vrot.slane %v610, 4
      %v617 = vshrl.u32 %v444, 16
      %v619 = vrot.slane %v617, 7
      %v620 = vshll.u32 %v444, 16
      %v622 = vor.u32 %v619, %v620
      %v623 = vrot.slane %v619, 4
      %v625 = vshrl.u32 %v445, 16
      %v627 = vrot.slane %v625, 7
      %v628 = vshll.u32 %v445, 16
      %v630 = vor.u32 %v627, %v628
      %v631 = vsel %vm540, %v623, %v630
      %v632 = vrot.slane %v627, 4
      %v634 = vshrl.u32 %v446, 16
      %v636 = vrot.slane %v634, 7
      %v637 = vshll.u32 %v446, 16
      %v639 = vor.u32 %v636, %v637
      %v640 = vrot.slane %v636, 4
      %v642 = vshrl.u32 %v447, 16
      %v644 = vrot.slane %v642, 7
      %v645 = vshll.u32 %v447, 16
      %v647 = vor.u32 %v644, %v645
      %v648 = vsel %vm540, %v640, %v647
      %v649 = vrot.slane %v644, 4
      %v651 = vshrl.u32 %v448, 16
      %v653 = vrot.slane %v651, 7
      %v654 = vshll.u32 %v448, 16
      %v656 = vor.u32 %v653, %v654
      %v657 = vrot.slane %v653, 4
      %v659 = vshrl.u32 %v449, 16
      %v661 = vrot.slane %v659, 7
      %v662 = vshll.u32 %v449, 16
      %v664 = vor.u32 %v661, %v662
      %v665 = vsel %vm540, %v657, %v664
      %v666 = vrot.slane %v661, 4
      %v668 = vshrl.u32 %v450, 16
      %v670 = vrot.slane %v668, 7
      %v671 = vshll.u32 %v450, 16
      %v673 = vor.u32 %v670, %v671
      %v674 = vrot.slane %v670, 4
      %v676 = vshrl.u32 %v451, 16
      %v678 = vrot.slane %v676, 7
      %v679 = vshll.u32 %v451, 16
      %v681 = vor.u32 %v678, %v679
      %v682 = vsel %vm540, %v674, %v681
      %v683 = vrot.slane %v678, 4
      %v685 = vshrl.u32 %v452, 16
      %v687 = vrot.slane %v685, 7
      %v688 = vshll.u32 %v452, 16
      %v690 = vor.u32 %v687, %v688
      %v691 = vrot.slane %v687, 4
      %v693 = vshrl.u32 %v453, 16
      %v695 = vrot.slane %v693, 7
      %v696 = vshll.u32 %v453, 16
      %v698 = vor.u32 %v695, %v696
      %v699 = vsel %vm540, %v691, %v698
      %v700 = vrot.slane %v695, 4
      %v702 = vshrl.u32 %v454, 16
      %v704 = vrot.slane %v702, 7
      %v705 = vshll.u32 %v454, 16
      %v707 = vor.u32 %v704, %v705
      %v708 = vrot.slane %v704, 4
      %v710 = vshrl.u32 %v455, 16
      %v712 = vrot.slane %v710, 7
      %v713 = vshll.u32 %v455, 16
      %v715 = vor.u32 %v712, %v713
      %v716 = vsel %vm540, %v708, %v715
      %v717 = vrot.slane %v712, 4
      %v719 = vshrl.u32 %v456, 16
      %v721 = vrot.slane %v719, 7
      %v722 = vshll.u32 %v456, 16
      %v724 = vor.u32 %v721, %v722
      %v725 = vrot.slane %v721, 4
      %v727 = vshrl.u32 %v457, 16
      %v729 = vrot.slane %v727, 7
      %v730 = vshll.u32 %v457, 16
      %v732 = vor.u32 %v729, %v730
      %v733 = vsel %vm540, %v725, %v732
      %v734 = vrot.slane %v729, 4
      %s759 = scalar_lea.vmem [#allocation2], 12
      %v760 = vld [vmem:[%s759] sm:$0xf]
      %v761 = vsel %vm562, %v605, %v760
      %762 = vst [vmem:[%s759] sm:$0xf] %v761
      %763 = vst.msk [vmem:[%s759 + $0x4] sm:$0xf] %vm566, %v614
      %v764 = vld [vmem:[%s759 + $0x8] sm:$0x1]
      %v765 = vsel %vm476, %v615, %v764
      %766 = vst [vmem:[%s759 + $0x8] sm:$0x1] %v765
      %v767 = vld [vmem:[%s759 + $0xc] sm:$0xf]
      %v768 = vsel %vm562, %v622, %v767
      %769 = vst [vmem:[%s759 + $0xc] sm:$0xf] %v768
      %770 = vst.msk [vmem:[%s759 + $0x10] sm:$0xf] %vm566, %v631
      %v771 = vld [vmem:[%s759 + $0x14] sm:$0x1]
      %v772 = vsel %vm476, %v632, %v771
      %773 = vst [vmem:[%s759 + $0x14] sm:$0x1] %v772
      %v774 = vld [vmem:[%s759 + $0x18] sm:$0xf]
      %v775 = vsel %vm562, %v639, %v774
      %776 = vst [vmem:[%s759 + $0x18] sm:$0xf] %v775
      %777 = vst.msk [vmem:[%s759 + $0x1c] sm:$0xf] %vm566, %v648
      %v778 = vld [vmem:[%s759 + $0x20] sm:$0x1]
      %v779 = vsel %vm476, %v649, %v778
      %780 = vst [vmem:[%s759 + $0x20] sm:$0x1] %v779
      %v781 = vld [vmem:[%s759 + $0x24] sm:$0xf]
      %v782 = vsel %vm562, %v656, %v781
      %783 = vst [vmem:[%s759 + $0x24] sm:$0xf] %v782
      %784 = vst.msk [vmem:[%s759 + $0x28] sm:$0xf] %vm566, %v665
      %v785 = vld [vmem:[%s759 + $0x2c] sm:$0x1]
      %v786 = vsel %vm476, %v666, %v785
      %787 = vst [vmem:[%s759 + $0x2c] sm:$0x1] %v786
      %v788 = vld [vmem:[%s759 + $0x30] sm:$0xf]
      %v789 = vsel %vm562, %v673, %v788
      %790 = vst [vmem:[%s759 + $0x30] sm:$0xf] %v789
      %791 = vst.msk [vmem:[%s759 + $0x34] sm:$0xf] %vm566, %v682
      %v792 = vld [vmem:[%s759 + $0x38] sm:$0x1]
      %v793 = vsel %vm476, %v683, %v792
      %794 = vst [vmem:[%s759 + $0x38] sm:$0x1] %v793
      %v795 = vld [vmem:[%s759 + $0x3c] sm:$0xf]
      %v796 = vsel %vm562, %v690, %v795
      %797 = vst [vmem:[%s759 + $0x3c] sm:$0xf] %v796
      %798 = vst.msk [vmem:[%s759 + $0x40] sm:$0xf] %vm566, %v699
      %v799 = vld [vmem:[%s759 + $0x44] sm:$0x1]
      %v800 = vsel %vm476, %v700, %v799
      %801 = vst [vmem:[%s759 + $0x44] sm:$0x1] %v800
      %v802 = vld [vmem:[%s759 + $0x48] sm:$0xf]
      %v803 = vsel %vm562, %v707, %v802
      %804 = vst [vmem:[%s759 + $0x48] sm:$0xf] %v803
      %805 = vst.msk [vmem:[%s759 + $0x4c] sm:$0xf] %vm566, %v716
      %v806 = vld [vmem:[%s759 + $0x50] sm:$0x1]
      %v807 = vsel %vm476, %v717, %v806
      %808 = vst [vmem:[%s759 + $0x50] sm:$0x1] %v807
      %v809 = vld [vmem:[%s759 + $0x54] sm:$0xf]
      %v810 = vsel %vm562, %v724, %v809
      %811 = vst [vmem:[%s759 + $0x54] sm:$0xf] %v810
      %812 = vst.msk [vmem:[%s759 + $0x58] sm:$0xf] %vm566, %v733
      %v813 = vld [vmem:[%s759 + $0x5c] sm:$0x1]
      %v814 = vsel %vm476, %v734, %v813
      %815 = vst [vmem:[%s759 + $0x5c] sm:$0x1] %v814
      %v816 = vld [vmem:[#allocation2] sm:$0xf]
      %v817 = vld [vmem:[#allocation2 + $0x4] sm:$0xf]
      %v818 = vld [vmem:[#allocation2 + $0xc] sm:$0xf]
      %v819 = vld [vmem:[#allocation2 + $0x10] sm:$0xf]
      %v820 = vld [vmem:[#allocation2 + $0x18] sm:$0xf]
      %v821 = vld [vmem:[#allocation2 + $0x1c] sm:$0xf]
      %v822 = vld [vmem:[#allocation2 + $0x24] sm:$0xf]
      %v823 = vld [vmem:[#allocation2 + $0x28] sm:$0xf]
      %v824 = vld [vmem:[#allocation2 + $0x30] sm:$0xf]
      %v825 = vld [vmem:[#allocation2 + $0x34] sm:$0xf]
      %v826 = vld [vmem:[#allocation2 + $0x3c] sm:$0xf]
      %v827 = vld [vmem:[#allocation2 + $0x40] sm:$0xf]
      %v828 = vld [vmem:[#allocation2 + $0x48] sm:$0xf]
      %v829 = vld [vmem:[#allocation2 + $0x4c] sm:$0xf]
      %v830 = vld [vmem:[#allocation2 + $0x54] sm:$0xf]
      %v831 = vld [vmem:[#allocation2 + $0x58] sm:$0xf]
      %v832 = vld [vmem:[%s4] sm:$0x3]
      %v833 = vld [vmem:[#allocation2 + $0x8] sm:$0x1]
      %v834 = vld [vmem:[#allocation2 + $0x14] sm:$0x1]
      %v835 = vld [vmem:[#allocation2 + $0x20] sm:$0x1]
      %v836 = vld [vmem:[#allocation2 + $0x2c] sm:$0x1]
      %v837 = vld [vmem:[#allocation2 + $0x38] sm:$0x1]
      %v838 = vld [vmem:[#allocation2 + $0x44] sm:$0x1]
      %v839 = vld [vmem:[#allocation2 + $0x50] sm:$0x1]
      %v840 = vld [vmem:[#allocation2 + $0x5c] sm:$0x1]
      %vm841 = vsmask.f32 3328
      %vm842 = vsmask.f32 7440
      %vm843 = vmor %vm841, %vm842
      %v845 = vshrl.u32 %v816, 16
      %v847 = vrot.slane %v845, 4
      %v848 = vshll.u32 %v816, 16
      %v850 = vrot.slane %v848, 5
      %v851 = vor.u32 %v847, %v850
      %v852 = vrot.slane %v851, 4
      %v854 = vshll.u32 %v817, 16
      %v856 = vrot.slane %v854, 5
      %v857 = vsel %vm843, %v852, %v856
      %v858 = vshrl.u32 %v817, 16
      %v860 = vrot.slane %v858, 4
      %v861 = vor.u32 %v860, %v856
      %v862 = vrot.slane %v861, 4
      %v864 = vshll.u32 %v833, 16
      %v866 = vrot.slane %v864, 5
      %v867 = vsel %vm843, %v862, %v866
      %v869 = vshrl.u32 %v818, 16
      %v871 = vrot.slane %v869, 4
      %v872 = vshll.u32 %v818, 16
      %v874 = vrot.slane %v872, 5
      %v875 = vor.u32 %v871, %v874
      %v876 = vrot.slane %v875, 4
      %v878 = vshll.u32 %v819, 16
      %v880 = vrot.slane %v878, 5
      %v881 = vsel %vm843, %v876, %v880
      %v882 = vshrl.u32 %v819, 16
      %v884 = vrot.slane %v882, 4
      %v885 = vor.u32 %v884, %v880
      %v886 = vrot.slane %v885, 4
      %v888 = vshll.u32 %v834, 16
      %v890 = vrot.slane %v888, 5
      %v891 = vsel %vm843, %v886, %v890
      %v893 = vshrl.u32 %v820, 16
      %v895 = vrot.slane %v893, 4
      %v896 = vshll.u32 %v820, 16
      %v898 = vrot.slane %v896, 5
      %v899 = vor.u32 %v895, %v898
      %v900 = vrot.slane %v899, 4
      %v902 = vshll.u32 %v821, 16
      %v904 = vrot.slane %v902, 5
      %v905 = vsel %vm843, %v900, %v904
      %v906 = vshrl.u32 %v821, 16
      %v908 = vrot.slane %v906, 4
      %v909 = vor.u32 %v908, %v904
      %v910 = vrot.slane %v909, 4
      %v912 = vshll.u32 %v835, 16
      %v914 = vrot.slane %v912, 5
      %v915 = vsel %vm843, %v910, %v914
      %v917 = vshrl.u32 %v822, 16
      %v919 = vrot.slane %v917, 4
      %v920 = vshll.u32 %v822, 16
      %v922 = vrot.slane %v920, 5
      %v923 = vor.u32 %v919, %v922
      %v924 = vrot.slane %v923, 4
      %v926 = vshll.u32 %v823, 16
      %v928 = vrot.slane %v926, 5
      %v929 = vsel %vm843, %v924, %v928
      %v930 = vshrl.u32 %v823, 16
      %v932 = vrot.slane %v930, 4
      %v933 = vor.u32 %v932, %v928
      %v934 = vrot.slane %v933, 4
      %v936 = vshll.u32 %v836, 16
      %v938 = vrot.slane %v936, 5
      %v939 = vsel %vm843, %v934, %v938
      %v941 = vshrl.u32 %v824, 16
      %v943 = vrot.slane %v941, 4
      %v944 = vshll.u32 %v824, 16
      %v946 = vrot.slane %v944, 5
      %v947 = vor.u32 %v943, %v946
      %v948 = vrot.slane %v947, 4
      %v950 = vshll.u32 %v825, 16
      %v952 = vrot.slane %v950, 5
      %v953 = vsel %vm843, %v948, %v952
      %v954 = vshrl.u32 %v825, 16
      %v956 = vrot.slane %v954, 4
      %v957 = vor.u32 %v956, %v952
      %v958 = vrot.slane %v957, 4
      %v960 = vshll.u32 %v837, 16
      %v962 = vrot.slane %v960, 5
      %v963 = vsel %vm843, %v958, %v962
      %v965 = vshrl.u32 %v826, 16
      %v967 = vrot.slane %v965, 4
      %v968 = vshll.u32 %v826, 16
      %v970 = vrot.slane %v968, 5
      %v971 = vor.u32 %v967, %v970
      %v972 = vrot.slane %v971, 4
      %v974 = vshll.u32 %v827, 16
      %v976 = vrot.slane %v974, 5
      %v977 = vsel %vm843, %v972, %v976
      %v978 = vshrl.u32 %v827, 16
      %v980 = vrot.slane %v978, 4
      %v981 = vor.u32 %v980, %v976
      %v982 = vrot.slane %v981, 4
      %v984 = vshll.u32 %v838, 16
      %v986 = vrot.slane %v984, 5
      %v987 = vsel %vm843, %v982, %v986
      %v989 = vshrl.u32 %v828, 16
      %v991 = vrot.slane %v989, 4
      %v992 = vshll.u32 %v828, 16
      %v994 = vrot.slane %v992, 5
      %v995 = vor.u32 %v991, %v994
      %v996 = vrot.slane %v995, 4
      %v998 = vshll.u32 %v829, 16
      %v1000 = vrot.slane %v998, 5
      %v1001 = vsel %vm843, %v996, %v1000
      %v1002 = vshrl.u32 %v829, 16
      %v1004 = vrot.slane %v1002, 4
      %v1005 = vor.u32 %v1004, %v1000
      %v1006 = vrot.slane %v1005, 4
      %v1008 = vshll.u32 %v839, 16
      %v1010 = vrot.slane %v1008, 5
      %v1011 = vsel %vm843, %v1006, %v1010
      %v1013 = vshrl.u32 %v830, 16
      %v1015 = vrot.slane %v1013, 4
      %v1016 = vshll.u32 %v830, 16
      %v1018 = vrot.slane %v1016, 5
      %v1019 = vor.u32 %v1015, %v1018
      %v1020 = vrot.slane %v1019, 4
      %v1022 = vshll.u32 %v831, 16
      %v1024 = vrot.slane %v1022, 5
      %v1025 = vsel %vm843, %v1020, %v1024
      %v1026 = vshrl.u32 %v831, 16
      %v1028 = vrot.slane %v1026, 4
      %v1029 = vor.u32 %v1028, %v1024
      %v1030 = vrot.slane %v1029, 4
      %v1032 = vshll.u32 %v840, 16
      %v1034 = vrot.slane %v1032, 5
      %v1035 = vsel %vm843, %v1030, %v1034
      %s1036 = scalar_lea.vmem %s4, 2
      %v1037 = vld [vmem:[%s1036] sm:$0x3]
      %v1038 = vunpack.c.l.b16 %v857
      %v1039 = vunpack.c.l.b16 %v867
      %v1040 = vunpack.c.l.b16 %v881
      %v1041 = vunpack.c.l.b16 %v891
      %v1042 = vunpack.c.l.b16 %v905
      %v1043 = vunpack.c.l.b16 %v915
      %v1044 = vunpack.c.l.b16 %v929
      %v1045 = vunpack.c.l.b16 %v939
      %v1046 = vunpack.c.l.b16 %v953
      %v1047 = vunpack.c.l.b16 %v963
      %v1048 = vunpack.c.l.b16 %v977
      %v1049 = vunpack.c.l.b16 %v987
      %v1050 = vunpack.c.l.b16 %v1001
      %v1051 = vunpack.c.l.b16 %v1011
      %v1052 = vunpack.c.l.b16 %v1025
      %v1053 = vunpack.c.l.b16 %v1035
      %v1054 = vpack.c.b16 %v1039, %v1038
      %v1055 = vpack.c.b16 %v1041, %v1040
      %v1056 = vpack.c.b16 %v1043, %v1042
      %v1057 = vpack.c.b16 %v1045, %v1044
      %v1058 = vpack.c.b16 %v1047, %v1046
      %v1059 = vpack.c.b16 %v1049, %v1048
      %v1060 = vpack.c.b16 %v1051, %v1050
      %v1061 = vpack.c.b16 %v1053, %v1052
      %vm1062 = vcmask 31744
      %v1064 = vsel %vm1062, %v1054, 0
      %v1067 = vsel %vm1062, %v1055, 0
      %v1070 = vsel %vm1062, %v1056, 0
      %v1073 = vsel %vm1062, %v1057, 0
      %v1076 = vsel %vm1062, %v1058, 0
      %v1079 = vsel %vm1062, %v1059, 0
      %v1082 = vsel %vm1062, %v1060, 0
      %v1085 = vsel %vm1062, %v1061, 0
      %vm1087 = vcmask 1041408
      %v1089 = vsel %vm1087, %v1037, 0
      %1091 = vmatprep.subr.bf16.mxu0 0
      %1092 = vmatpush1.bf16.msra.mxu0 0
      %1093 = vmatprep.subr.bf16.mxu0 0
      %1094 = vmatpush1.bf16.msra.mxu0 0
      %1095 = vmatprep.subr.bf16.mxu0 0
      %1096 = vmatpush1.bf16.msra.mxu0 0
      %1097 = vmatprep.subr.bf16.mxu0 0
      %1098 = vmatpush1.bf16.msra.mxu0 0
      %1099 = vmatprep.subr.bf16.mxu0 0
      %1100 = vmatpush1.bf16.msra.mxu0 0
      %1101 = vmatprep.subr.bf16.mxu0 0
      %1102 = vmatpush1.bf16.msra.mxu0 0
      %1103 = vmatprep.subr.bf16.mxu0 0
      %1104 = vmatpush1.bf16.msra.mxu0 0
      %1105 = vmatprep.subr.bf16.mxu0 0
      %1106 = vmatpush1.bf16.msra.mxu0 %v1089
      %1107 = vmatprep.subr.bf16.mxu0 0
      %1108 = vmatpush2.bf16.msra.mxu0 0
      %1109 = vmatprep.subr.bf16.mxu0 0
      %1110 = vmatpush2.bf16.msra.mxu0 0
      %1111 = vmatprep.subr.bf16.mxu0 0
      %1112 = vmatpush2.bf16.msra.mxu0 0
      %1113 = vmatprep.subr.bf16.mxu0 0
      %1114 = vmatpush2.bf16.msra.mxu0 0
      %1115 = vmatprep.subr.bf16.mxu0 0
      %1116 = vmatpush2.bf16.msra.mxu0 0
      %1117 = vmatprep.subr.bf16.mxu0 0
      %1118 = vmatpush2.bf16.msra.mxu0 0
      %1119 = vmatprep.subr.bf16.mxu0 0
      %1120 = vmatpush2.bf16.msra.mxu0 0
      %1121 = vmatprep.subr.bf16.mxu0 0
      %1122 = vmatpush2.bf16.msra.mxu0 0
      %1123 = vmatprep.mubr.bf16.mxu0 0
      %1124 = vmatmul.mubr.bf16.gmra.mxu0 %v1064
      %v1125 = vpop.f32.mrf.mxu0
      %v1126 = vadd.f32 0.0, %v1125
      %v1127 = vpop.f32.mrf.mxu0
      %v1128 = vpop.f32.mrf.mxu0
      %v1129 = vadd.f32 0.0, %v1128
      %v1130 = vpop.f32.mrf.mxu0
      %1131 = vmatprep.mubr.bf16.mxu0 0
      %1132 = vmatmul.mubr.bf16.gmra.mxu0 %v1067
      %v1133 = vpop.f32.mrf.mxu0
      %v1134 = vadd.f32 0.0, %v1133
      %v1135 = vpop.f32.mrf.mxu0
      %v1136 = vpop.f32.mrf.mxu0
      %v1137 = vadd.f32 0.0, %v1136
      %v1138 = vpop.f32.mrf.mxu0
      %1139 = vmatprep.mubr.bf16.mxu0 0
      %1140 = vmatmul.mubr.bf16.gmra.mxu0 %v1070
      %v1141 = vpop.f32.mrf.mxu0
      %v1142 = vadd.f32 0.0, %v1141
      %v1143 = vpop.f32.mrf.mxu0
      %v1144 = vpop.f32.mrf.mxu0
      %v1145 = vadd.f32 0.0, %v1144
      %v1146 = vpop.f32.mrf.mxu0
      %1147 = vmatprep.mubr.bf16.mxu0 0
      %1148 = vmatmul.mubr.bf16.gmra.mxu0 %v1073
      %v1149 = vpop.f32.mrf.mxu0
      %v1150 = vadd.f32 0.0, %v1149
      %v1151 = vpop.f32.mrf.mxu0
      %v1152 = vpop.f32.mrf.mxu0
      %v1153 = vadd.f32 0.0, %v1152
      %v1154 = vpop.f32.mrf.mxu0
      %1155 = vmatprep.mubr.bf16.mxu0 0
      %1156 = vmatmul.mubr.bf16.gmra.mxu0 %v1076
      %v1157 = vpop.f32.mrf.mxu0
      %v1158 = vadd.f32 0.0, %v1157
      %v1159 = vpop.f32.mrf.mxu0
      %v1160 = vpop.f32.mrf.mxu0
      %v1161 = vadd.f32 0.0, %v1160
      %v1162 = vpop.f32.mrf.mxu0
      %1163 = vmatprep.mubr.bf16.mxu0 0
      %1164 = vmatmul.mubr.bf16.gmra.mxu0 %v1079
      %v1165 = vpop.f32.mrf.mxu0
      %v1166 = vadd.f32 0.0, %v1165
      %v1167 = vpop.f32.mrf.mxu0
      %v1168 = vpop.f32.mrf.mxu0
      %v1169 = vadd.f32 0.0, %v1168
      %v1170 = vpop.f32.mrf.mxu0
      %1171 = vmatprep.mubr.bf16.mxu0 0
      %1172 = vmatmul.mubr.bf16.gmra.mxu0 %v1082
      %v1173 = vpop.f32.mrf.mxu0
      %v1174 = vadd.f32 0.0, %v1173
      %v1175 = vpop.f32.mrf.mxu0
      %v1176 = vpop.f32.mrf.mxu0
      %v1177 = vadd.f32 0.0, %v1176
      %v1178 = vpop.f32.mrf.mxu0
      %1179 = vmatprep.mubr.bf16.mxu0 0
      %1180 = vmatmul.mubr.bf16.gmra.mxu0 %v1085
      %v1181 = vpop.f32.mrf.mxu0
      %v1182 = vadd.f32 0.0, %v1181
      %v1183 = vpop.f32.mrf.mxu0
      %v1184 = vpop.f32.mrf.mxu0
      %v1185 = vadd.f32 0.0, %v1184
      %v1186 = vpop.f32.mrf.mxu0
      %1187 = vdwg.mxu0
      %v1204 = vunpack.c.l.b16 %v816
      %v1205 = vunpack.c.l.b16 %v817
      %v1206 = vunpack.c.l.b16 %v818
      %v1207 = vunpack.c.l.b16 %v819
      %v1208 = vunpack.c.l.b16 %v820
      %v1209 = vunpack.c.l.b16 %v821
      %v1210 = vunpack.c.l.b16 %v822
      %v1211 = vunpack.c.l.b16 %v823
      %v1212 = vunpack.c.l.b16 %v824
      %v1213 = vunpack.c.l.b16 %v825
      %v1214 = vunpack.c.l.b16 %v826
      %v1215 = vunpack.c.l.b16 %v827
      %v1216 = vunpack.c.l.b16 %v828
      %v1217 = vunpack.c.l.b16 %v829
      %v1218 = vunpack.c.l.b16 %v830
      %v1219 = vunpack.c.l.b16 %v831
      %v1220 = vpack.c.b16 %v1205, %v1204
      %v1221 = vpack.c.b16 %v1207, %v1206
      %v1222 = vpack.c.b16 %v1209, %v1208
      %v1223 = vpack.c.b16 %v1211, %v1210
      %v1224 = vpack.c.b16 %v1213, %v1212
      %v1225 = vpack.c.b16 %v1215, %v1214
      %v1226 = vpack.c.b16 %v1217, %v1216
      %v1227 = vpack.c.b16 %v1219, %v1218
      %v1229 = vsel %vm1062, %v1220, 0
      %v1232 = vsel %vm1062, %v1221, 0
      %v1235 = vsel %vm1062, %v1222, 0
      %v1238 = vsel %vm1062, %v1223, 0
      %v1241 = vsel %vm1062, %v1224, 0
      %v1244 = vsel %vm1062, %v1225, 0
      %v1247 = vsel %vm1062, %v1226, 0
      %v1250 = vsel %vm1062, %v1227, 0
      %v1253 = vsel %vm1087, %v832, 0
      %1255 = vmatprep.subr.bf16.mxu0 0
      %1256 = vmatpush1.bf16.msra.mxu0 0
      %1257 = vmatprep.subr.bf16.mxu0 0
      %1258 = vmatpush1.bf16.msra.mxu0 0
      %1259 = vmatprep.subr.bf16.mxu0 0
      %1260 = vmatpush1.bf16.msra.mxu0 0
      %1261 = vmatprep.subr.bf16.mxu0 0
      %1262 = vmatpush1.bf16.msra.mxu0 0
      %1263 = vmatprep.subr.bf16.mxu0 0
      %1264 = vmatpush1.bf16.msra.mxu0 0
      %1265 = vmatprep.subr.bf16.mxu0 0
      %1266 = vmatpush1.bf16.msra.mxu0 0
      %1267 = vmatprep.subr.bf16.mxu0 0
      %1268 = vmatpush1.bf16.msra.mxu0 0
      %1269 = vmatprep.subr.bf16.mxu0 0
      %1270 = vmatpush1.bf16.msra.mxu0 %v1253
      %1271 = vmatprep.subr.bf16.mxu0 0
      %1272 = vmatpush2.bf16.msra.mxu0 0
      %1273 = vmatprep.subr.bf16.mxu0 0
      %1274 = vmatpush2.bf16.msra.mxu0 0
      %1275 = vmatprep.subr.bf16.mxu0 0
      %1276 = vmatpush2.bf16.msra.mxu0 0
      %1277 = vmatprep.subr.bf16.mxu0 0
      %1278 = vmatpush2.bf16.msra.mxu0 0
      %1279 = vmatprep.subr.bf16.mxu0 0
      %1280 = vmatpush2.bf16.msra.mxu0 0
      %1281 = vmatprep.subr.bf16.mxu0 0
      %1282 = vmatpush2.bf16.msra.mxu0 0
      %1283 = vmatprep.subr.bf16.mxu0 0
      %1284 = vmatpush2.bf16.msra.mxu0 0
      %1285 = vmatprep.subr.bf16.mxu0 0
      %1286 = vmatpush2.bf16.msra.mxu0 0
      %1287 = vmatprep.mubr.bf16.mxu0 0
      %1288 = vmatmul.mubr.bf16.gmra.mxu0 %v1229
      %v1289 = vpop.f32.mrf.mxu0
      %v1290 = vadd.f32 %v1126, %v1289
      %v1291 = vpop.f32.mrf.mxu0
      %v1292 = vpop.f32.mrf.mxu0
      %v1293 = vadd.f32 %v1129, %v1292
      %v1294 = vpop.f32.mrf.mxu0
      %1295 = vmatprep.mubr.bf16.mxu0 0
      %1296 = vmatmul.mubr.bf16.gmra.mxu0 %v1232
      %v1297 = vpop.f32.mrf.mxu0
      %v1298 = vadd.f32 %v1134, %v1297
      %v1299 = vpop.f32.mrf.mxu0
      %v1300 = vpop.f32.mrf.mxu0
      %v1301 = vadd.f32 %v1137, %v1300
      %v1302 = vpop.f32.mrf.mxu0
      %1303 = vmatprep.mubr.bf16.mxu0 0
      %1304 = vmatmul.mubr.bf16.gmra.mxu0 %v1235
      %v1305 = vpop.f32.mrf.mxu0
      %v1306 = vadd.f32 %v1142, %v1305
      %v1307 = vpop.f32.mrf.mxu0
      %v1308 = vpop.f32.mrf.mxu0
      %v1309 = vadd.f32 %v1145, %v1308
      %v1310 = vpop.f32.mrf.mxu0
      %1311 = vmatprep.mubr.bf16.mxu0 0
      %1312 = vmatmul.mubr.bf16.gmra.mxu0 %v1238
      %v1313 = vpop.f32.mrf.mxu0
      %v1314 = vadd.f32 %v1150, %v1313
      %v1315 = vpop.f32.mrf.mxu0
      %v1316 = vpop.f32.mrf.mxu0
      %v1317 = vadd.f32 %v1153, %v1316
      %v1318 = vpop.f32.mrf.mxu0
      %1319 = vmatprep.mubr.bf16.mxu0 0
      %1320 = vmatmul.mubr.bf16.gmra.mxu0 %v1241
      %v1321 = vpop.f32.mrf.mxu0
      %v1322 = vadd.f32 %v1158, %v1321
      %v1323 = vpop.f32.mrf.mxu0
      %v1324 = vpop.f32.mrf.mxu0
      %v1325 = vadd.f32 %v1161, %v1324
      %v1326 = vpop.f32.mrf.mxu0
      %1327 = vmatprep.mubr.bf16.mxu0 0
      %1328 = vmatmul.mubr.bf16.gmra.mxu0 %v1244
      %v1329 = vpop.f32.mrf.mxu0
      %v1330 = vadd.f32 %v1166, %v1329
      %v1331 = vpop.f32.mrf.mxu0
      %v1332 = vpop.f32.mrf.mxu0
      %v1333 = vadd.f32 %v1169, %v1332
      %v1334 = vpop.f32.mrf.mxu0
      %1335 = vmatprep.mubr.bf16.mxu0 0
      %1336 = vmatmul.mubr.bf16.gmra.mxu0 %v1247
      %v1337 = vpop.f32.mrf.mxu0
      %v1338 = vadd.f32 %v1174, %v1337
      %v1339 = vpop.f32.mrf.mxu0
      %v1340 = vpop.f32.mrf.mxu0
      %v1341 = vadd.f32 %v1177, %v1340
      %v1342 = vpop.f32.mrf.mxu0
      %1343 = vmatprep.mubr.bf16.mxu0 0
      %1344 = vmatmul.mubr.bf16.gmra.mxu0 %v1250
      %v1345 = vpop.f32.mrf.mxu0
      %v1346 = vadd.f32 %v1182, %v1345
      %v1347 = vpop.f32.mrf.mxu0
      %v1348 = vpop.f32.mrf.mxu0
      %v1349 = vadd.f32 %v1185, %v1348
      %v1350 = vpop.f32.mrf.mxu0
      %1351 = vdwg.mxu0
      %v1352 = vld [vmem:[#allocation2] sm:$0xe]
      %v1353 = vld [vmem:[#allocation2 + $0xc] sm:$0xe]
      %v1354 = vld [vmem:[#allocation2 + $0x18] sm:$0xe]
      %v1355 = vld [vmem:[#allocation2 + $0x24] sm:$0xe]
      %v1356 = vld [vmem:[#allocation2 + $0x30] sm:$0xe]
      %v1357 = vld [vmem:[#allocation2 + $0x3c] sm:$0xe]
      %v1358 = vld [vmem:[#allocation2 + $0x48] sm:$0xe]
      %v1359 = vld [vmem:[#allocation2 + $0x54] sm:$0xe]
      %vm1376 = vcmask 1042432
      %vm1377 = vcmask 1046532
      %vm1378 = vmor %vm1376, %vm1377
      %v1379 = vrot.slane %v1352, 5
      %v1380 = vrot.slane %v1379, 4
      %v1381 = vrot.slane %v817, 5
      %v1382 = vsel %vm1378, %v1380, %v1381
      %v1383 = vrot.slane %v1381, 4
      %v1384 = vrot.slane %v833, 5
      %v1385 = vsel %vm1378, %v1383, %v1384
      %v1386 = vrot.slane %v1353, 5
      %v1387 = vrot.slane %v1386, 4
      %v1388 = vrot.slane %v819, 5
      %v1389 = vsel %vm1378, %v1387, %v1388
      %v1390 = vrot.slane %v1388, 4
      %v1391 = vrot.slane %v834, 5
      %v1392 = vsel %vm1378, %v1390, %v1391
      %v1393 = vrot.slane %v1354, 5
      %v1394 = vrot.slane %v1393, 4
      %v1395 = vrot.slane %v821, 5
      %v1396 = vsel %vm1378, %v1394, %v1395
      %v1397 = vrot.slane %v1395, 4
      %v1398 = vrot.slane %v835, 5
      %v1399 = vsel %vm1378, %v1397, %v1398
      %v1400 = vrot.slane %v1355, 5
      %v1401 = vrot.slane %v1400, 4
      %v1402 = vrot.slane %v823, 5
      %v1403 = vsel %vm1378, %v1401, %v1402
      %v1404 = vrot.slane %v1402, 4
      %v1405 = vrot.slane %v836, 5
      %v1406 = vsel %vm1378, %v1404, %v1405
      %v1407 = vrot.slane %v1356, 5
      %v1408 = vrot.slane %v1407, 4
      %v1409 = vrot.slane %v825, 5
      %v1410 = vsel %vm1378, %v1408, %v1409
      %v1411 = vrot.slane %v1409, 4
      %v1412 = vrot.slane %v837, 5
      %v1413 = vsel %vm1378, %v1411, %v1412
      %v1414 = vrot.slane %v1357, 5
      %v1415 = vrot.slane %v1414, 4
      %v1416 = vrot.slane %v827, 5
      %v1417 = vsel %vm1378, %v1415, %v1416
      %v1418 = vrot.slane %v1416, 4
      %v1419 = vrot.slane %v838, 5
      %v1420 = vsel %vm1378, %v1418, %v1419
      %v1421 = vrot.slane %v1358, 5
      %v1422 = vrot.slane %v1421, 4
      %v1423 = vrot.slane %v829, 5
      %v1424 = vsel %vm1378, %v1422, %v1423
      %v1425 = vrot.slane %v1423, 4
      %v1426 = vrot.slane %v839, 5
      %v1427 = vsel %vm1378, %v1425, %v1426
      %v1428 = vrot.slane %v1359, 5
      %v1429 = vrot.slane %v1428, 4
      %v1430 = vrot.slane %v831, 5
      %v1431 = vsel %vm1378, %v1429, %v1430
      %v1432 = vrot.slane %v1430, 4
      %v1433 = vrot.slane %v840, 5
      %v1434 = vsel %vm1378, %v1432, %v1433
      %s1435 = scalar_lea.vmem %s4, 4
      %v1436 = vld [vmem:[%s1435] sm:$0x3]
      %v1437 = vunpack.c.l.b16 %v1382
      %v1438 = vunpack.c.l.b16 %v1385
      %v1439 = vunpack.c.l.b16 %v1389
      %v1440 = vunpack.c.l.b16 %v1392
      %v1441 = vunpack.c.l.b16 %v1396
      %v1442 = vunpack.c.l.b16 %v1399
      %v1443 = vunpack.c.l.b16 %v1403
      %v1444 = vunpack.c.l.b16 %v1406
      %v1445 = vunpack.c.l.b16 %v1410
      %v1446 = vunpack.c.l.b16 %v1413
      %v1447 = vunpack.c.l.b16 %v1417
      %v1448 = vunpack.c.l.b16 %v1420
      %v1449 = vunpack.c.l.b16 %v1424
      %v1450 = vunpack.c.l.b16 %v1427
      %v1451 = vunpack.c.l.b16 %v1431
      %v1452 = vunpack.c.l.b16 %v1434
      %v1453 = vpack.c.b16 %v1438, %v1437
      %v1454 = vpack.c.b16 %v1440, %v1439
      %v1455 = vpack.c.b16 %v1442, %v1441
      %v1456 = vpack.c.b16 %v1444, %v1443
      %v1457 = vpack.c.b16 %v1446, %v1445
      %v1458 = vpack.c.b16 %v1448, %v1447
      %v1459 = vpack.c.b16 %v1450, %v1449
      %v1460 = vpack.c.b16 %v1452, %v1451
      %v1462 = vsel %vm1062, %v1453, 0
      %v1465 = vsel %vm1062, %v1454, 0
      %v1468 = vsel %vm1062, %v1455, 0
      %v1471 = vsel %vm1062, %v1456, 0
      %v1474 = vsel %vm1062, %v1457, 0
      %v1477 = vsel %vm1062, %v1458, 0
      %v1480 = vsel %vm1062, %v1459, 0
      %v1483 = vsel %vm1062, %v1460, 0
      %v1486 = vsel %vm1087, %v1436, 0
      %1488 = vmatprep.subr.bf16.mxu0 0
      %1489 = vmatpush1.bf16.msra.mxu0 0
      %1490 = vmatprep.subr.bf16.mxu0 0
      %1491 = vmatpush1.bf16.msra.mxu0 0
      %1492 = vmatprep.subr.bf16.mxu0 0
      %1493 = vmatpush1.bf16.msra.mxu0 0
      %1494 = vmatprep.subr.bf16.mxu0 0
      %1495 = vmatpush1.bf16.msra.mxu0 0
      %1496 = vmatprep.subr.bf16.mxu0 0
      %1497 = vmatpush1.bf16.msra.mxu0 0
      %1498 = vmatprep.subr.bf16.mxu0 0
      %1499 = vmatpush1.bf16.msra.mxu0 0
      %1500 = vmatprep.subr.bf16.mxu0 0
      %1501 = vmatpush1.bf16.msra.mxu0 0
      %1502 = vmatprep.subr.bf16.mxu0 0
      %1503 = vmatpush1.bf16.msra.mxu0 %v1486
      %1504 = vmatprep.subr.bf16.mxu0 0
      %1505 = vmatpush2.bf16.msra.mxu0 0
      %1506 = vmatprep.subr.bf16.mxu0 0
      %1507 = vmatpush2.bf16.msra.mxu0 0
      %1508 = vmatprep.subr.bf16.mxu0 0
      %1509 = vmatpush2.bf16.msra.mxu0 0
      %1510 = vmatprep.subr.bf16.mxu0 0
      %1511 = vmatpush2.bf16.msra.mxu0 0
      %1512 = vmatprep.subr.bf16.mxu0 0
      %1513 = vmatpush2.bf16.msra.mxu0 0
      %1514 = vmatprep.subr.bf16.mxu0 0
      %1515 = vmatpush2.bf16.msra.mxu0 0
      %1516 = vmatprep.subr.bf16.mxu0 0
      %1517 = vmatpush2.bf16.msra.mxu0 0
      %1518 = vmatprep.subr.bf16.mxu0 0
      %1519 = vmatpush2.bf16.msra.mxu0 0
      %1520 = vmatprep.mubr.bf16.mxu0 0
      %1521 = vmatmul.mubr.bf16.gmra.mxu0 %v1462
      %v1522 = vpop.f32.mrf.mxu0
      %v1523 = vadd.f32 0.0, %v1522
      %v1524 = vpop.f32.mrf.mxu0
      %v1525 = vpop.f32.mrf.mxu0
      %v1526 = vadd.f32 0.0, %v1525
      %v1527 = vpop.f32.mrf.mxu0
      %1528 = vmatprep.mubr.bf16.mxu0 0
      %1529 = vmatmul.mubr.bf16.gmra.mxu0 %v1465
      %v1530 = vpop.f32.mrf.mxu0
      %v1531 = vadd.f32 0.0, %v1530
      %v1532 = vpop.f32.mrf.mxu0
      %v1533 = vpop.f32.mrf.mxu0
      %v1534 = vadd.f32 0.0, %v1533
      %v1535 = vpop.f32.mrf.mxu0
      %1536 = vmatprep.mubr.bf16.mxu0 0
      %1537 = vmatmul.mubr.bf16.gmra.mxu0 %v1468
      %v1538 = vpop.f32.mrf.mxu0
      %v1539 = vadd.f32 0.0, %v1538
      %v1540 = vpop.f32.mrf.mxu0
      %v1541 = vpop.f32.mrf.mxu0
      %v1542 = vadd.f32 0.0, %v1541
      %v1543 = vpop.f32.mrf.mxu0
      %1544 = vmatprep.mubr.bf16.mxu0 0
      %1545 = vmatmul.mubr.bf16.gmra.mxu0 %v1471
      %v1546 = vpop.f32.mrf.mxu0
      %v1547 = vadd.f32 0.0, %v1546
      %v1548 = vpop.f32.mrf.mxu0
      %v1549 = vpop.f32.mrf.mxu0
      %v1550 = vadd.f32 0.0, %v1549
      %v1551 = vpop.f32.mrf.mxu0
      %1552 = vmatprep.mubr.bf16.mxu0 0
      %1553 = vmatmul.mubr.bf16.gmra.mxu0 %v1474
      %v1554 = vpop.f32.mrf.mxu0
      %v1555 = vadd.f32 0.0, %v1554
      %v1556 = vpop.f32.mrf.mxu0
      %v1557 = vpop.f32.mrf.mxu0
      %v1558 = vadd.f32 0.0, %v1557
      %v1559 = vpop.f32.mrf.mxu0
      %1560 = vmatprep.mubr.bf16.mxu0 0
      %1561 = vmatmul.mubr.bf16.gmra.mxu0 %v1477
      %v1562 = vpop.f32.mrf.mxu0
      %v1563 = vadd.f32 0.0, %v1562
      %v1564 = vpop.f32.mrf.mxu0
      %v1565 = vpop.f32.mrf.mxu0
      %v1566 = vadd.f32 0.0, %v1565
      %v1567 = vpop.f32.mrf.mxu0
      %1568 = vmatprep.mubr.bf16.mxu0 0
      %1569 = vmatmul.mubr.bf16.gmra.mxu0 %v1480
      %v1570 = vpop.f32.mrf.mxu0
      %v1571 = vadd.f32 0.0, %v1570
      %v1572 = vpop.f32.mrf.mxu0
      %v1573 = vpop.f32.mrf.mxu0
      %v1574 = vadd.f32 0.0, %v1573
      %v1575 = vpop.f32.mrf.mxu0
      %1576 = vmatprep.mubr.bf16.mxu0 0
      %1577 = vmatmul.mubr.bf16.gmra.mxu0 %v1483
      %v1578 = vpop.f32.mrf.mxu0
      %v1579 = vadd.f32 0.0, %v1578
      %v1580 = vpop.f32.mrf.mxu0
      %v1581 = vpop.f32.mrf.mxu0
      %v1582 = vadd.f32 0.0, %v1581
      %v1583 = vpop.f32.mrf.mxu0
      %1584 = vdwg.mxu0
      %v1585 = vadd.f32 %v1290, %v1523
      %v1586 = vadd.f32 %v1293, %v1526
      %v1587 = vadd.f32 %v1298, %v1531
      %v1588 = vadd.f32 %v1301, %v1534
      %v1589 = vadd.f32 %v1306, %v1539
      %v1590 = vadd.f32 %v1309, %v1542
      %v1591 = vadd.f32 %v1314, %v1547
      %v1592 = vadd.f32 %v1317, %v1550
      %v1593 = vadd.f32 %v1322, %v1555
      %v1594 = vadd.f32 %v1325, %v1558
      %v1595 = vadd.f32 %v1330, %v1563
      %v1596 = vadd.f32 %v1333, %v1566
      %v1597 = vadd.f32 %v1338, %v1571
      %v1598 = vadd.f32 %v1341, %v1574
      %v1599 = vadd.f32 %v1346, %v1579
      %v1600 = vadd.f32 %v1349, %v1582
      %v1601 = vld [vmem:[%s759] sm:$0xf]
      %v1602 = vld [vmem:[%s759 + $0x4] sm:$0xf]
      %v1603 = vld [vmem:[%s759 + $0xc] sm:$0xf]
      %v1604 = vld [vmem:[%s759 + $0x10] sm:$0xf]
      %v1605 = vld [vmem:[%s759 + $0x18] sm:$0xf]
      %v1606 = vld [vmem:[%s759 + $0x1c] sm:$0xf]
      %v1607 = vld [vmem:[%s759 + $0x24] sm:$0xf]
      %v1608 = vld [vmem:[%s759 + $0x28] sm:$0xf]
      %v1609 = vld [vmem:[%s759 + $0x30] sm:$0xf]
      %v1610 = vld [vmem:[%s759 + $0x34] sm:$0xf]
      %v1611 = vld [vmem:[%s759 + $0x3c] sm:$0xf]
      %v1612 = vld [vmem:[%s759 + $0x40] sm:$0xf]
      %v1613 = vld [vmem:[%s759 + $0x48] sm:$0xf]
      %v1614 = vld [vmem:[%s759 + $0x4c] sm:$0xf]
      %v1615 = vld [vmem:[%s759 + $0x54] sm:$0xf]
      %v1616 = vld [vmem:[%s759 + $0x58] sm:$0xf]
      %s1617 = scalar_lea.vmem %s4, 6
      %v1618 = vld [vmem:[%s1617] sm:$0x3]
      %v1635 = vunpack.c.l.b16 %v1601
      %v1636 = vunpack.c.l.b16 %v1602
      %v1637 = vunpack.c.l.b16 %v1603
      %v1638 = vunpack.c.l.b16 %v1604
      %v1639 = vunpack.c.l.b16 %v1605
      %v1640 = vunpack.c.l.b16 %v1606
      %v1641 = vunpack.c.l.b16 %v1607
      %v1642 = vunpack.c.l.b16 %v1608
      %v1643 = vunpack.c.l.b16 %v1609
      %v1644 = vunpack.c.l.b16 %v1610
      %v1645 = vunpack.c.l.b16 %v1611
      %v1646 = vunpack.c.l.b16 %v1612
      %v1647 = vunpack.c.l.b16 %v1613
      %v1648 = vunpack.c.l.b16 %v1614
      %v1649 = vunpack.c.l.b16 %v1615
      %v1650 = vunpack.c.l.b16 %v1616
      %v1651 = vpack.c.b16 %v1636, %v1635
      %v1652 = vpack.c.b16 %v1638, %v1637
      %v1653 = vpack.c.b16 %v1640, %v1639
      %v1654 = vpack.c.b16 %v1642, %v1641
      %v1655 = vpack.c.b16 %v1644, %v1643
      %v1656 = vpack.c.b16 %v1646, %v1645
      %v1657 = vpack.c.b16 %v1648, %v1647
      %v1658 = vpack.c.b16 %v1650, %v1649
      %v1660 = vsel %vm1062, %v1651, 0
      %v1663 = vsel %vm1062, %v1652, 0
      %v1666 = vsel %vm1062, %v1653, 0
      %v1669 = vsel %vm1062, %v1654, 0
      %v1672 = vsel %vm1062, %v1655, 0
      %v1675 = vsel %vm1062, %v1656, 0
      %v1678 = vsel %vm1062, %v1657, 0
      %v1681 = vsel %vm1062, %v1658, 0
      %v1684 = vsel %vm1087, %v1618, 0
      %1686 = vmatprep.subr.bf16.mxu0 0
      %1687 = vmatpush1.bf16.msra.mxu0 0
      %1688 = vmatprep.subr.bf16.mxu0 0
      %1689 = vmatpush1.bf16.msra.mxu0 0
      %1690 = vmatprep.subr.bf16.mxu0 0
      %1691 = vmatpush1.bf16.msra.mxu0 0
      %1692 = vmatprep.subr.bf16.mxu0 0
      %1693 = vmatpush1.bf16.msra.mxu0 0
      %1694 = vmatprep.subr.bf16.mxu0 0
      %1695 = vmatpush1.bf16.msra.mxu0 0
      %1696 = vmatprep.subr.bf16.mxu0 0
      %1697 = vmatpush1.bf16.msra.mxu0 0
      %1698 = vmatprep.subr.bf16.mxu0 0
      %1699 = vmatpush1.bf16.msra.mxu0 0
      %1700 = vmatprep.subr.bf16.mxu0 0
      %1701 = vmatpush1.bf16.msra.mxu0 %v1684
      %1702 = vmatprep.subr.bf16.mxu0 0
      %1703 = vmatpush2.bf16.msra.mxu0 0
      %1704 = vmatprep.subr.bf16.mxu0 0
      %1705 = vmatpush2.bf16.msra.mxu0 0
      %1706 = vmatprep.subr.bf16.mxu0 0
      %1707 = vmatpush2.bf16.msra.mxu0 0
      %1708 = vmatprep.subr.bf16.mxu0 0
      %1709 = vmatpush2.bf16.msra.mxu0 0
      %1710 = vmatprep.subr.bf16.mxu0 0
      %1711 = vmatpush2.bf16.msra.mxu0 0
      %1712 = vmatprep.subr.bf16.mxu0 0
      %1713 = vmatpush2.bf16.msra.mxu0 0
      %1714 = vmatprep.subr.bf16.mxu0 0
      %1715 = vmatpush2.bf16.msra.mxu0 0
      %1716 = vmatprep.subr.bf16.mxu0 0
      %1717 = vmatpush2.bf16.msra.mxu0 0
      %1718 = vmatprep.mubr.bf16.mxu0 0
      %1719 = vmatmul.mubr.bf16.gmra.mxu0 %v1660
      %v1720 = vpop.f32.mrf.mxu0
      %v1721 = vadd.f32 0.0, %v1720
      %v1722 = vpop.f32.mrf.mxu0
      %v1723 = vpop.f32.mrf.mxu0
      %v1724 = vadd.f32 0.0, %v1723
      %v1725 = vpop.f32.mrf.mxu0
      %1726 = vmatprep.mubr.bf16.mxu0 0
      %1727 = vmatmul.mubr.bf16.gmra.mxu0 %v1663
      %v1728 = vpop.f32.mrf.mxu0
      %v1729 = vadd.f32 0.0, %v1728
      %v1730 = vpop.f32.mrf.mxu0
      %v1731 = vpop.f32.mrf.mxu0
      %v1732 = vadd.f32 0.0, %v1731
      %v1733 = vpop.f32.mrf.mxu0
      %1734 = vmatprep.mubr.bf16.mxu0 0
      %1735 = vmatmul.mubr.bf16.gmra.mxu0 %v1666
      %v1736 = vpop.f32.mrf.mxu0
      %v1737 = vadd.f32 0.0, %v1736
      %v1738 = vpop.f32.mrf.mxu0
      %v1739 = vpop.f32.mrf.mxu0
      %v1740 = vadd.f32 0.0, %v1739
      %v1741 = vpop.f32.mrf.mxu0
      %1742 = vmatprep.mubr.bf16.mxu0 0
      %1743 = vmatmul.mubr.bf16.gmra.mxu0 %v1669
      %v1744 = vpop.f32.mrf.mxu0
      %v1745 = vadd.f32 0.0, %v1744
      %v1746 = vpop.f32.mrf.mxu0
      %v1747 = vpop.f32.mrf.mxu0
      %v1748 = vadd.f32 0.0, %v1747
      %v1749 = vpop.f32.mrf.mxu0
      %1750 = vmatprep.mubr.bf16.mxu0 0
      %1751 = vmatmul.mubr.bf16.gmra.mxu0 %v1672
      %v1752 = vpop.f32.mrf.mxu0
      %v1753 = vadd.f32 0.0, %v1752
      %v1754 = vpop.f32.mrf.mxu0
      %v1755 = vpop.f32.mrf.mxu0
      %v1756 = vadd.f32 0.0, %v1755
      %v1757 = vpop.f32.mrf.mxu0
      %1758 = vmatprep.mubr.bf16.mxu0 0
      %1759 = vmatmul.mubr.bf16.gmra.mxu0 %v1675
      %v1760 = vpop.f32.mrf.mxu0
      %v1761 = vadd.f32 0.0, %v1760
      %v1762 = vpop.f32.mrf.mxu0
      %v1763 = vpop.f32.mrf.mxu0
      %v1764 = vadd.f32 0.0, %v1763
      %v1765 = vpop.f32.mrf.mxu0
      %1766 = vmatprep.mubr.bf16.mxu0 0
      %1767 = vmatmul.mubr.bf16.gmra.mxu0 %v1678
      %v1768 = vpop.f32.mrf.mxu0
      %v1769 = vadd.f32 0.0, %v1768
      %v1770 = vpop.f32.mrf.mxu0
      %v1771 = vpop.f32.mrf.mxu0
      %v1772 = vadd.f32 0.0, %v1771
      %v1773 = vpop.f32.mrf.mxu0
      %1774 = vmatprep.mubr.bf16.mxu0 0
      %1775 = vmatmul.mubr.bf16.gmra.mxu0 %v1681
      %v1776 = vpop.f32.mrf.mxu0
      %v1777 = vadd.f32 0.0, %v1776
      %v1778 = vpop.f32.mrf.mxu0
      %v1779 = vpop.f32.mrf.mxu0
      %v1780 = vadd.f32 0.0, %v1779
      %v1781 = vpop.f32.mrf.mxu0
      %1782 = vdwg.mxu0
      %v1783 = vadd.f32 %v1585, %v1721
      %v1784 = vadd.f32 %v1586, %v1724
      %v1785 = vadd.f32 %v1587, %v1729
      %v1786 = vadd.f32 %v1588, %v1732
      %v1787 = vadd.f32 %v1589, %v1737
      %v1788 = vadd.f32 %v1590, %v1740
      %v1789 = vadd.f32 %v1591, %v1745
      %v1790 = vadd.f32 %v1592, %v1748
      %v1791 = vadd.f32 %v1593, %v1753
      %v1792 = vadd.f32 %v1594, %v1756
      %v1793 = vadd.f32 %v1595, %v1761
      %v1794 = vadd.f32 %v1596, %v1764
      %v1795 = vadd.f32 %v1597, %v1769
      %v1796 = vadd.f32 %v1598, %v1772
      %v1797 = vadd.f32 %v1599, %v1777
      %v1798 = vadd.f32 %v1600, %v1780
      %v1799 = vld [vmem:[%s759] sm:$0xf]
      %v1800 = vld [vmem:[%s759 + $0x4] sm:$0xf]
      %v1801 = vld [vmem:[%s759 + $0x8] sm:$0x1]
      %v1802 = vld [vmem:[%s759 + $0xc] sm:$0xf]
      %v1803 = vld [vmem:[%s759 + $0x10] sm:$0xf]
      %v1804 = vld [vmem:[%s759 + $0x14] sm:$0x1]
      %v1805 = vld [vmem:[%s759 + $0x18] sm:$0xf]
      %v1806 = vld [vmem:[%s759 + $0x1c] sm:$0xf]
      %v1807 = vld [vmem:[%s759 + $0x20] sm:$0x1]
      %v1808 = vld [vmem:[%s759 + $0x24] sm:$0xf]
      %v1809 = vld [vmem:[%s759 + $0x28] sm:$0xf]
      %v1810 = vld [vmem:[%s759 + $0x2c] sm:$0x1]
      %v1811 = vld [vmem:[%s759 + $0x30] sm:$0xf]
      %v1812 = vld [vmem:[%s759 + $0x34] sm:$0xf]
      %v1813 = vld [vmem:[%s759 + $0x38] sm:$0x1]
      %v1814 = vld [vmem:[%s759 + $0x3c] sm:$0xf]
      %v1815 = vld [vmem:[%s759 + $0x40] sm:$0xf]
      %v1816 = vld [vmem:[%s759 + $0x44] sm:$0x1]
      %v1817 = vld [vmem:[%s759 + $0x48] sm:$0xf]
      %v1818 = vld [vmem:[%s759 + $0x4c] sm:$0xf]
      %v1819 = vld [vmem:[%s759 + $0x50] sm:$0x1]
      %v1820 = vld [vmem:[%s759 + $0x54] sm:$0xf]
      %v1821 = vld [vmem:[%s759 + $0x58] sm:$0xf]
      %v1822 = vld [vmem:[%s759 + $0x5c] sm:$0x1]
      %v1824 = vshrl.u32 %v1799, 16
      %v1826 = vrot.slane %v1824, 4
      %v1827 = vshll.u32 %v1799, 16
      %v1829 = vrot.slane %v1827, 5
      %v1830 = vor.u32 %v1826, %v1829
      %v1831 = vrot.slane %v1830, 4
      %v1833 = vshll.u32 %v1800, 16
      %v1835 = vrot.slane %v1833, 5
      %v1836 = vsel %vm843, %v1831, %v1835
      %v1837 = vshrl.u32 %v1800, 16
      %v1839 = vrot.slane %v1837, 4
      %v1840 = vor.u32 %v1839, %v1835
      %v1841 = vrot.slane %v1840, 4
      %v1843 = vshll.u32 %v1801, 16
      %v1845 = vrot.slane %v1843, 5
      %v1846 = vsel %vm843, %v1841, %v1845
      %v1848 = vshrl.u32 %v1802, 16
      %v1850 = vrot.slane %v1848, 4
      %v1851 = vshll.u32 %v1802, 16
      %v1853 = vrot.slane %v1851, 5
      %v1854 = vor.u32 %v1850, %v1853
      %v1855 = vrot.slane %v1854, 4
      %v1857 = vshll.u32 %v1803, 16
      %v1859 = vrot.slane %v1857, 5
      %v1860 = vsel %vm843, %v1855, %v1859
      %v1861 = vshrl.u32 %v1803, 16
      %v1863 = vrot.slane %v1861, 4
      %v1864 = vor.u32 %v1863, %v1859
      %v1865 = vrot.slane %v1864, 4
      %v1867 = vshll.u32 %v1804, 16
      %v1869 = vrot.slane %v1867, 5
      %v1870 = vsel %vm843, %v1865, %v1869
      %v1872 = vshrl.u32 %v1805, 16
      %v1874 = vrot.slane %v1872, 4
      %v1875 = vshll.u32 %v1805, 16
      %v1877 = vrot.slane %v1875, 5
      %v1878 = vor.u32 %v1874, %v1877
      %v1879 = vrot.slane %v1878, 4
      %v1881 = vshll.u32 %v1806, 16
      %v1883 = vrot.slane %v1881, 5
      %v1884 = vsel %vm843, %v1879, %v1883
      %v1885 = vshrl.u32 %v1806, 16
      %v1887 = vrot.slane %v1885, 4
      %v1888 = vor.u32 %v1887, %v1883
      %v1889 = vrot.slane %v1888, 4
      %v1891 = vshll.u32 %v1807, 16
      %v1893 = vrot.slane %v1891, 5
      %v1894 = vsel %vm843, %v1889, %v1893
      %v1896 = vshrl.u32 %v1808, 16
      %v1898 = vrot.slane %v1896, 4
      %v1899 = vshll.u32 %v1808, 16
      %v1901 = vrot.slane %v1899, 5
      %v1902 = vor.u32 %v1898, %v1901
      %v1903 = vrot.slane %v1902, 4
      %v1905 = vshll.u32 %v1809, 16
      %v1907 = vrot.slane %v1905, 5
      %v1908 = vsel %vm843, %v1903, %v1907
      %v1909 = vshrl.u32 %v1809, 16
      %v1911 = vrot.slane %v1909, 4
      %v1912 = vor.u32 %v1911, %v1907
      %v1913 = vrot.slane %v1912, 4
      %v1915 = vshll.u32 %v1810, 16
      %v1917 = vrot.slane %v1915, 5
      %v1918 = vsel %vm843, %v1913, %v1917
      %v1920 = vshrl.u32 %v1811, 16
      %v1922 = vrot.slane %v1920, 4
      %v1923 = vshll.u32 %v1811, 16
      %v1925 = vrot.slane %v1923, 5
      %v1926 = vor.u32 %v1922, %v1925
      %v1927 = vrot.slane %v1926, 4
      %v1929 = vshll.u32 %v1812, 16
      %v1931 = vrot.slane %v1929, 5
      %v1932 = vsel %vm843, %v1927, %v1931
      %v1933 = vshrl.u32 %v1812, 16
      %v1935 = vrot.slane %v1933, 4
      %v1936 = vor.u32 %v1935, %v1931
      %v1937 = vrot.slane %v1936, 4
      %v1939 = vshll.u32 %v1813, 16
      %v1941 = vrot.slane %v1939, 5
      %v1942 = vsel %vm843, %v1937, %v1941
      %v1944 = vshrl.u32 %v1814, 16
      %v1946 = vrot.slane %v1944, 4
      %v1947 = vshll.u32 %v1814, 16
      %v1949 = vrot.slane %v1947, 5
      %v1950 = vor.u32 %v1946, %v1949
      %v1951 = vrot.slane %v1950, 4
      %v1953 = vshll.u32 %v1815, 16
      %v1955 = vrot.slane %v1953, 5
      %v1956 = vsel %vm843, %v1951, %v1955
      %v1957 = vshrl.u32 %v1815, 16
      %v1959 = vrot.slane %v1957, 4
      %v1960 = vor.u32 %v1959, %v1955
      %v1961 = vrot.slane %v1960, 4
      %v1963 = vshll.u32 %v1816, 16
      %v1965 = vrot.slane %v1963, 5
      %v1966 = vsel %vm843, %v1961, %v1965
      %v1968 = vshrl.u32 %v1817, 16
      %v1970 = vrot.slane %v1968, 4
      %v1971 = vshll.u32 %v1817, 16
      %v1973 = vrot.slane %v1971, 5
      %v1974 = vor.u32 %v1970, %v1973
      %v1975 = vrot.slane %v1974, 4
      %v1977 = vshll.u32 %v1818, 16
      %v1979 = vrot.slane %v1977, 5
      %v1980 = vsel %vm843, %v1975, %v1979
      %v1981 = vshrl.u32 %v1818, 16
      %v1983 = vrot.slane %v1981, 4
      %v1984 = vor.u32 %v1983, %v1979
      %v1985 = vrot.slane %v1984, 4
      %v1987 = vshll.u32 %v1819, 16
      %v1989 = vrot.slane %v1987, 5
      %v1990 = vsel %vm843, %v1985, %v1989
      %v1992 = vshrl.u32 %v1820, 16
      %v1994 = vrot.slane %v1992, 4
      %v1995 = vshll.u32 %v1820, 16
      %v1997 = vrot.slane %v1995, 5
      %v1998 = vor.u32 %v1994, %v1997
      %v1999 = vrot.slane %v1998, 4
      %v2001 = vshll.u32 %v1821, 16
      %v2003 = vrot.slane %v2001, 5
      %v2004 = vsel %vm843, %v1999, %v2003
      %v2005 = vshrl.u32 %v1821, 16
      %v2007 = vrot.slane %v2005, 4
      %v2008 = vor.u32 %v2007, %v2003
      %v2009 = vrot.slane %v2008, 4
      %v2011 = vshll.u32 %v1822, 16
      %v2013 = vrot.slane %v2011, 5
      %v2014 = vsel %vm843, %v2009, %v2013
      %s2015 = scalar_lea.vmem %s4, 8
      %v2016 = vld [vmem:[%s2015] sm:$0x3]
      %v2017 = vunpack.c.l.b16 %v1836
      %v2018 = vunpack.c.l.b16 %v1846
      %v2019 = vunpack.c.l.b16 %v1860
      %v2020 = vunpack.c.l.b16 %v1870
      %v2021 = vunpack.c.l.b16 %v1884
      %v2022 = vunpack.c.l.b16 %v1894
      %v2023 = vunpack.c.l.b16 %v1908
      %v2024 = vunpack.c.l.b16 %v1918
      %v2025 = vunpack.c.l.b16 %v1932
      %v2026 = vunpack.c.l.b16 %v1942
      %v2027 = vunpack.c.l.b16 %v1956
      %v2028 = vunpack.c.l.b16 %v1966
      %v2029 = vunpack.c.l.b16 %v1980
      %v2030 = vunpack.c.l.b16 %v1990
      %v2031 = vunpack.c.l.b16 %v2004
      %v2032 = vunpack.c.l.b16 %v2014
      %v2033 = vpack.c.b16 %v2018, %v2017
      %v2034 = vpack.c.b16 %v2020, %v2019
      %v2035 = vpack.c.b16 %v2022, %v2021
      %v2036 = vpack.c.b16 %v2024, %v2023
      %v2037 = vpack.c.b16 %v2026, %v2025
      %v2038 = vpack.c.b16 %v2028, %v2027
      %v2039 = vpack.c.b16 %v2030, %v2029
      %v2040 = vpack.c.b16 %v2032, %v2031
      %v2042 = vsel %vm1062, %v2033, 0
      %v2045 = vsel %vm1062, %v2034, 0
      %v2048 = vsel %vm1062, %v2035, 0
      %v2051 = vsel %vm1062, %v2036, 0
      %v2054 = vsel %vm1062, %v2037, 0
      %v2057 = vsel %vm1062, %v2038, 0
      %v2060 = vsel %vm1062, %v2039, 0
      %v2063 = vsel %vm1062, %v2040, 0
      %v2066 = vsel %vm1087, %v2016, 0
      %2068 = vmatprep.subr.bf16.mxu0 0
      %2069 = vmatpush1.bf16.msra.mxu0 0
      %2070 = vmatprep.subr.bf16.mxu0 0
      %2071 = vmatpush1.bf16.msra.mxu0 0
      %2072 = vmatprep.subr.bf16.mxu0 0
      %2073 = vmatpush1.bf16.msra.mxu0 0
      %2074 = vmatprep.subr.bf16.mxu0 0
      %2075 = vmatpush1.bf16.msra.mxu0 0
      %2076 = vmatprep.subr.bf16.mxu0 0
      %2077 = vmatpush1.bf16.msra.mxu0 0
      %2078 = vmatprep.subr.bf16.mxu0 0
      %2079 = vmatpush1.bf16.msra.mxu0 0
      %2080 = vmatprep.subr.bf16.mxu0 0
      %2081 = vmatpush1.bf16.msra.mxu0 0
      %2082 = vmatprep.subr.bf16.mxu0 0
      %2083 = vmatpush1.bf16.msra.mxu0 %v2066
      %2084 = vmatprep.subr.bf16.mxu0 0
      %2085 = vmatpush2.bf16.msra.mxu0 0
      %2086 = vmatprep.subr.bf16.mxu0 0
      %2087 = vmatpush2.bf16.msra.mxu0 0
      %2088 = vmatprep.subr.bf16.mxu0 0
      %2089 = vmatpush2.bf16.msra.mxu0 0
      %2090 = vmatprep.subr.bf16.mxu0 0
      %2091 = vmatpush2.bf16.msra.mxu0 0
      %2092 = vmatprep.subr.bf16.mxu0 0
      %2093 = vmatpush2.bf16.msra.mxu0 0
      %2094 = vmatprep.subr.bf16.mxu0 0
      %2095 = vmatpush2.bf16.msra.mxu0 0
      %2096 = vmatprep.subr.bf16.mxu0 0
      %2097 = vmatpush2.bf16.msra.mxu0 0
      %2098 = vmatprep.subr.bf16.mxu0 0
      %2099 = vmatpush2.bf16.msra.mxu0 0
      %2100 = vmatprep.mubr.bf16.mxu0 0
      %2101 = vmatmul.mubr.bf16.gmra.mxu0 %v2042
      %v2102 = vpop.f32.mrf.mxu0
      %v2103 = vadd.f32 0.0, %v2102
      %v2104 = vpop.f32.mrf.mxu0
      %v2105 = vpop.f32.mrf.mxu0
      %v2106 = vadd.f32 0.0, %v2105
      %v2107 = vpop.f32.mrf.mxu0
      %2108 = vmatprep.mubr.bf16.mxu0 0
      %2109 = vmatmul.mubr.bf16.gmra.mxu0 %v2045
      %v2110 = vpop.f32.mrf.mxu0
      %v2111 = vadd.f32 0.0, %v2110
      %v2112 = vpop.f32.mrf.mxu0
      %v2113 = vpop.f32.mrf.mxu0
      %v2114 = vadd.f32 0.0, %v2113
      %v2115 = vpop.f32.mrf.mxu0
      %2116 = vmatprep.mubr.bf16.mxu0 0
      %2117 = vmatmul.mubr.bf16.gmra.mxu0 %v2048
      %v2118 = vpop.f32.mrf.mxu0
      %v2119 = vadd.f32 0.0, %v2118
      %v2120 = vpop.f32.mrf.mxu0
      %v2121 = vpop.f32.mrf.mxu0
      %v2122 = vadd.f32 0.0, %v2121
      %v2123 = vpop.f32.mrf.mxu0
      %2124 = vmatprep.mubr.bf16.mxu0 0
      %2125 = vmatmul.mubr.bf16.gmra.mxu0 %v2051
      %v2126 = vpop.f32.mrf.mxu0
      %v2127 = vadd.f32 0.0, %v2126
      %v2128 = vpop.f32.mrf.mxu0
      %v2129 = vpop.f32.mrf.mxu0
      %v2130 = vadd.f32 0.0, %v2129
      %v2131 = vpop.f32.mrf.mxu0
      %2132 = vmatprep.mubr.bf16.mxu0 0
      %2133 = vmatmul.mubr.bf16.gmra.mxu0 %v2054
      %v2134 = vpop.f32.mrf.mxu0
      %v2135 = vadd.f32 0.0, %v2134
      %v2136 = vpop.f32.mrf.mxu0
      %v2137 = vpop.f32.mrf.mxu0
      %v2138 = vadd.f32 0.0, %v2137
      %v2139 = vpop.f32.mrf.mxu0
      %2140 = vmatprep.mubr.bf16.mxu0 0
      %2141 = vmatmul.mubr.bf16.gmra.mxu0 %v2057
      %v2142 = vpop.f32.mrf.mxu0
      %v2143 = vadd.f32 0.0, %v2142
      %v2144 = vpop.f32.mrf.mxu0
      %v2145 = vpop.f32.mrf.mxu0
      %v2146 = vadd.f32 0.0, %v2145
      %v2147 = vpop.f32.mrf.mxu0
      %2148 = vmatprep.mubr.bf16.mxu0 0
      %2149 = vmatmul.mubr.bf16.gmra.mxu0 %v2060
      %v2150 = vpop.f32.mrf.mxu0
      %v2151 = vadd.f32 0.0, %v2150
      %v2152 = vpop.f32.mrf.mxu0
      %v2153 = vpop.f32.mrf.mxu0
      %v2154 = vadd.f32 0.0, %v2153
      %v2155 = vpop.f32.mrf.mxu0
      %2156 = vmatprep.mubr.bf16.mxu0 0
      %2157 = vmatmul.mubr.bf16.gmra.mxu0 %v2063
      %v2158 = vpop.f32.mrf.mxu0
      %v2159 = vadd.f32 0.0, %v2158
      %v2160 = vpop.f32.mrf.mxu0
      %v2161 = vpop.f32.mrf.mxu0
      %v2162 = vadd.f32 0.0, %v2161
      %v2163 = vpop.f32.mrf.mxu0
      %2164 = vdwg.mxu0
      %v2165 = vadd.f32 %v1783, %v2103
      %v2166 = vadd.f32 %v1784, %v2106
      %v2167 = vadd.f32 %v1785, %v2111
      %v2168 = vadd.f32 %v1786, %v2114
      %v2169 = vadd.f32 %v1787, %v2119
      %v2170 = vadd.f32 %v1788, %v2122
      %v2171 = vadd.f32 %v1789, %v2127
      %v2172 = vadd.f32 %v1790, %v2130
      %v2173 = vadd.f32 %v1791, %v2135
      %v2174 = vadd.f32 %v1792, %v2138
      %v2175 = vadd.f32 %v1793, %v2143
      %v2176 = vadd.f32 %v1794, %v2146
      %v2177 = vadd.f32 %v1795, %v2151
      %v2178 = vadd.f32 %v1796, %v2154
      %v2179 = vadd.f32 %v1797, %v2159
      %v2180 = vadd.f32 %v1798, %v2162
      %v2181 = vld [vmem:[%s759] sm:$0xe]
      %v2182 = vld [vmem:[%s759 + $0xc] sm:$0xe]
      %v2183 = vld [vmem:[%s759 + $0x18] sm:$0xe]
      %v2184 = vld [vmem:[%s759 + $0x24] sm:$0xe]
      %v2185 = vld [vmem:[%s759 + $0x30] sm:$0xe]
      %v2186 = vld [vmem:[%s759 + $0x3c] sm:$0xe]
      %v2187 = vld [vmem:[%s759 + $0x48] sm:$0xe]
      %v2188 = vld [vmem:[%s759 + $0x54] sm:$0xe]
      %v2213 = vrot.slane %v2181, 5
      %v2214 = vrot.slane %v2213, 4
      %v2215 = vrot.slane %v1800, 5
      %v2216 = vsel %vm1378, %v2214, %v2215
      %v2217 = vrot.slane %v2215, 4
      %v2218 = vrot.slane %v1801, 5
      %v2219 = vsel %vm1378, %v2217, %v2218
      %v2220 = vrot.slane %v2182, 5
      %v2221 = vrot.slane %v2220, 4
      %v2222 = vrot.slane %v1803, 5
      %v2223 = vsel %vm1378, %v2221, %v2222
      %v2224 = vrot.slane %v2222, 4
      %v2225 = vrot.slane %v1804, 5
      %v2226 = vsel %vm1378, %v2224, %v2225
      %v2227 = vrot.slane %v2183, 5
      %v2228 = vrot.slane %v2227, 4
      %v2229 = vrot.slane %v1806, 5
      %v2230 = vsel %vm1378, %v2228, %v2229
      %v2231 = vrot.slane %v2229, 4
      %v2232 = vrot.slane %v1807, 5
      %v2233 = vsel %vm1378, %v2231, %v2232
      %v2234 = vrot.slane %v2184, 5
      %v2235 = vrot.slane %v2234, 4
      %v2236 = vrot.slane %v1809, 5
      %v2237 = vsel %vm1378, %v2235, %v2236
      %v2238 = vrot.slane %v2236, 4
      %v2239 = vrot.slane %v1810, 5
      %v2240 = vsel %vm1378, %v2238, %v2239
      %v2241 = vrot.slane %v2185, 5
      %v2242 = vrot.slane %v2241, 4
      %v2243 = vrot.slane %v1812, 5
      %v2244 = vsel %vm1378, %v2242, %v2243
      %v2245 = vrot.slane %v2243, 4
      %v2246 = vrot.slane %v1813, 5
      %v2247 = vsel %vm1378, %v2245, %v2246
      %v2248 = vrot.slane %v2186, 5
      %v2249 = vrot.slane %v2248, 4
      %v2250 = vrot.slane %v1815, 5
      %v2251 = vsel %vm1378, %v2249, %v2250
      %v2252 = vrot.slane %v2250, 4
      %v2253 = vrot.slane %v1816, 5
      %v2254 = vsel %vm1378, %v2252, %v2253
      %v2255 = vrot.slane %v2187, 5
      %v2256 = vrot.slane %v2255, 4
      %v2257 = vrot.slane %v1818, 5
      %v2258 = vsel %vm1378, %v2256, %v2257
      %v2259 = vrot.slane %v2257, 4
      %v2260 = vrot.slane %v1819, 5
      %v2261 = vsel %vm1378, %v2259, %v2260
      %v2262 = vrot.slane %v2188, 5
      %v2263 = vrot.slane %v2262, 4
      %v2264 = vrot.slane %v1821, 5
      %v2265 = vsel %vm1378, %v2263, %v2264
      %v2266 = vrot.slane %v2264, 4
      %v2267 = vrot.slane %v1822, 5
      %v2268 = vsel %vm1378, %v2266, %v2267
      %s2269 = scalar_lea.vmem %s4, 10
      %v2270 = vld [vmem:[%s2269] sm:$0x3]
      %v2271 = vunpack.c.l.b16 %v2216
      %v2272 = vunpack.c.l.b16 %v2219
      %v2273 = vunpack.c.l.b16 %v2223
      %v2274 = vunpack.c.l.b16 %v2226
      %v2275 = vunpack.c.l.b16 %v2230
      %v2276 = vunpack.c.l.b16 %v2233
      %v2277 = vunpack.c.l.b16 %v2237
      %v2278 = vunpack.c.l.b16 %v2240
      %v2279 = vunpack.c.l.b16 %v2244
      %v2280 = vunpack.c.l.b16 %v2247
      %v2281 = vunpack.c.l.b16 %v2251
      %v2282 = vunpack.c.l.b16 %v2254
      %v2283 = vunpack.c.l.b16 %v2258
      %v2284 = vunpack.c.l.b16 %v2261
      %v2285 = vunpack.c.l.b16 %v2265
      %v2286 = vunpack.c.l.b16 %v2268
      %v2287 = vpack.c.b16 %v2272, %v2271
      %v2288 = vpack.c.b16 %v2274, %v2273
      %v2289 = vpack.c.b16 %v2276, %v2275
      %v2290 = vpack.c.b16 %v2278, %v2277
      %v2291 = vpack.c.b16 %v2280, %v2279
      %v2292 = vpack.c.b16 %v2282, %v2281
      %v2293 = vpack.c.b16 %v2284, %v2283
      %v2294 = vpack.c.b16 %v2286, %v2285
      %v2296 = vsel %vm1062, %v2287, 0
      %v2299 = vsel %vm1062, %v2288, 0
      %v2302 = vsel %vm1062, %v2289, 0
      %v2305 = vsel %vm1062, %v2290, 0
      %v2308 = vsel %vm1062, %v2291, 0
      %v2311 = vsel %vm1062, %v2292, 0
      %v2314 = vsel %vm1062, %v2293, 0
      %v2317 = vsel %vm1062, %v2294, 0
      %v2320 = vsel %vm1087, %v2270, 0
      %2322 = vmatprep.subr.bf16.mxu0 0
      %2323 = vmatpush1.bf16.msra.mxu0 0
      %2324 = vmatprep.subr.bf16.mxu0 0
      %2325 = vmatpush1.bf16.msra.mxu0 0
      %2326 = vmatprep.subr.bf16.mxu0 0
      %2327 = vmatpush1.bf16.msra.mxu0 0
      %2328 = vmatprep.subr.bf16.mxu0 0
      %2329 = vmatpush1.bf16.msra.mxu0 0
      %2330 = vmatprep.subr.bf16.mxu0 0
      %2331 = vmatpush1.bf16.msra.mxu0 0
      %2332 = vmatprep.subr.bf16.mxu0 0
      %2333 = vmatpush1.bf16.msra.mxu0 0
      %2334 = vmatprep.subr.bf16.mxu0 0
      %2335 = vmatpush1.bf16.msra.mxu0 0
      %2336 = vmatprep.subr.bf16.mxu0 0
      %2337 = vmatpush1.bf16.msra.mxu0 %v2320
      %2338 = vmatprep.subr.bf16.mxu0 0
      %2339 = vmatpush2.bf16.msra.mxu0 0
      %2340 = vmatprep.subr.bf16.mxu0 0
      %2341 = vmatpush2.bf16.msra.mxu0 0
      %2342 = vmatprep.subr.bf16.mxu0 0
      %2343 = vmatpush2.bf16.msra.mxu0 0
      %2344 = vmatprep.subr.bf16.mxu0 0
      %2345 = vmatpush2.bf16.msra.mxu0 0
      %2346 = vmatprep.subr.bf16.mxu0 0
      %2347 = vmatpush2.bf16.msra.mxu0 0
      %2348 = vmatprep.subr.bf16.mxu0 0
      %2349 = vmatpush2.bf16.msra.mxu0 0
      %2350 = vmatprep.subr.bf16.mxu0 0
      %2351 = vmatpush2.bf16.msra.mxu0 0
      %2352 = vmatprep.subr.bf16.mxu0 0
      %2353 = vmatpush2.bf16.msra.mxu0 0
      %2354 = vmatprep.mubr.bf16.mxu0 0
      %2355 = vmatmul.mubr.bf16.gmra.mxu0 %v2296
      %v2356 = vpop.f32.mrf.mxu0
      %v2357 = vadd.f32 0.0, %v2356
      %v2358 = vpop.f32.mrf.mxu0
      %v2359 = vpop.f32.mrf.mxu0
      %v2360 = vadd.f32 0.0, %v2359
      %v2361 = vpop.f32.mrf.mxu0
      %2362 = vmatprep.mubr.bf16.mxu0 0
      %2363 = vmatmul.mubr.bf16.gmra.mxu0 %v2299
      %v2364 = vpop.f32.mrf.mxu0
      %v2365 = vadd.f32 0.0, %v2364
      %v2366 = vpop.f32.mrf.mxu0
      %v2367 = vpop.f32.mrf.mxu0
      %v2368 = vadd.f32 0.0, %v2367
      %v2369 = vpop.f32.mrf.mxu0
      %2370 = vmatprep.mubr.bf16.mxu0 0
      %2371 = vmatmul.mubr.bf16.gmra.mxu0 %v2302
      %v2372 = vpop.f32.mrf.mxu0
      %v2373 = vadd.f32 0.0, %v2372
      %v2374 = vpop.f32.mrf.mxu0
      %v2375 = vpop.f32.mrf.mxu0
      %v2376 = vadd.f32 0.0, %v2375
      %v2377 = vpop.f32.mrf.mxu0
      %2378 = vmatprep.mubr.bf16.mxu0 0
      %2379 = vmatmul.mubr.bf16.gmra.mxu0 %v2305
      %v2380 = vpop.f32.mrf.mxu0
      %v2381 = vadd.f32 0.0, %v2380
      %v2382 = vpop.f32.mrf.mxu0
      %v2383 = vpop.f32.mrf.mxu0
      %v2384 = vadd.f32 0.0, %v2383
      %v2385 = vpop.f32.mrf.mxu0
      %2386 = vmatprep.mubr.bf16.mxu0 0
      %2387 = vmatmul.mubr.bf16.gmra.mxu0 %v2308
      %v2388 = vpop.f32.mrf.mxu0
      %v2389 = vadd.f32 0.0, %v2388
      %v2390 = vpop.f32.mrf.mxu0
      %v2391 = vpop.f32.mrf.mxu0
      %v2392 = vadd.f32 0.0, %v2391
      %v2393 = vpop.f32.mrf.mxu0
      %2394 = vmatprep.mubr.bf16.mxu0 0
      %2395 = vmatmul.mubr.bf16.gmra.mxu0 %v2311
      %v2396 = vpop.f32.mrf.mxu0
      %v2397 = vadd.f32 0.0, %v2396
      %v2398 = vpop.f32.mrf.mxu0
      %v2399 = vpop.f32.mrf.mxu0
      %v2400 = vadd.f32 0.0, %v2399
      %v2401 = vpop.f32.mrf.mxu0
      %2402 = vmatprep.mubr.bf16.mxu0 0
      %2403 = vmatmul.mubr.bf16.gmra.mxu0 %v2314
      %v2404 = vpop.f32.mrf.mxu0
      %v2405 = vadd.f32 0.0, %v2404
      %v2406 = vpop.f32.mrf.mxu0
      %v2407 = vpop.f32.mrf.mxu0
      %v2408 = vadd.f32 0.0, %v2407
      %v2409 = vpop.f32.mrf.mxu0
      %2410 = vmatprep.mubr.bf16.mxu0 0
      %2411 = vmatmul.mubr.bf16.gmra.mxu0 %v2317
      %v2412 = vpop.f32.mrf.mxu0
      %v2413 = vadd.f32 0.0, %v2412
      %v2414 = vpop.f32.mrf.mxu0
      %v2415 = vpop.f32.mrf.mxu0
      %v2416 = vadd.f32 0.0, %v2415
      %v2417 = vpop.f32.mrf.mxu0
      %2418 = vdwg.mxu0
      %v2419 = vadd.f32 %v2165, %v2357
      %v2420 = vadd.f32 %v2166, %v2360
      %v2421 = vadd.f32 %v2167, %v2365
      %v2422 = vadd.f32 %v2168, %v2368
      %v2423 = vadd.f32 %v2169, %v2373
      %v2424 = vadd.f32 %v2170, %v2376
      %v2425 = vadd.f32 %v2171, %v2381
      %v2426 = vadd.f32 %v2172, %v2384
      %v2427 = vadd.f32 %v2173, %v2389
      %v2428 = vadd.f32 %v2174, %v2392
      %v2429 = vadd.f32 %v2175, %v2397
      %v2430 = vadd.f32 %v2176, %v2400
      %v2431 = vadd.f32 %v2177, %v2405
      %v2432 = vadd.f32 %v2178, %v2408
      %v2433 = vadd.f32 %v2179, %v2413
      %v2434 = vadd.f32 %v2180, %v2416
      %s2435 = scalar_lea.vmem [#allocation2], 24
      %v2436 = vld [vmem:[%s2435] sm:$0xf]
      %v2437 = vld [vmem:[%s2435 + $0x4] sm:$0xf]
      %v2438 = vld [vmem:[%s2435 + $0xc] sm:$0xf]
      %v2439 = vld [vmem:[%s2435 + $0x10] sm:$0xf]
      %v2440 = vld [vmem:[%s2435 + $0x18] sm:$0xf]
      %v2441 = vld [vmem:[%s2435 + $0x1c] sm:$0xf]
      %v2442 = vld [vmem:[%s2435 + $0x24] sm:$0xf]
      %v2443 = vld [vmem:[%s2435 + $0x28] sm:$0xf]
      %v2444 = vld [vmem:[%s2435 + $0x30] sm:$0xf]
      %v2445 = vld [vmem:[%s2435 + $0x34] sm:$0xf]
      %v2446 = vld [vmem:[%s2435 + $0x3c] sm:$0xf]
      %v2447 = vld [vmem:[%s2435 + $0x40] sm:$0xf]
      %v2448 = vld [vmem:[%s2435 + $0x48] sm:$0xf]
      %v2449 = vld [vmem:[%s2435 + $0x4c] sm:$0xf]
      %v2450 = vld [vmem:[%s2435 + $0x54] sm:$0xf]
      %v2451 = vld [vmem:[%s2435 + $0x58] sm:$0xf]
      %s2452 = scalar_lea.vmem %s4, 12
      %v2453 = vld [vmem:[%s2452] sm:$0x3]
      %v2470 = vunpack.c.l.b16 %v2436
      %v2471 = vunpack.c.l.b16 %v2437
      %v2472 = vunpack.c.l.b16 %v2438
      %v2473 = vunpack.c.l.b16 %v2439
      %v2474 = vunpack.c.l.b16 %v2440
      %v2475 = vunpack.c.l.b16 %v2441
      %v2476 = vunpack.c.l.b16 %v2442
      %v2477 = vunpack.c.l.b16 %v2443
      %v2478 = vunpack.c.l.b16 %v2444
      %v2479 = vunpack.c.l.b16 %v2445
      %v2480 = vunpack.c.l.b16 %v2446
      %v2481 = vunpack.c.l.b16 %v2447
      %v2482 = vunpack.c.l.b16 %v2448
      %v2483 = vunpack.c.l.b16 %v2449
      %v2484 = vunpack.c.l.b16 %v2450
      %v2485 = vunpack.c.l.b16 %v2451
      %v2486 = vpack.c.b16 %v2471, %v2470
      %v2487 = vpack.c.b16 %v2473, %v2472
      %v2488 = vpack.c.b16 %v2475, %v2474
      %v2489 = vpack.c.b16 %v2477, %v2476
      %v2490 = vpack.c.b16 %v2479, %v2478
      %v2491 = vpack.c.b16 %v2481, %v2480
      %v2492 = vpack.c.b16 %v2483, %v2482
      %v2493 = vpack.c.b16 %v2485, %v2484
      %v2495 = vsel %vm1062, %v2486, 0
      %v2498 = vsel %vm1062, %v2487, 0
      %v2501 = vsel %vm1062, %v2488, 0
      %v2504 = vsel %vm1062, %v2489, 0
      %v2507 = vsel %vm1062, %v2490, 0
      %v2510 = vsel %vm1062, %v2491, 0
      %v2513 = vsel %vm1062, %v2492, 0
      %v2516 = vsel %vm1062, %v2493, 0
      %v2519 = vsel %vm1087, %v2453, 0
      %2521 = vmatprep.subr.bf16.mxu0 0
      %2522 = vmatpush1.bf16.msra.mxu0 0
      %2523 = vmatprep.subr.bf16.mxu0 0
      %2524 = vmatpush1.bf16.msra.mxu0 0
      %2525 = vmatprep.subr.bf16.mxu0 0
      %2526 = vmatpush1.bf16.msra.mxu0 0
      %2527 = vmatprep.subr.bf16.mxu0 0
      %2528 = vmatpush1.bf16.msra.mxu0 0
      %2529 = vmatprep.subr.bf16.mxu0 0
      %2530 = vmatpush1.bf16.msra.mxu0 0
      %2531 = vmatprep.subr.bf16.mxu0 0
      %2532 = vmatpush1.bf16.msra.mxu0 0
      %2533 = vmatprep.subr.bf16.mxu0 0
      %2534 = vmatpush1.bf16.msra.mxu0 0
      %2535 = vmatprep.subr.bf16.mxu0 0
      %2536 = vmatpush1.bf16.msra.mxu0 %v2519
      %2537 = vmatprep.subr.bf16.mxu0 0
      %2538 = vmatpush2.bf16.msra.mxu0 0
      %2539 = vmatprep.subr.bf16.mxu0 0
      %2540 = vmatpush2.bf16.msra.mxu0 0
      %2541 = vmatprep.subr.bf16.mxu0 0
      %2542 = vmatpush2.bf16.msra.mxu0 0
      %2543 = vmatprep.subr.bf16.mxu0 0
      %2544 = vmatpush2.bf16.msra.mxu0 0
      %2545 = vmatprep.subr.bf16.mxu0 0
      %2546 = vmatpush2.bf16.msra.mxu0 0
      %2547 = vmatprep.subr.bf16.mxu0 0
      %2548 = vmatpush2.bf16.msra.mxu0 0
      %2549 = vmatprep.subr.bf16.mxu0 0
      %2550 = vmatpush2.bf16.msra.mxu0 0
      %2551 = vmatprep.subr.bf16.mxu0 0
      %2552 = vmatpush2.bf16.msra.mxu0 0
      %2553 = vmatprep.mubr.bf16.mxu0 0
      %2554 = vmatmul.mubr.bf16.gmra.mxu0 %v2495
      %v2555 = vpop.f32.mrf.mxu0
      %v2556 = vadd.f32 0.0, %v2555
      %v2557 = vpop.f32.mrf.mxu0
      %v2558 = vpop.f32.mrf.mxu0
      %v2559 = vadd.f32 0.0, %v2558
      %v2560 = vpop.f32.mrf.mxu0
      %2561 = vmatprep.mubr.bf16.mxu0 0
      %2562 = vmatmul.mubr.bf16.gmra.mxu0 %v2498
      %v2563 = vpop.f32.mrf.mxu0
      %v2564 = vadd.f32 0.0, %v2563
      %v2565 = vpop.f32.mrf.mxu0
      %v2566 = vpop.f32.mrf.mxu0
      %v2567 = vadd.f32 0.0, %v2566
      %v2568 = vpop.f32.mrf.mxu0
      %2569 = vmatprep.mubr.bf16.mxu0 0
      %2570 = vmatmul.mubr.bf16.gmra.mxu0 %v2501
      %v2571 = vpop.f32.mrf.mxu0
      %v2572 = vadd.f32 0.0, %v2571
      %v2573 = vpop.f32.mrf.mxu0
      %v2574 = vpop.f32.mrf.mxu0
      %v2575 = vadd.f32 0.0, %v2574
      %v2576 = vpop.f32.mrf.mxu0
      %2577 = vmatprep.mubr.bf16.mxu0 0
      %2578 = vmatmul.mubr.bf16.gmra.mxu0 %v2504
      %v2579 = vpop.f32.mrf.mxu0
      %v2580 = vadd.f32 0.0, %v2579
      %v2581 = vpop.f32.mrf.mxu0
      %v2582 = vpop.f32.mrf.mxu0
      %v2583 = vadd.f32 0.0, %v2582
      %v2584 = vpop.f32.mrf.mxu0
      %2585 = vmatprep.mubr.bf16.mxu0 0
      %2586 = vmatmul.mubr.bf16.gmra.mxu0 %v2507
      %v2587 = vpop.f32.mrf.mxu0
      %v2588 = vadd.f32 0.0, %v2587
      %v2589 = vpop.f32.mrf.mxu0
      %v2590 = vpop.f32.mrf.mxu0
      %v2591 = vadd.f32 0.0, %v2590
      %v2592 = vpop.f32.mrf.mxu0
      %2593 = vmatprep.mubr.bf16.mxu0 0
      %2594 = vmatmul.mubr.bf16.gmra.mxu0 %v2510
      %v2595 = vpop.f32.mrf.mxu0
      %v2596 = vadd.f32 0.0, %v2595
      %v2597 = vpop.f32.mrf.mxu0
      %v2598 = vpop.f32.mrf.mxu0
      %v2599 = vadd.f32 0.0, %v2598
      %v2600 = vpop.f32.mrf.mxu0
      %2601 = vmatprep.mubr.bf16.mxu0 0
      %2602 = vmatmul.mubr.bf16.gmra.mxu0 %v2513
      %v2603 = vpop.f32.mrf.mxu0
      %v2604 = vadd.f32 0.0, %v2603
      %v2605 = vpop.f32.mrf.mxu0
      %v2606 = vpop.f32.mrf.mxu0
      %v2607 = vadd.f32 0.0, %v2606
      %v2608 = vpop.f32.mrf.mxu0
      %2609 = vmatprep.mubr.bf16.mxu0 0
      %2610 = vmatmul.mubr.bf16.gmra.mxu0 %v2516
      %v2611 = vpop.f32.mrf.mxu0
      %v2612 = vadd.f32 0.0, %v2611
      %v2613 = vpop.f32.mrf.mxu0
      %v2614 = vpop.f32.mrf.mxu0
      %v2615 = vadd.f32 0.0, %v2614
      %v2616 = vpop.f32.mrf.mxu0
      %2617 = vdwg.mxu0
      %v2618 = vadd.f32 %v2419, %v2556
      %v2619 = vadd.f32 %v2420, %v2559
      %v2620 = vadd.f32 %v2421, %v2564
      %v2621 = vadd.f32 %v2422, %v2567
      %v2622 = vadd.f32 %v2423, %v2572
      %v2623 = vadd.f32 %v2424, %v2575
      %v2624 = vadd.f32 %v2425, %v2580
      %v2625 = vadd.f32 %v2426, %v2583
      %v2626 = vadd.f32 %v2427, %v2588
      %v2627 = vadd.f32 %v2428, %v2591
      %v2628 = vadd.f32 %v2429, %v2596
      %v2629 = vadd.f32 %v2430, %v2599
      %v2630 = vadd.f32 %v2431, %v2604
      %v2631 = vadd.f32 %v2432, %v2607
      %v2632 = vadd.f32 %v2433, %v2612
      %v2633 = vadd.f32 %v2434, %v2615
      %v2634 = vld [vmem:[%s2435] sm:$0xf]
      %v2635 = vld [vmem:[%s2435 + $0x4] sm:$0xf]
      %v2636 = vld [vmem:[%s2435 + $0x8] sm:$0x1]
      %v2637 = vld [vmem:[%s2435 + $0xc] sm:$0xf]
      %v2638 = vld [vmem:[%s2435 + $0x10] sm:$0xf]
      %v2639 = vld [vmem:[%s2435 + $0x14] sm:$0x1]
      %v2640 = vld [vmem:[%s2435 + $0x18] sm:$0xf]
      %v2641 = vld [vmem:[%s2435 + $0x1c] sm:$0xf]
      %v2642 = vld [vmem:[%s2435 + $0x20] sm:$0x1]
      %v2643 = vld [vmem:[%s2435 + $0x24] sm:$0xf]
      %v2644 = vld [vmem:[%s2435 + $0x28] sm:$0xf]
      %v2645 = vld [vmem:[%s2435 + $0x2c] sm:$0x1]
      %v2646 = vld [vmem:[%s2435 + $0x30] sm:$0xf]
      %v2647 = vld [vmem:[%s2435 + $0x34] sm:$0xf]
      %v2648 = vld [vmem:[%s2435 + $0x38] sm:$0x1]
      %v2649 = vld [vmem:[%s2435 + $0x3c] sm:$0xf]
      %v2650 = vld [vmem:[%s2435 + $0x40] sm:$0xf]
      %v2651 = vld [vmem:[%s2435 + $0x44] sm:$0x1]
      %v2652 = vld [vmem:[%s2435 + $0x48] sm:$0xf]
      %v2653 = vld [vmem:[%s2435 + $0x4c] sm:$0xf]
      %v2654 = vld [vmem:[%s2435 + $0x50] sm:$0x1]
      %v2655 = vld [vmem:[%s2435 + $0x54] sm:$0xf]
      %v2656 = vld [vmem:[%s2435 + $0x58] sm:$0xf]
      %v2657 = vld [vmem:[%s2435 + $0x5c] sm:$0x1]
      %v2659 = vshrl.u32 %v2634, 16
      %v2661 = vrot.slane %v2659, 4
      %v2662 = vshll.u32 %v2634, 16
      %v2664 = vrot.slane %v2662, 5
      %v2665 = vor.u32 %v2661, %v2664
      %v2666 = vrot.slane %v2665, 4
      %v2668 = vshll.u32 %v2635, 16
      %v2670 = vrot.slane %v2668, 5
      %v2671 = vsel %vm843, %v2666, %v2670
      %v2672 = vshrl.u32 %v2635, 16
      %v2674 = vrot.slane %v2672, 4
      %v2675 = vor.u32 %v2674, %v2670
      %v2676 = vrot.slane %v2675, 4
      %v2678 = vshll.u32 %v2636, 16
      %v2680 = vrot.slane %v2678, 5
      %v2681 = vsel %vm843, %v2676, %v2680
      %v2683 = vshrl.u32 %v2637, 16
      %v2685 = vrot.slane %v2683, 4
      %v2686 = vshll.u32 %v2637, 16
      %v2688 = vrot.slane %v2686, 5
      %v2689 = vor.u32 %v2685, %v2688
      %v2690 = vrot.slane %v2689, 4
      %v2692 = vshll.u32 %v2638, 16
      %v2694 = vrot.slane %v2692, 5
      %v2695 = vsel %vm843, %v2690, %v2694
      %v2696 = vshrl.u32 %v2638, 16
      %v2698 = vrot.slane %v2696, 4
      %v2699 = vor.u32 %v2698, %v2694
      %v2700 = vrot.slane %v2699, 4
      %v2702 = vshll.u32 %v2639, 16
      %v2704 = vrot.slane %v2702, 5
      %v2705 = vsel %vm843, %v2700, %v2704
      %v2707 = vshrl.u32 %v2640, 16
      %v2709 = vrot.slane %v2707, 4
      %v2710 = vshll.u32 %v2640, 16
      %v2712 = vrot.slane %v2710, 5
      %v2713 = vor.u32 %v2709, %v2712
      %v2714 = vrot.slane %v2713, 4
      %v2716 = vshll.u32 %v2641, 16
      %v2718 = vrot.slane %v2716, 5
      %v2719 = vsel %vm843, %v2714, %v2718
      %v2720 = vshrl.u32 %v2641, 16
      %v2722 = vrot.slane %v2720, 4
      %v2723 = vor.u32 %v2722, %v2718
      %v2724 = vrot.slane %v2723, 4
      %v2726 = vshll.u32 %v2642, 16
      %v2728 = vrot.slane %v2726, 5
      %v2729 = vsel %vm843, %v2724, %v2728
      %v2731 = vshrl.u32 %v2643, 16
      %v2733 = vrot.slane %v2731, 4
      %v2734 = vshll.u32 %v2643, 16
      %v2736 = vrot.slane %v2734, 5
      %v2737 = vor.u32 %v2733, %v2736
      %v2738 = vrot.slane %v2737, 4
      %v2740 = vshll.u32 %v2644, 16
      %v2742 = vrot.slane %v2740, 5
      %v2743 = vsel %vm843, %v2738, %v2742
      %v2744 = vshrl.u32 %v2644, 16
      %v2746 = vrot.slane %v2744, 4
      %v2747 = vor.u32 %v2746, %v2742
      %v2748 = vrot.slane %v2747, 4
      %v2750 = vshll.u32 %v2645, 16
      %v2752 = vrot.slane %v2750, 5
      %v2753 = vsel %vm843, %v2748, %v2752
      %v2755 = vshrl.u32 %v2646, 16
      %v2757 = vrot.slane %v2755, 4
      %v2758 = vshll.u32 %v2646, 16
      %v2760 = vrot.slane %v2758, 5
      %v2761 = vor.u32 %v2757, %v2760
      %v2762 = vrot.slane %v2761, 4
      %v2764 = vshll.u32 %v2647, 16
      %v2766 = vrot.slane %v2764, 5
      %v2767 = vsel %vm843, %v2762, %v2766
      %v2768 = vshrl.u32 %v2647, 16
      %v2770 = vrot.slane %v2768, 4
      %v2771 = vor.u32 %v2770, %v2766
      %v2772 = vrot.slane %v2771, 4
      %v2774 = vshll.u32 %v2648, 16
      %v2776 = vrot.slane %v2774, 5
      %v2777 = vsel %vm843, %v2772, %v2776
      %v2779 = vshrl.u32 %v2649, 16
      %v2781 = vrot.slane %v2779, 4
      %v2782 = vshll.u32 %v2649, 16
      %v2784 = vrot.slane %v2782, 5
      %v2785 = vor.u32 %v2781, %v2784
      %v2786 = vrot.slane %v2785, 4
      %v2788 = vshll.u32 %v2650, 16
      %v2790 = vrot.slane %v2788, 5
      %v2791 = vsel %vm843, %v2786, %v2790
      %v2792 = vshrl.u32 %v2650, 16
      %v2794 = vrot.slane %v2792, 4
      %v2795 = vor.u32 %v2794, %v2790
      %v2796 = vrot.slane %v2795, 4
      %v2798 = vshll.u32 %v2651, 16
      %v2800 = vrot.slane %v2798, 5
      %v2801 = vsel %vm843, %v2796, %v2800
      %v2803 = vshrl.u32 %v2652, 16
      %v2805 = vrot.slane %v2803, 4
      %v2806 = vshll.u32 %v2652, 16
      %v2808 = vrot.slane %v2806, 5
      %v2809 = vor.u32 %v2805, %v2808
      %v2810 = vrot.slane %v2809, 4
      %v2812 = vshll.u32 %v2653, 16
      %v2814 = vrot.slane %v2812, 5
      %v2815 = vsel %vm843, %v2810, %v2814
      %v2816 = vshrl.u32 %v2653, 16
      %v2818 = vrot.slane %v2816, 4
      %v2819 = vor.u32 %v2818, %v2814
      %v2820 = vrot.slane %v2819, 4
      %v2822 = vshll.u32 %v2654, 16
      %v2824 = vrot.slane %v2822, 5
      %v2825 = vsel %vm843, %v2820, %v2824
      %v2827 = vshrl.u32 %v2655, 16
      %v2829 = vrot.slane %v2827, 4
      %v2830 = vshll.u32 %v2655, 16
      %v2832 = vrot.slane %v2830, 5
      %v2833 = vor.u32 %v2829, %v2832
      %v2834 = vrot.slane %v2833, 4
      %v2836 = vshll.u32 %v2656, 16
      %v2838 = vrot.slane %v2836, 5
      %v2839 = vsel %vm843, %v2834, %v2838
      %v2840 = vshrl.u32 %v2656, 16
      %v2842 = vrot.slane %v2840, 4
      %v2843 = vor.u32 %v2842, %v2838
      %v2844 = vrot.slane %v2843, 4
      %v2846 = vshll.u32 %v2657, 16
      %v2848 = vrot.slane %v2846, 5
      %v2849 = vsel %vm843, %v2844, %v2848
      %s2850 = scalar_lea.vmem %s4, 14
      %v2851 = vld [vmem:[%s2850] sm:$0x3]
      %v2852 = vunpack.c.l.b16 %v2671
      %v2853 = vunpack.c.l.b16 %v2681
      %v2854 = vunpack.c.l.b16 %v2695
      %v2855 = vunpack.c.l.b16 %v2705
      %v2856 = vunpack.c.l.b16 %v2719
      %v2857 = vunpack.c.l.b16 %v2729
      %v2858 = vunpack.c.l.b16 %v2743
      %v2859 = vunpack.c.l.b16 %v2753
      %v2860 = vunpack.c.l.b16 %v2767
      %v2861 = vunpack.c.l.b16 %v2777
      %v2862 = vunpack.c.l.b16 %v2791
      %v2863 = vunpack.c.l.b16 %v2801
      %v2864 = vunpack.c.l.b16 %v2815
      %v2865 = vunpack.c.l.b16 %v2825
      %v2866 = vunpack.c.l.b16 %v2839
      %v2867 = vunpack.c.l.b16 %v2849
      %v2868 = vpack.c.b16 %v2853, %v2852
      %v2869 = vpack.c.b16 %v2855, %v2854
      %v2870 = vpack.c.b16 %v2857, %v2856
      %v2871 = vpack.c.b16 %v2859, %v2858
      %v2872 = vpack.c.b16 %v2861, %v2860
      %v2873 = vpack.c.b16 %v2863, %v2862
      %v2874 = vpack.c.b16 %v2865, %v2864
      %v2875 = vpack.c.b16 %v2867, %v2866
      %v2877 = vsel %vm1062, %v2868, 0
      %v2880 = vsel %vm1062, %v2869, 0
      %v2883 = vsel %vm1062, %v2870, 0
      %v2886 = vsel %vm1062, %v2871, 0
      %v2889 = vsel %vm1062, %v2872, 0
      %v2892 = vsel %vm1062, %v2873, 0
      %v2895 = vsel %vm1062, %v2874, 0
      %v2898 = vsel %vm1062, %v2875, 0
      %v2901 = vsel %vm1087, %v2851, 0
      %2903 = vmatprep.subr.bf16.mxu0 0
      %2904 = vmatpush1.bf16.msra.mxu0 0
      %2905 = vmatprep.subr.bf16.mxu0 0
      %2906 = vmatpush1.bf16.msra.mxu0 0
      %2907 = vmatprep.subr.bf16.mxu0 0
      %2908 = vmatpush1.bf16.msra.mxu0 0
      %2909 = vmatprep.subr.bf16.mxu0 0
      %2910 = vmatpush1.bf16.msra.mxu0 0
      %2911 = vmatprep.subr.bf16.mxu0 0
      %2912 = vmatpush1.bf16.msra.mxu0 0
      %2913 = vmatprep.subr.bf16.mxu0 0
      %2914 = vmatpush1.bf16.msra.mxu0 0
      %2915 = vmatprep.subr.bf16.mxu0 0
      %2916 = vmatpush1.bf16.msra.mxu0 0
      %2917 = vmatprep.subr.bf16.mxu0 0
      %2918 = vmatpush1.bf16.msra.mxu0 %v2901
      %2919 = vmatprep.subr.bf16.mxu0 0
      %2920 = vmatpush2.bf16.msra.mxu0 0
      %2921 = vmatprep.subr.bf16.mxu0 0
      %2922 = vmatpush2.bf16.msra.mxu0 0
      %2923 = vmatprep.subr.bf16.mxu0 0
      %2924 = vmatpush2.bf16.msra.mxu0 0
      %2925 = vmatprep.subr.bf16.mxu0 0
      %2926 = vmatpush2.bf16.msra.mxu0 0
      %2927 = vmatprep.subr.bf16.mxu0 0
      %2928 = vmatpush2.bf16.msra.mxu0 0
      %2929 = vmatprep.subr.bf16.mxu0 0
      %2930 = vmatpush2.bf16.msra.mxu0 0
      %2931 = vmatprep.subr.bf16.mxu0 0
      %2932 = vmatpush2.bf16.msra.mxu0 0
      %2933 = vmatprep.subr.bf16.mxu0 0
      %2934 = vmatpush2.bf16.msra.mxu0 0
      %2935 = vmatprep.mubr.bf16.mxu0 0
      %2936 = vmatmul.mubr.bf16.gmra.mxu0 %v2877
      %v2937 = vpop.f32.mrf.mxu0
      %v2938 = vadd.f32 0.0, %v2937
      %v2939 = vpop.f32.mrf.mxu0
      %v2940 = vpop.f32.mrf.mxu0
      %v2941 = vadd.f32 0.0, %v2940
      %v2942 = vpop.f32.mrf.mxu0
      %2943 = vmatprep.mubr.bf16.mxu0 0
      %2944 = vmatmul.mubr.bf16.gmra.mxu0 %v2880
      %v2945 = vpop.f32.mrf.mxu0
      %v2946 = vadd.f32 0.0, %v2945
      %v2947 = vpop.f32.mrf.mxu0
      %v2948 = vpop.f32.mrf.mxu0
      %v2949 = vadd.f32 0.0, %v2948
      %v2950 = vpop.f32.mrf.mxu0
      %2951 = vmatprep.mubr.bf16.mxu0 0
      %2952 = vmatmul.mubr.bf16.gmra.mxu0 %v2883
      %v2953 = vpop.f32.mrf.mxu0
      %v2954 = vadd.f32 0.0, %v2953
      %v2955 = vpop.f32.mrf.mxu0
      %v2956 = vpop.f32.mrf.mxu0
      %v2957 = vadd.f32 0.0, %v2956
      %v2958 = vpop.f32.mrf.mxu0
      %2959 = vmatprep.mubr.bf16.mxu0 0
      %2960 = vmatmul.mubr.bf16.gmra.mxu0 %v2886
      %v2961 = vpop.f32.mrf.mxu0
      %v2962 = vadd.f32 0.0, %v2961
      %v2963 = vpop.f32.mrf.mxu0
      %v2964 = vpop.f32.mrf.mxu0
      %v2965 = vadd.f32 0.0, %v2964
      %v2966 = vpop.f32.mrf.mxu0
      %2967 = vmatprep.mubr.bf16.mxu0 0
      %2968 = vmatmul.mubr.bf16.gmra.mxu0 %v2889
      %v2969 = vpop.f32.mrf.mxu0
      %v2970 = vadd.f32 0.0, %v2969
      %v2971 = vpop.f32.mrf.mxu0
      %v2972 = vpop.f32.mrf.mxu0
      %v2973 = vadd.f32 0.0, %v2972
      %v2974 = vpop.f32.mrf.mxu0
      %2975 = vmatprep.mubr.bf16.mxu0 0
      %2976 = vmatmul.mubr.bf16.gmra.mxu0 %v2892
      %v2977 = vpop.f32.mrf.mxu0
      %v2978 = vadd.f32 0.0, %v2977
      %v2979 = vpop.f32.mrf.mxu0
      %v2980 = vpop.f32.mrf.mxu0
      %v2981 = vadd.f32 0.0, %v2980
      %v2982 = vpop.f32.mrf.mxu0
      %2983 = vmatprep.mubr.bf16.mxu0 0
      %2984 = vmatmul.mubr.bf16.gmra.mxu0 %v2895
      %v2985 = vpop.f32.mrf.mxu0
      %v2986 = vadd.f32 0.0, %v2985
      %v2987 = vpop.f32.mrf.mxu0
      %v2988 = vpop.f32.mrf.mxu0
      %v2989 = vadd.f32 0.0, %v2988
      %v2990 = vpop.f32.mrf.mxu0
      %2991 = vmatprep.mubr.bf16.mxu0 0
      %2992 = vmatmul.mubr.bf16.gmra.mxu0 %v2898
      %v2993 = vpop.f32.mrf.mxu0
      %v2994 = vadd.f32 0.0, %v2993
      %v2995 = vpop.f32.mrf.mxu0
      %v2996 = vpop.f32.mrf.mxu0
      %v2997 = vadd.f32 0.0, %v2996
      %v2998 = vpop.f32.mrf.mxu0
      %2999 = vdwg.mxu0
      %v3000 = vadd.f32 %v2618, %v2938
      %v3001 = vadd.f32 %v2619, %v2941
      %v3002 = vadd.f32 %v2620, %v2946
      %v3003 = vadd.f32 %v2621, %v2949
      %v3004 = vadd.f32 %v2622, %v2954
      %v3005 = vadd.f32 %v2623, %v2957
      %v3006 = vadd.f32 %v2624, %v2962
      %v3007 = vadd.f32 %v2625, %v2965
      %v3008 = vadd.f32 %v2626, %v2970
      %v3009 = vadd.f32 %v2627, %v2973
      %v3010 = vadd.f32 %v2628, %v2978
      %v3011 = vadd.f32 %v2629, %v2981
      %v3012 = vadd.f32 %v2630, %v2986
      %v3013 = vadd.f32 %v2631, %v2989
      %v3014 = vadd.f32 %v2632, %v2994
      %v3015 = vadd.f32 %v2633, %v2997
      %v3016 = vld [vmem:[%s2435] sm:$0xe]
      %v3017 = vld [vmem:[%s2435 + $0xc] sm:$0xe]
      %v3018 = vld [vmem:[%s2435 + $0x18] sm:$0xe]
      %v3019 = vld [vmem:[%s2435 + $0x24] sm:$0xe]
      %v3020 = vld [vmem:[%s2435 + $0x30] sm:$0xe]
      %v3021 = vld [vmem:[%s2435 + $0x3c] sm:$0xe]
      %v3022 = vld [vmem:[%s2435 + $0x48] sm:$0xe]
      %v3023 = vld [vmem:[%s2435 + $0x54] sm:$0xe]
      %v3048 = vrot.slane %v3016, 5
      %v3049 = vrot.slane %v3048, 4
      %v3050 = vrot.slane %v2635, 5
      %v3051 = vsel %vm1378, %v3049, %v3050
      %v3052 = vrot.slane %v3050, 4
      %v3053 = vrot.slane %v2636, 5
      %v3054 = vsel %vm1378, %v3052, %v3053
      %v3055 = vrot.slane %v3017, 5
      %v3056 = vrot.slane %v3055, 4
      %v3057 = vrot.slane %v2638, 5
      %v3058 = vsel %vm1378, %v3056, %v3057
      %v3059 = vrot.slane %v3057, 4
      %v3060 = vrot.slane %v2639, 5
      %v3061 = vsel %vm1378, %v3059, %v3060
      %v3062 = vrot.slane %v3018, 5
      %v3063 = vrot.slane %v3062, 4
      %v3064 = vrot.slane %v2641, 5
      %v3065 = vsel %vm1378, %v3063, %v3064
      %v3066 = vrot.slane %v3064, 4
      %v3067 = vrot.slane %v2642, 5
      %v3068 = vsel %vm1378, %v3066, %v3067
      %v3069 = vrot.slane %v3019, 5
      %v3070 = vrot.slane %v3069, 4
      %v3071 = vrot.slane %v2644, 5
      %v3072 = vsel %vm1378, %v3070, %v3071
      %v3073 = vrot.slane %v3071, 4
      %v3074 = vrot.slane %v2645, 5
      %v3075 = vsel %vm1378, %v3073, %v3074
      %v3076 = vrot.slane %v3020, 5
      %v3077 = vrot.slane %v3076, 4
      %v3078 = vrot.slane %v2647, 5
      %v3079 = vsel %vm1378, %v3077, %v3078
      %v3080 = vrot.slane %v3078, 4
      %v3081 = vrot.slane %v2648, 5
      %v3082 = vsel %vm1378, %v3080, %v3081
      %v3083 = vrot.slane %v3021, 5
      %v3084 = vrot.slane %v3083, 4
      %v3085 = vrot.slane %v2650, 5
      %v3086 = vsel %vm1378, %v3084, %v3085
      %v3087 = vrot.slane %v3085, 4
      %v3088 = vrot.slane %v2651, 5
      %v3089 = vsel %vm1378, %v3087, %v3088
      %v3090 = vrot.slane %v3022, 5
      %v3091 = vrot.slane %v3090, 4
      %v3092 = vrot.slane %v2653, 5
      %v3093 = vsel %vm1378, %v3091, %v3092
      %v3094 = vrot.slane %v3092, 4
      %v3095 = vrot.slane %v2654, 5
      %v3096 = vsel %vm1378, %v3094, %v3095
      %v3097 = vrot.slane %v3023, 5
      %v3098 = vrot.slane %v3097, 4
      %v3099 = vrot.slane %v2656, 5
      %v3100 = vsel %vm1378, %v3098, %v3099
      %v3101 = vrot.slane %v3099, 4
      %v3102 = vrot.slane %v2657, 5
      %v3103 = vsel %vm1378, %v3101, %v3102
      %s3104 = scalar_lea.vmem %s4, 16
      %v3105 = vld [vmem:[%s3104] sm:$0x3]
      %v3106 = vunpack.c.l.b16 %v3051
      %v3107 = vunpack.c.l.b16 %v3054
      %v3108 = vunpack.c.l.b16 %v3058
      %v3109 = vunpack.c.l.b16 %v3061
      %v3110 = vunpack.c.l.b16 %v3065
      %v3111 = vunpack.c.l.b16 %v3068
      %v3112 = vunpack.c.l.b16 %v3072
      %v3113 = vunpack.c.l.b16 %v3075
      %v3114 = vunpack.c.l.b16 %v3079
      %v3115 = vunpack.c.l.b16 %v3082
      %v3116 = vunpack.c.l.b16 %v3086
      %v3117 = vunpack.c.l.b16 %v3089
      %v3118 = vunpack.c.l.b16 %v3093
      %v3119 = vunpack.c.l.b16 %v3096
      %v3120 = vunpack.c.l.b16 %v3100
      %v3121 = vunpack.c.l.b16 %v3103
      %v3122 = vpack.c.b16 %v3107, %v3106
      %v3123 = vpack.c.b16 %v3109, %v3108
      %v3124 = vpack.c.b16 %v3111, %v3110
      %v3125 = vpack.c.b16 %v3113, %v3112
      %v3126 = vpack.c.b16 %v3115, %v3114
      %v3127 = vpack.c.b16 %v3117, %v3116
      %v3128 = vpack.c.b16 %v3119, %v3118
      %v3129 = vpack.c.b16 %v3121, %v3120
      %v3131 = vsel %vm1062, %v3122, 0
      %v3134 = vsel %vm1062, %v3123, 0
      %v3137 = vsel %vm1062, %v3124, 0
      %v3140 = vsel %vm1062, %v3125, 0
      %v3143 = vsel %vm1062, %v3126, 0
      %v3146 = vsel %vm1062, %v3127, 0
      %v3149 = vsel %vm1062, %v3128, 0
      %v3152 = vsel %vm1062, %v3129, 0
      %v3155 = vsel %vm1087, %v3105, 0
      %3157 = vmatprep.subr.bf16.mxu0 0
      %3158 = vmatpush1.bf16.msra.mxu0 0
      %3159 = vmatprep.subr.bf16.mxu0 0
      %3160 = vmatpush1.bf16.msra.mxu0 0
      %3161 = vmatprep.subr.bf16.mxu0 0
      %3162 = vmatpush1.bf16.msra.mxu0 0
      %3163 = vmatprep.subr.bf16.mxu0 0
      %3164 = vmatpush1.bf16.msra.mxu0 0
      %3165 = vmatprep.subr.bf16.mxu0 0
      %3166 = vmatpush1.bf16.msra.mxu0 0
      %3167 = vmatprep.subr.bf16.mxu0 0
      %3168 = vmatpush1.bf16.msra.mxu0 0
      %3169 = vmatprep.subr.bf16.mxu0 0
      %3170 = vmatpush1.bf16.msra.mxu0 0
      %3171 = vmatprep.subr.bf16.mxu0 0
      %3172 = vmatpush1.bf16.msra.mxu0 %v3155
      %3173 = vmatprep.subr.bf16.mxu0 0
      %3174 = vmatpush2.bf16.msra.mxu0 0
      %3175 = vmatprep.subr.bf16.mxu0 0
      %3176 = vmatpush2.bf16.msra.mxu0 0
      %3177 = vmatprep.subr.bf16.mxu0 0
      %3178 = vmatpush2.bf16.msra.mxu0 0
      %3179 = vmatprep.subr.bf16.mxu0 0
      %3180 = vmatpush2.bf16.msra.mxu0 0
      %3181 = vmatprep.subr.bf16.mxu0 0
      %3182 = vmatpush2.bf16.msra.mxu0 0
      %3183 = vmatprep.subr.bf16.mxu0 0
      %3184 = vmatpush2.bf16.msra.mxu0 0
      %3185 = vmatprep.subr.bf16.mxu0 0
      %3186 = vmatpush2.bf16.msra.mxu0 0
      %3187 = vmatprep.subr.bf16.mxu0 0
      %3188 = vmatpush2.bf16.msra.mxu0 0
      %3189 = vmatprep.mubr.bf16.mxu0 0
      %3190 = vmatmul.mubr.bf16.gmra.mxu0 %v3131
      %v3191 = vpop.f32.mrf.mxu0
      %v3192 = vadd.f32 0.0, %v3191
      %v3193 = vpop.f32.mrf.mxu0
      %v3194 = vpop.f32.mrf.mxu0
      %v3195 = vadd.f32 0.0, %v3194
      %v3196 = vpop.f32.mrf.mxu0
      %3197 = vmatprep.mubr.bf16.mxu0 0
      %3198 = vmatmul.mubr.bf16.gmra.mxu0 %v3134
      %v3199 = vpop.f32.mrf.mxu0
      %v3200 = vadd.f32 0.0, %v3199
      %v3201 = vpop.f32.mrf.mxu0
      %v3202 = vpop.f32.mrf.mxu0
      %v3203 = vadd.f32 0.0, %v3202
      %v3204 = vpop.f32.mrf.mxu0
      %3205 = vmatprep.mubr.bf16.mxu0 0
      %3206 = vmatmul.mubr.bf16.gmra.mxu0 %v3137
      %v3207 = vpop.f32.mrf.mxu0
      %v3208 = vadd.f32 0.0, %v3207
      %v3209 = vpop.f32.mrf.mxu0
      %v3210 = vpop.f32.mrf.mxu0
      %v3211 = vadd.f32 0.0, %v3210
      %v3212 = vpop.f32.mrf.mxu0
      %3213 = vmatprep.mubr.bf16.mxu0 0
      %3214 = vmatmul.mubr.bf16.gmra.mxu0 %v3140
      %v3215 = vpop.f32.mrf.mxu0
      %v3216 = vadd.f32 0.0, %v3215
      %v3217 = vpop.f32.mrf.mxu0
      %v3218 = vpop.f32.mrf.mxu0
      %v3219 = vadd.f32 0.0, %v3218
      %v3220 = vpop.f32.mrf.mxu0
      %3221 = vmatprep.mubr.bf16.mxu0 0
      %3222 = vmatmul.mubr.bf16.gmra.mxu0 %v3143
      %v3223 = vpop.f32.mrf.mxu0
      %v3224 = vadd.f32 0.0, %v3223
      %v3225 = vpop.f32.mrf.mxu0
      %v3226 = vpop.f32.mrf.mxu0
      %v3227 = vadd.f32 0.0, %v3226
      %v3228 = vpop.f32.mrf.mxu0
      %3229 = vmatprep.mubr.bf16.mxu0 0
      %3230 = vmatmul.mubr.bf16.gmra.mxu0 %v3146
      %v3231 = vpop.f32.mrf.mxu0
      %v3232 = vadd.f32 0.0, %v3231
      %v3233 = vpop.f32.mrf.mxu0
      %v3234 = vpop.f32.mrf.mxu0
      %v3235 = vadd.f32 0.0, %v3234
      %v3236 = vpop.f32.mrf.mxu0
      %3237 = vmatprep.mubr.bf16.mxu0 0
      %3238 = vmatmul.mubr.bf16.gmra.mxu0 %v3149
      %v3239 = vpop.f32.mrf.mxu0
      %v3240 = vadd.f32 0.0, %v3239
      %v3241 = vpop.f32.mrf.mxu0
      %v3242 = vpop.f32.mrf.mxu0
      %v3243 = vadd.f32 0.0, %v3242
      %v3244 = vpop.f32.mrf.mxu0
      %3245 = vmatprep.mubr.bf16.mxu0 0
      %3246 = vmatmul.mubr.bf16.gmra.mxu0 %v3152
      %v3247 = vpop.f32.mrf.mxu0
      %v3248 = vadd.f32 0.0, %v3247
      %v3249 = vpop.f32.mrf.mxu0
      %v3250 = vpop.f32.mrf.mxu0
      %v3251 = vadd.f32 0.0, %v3250
      %v3252 = vpop.f32.mrf.mxu0
      %3253 = vdwg.mxu0
      %v3254 = vadd.f32 %v3000, %v3192
      %v3255 = vadd.f32 %v3001, %v3195
      %v3256 = vadd.f32 %v3002, %v3200
      %v3257 = vadd.f32 %v3003, %v3203
      %v3258 = vadd.f32 %v3004, %v3208
      %v3259 = vadd.f32 %v3005, %v3211
      %v3260 = vadd.f32 %v3006, %v3216
      %v3261 = vadd.f32 %v3007, %v3219
      %v3262 = vadd.f32 %v3008, %v3224
      %v3263 = vadd.f32 %v3009, %v3227
      %v3264 = vadd.f32 %v3010, %v3232
      %v3265 = vadd.f32 %v3011, %v3235
      %v3266 = vadd.f32 %v3012, %v3240
      %v3267 = vadd.f32 %v3013, %v3243
      %v3268 = vadd.f32 %v3014, %v3248
      %v3269 = vadd.f32 %v3015, %v3251
      %v3270 = vpack.c.bf16 %v3255, %v3254
      %v3271 = vpack.c.bf16 %v3257, %v3256
      %v3272 = vpack.c.bf16 %v3259, %v3258
      %v3273 = vpack.c.bf16 %v3261, %v3260
      %v3274 = vpack.c.bf16 %v3263, %v3262
      %v3275 = vpack.c.bf16 %v3265, %v3264
      %v3276 = vpack.c.bf16 %v3267, %v3266
      %v3277 = vpack.c.bf16 %v3269, %v3268
      %v3286 = vunpack.c.l.b16 %v3270
      %v3287 = vunpack.c.h.b16 %v3270
      %v3288 = vunpack.c.l.b16 %v3271
      %v3289 = vunpack.c.h.b16 %v3271
      %v3290 = vunpack.c.l.b16 %v3272
      %v3291 = vunpack.c.h.b16 %v3272
      %v3292 = vunpack.c.l.b16 %v3273
      %v3293 = vunpack.c.h.b16 %v3273
      %v3294 = vunpack.c.l.b16 %v3274
      %v3295 = vunpack.c.h.b16 %v3274
      %v3296 = vunpack.c.l.b16 %v3275
      %v3297 = vunpack.c.h.b16 %v3275
      %v3298 = vunpack.c.l.b16 %v3276
      %v3299 = vunpack.c.h.b16 %v3276
      %v3300 = vunpack.c.l.b16 %v3277
      %v3301 = vunpack.c.h.b16 %v3277
      %v3302 = vpack.c.b16 %v3286, %v3286
      %v3303 = vpack.c.b16 %v3287, %v3287
      %v3304 = vpack.c.b16 %v3288, %v3288
      %v3305 = vpack.c.b16 %v3289, %v3289
      %v3306 = vpack.c.b16 %v3290, %v3290
      %v3307 = vpack.c.b16 %v3291, %v3291
      %v3308 = vpack.c.b16 %v3292, %v3292
      %v3309 = vpack.c.b16 %v3293, %v3293
      %v3310 = vpack.c.b16 %v3294, %v3294
      %v3311 = vpack.c.b16 %v3295, %v3295
      %v3312 = vpack.c.b16 %v3296, %v3296
      %v3313 = vpack.c.b16 %v3297, %v3297
      %v3314 = vpack.c.b16 %v3298, %v3298
      %v3315 = vpack.c.b16 %v3299, %v3299
      %v3316 = vpack.c.b16 %v3300, %v3300
      %v3317 = vpack.c.b16 %v3301, %v3301
      %3334 = vst [vmem:[%s431] sm:$0xf] %v3302
      %3335 = vst [vmem:[%s431 + $0x4] sm:$0xf] %v3303
      %3336 = vst [vmem:[%s431 + $0x8] sm:$0xf] %v3304
      %3337 = vst [vmem:[%s431 + $0xc] sm:$0xf] %v3305
      %3338 = vst [vmem:[%s431 + $0x10] sm:$0xf] %v3306
      %3339 = vst [vmem:[%s431 + $0x14] sm:$0xf] %v3307
      %3340 = vst [vmem:[%s431 + $0x18] sm:$0xf] %v3308
      %3341 = vst [vmem:[%s431 + $0x1c] sm:$0xf] %v3309
      %3342 = vst [vmem:[%s431 + $0x20] sm:$0xf] %v3310
      %3343 = vst [vmem:[%s431 + $0x24] sm:$0xf] %v3311
      %3344 = vst [vmem:[%s431 + $0x28] sm:$0xf] %v3312
      %3345 = vst [vmem:[%s431 + $0x2c] sm:$0xf] %v3313
      %3346 = vst [vmem:[%s431 + $0x30] sm:$0xf] %v3314
      %3347 = vst [vmem:[%s431 + $0x34] sm:$0xf] %v3315
      %3348 = vst [vmem:[%s431 + $0x38] sm:$0xf] %v3316
      %3349 = vst [vmem:[%s431 + $0x3c] sm:$0xf] %v3317
      %v3350 = vadd.f32 %v3254, %v3255
      %v3351 = vadd.f32 %v3350, %v3256
      %v3352 = vadd.f32 %v3351, %v3257
      %v3353 = vadd.f32 %v3352, %v3258
      %v3354 = vadd.f32 %v3353, %v3259
      %v3355 = vadd.f32 %v3354, %v3260
      %v3356 = vadd.f32 %v3355, %v3261
      %v3357 = vadd.f32 %v3356, %v3262
      %v3358 = vadd.f32 %v3357, %v3263
      %v3359 = vadd.f32 %v3358, %v3264
      %v3360 = vadd.f32 %v3359, %v3265
      %v3361 = vadd.f32 %v3360, %v3266
      %v3362 = vadd.f32 %v3361, %v3267
      %v3363 = vadd.f32 %v3362, %v3268
      %v3364 = vadd.f32 %v3363, %v3269
      %v3365 = vrot.slane %v3364, 4
      %v3366 = vadd.f32 %v3364, %v3365
      %v3367 = vrot.slane %v3366, 2
      %v3368 = vadd.f32 %v3366, %v3367
      %v3369 = vrot.slane %v3368, 1
      %v3370 = vadd.f32 %v3368, %v3369
      %v3371 = vmul.f32 %v3254, %v3254
      %v3372 = vmul.f32 %v3255, %v3255
      %v3373 = vmul.f32 %v3256, %v3256
      %v3374 = vmul.f32 %v3257, %v3257
      %v3375 = vmul.f32 %v3258, %v3258
      %v3376 = vmul.f32 %v3259, %v3259
      %v3377 = vmul.f32 %v3260, %v3260
      %v3378 = vmul.f32 %v3261, %v3261
      %v3379 = vmul.f32 %v3262, %v3262
      %v3380 = vmul.f32 %v3263, %v3263
      %v3381 = vmul.f32 %v3264, %v3264
      %v3382 = vmul.f32 %v3265, %v3265
      %v3383 = vmul.f32 %v3266, %v3266
      %v3384 = vmul.f32 %v3267, %v3267
      %v3385 = vmul.f32 %v3268, %v3268
      %v3386 = vmul.f32 %v3269, %v3269
      %v3387 = vadd.f32 %v3371, %v3372
      %v3388 = vadd.f32 %v3387, %v3373
      %v3389 = vadd.f32 %v3388, %v3374
      %v3390 = vadd.f32 %v3389, %v3375
      %v3391 = vadd.f32 %v3390, %v3376
      %v3392 = vadd.f32 %v3391, %v3377
      %v3393 = vadd.f32 %v3392, %v3378
      %v3394 = vadd.f32 %v3393, %v3379
      %v3395 = vadd.f32 %v3394, %v3380
      %v3396 = vadd.f32 %v3395, %v3381
      %v3397 = vadd.f32 %v3396, %v3382
      %v3398 = vadd.f32 %v3397, %v3383
      %v3399 = vadd.f32 %v3398, %v3384
      %v3400 = vadd.f32 %v3399, %v3385
      %v3401 = vadd.f32 %v3400, %v3386
      %v3402 = vrot.slane %v3401, 4
      %v3403 = vadd.f32 %v3401, %v3402
      %v3404 = vrot.slane %v3403, 2
      %v3405 = vadd.f32 %v3403, %v3404
      %v3406 = vrot.slane %v3405, 1
      %v3407 = vadd.f32 %v3405, %v3406
      %vm3408 = vcmask 1040384
      %v3409 = vsel %vm3408, %v3370, %v3407
      %3410 = vst [vmem:[%s440] sm:$0x3] %v3409
      %s3411 = smul.u32 8, %s23
      %p3412 = scmp.lt.s32.totalorder %s22, 1
      %s3413 = scalar_select %p3412, %s22, 1
      %p3414 = scmp.lt.s32.totalorder %s3411, 15
      %s3415 = scalar_select %p3414, %s3411, 15
      %s3416 = smul.addr %s3415, 2
      %s3417 = smul.addr %s3413, 32
      %s3418 = sadd.s32 %s3416, %s3417
      %s3419 = smul.addr %s3418, 4
      %s3420 = scalar_lea.vmem %s5, %s3419
      %p3421 = scmp.lt.s32.totalorder %s22, 1
      %s3422 = scalar_select %p3421, %s22, 1
      %p3423 = scmp.lt.s32.totalorder %s23, 1
      %s3424 = scalar_select %p3423, %s23, 1
      %s3425 = smul.addr %s3422, 2
      %s3426 = sadd.s32 %s3424, %s3425
      %s3427 = smul.addr %s3426, 2
      %s3428 = scalar_lea.vmem %s6, %s3427
      // Predicated region
      $region41: #{double_conv.3} parent=39 // pred_check
        %p3429 = pneg %p192
      $region42: #{double_conv.3} parent=39 // pred_check_branch
        %3431 = sbr.rel (%p3429) target = $region44
      $region43: #{double_conv.3} parent=39 // pred_region
        %s3432 = smul.u32 8, %s23
      $region44: #{double_conv.3} parent=39 // pred_fallthru
        _
      // Predicated region
      $region45: #{double_conv.3} parent=39 // pred_check
        %p3433 = pneg %p220
      $region46: #{double_conv.3} parent=39 // pred_check_branch
        %3435 = sbr.rel (%p3433) target = $region48
      $region47: #{double_conv.3} parent=39 // pred_region
        _
      $region48: #{double_conv.3} parent=39 // pred_fallthru
        _
    $region40: #{double_conv.3} parent=5 // pred_fallthru
      _
    %p3436 = scmp.le.s32.totalorder 2, %s13
    // Predicated region
    $region49: #{double_conv.3} parent=5 // pred_check
      %p3437 = pneg %p3436
    $region50: #{double_conv.3} parent=5 // pred_check_branch
      %3439 = sbr.rel (%p3437) target = $region52
    $region51: #{double_conv.3} parent=5 // pred_region
      %s3440 = ssub.s32 %s13, 2
      // Predicated region
      $region53: #{double_conv.3} parent=51 // pred_check
        %p3441 = pneg %p198
      $region54: #{double_conv.3} parent=51 // pred_check_branch
        %3443 = sbr.rel (%p3441) target = $region56
      $region55: #{double_conv.3} parent=51 // pred_region
        %s3444 = smul.u32 8, %s25
        %p3445 = scmp.lt.s32.totalorder %s24, 1
        %s3446 = scalar_select %p3445, %s24, 1
        %p3447 = scmp.lt.s32.totalorder %s3444, 15
        %s3448 = scalar_select %p3447, %s3444, 15
        %s3449 = smul.addr %s3448, 2
        %s3450 = smul.addr %s3446, 32
        %s3451 = sadd.s32 %s3449, %s3450
        %s3452 = smul.addr %s3451, 4
        %s3453 = scalar_lea.vmem %s5, %s3452
      $region56: #{double_conv.3} parent=51 // pred_fallthru
        _
      // Predicated region
      $region57: #{double_conv.3} parent=51 // pred_check
        %p3454 = pneg %p226
      $region58: #{double_conv.3} parent=51 // pred_check_branch
        %3456 = sbr.rel (%p3454) target = $region60
      $region59: #{double_conv.3} parent=51 // pred_region
        %p3457 = scmp.lt.s32.totalorder %s24, 1
        %s3458 = scalar_select %p3457, %s24, 1
        %p3459 = scmp.lt.s32.totalorder %s25, 1
        %s3460 = scalar_select %p3459, %s25, 1
        %s3461 = smul.addr %s3458, 2
        %s3462 = sadd.s32 %s3460, %s3461
        %s3463 = smul.addr %s3462, 2
        %s3464 = scalar_lea.vmem %s6, %s3463
      $region60: #{double_conv.3} parent=51 // pred_fallthru
        _
    $region52: #{double_conv.3} parent=5 // pred_fallthru
      _
  $region6: #{double_conv.3} parent=0 // loop_footer
    %s17 = sadd.s32 1, %s13
  $region7: #{double_conv.3} parent=0 // loop_footer_branch
    %12 = sbr.rel target = $region3
  $region8: #{double_conv.3} parent=0 // loop_exit
    _

// kernel: double_conv.4
$region0: #{double_conv.4}
  #allocation0 [shape = 'u32[]', space=smem, size = 0x4, offset = 0x4, fixed_abs, tag = 'smem constant byte address 0x4 - core index']
  #allocation1 [shape = 'u32[144,128]{1,0:T(1,128)}', space=vmem, size = 0x12000, scoped, tag = 'internal scratch']
  #allocation2 [shape = 'bf16[10,18,128]{2,1,0:T(8,128)(2,1)}', space=vmem, size = 0xf000, scoped, tag = 'scratch operand']
  %s0 = inlined_call_operand.vmem [shape: bf16[2,16,16,128], index: 0, kind: input, shape index: {}, may-alias: {0,1,2}]
  %s1 = inlined_call_operand.vmem [shape: bf16[2,16,16,128], index: 1, kind: input, shape index: {}, may-alias: {0,1,2}]
  %s2 = inlined_call_operand.vmem [shape: bf16[2,16,16,128], index: 2, kind: input, shape index: {}, may-alias: {0,1,2}]
  %s3 = inlined_call_operand.vmem [shape: f32[2,128], index: 3, kind: input, shape index: {}]
  %s4 = inlined_call_operand.vmem [shape: bf16[9,128,128], index: 4, kind: input, shape index: {}]
  %s5 = inlined_call_operand.vmem [shape: bf16[2,16,16,128], index: 5, kind: output, shape index: {0}]
  %s6 = inlined_call_operand.vmem [shape: f32[2,2,2,128], index: 6, kind: output, shape index: {1}]
  %7 = xla_tuple %s5, %s6
  %s8 = sld [smem:[#allocation0]]
  $region61: #{double_conv.4} parent=0
    _
  %s10 = ssub.s32 1, %s8
  %s11 = scalar_select 0, %s10, %s8
  loop: start=0, step=1, limit=6
  $region2: #{double_conv.4} parent=0 // loop_pre_header
    _
  $region3: #{double_conv.4} parent=0 // loop_header
    %s13 = sphi 0, %s17
    %p14 = scmp.ge.s32.totalorder %s13, 6
    %s20 = sphi 0, %s32
    %s21 = sphi 0, %s28
    %s22 = sphi 0, %s20
    %s23 = sphi 0, %s21
    %s24 = sphi 0, %s22
    %s25 = sphi 0, %s23
    %s37 = sphi 0, %s39
    %s40 = sphi 0, %s37
    %s41 = sphi 0, %s40
    %s57 = sphi 0, %s41
    %s73 = sphi 0, %s75
    %s76 = sphi 0, %s73
    %s77 = sphi 0, %s76
    %s93 = sphi 0, %s77
    %s109 = sphi 0, %s111
    %s112 = sphi 0, %s109
    %s113 = sphi 0, %s112
    %s129 = sphi 0, %s113
    %s133 = sphi 0, %s133
    %s135 = sphi 0, %s133
    %s136 = sphi 0, %s135
    %s150 = sphi 0, %s136
    %s154 = sphi 0, %s154
    %s156 = sphi 0, %s154
    %s157 = sphi 0, %s156
    %s171 = sphi 0, %s157
    %s179 = sphi 0, %s181
    %s182 = sphi 0, %s179
    %s183 = sphi 0, %s182
    %s199 = sphi 0, %s183
    %s207 = sphi 0, %s209
    %s210 = sphi 0, %s207
    %s211 = sphi 0, %s210
    %s227 = sphi 0, %s211
  $region4: #{double_conv.4} parent=0 // loop_header_branch
    %16 = sbr.rel (%p14) target = $region8
  $region5: #{double_conv.4} parent=0 // loop_body
    %s18 = ssub.s32 %s13, 1
    %s19 = ssub.s32 %s13, 2
    %s26 = sadd.s32 1, %s21
    %p27 = scmp.ge.s32.totalorder %s26, 2
    %s28 = scalar_select %p27, 0, %s26
    %s29 = sadd.s32 1, %s20
    %s30 = scalar_select %p27, %s29, %s20
    %p31 = scmp.ge.s32.totalorder %s30, 2
    %s32 = scalar_select %p31, 0, %s30
    %s33 = ssub.s32 %s20, %s32
    %s34 = ssub.s32 %s21, %s28
    %s35 = sor.u32 %s33, %s34
    %p36 = scmp.eq.s32.totalorder %s35, 0
    %s38 = sadd.s32 %s37, 1
    %s39 = scalar_select %p36, %s37, %s38
    %p42 = pneg %p36
    %p43 = scmp.eq.s32.totalorder %s13, 3
    %p44 = por %p42, %p43
    %p45 = scmp.ne.s32.totalorder %s37, %s40
    %p46 = scmp.eq.s32.totalorder %s13, 0
    %p47 = por %p45, %p46
    %p48 = scmp.ne.s32.totalorder %s37, %s40
    %p49 = scmp.eq.s32.totalorder %s18, 3
    %p50 = por %p48, %p49
    %p51 = scmp.ne.s32.totalorder %s40, %s41
    %p52 = scmp.eq.s32.totalorder %s18, 0
    %p53 = por %p51, %p52
    %p54 = scmp.ne.s32.totalorder %s40, %s41
    %p55 = scmp.eq.s32.totalorder %s19, 3
    %p56 = por %p54, %p55
    %p58 = scmp.ne.s32.totalorder %s41, %s57
    %p59 = scmp.eq.s32.totalorder %s19, 0
    %p60 = por %p58, %p59
    %s61 = smul.u32 %s21, 8
    %s62 = ssub.s32 %s61, 1
    %p63 = scmp.gt.s32.totalorder %s62, 0
    %s64 = scalar_select %p63, %s62, 0
    %s65 = smul.u32 %s28, 8
    %s66 = ssub.s32 %s65, 1
    %p67 = scmp.gt.s32.totalorder %s66, 0
    %s68 = scalar_select %p67, %s66, 0
    %s69 = ssub.s32 %s20, %s32
    %s70 = ssub.s32 %s64, %s68
    %s71 = sor.u32 %s69, %s70
    %p72 = scmp.eq.s32.totalorder %s71, 0
    %s74 = sadd.s32 %s73, 1
    %s75 = scalar_select %p72, %s73, %s74
    %p78 = pneg %p72
    %p79 = scmp.eq.s32.totalorder %s13, 3
    %p80 = por %p78, %p79
    %p81 = scmp.ne.s32.totalorder %s73, %s76
    %p82 = scmp.eq.s32.totalorder %s13, 0
    %p83 = por %p81, %p82
    %p84 = scmp.ne.s32.totalorder %s73, %s76
    %p85 = scmp.eq.s32.totalorder %s18, 3
    %p86 = por %p84, %p85
    %p87 = scmp.ne.s32.totalorder %s76, %s77
    %p88 = scmp.eq.s32.totalorder %s18, 0
    %p89 = por %p87, %p88
    %p90 = scmp.ne.s32.totalorder %s76, %s77
    %p91 = scmp.eq.s32.totalorder %s19, 3
    %p92 = por %p90, %p91
    %p94 = scmp.ne.s32.totalorder %s77, %s93
    %p95 = scmp.eq.s32.totalorder %s19, 0
    %p96 = por %p94, %p95
    %s97 = smul.u32 %s21, 8
    %s98 = sadd.s32 %s97, 8
    %p99 = scmp.lt.s32.totalorder %s98, 15
    %s100 = scalar_select %p99, %s98, 15
    %s101 = smul.u32 %s28, 8
    %s102 = sadd.s32 %s101, 8
    %p103 = scmp.lt.s32.totalorder %s102, 15
    %s104 = scalar_select %p103, %s102, 15
    %s105 = ssub.s32 %s20, %s32
    %s106 = ssub.s32 %s100, %s104
    %s107 = sor.u32 %s105, %s106
    %p108 = scmp.eq.s32.totalorder %s107, 0
    %s110 = sadd.s32 %s109, 1
    %s111 = scalar_select %p108, %s109, %s110
    %p114 = pneg %p108
    %p115 = scmp.eq.s32.totalorder %s13, 3
    %p116 = por %p114, %p115
    %p117 = scmp.ne.s32.totalorder %s109, %s112
    %p118 = scmp.eq.s32.totalorder %s13, 0
    %p119 = por %p117, %p118
    %p120 = scmp.ne.s32.totalorder %s109, %s112
    %p121 = scmp.eq.s32.totalorder %s18, 3
    %p122 = por %p120, %p121
    %p123 = scmp.ne.s32.totalorder %s112, %s113
    %p124 = scmp.eq.s32.totalorder %s18, 0
    %p125 = por %p123, %p124
    %p126 = scmp.ne.s32.totalorder %s112, %s113
    %p127 = scmp.eq.s32.totalorder %s19, 3
    %p128 = por %p126, %p127
    %p130 = scmp.ne.s32.totalorder %s113, %s129
    %p131 = scmp.eq.s32.totalorder %s19, 0
    %p132 = por %p130, %p131
    %s134 = sadd.s32 %s133, 1
    %p137 = scmp.eq.s32.totalorder %s13, 3
    %p138 = scmp.ne.s32.totalorder %s133, %s135
    %p139 = scmp.eq.s32.totalorder %s13, 0
    %p140 = por %p138, %p139
    %p141 = scmp.ne.s32.totalorder %s133, %s135
    %p142 = scmp.eq.s32.totalorder %s18, 3
    %p143 = por %p141, %p142
    %p144 = scmp.ne.s32.totalorder %s135, %s136
    %p145 = scmp.eq.s32.totalorder %s18, 0
    %p146 = por %p144, %p145
    %p147 = scmp.ne.s32.totalorder %s135, %s136
    %p148 = scmp.eq.s32.totalorder %s19, 3
    %p149 = por %p147, %p148
    %p151 = scmp.ne.s32.totalorder %s136, %s150
    %p152 = scmp.eq.s32.totalorder %s19, 0
    %p153 = por %p151, %p152
    %s155 = sadd.s32 %s154, 1
    %p158 = scmp.eq.s32.totalorder %s13, 3
    %p159 = scmp.ne.s32.totalorder %s154, %s156
    %p160 = scmp.eq.s32.totalorder %s13, 0
    %p161 = por %p159, %p160
    %p162 = scmp.ne.s32.totalorder %s154, %s156
    %p163 = scmp.eq.s32.totalorder %s18, 3
    %p164 = por %p162, %p163
    %p165 = scmp.ne.s32.totalorder %s156, %s157
    %p166 = scmp.eq.s32.totalorder %s18, 0
    %p167 = por %p165, %p166
    %p168 = scmp.ne.s32.totalorder %s156, %s157
    %p169 = scmp.eq.s32.totalorder %s19, 3
    %p170 = por %p168, %p169
    %p172 = scmp.ne.s32.totalorder %s157, %s171
    %p173 = scmp.eq.s32.totalorder %s19, 0
    %p174 = por %p172, %p173
    %s175 = ssub.s32 %s20, %s32
    %s176 = ssub.s32 %s21, %s28
    %s177 = sor.u32 %s175, %s176
    %p178 = scmp.eq.s32.totalorder %s177, 0
    %s180 = sadd.s32 %s179, 1
    %s181 = scalar_select %p178, %s179, %s180
    %p184 = pneg %p178
    %p185 = scmp.eq.s32.totalorder %s13, 3
    %p186 = por %p184, %p185
    %p187 = scmp.ne.s32.totalorder %s179, %s182
    %p188 = scmp.eq.s32.totalorder %s13, 0
    %p189 = por %p187, %p188
    %p190 = scmp.ne.s32.totalorder %s179, %s182
    %p191 = scmp.eq.s32.totalorder %s18, 3
    %p192 = por %p190, %p191
    %p193 = scmp.ne.s32.totalorder %s182, %s183
    %p194 = scmp.eq.s32.totalorder %s18, 0
    %p195 = por %p193, %p194
    %p196 = scmp.ne.s32.totalorder %s182, %s183
    %p197 = scmp.eq.s32.totalorder %s19, 3
    %p198 = por %p196, %p197
    %p200 = scmp.ne.s32.totalorder %s183, %s199
    %p201 = scmp.eq.s32.totalorder %s19, 0
    %p202 = por %p200, %p201
    %s203 = ssub.s32 %s20, %s32
    %s204 = ssub.s32 %s21, %s28
    %s205 = sor.u32 %s203, %s204
    %p206 = scmp.eq.s32.totalorder %s205, 0
    %s208 = sadd.s32 %s207, 1
    %s209 = scalar_select %p206, %s207, %s208
    %p212 = pneg %p206
    %p213 = scmp.eq.s32.totalorder %s13, 3
    %p214 = por %p212, %p213
    %p215 = scmp.ne.s32.totalorder %s207, %s210
    %p216 = scmp.eq.s32.totalorder %s13, 0
    %p217 = por %p215, %p216
    %p218 = scmp.ne.s32.totalorder %s207, %s210
    %p219 = scmp.eq.s32.totalorder %s18, 3
    %p220 = por %p218, %p219
    %p221 = scmp.ne.s32.totalorder %s210, %s211
    %p222 = scmp.eq.s32.totalorder %s18, 0
    %p223 = por %p221, %p222
    %p224 = scmp.ne.s32.totalorder %s210, %s211
    %p225 = scmp.eq.s32.totalorder %s19, 3
    %p226 = por %p224, %p225
    %p228 = scmp.ne.s32.totalorder %s211, %s227
    %p229 = scmp.eq.s32.totalorder %s19, 0
    %p230 = por %p228, %p229
    %p231 = scmp.le.s32.totalorder 1, %s13
    %p232 = scmp.lt.s32.totalorder %s13, 5
    %p233 = pnand %p231, %p232
    %p234 = pneg %p233
    // Predicated region
    $region9: #{double_conv.4} parent=5 // pred_check
      _
    $region10: #{double_conv.4} parent=5 // pred_check_branch
      %236 = sbr.rel (%p233) target = $region12
    $region11: #{double_conv.4} parent=5 // pred_region
      %s237 = ssub.s32 %s13, 1
      // Predicated region
      $region13: #{double_conv.4} parent=11 // pred_check
        %p238 = pneg %p146
      $region14: #{double_conv.4} parent=11 // pred_check_branch
        %240 = sbr.rel (%p238) target = $region16
      $region15: #{double_conv.4} parent=11 // pred_region
        _
      $region16: #{double_conv.4} parent=11 // pred_fallthru
        _
      // Predicated region
      $region17: #{double_conv.4} parent=11 // pred_check
        %p241 = pneg %p167
      $region18: #{double_conv.4} parent=11 // pred_check_branch
        %243 = sbr.rel (%p241) target = $region20
      $region19: #{double_conv.4} parent=11 // pred_region
        _
      $region20: #{double_conv.4} parent=11 // pred_fallthru
        _
    $region12: #{double_conv.4} parent=5 // pred_fallthru
      _
    %p244 = scmp.lt.s32.totalorder %s13, 4
    // Predicated region
    $region21: #{double_conv.4} parent=5 // pred_check
      %p245 = pneg %p244
    $region22: #{double_conv.4} parent=5 // pred_check_branch
      %247 = sbr.rel (%p245) target = $region24
    $region23: #{double_conv.4} parent=5 // pred_region
      // Predicated region
      $region25: #{double_conv.4} parent=23 // pred_check
        %p248 = pneg %p47
      $region26: #{double_conv.4} parent=23 // pred_check_branch
        %250 = sbr.rel (%p248) target = $region28
      $region27: #{double_conv.4} parent=23 // pred_region
        %s251 = smul.u32 8, %s21
        %p252 = scmp.lt.s32.totalorder %s20, 1
        %s253 = scalar_select %p252, %s20, 1
        %p254 = scmp.lt.s32.totalorder %s251, 15
        %s255 = scalar_select %p254, %s251, 15
        %s256 = smul.addr %s255, 2
        %s257 = smul.addr %s253, 32
        %s258 = sadd.s32 %s256, %s257
        %s259 = smul.addr %s258, 4
        %s260 = scalar_lea.vmem %s0, %s259
        %s261 = smul.u32 8, %s21
      $region28: #{double_conv.4} parent=23 // pred_fallthru
        _
      // Predicated region
      $region29: #{double_conv.4} parent=23 // pred_check
        %p262 = pneg %p83
      $region30: #{double_conv.4} parent=23 // pred_check_branch
        %264 = sbr.rel (%p262) target = $region32
      $region31: #{double_conv.4} parent=23 // pred_region
        %s265 = smul.u32 %s21, 8
        %s266 = ssub.s32 %s265, 1
        %p267 = scmp.gt.s32.totalorder %s266, 0
        %s268 = scalar_select %p267, %s266, 0
        %p269 = scmp.lt.s32.totalorder %s20, 1
        %s270 = scalar_select %p269, %s20, 1
        %p271 = scmp.lt.s32.totalorder %s268, 15
        %s272 = scalar_select %p271, %s268, 15
        %s273 = smul.addr %s272, 2
        %s274 = smul.addr %s270, 32
        %s275 = sadd.s32 %s273, %s274
        %s276 = smul.addr %s275, 4
        %s277 = scalar_lea.vmem %s1, %s276
        %s278 = smul.u32 %s21, 8
        %s279 = ssub.s32 %s278, 1
        %p280 = scmp.gt.s32.totalorder %s279, 0
        %s281 = scalar_select %p280, %s279, 0
      $region32: #{double_conv.4} parent=23 // pred_fallthru
        _
      // Predicated region
      $region33: #{double_conv.4} parent=23 // pred_check
        %p282 = pneg %p119
      $region34: #{double_conv.4} parent=23 // pred_check_branch
        %284 = sbr.rel (%p282) target = $region36
      $region35: #{double_conv.4} parent=23 // pred_region
        %s285 = smul.u32 %s21, 8
        %s286 = sadd.s32 %s285, 8
        %p287 = scmp.lt.s32.totalorder %s286, 15
        %s288 = scalar_select %p287, %s286, 15
        %p289 = scmp.lt.s32.totalorder %s20, 1
        %s290 = scalar_select %p289, %s20, 1
        %p291 = scmp.lt.s32.totalorder %s288, 15
        %s292 = scalar_select %p291, %s288, 15
        %s293 = smul.addr %s292, 2
        %s294 = smul.addr %s290, 32
        %s295 = sadd.s32 %s293, %s294
        %s296 = smul.addr %s295, 4
        %s297 = scalar_lea.vmem %s2, %s296
        %s298 = smul.u32 %s21, 8
        %s299 = sadd.s32 %s298, 8
        %p300 = scmp.lt.s32.totalorder %s299, 15
        %s301 = scalar_select %p300, %s299, 15
      $region36: #{double_conv.4} parent=23 // pred_fallthru
        _
    $region24: #{double_conv.4} parent=5 // pred_fallthru
      _
    %p302 = scmp.le.s32.totalorder 1, %s13
    %p303 = scmp.lt.s32.totalorder %s13, 5
    %p304 = pnand %p302, %p303
    %p305 = pneg %p304
    // Predicated region
    $region37: #{double_conv.4} parent=5 // pred_check
      _
    $region38: #{double_conv.4} parent=5 // pred_check_branch
      %307 = sbr.rel (%p304) target = $region40
    $region39: #{double_conv.4} parent=5 // pred_region
      %s308 = ssub.s32 %s13, 1
      %s309 = smul.u32 8, %s23
      %p310 = scmp.lt.s32.totalorder %s22, 1
      %s311 = scalar_select %p310, %s22, 1
      %p312 = scmp.lt.s32.totalorder %s309, 15
      %s313 = scalar_select %p312, %s309, 15
      %s314 = smul.addr %s313, 2
      %s315 = smul.addr %s311, 32
      %s316 = sadd.s32 %s314, %s315
      %s317 = smul.addr %s316, 4
      %s318 = scalar_lea.vmem %s0, %s317
      %p319 = pneg %p53
      %p320 = pneg %p50
      %s321 = smul.u32 %s23, 8
      %s322 = ssub.s32 %s321, 1
      %p323 = scmp.gt.s32.totalorder %s322, 0
      %s324 = scalar_select %p323, %s322, 0
      %p325 = scmp.lt.s32.totalorder %s22, 1
      %s326 = scalar_select %p325, %s22, 1
      %p327 = scmp.lt.s32.totalorder %s324, 15
      %s328 = scalar_select %p327, %s324, 15
      %s329 = smul.addr %s328, 2
      %s330 = smul.addr %s326, 32
      %s331 = sadd.s32 %s329, %s330
      %s332 = smul.addr %s331, 4
      %s333 = scalar_lea.vmem %s1, %s332
      %p334 = pneg %p89
      %p335 = pneg %p86
      %s336 = smul.u32 %s23, 8
      %s337 = sadd.s32 %s336, 8
      %p338 = scmp.lt.s32.totalorder %s337, 15
      %s339 = scalar_select %p338, %s337, 15
      %p340 = scmp.lt.s32.totalorder %s22, 1
      %s341 = scalar_select %p340, %s22, 1
      %p342 = scmp.lt.s32.totalorder %s339, 15
      %s343 = scalar_select %p342, %s339, 15
      %s344 = smul.addr %s343, 2
      %s345 = smul.addr %s341, 32
      %s346 = sadd.s32 %s344, %s345
      %s347 = smul.addr %s346, 4
      %s348 = scalar_lea.vmem %s2, %s347
      %p349 = pneg %p125
      %p350 = pneg %p122
      %p351 = pneg %p146
      %p352 = pneg %p143
      %p353 = pneg %p167
      %p354 = pneg %p164
      %p355 = pneg %p195
      %p356 = pneg %p192
      %s357 = smul.u32 8, %s23
      %p358 = scmp.lt.s32.totalorder %s22, 1
      %s359 = scalar_select %p358, %s22, 1
      %p360 = scmp.lt.s32.totalorder %s357, 15
      %s361 = scalar_select %p360, %s357, 15
      %s362 = smul.addr %s361, 2
      %s363 = smul.addr %s359, 32
      %s364 = sadd.s32 %s362, %s363
      %s365 = smul.addr %s364, 4
      %s366 = scalar_lea.vmem %s5, %s365
      %p367 = pneg %p223
      %p368 = pneg %p220
      %p369 = scmp.lt.s32.totalorder %s22, 1
      %s370 = scalar_select %p369, %s22, 1
      %p371 = scmp.lt.s32.totalorder %s23, 1
      %s372 = scalar_select %p371, %s23, 1
      %s373 = smul.addr %s370, 2
      %s374 = sadd.s32 %s372, %s373
      %s375 = smul.addr %s374, 2
      %s376 = scalar_lea.vmem %s6, %s375
      %s377 = smul.u32 8, %s23
      %p378 = scmp.lt.s32.totalorder %s22, 1
      %s379 = scalar_select %p378, %s22, 1
      %p380 = scmp.lt.s32.totalorder %s377, 15
      %s381 = scalar_select %p380, %s377, 15
      %s382 = smul.addr %s381, 2
      %s383 = smul.addr %s379, 32
      %s384 = sadd.s32 %s382, %s383
      %s385 = smul.addr %s384, 4
      %s386 = scalar_lea.vmem %s0, %s385
      %s387 = smul.u32 8, %s23
      %s388 = smul.u32 %s23, 8
      %s389 = ssub.s32 %s388, 1
      %p390 = scmp.gt.s32.totalorder %s389, 0
      %s391 = scalar_select %p390, %s389, 0
      %p392 = scmp.lt.s32.totalorder %s22, 1
      %s393 = scalar_select %p392, %s22, 1
      %p394 = scmp.lt.s32.totalorder %s391, 15
      %s395 = scalar_select %p394, %s391, 15
      %s396 = smul.addr %s395, 2
      %s397 = smul.addr %s393, 32
      %s398 = sadd.s32 %s396, %s397
      %s399 = smul.addr %s398, 4
      %s400 = scalar_lea.vmem %s1, %s399
      %s401 = smul.u32 %s23, 8
      %s402 = ssub.s32 %s401, 1
      %p403 = scmp.gt.s32.totalorder %s402, 0
      %s404 = scalar_select %p403, %s402, 0
      %s405 = smul.u32 %s23, 8
      %s406 = sadd.s32 %s405, 8
      %p407 = scmp.lt.s32.totalorder %s406, 15
      %s408 = scalar_select %p407, %s406, 15
      %p409 = scmp.lt.s32.totalorder %s22, 1
      %s410 = scalar_select %p409, %s22, 1
      %p411 = scmp.lt.s32.totalorder %s408, 15
      %s412 = scalar_select %p411, %s408, 15
      %s413 = smul.addr %s412, 2
      %s414 = smul.addr %s410, 32
      %s415 = sadd.s32 %s413, %s414
      %s416 = smul.addr %s415, 4
      %s417 = scalar_lea.vmem %s2, %s416
      %s418 = smul.u32 %s23, 8
      %s419 = sadd.s32 %s418, 8
      %p420 = scmp.lt.s32.totalorder %s419, 15
      %s421 = scalar_select %p420, %s419, 15
      %s422 = smul.u32 8, %s23
      %p423 = scmp.lt.s32.totalorder %s22, 1
      %s424 = scalar_select %p423, %s22, 1
      %p425 = scmp.lt.s32.totalorder %s422, 15
      %s426 = scalar_select %p425, %s422, 15
      %s427 = smul.addr %s426, 2
      %s428 = smul.addr %s424, 32
      %s429 = sadd.s32 %s427, %s428
      %s430 = smul.addr %s429, 4
      %s431 = scalar_lea.vmem %s5, %s430
      %s432 = smul.u32 8, %s23
      %p433 = scmp.lt.s32.totalorder %s22, 1
      %s434 = scalar_select %p433, %s22, 1
      %p435 = scmp.lt.s32.totalorder %s23, 1
      %s436 = scalar_select %p435, %s23, 1
      %s437 = smul.addr %s434, 2
      %s438 = sadd.s32 %s436, %s437
      %s439 = smul.addr %s438, 2
      %s440 = scalar_lea.vmem %s6, %s439
      %v442 = vld [vmem:[%s386] sm:$0xf]
      %v443 = vld [vmem:[%s386 + $0x4] sm:$0xf]
      %v444 = vld [vmem:[%s386 + $0x8] sm:$0xf]
      %v445 = vld [vmem:[%s386 + $0xc] sm:$0xf]
      %v446 = vld [vmem:[%s386 + $0x10] sm:$0xf]
      %v447 = vld [vmem:[%s386 + $0x14] sm:$0xf]
      %v448 = vld [vmem:[%s386 + $0x18] sm:$0xf]
      %v449 = vld [vmem:[%s386 + $0x1c] sm:$0xf]
      %v450 = vld [vmem:[%s386 + $0x20] sm:$0xf]
      %v451 = vld [vmem:[%s386 + $0x24] sm:$0xf]
      %v452 = vld [vmem:[%s386 + $0x28] sm:$0xf]
      %v453 = vld [vmem:[%s386 + $0x2c] sm:$0xf]
      %v454 = vld [vmem:[%s386 + $0x30] sm:$0xf]
      %v455 = vld [vmem:[%s386 + $0x34] sm:$0xf]
      %v456 = vld [vmem:[%s386 + $0x38] sm:$0xf]
      %v457 = vld [vmem:[%s386 + $0x3c] sm:$0xf]
      %v458 = vld [vmem:[%s400] sm:$0xf]
      %v459 = vld [vmem:[%s400 + $0x4] sm:$0xf]
      %v460 = vld [vmem:[%s417] sm:$0xf]
      %v461 = vld [vmem:[%s417 + $0x4] sm:$0xf]
      %v462 = vld [vmem:[%s3] sm:$0x3]
      %v463 = vunpack.c.l.bf16 %v442
      %v464 = vunpack.c.l.bf16 %v443
      %v465 = vunpack.c.l.bf16 %v444
      %v466 = vunpack.c.l.bf16 %v445
      %v467 = vunpack.c.l.bf16 %v446
      %v468 = vunpack.c.l.bf16 %v447
      %v469 = vunpack.c.l.bf16 %v448
      %v470 = vunpack.c.l.bf16 %v449
      %v471 = vunpack.c.l.bf16 %v450
      %v472 = vunpack.c.l.bf16 %v451
      %v473 = vunpack.c.l.bf16 %v452
      %v474 = vunpack.c.l.bf16 %v453
      %v475 = vunpack.c.l.bf16 %v454
      %v476 = vunpack.c.l.bf16 %v455
      %v477 = vunpack.c.l.bf16 %v456
      %v478 = vunpack.c.l.bf16 %v457
      %v479 = vlaneseq
      %v480 = vshrl.u32 %v479, 7
      %v481 = vsub.s32 0, %v480
      %v482 = vrot.slane %v462, %v481
      %v483 = vmul.f32 %v463, %v482
      %v484 = vmul.f32 %v464, %v482
      %v485 = vmul.f32 %v465, %v482
      %v486 = vmul.f32 %v466, %v482
      %v487 = vmul.f32 %v467, %v482
      %v488 = vmul.f32 %v468, %v482
      %v489 = vmul.f32 %v469, %v482
      %v490 = vmul.f32 %v470, %v482
      %v491 = vmul.f32 %v471, %v482
      %v492 = vmul.f32 %v472, %v482
      %v493 = vmul.f32 %v473, %v482
      %v494 = vmul.f32 %v474, %v482
      %v495 = vmul.f32 %v475, %v482
      %v496 = vmul.f32 %v476, %v482
      %v497 = vmul.f32 %v477, %v482
      %v498 = vmul.f32 %v478, %v482
      %v499 = vlaneseq
      %v500 = vshrl.u32 %v499, 7
      %v501 = vsub.s32 1, %v500
      %v502 = vrot.slane %v462, %v501
      %v503 = vadd.f32 %v483, %v502
      %v504 = vadd.f32 %v484, %v502
      %v505 = vadd.f32 %v485, %v502
      %v506 = vadd.f32 %v486, %v502
      %v507 = vadd.f32 %v487, %v502
      %v508 = vadd.f32 %v488, %v502
      %v509 = vadd.f32 %v489, %v502
      %v510 = vadd.f32 %v490, %v502
      %v511 = vadd.f32 %v491, %v502
      %v512 = vadd.f32 %v492, %v502
      %v513 = vadd.f32 %v493, %v502
      %v514 = vadd.f32 %v494, %v502
      %v515 = vadd.f32 %v495, %v502
      %v516 = vadd.f32 %v496, %v502
      %v517 = vadd.f32 %v497, %v502
      %v518 = vadd.f32 %v498, %v502
      %v519 = vmax.f32 %v503, 0.0
      %v520 = vmax.f32 %v504, 0.0
      %v521 = vmax.f32 %v505, 0.0
      %v522 = vmax.f32 %v506, 0.0
      %v523 = vmax.f32 %v507, 0.0
      %v524 = vmax.f32 %v508, 0.0
      %v525 = vmax.f32 %v509, 0.0
      %v526 = vmax.f32 %v510, 0.0
      %v527 = vmax.f32 %v511, 0.0
      %v528 = vmax.f32 %v512, 0.0
      %v529 = vmax.f32 %v513, 0.0
      %v530 = vmax.f32 %v514, 0.0
      %v531 = vmax.f32 %v515, 0.0
      %v532 = vmax.f32 %v516, 0.0
      %v533 = vmax.f32 %v517, 0.0
      %v534 = vmax.f32 %v518, 0.0
      %v535 = vunpack.c.l.bf16 %v458
      %v536 = vunpack.c.l.bf16 %v459
      %v537 = vmul.f32 %v535, %v482
      %v538 = vmul.f32 %v536, %v482
      %v539 = vadd.f32 %v537, %v502
      %v540 = vadd.f32 %v538, %v502
      %v541 = vmax.f32 %v539, 0.0
      %v542 = vmax.f32 %v540, 0.0
      %v543 = vunpack.c.l.bf16 %v460
      %v544 = vunpack.c.l.bf16 %v461
      %v545 = vmul.f32 %v543, %v482
      %v546 = vmul.f32 %v544, %v482
      %v547 = vadd.f32 %v545, %v502
      %v548 = vadd.f32 %v546, %v502
      %v549 = vmax.f32 %v547, 0.0
      %v550 = vmax.f32 %v548, 0.0
      %v551 = vpack.c.bf16 %v520, %v519
      %v552 = vpack.c.bf16 %v522, %v521
      %v553 = vpack.c.bf16 %v524, %v523
      %v554 = vpack.c.bf16 %v526, %v525
      %v555 = vpack.c.bf16 %v528, %v527
      %v556 = vpack.c.bf16 %v530, %v529
      %v557 = vpack.c.bf16 %v532, %v531
      %v558 = vpack.c.bf16 %v534, %v533
      %v559 = vpack.c.bf16 %v542, %v541
      %v560 = vpack.c.bf16 %v550, %v549
      %p561 = scmp.gt.s32.totalorder %s23, 0
      %s562 = scalar_select %p561, 1, 0
      %v563 = vstv %s562
      %vm564 = vcmp.eq.s32.totalorder %v563, 1
      %v565 = vsel %vm564, %v559, 0
      %p566 = scmp.lt.s32.totalorder %s23, 1
      %s567 = scalar_select %p566, 1, 0
      %v568 = vstv %s567
      %vm569 = vcmp.eq.s32.totalorder %v568, 1
      %v570 = vsel %vm569, %v560, 0
      %vm571 = vcmask 1040384
      %vm572 = vsmask.f32 256
      %vm573 = vmand %vm571, %vm572
      %v574 = vld [vmem:[#allocation2] sm:$0x1]
      %v575 = vsel %vm573, 0, %v574
      %576 = vst [vmem:[#allocation2] sm:$0x1] %v575
      %v577 = vld [vmem:[#allocation2 + $0xc] sm:$0x1]
      %v578 = vsel %vm573, 0, %v577
      %579 = vst [vmem:[#allocation2 + $0xc] sm:$0x1] %v578
      %v580 = vld [vmem:[#allocation2 + $0x18] sm:$0x1]
      %v581 = vsel %vm573, 0, %v580
      %582 = vst [vmem:[#allocation2 + $0x18] sm:$0x1] %v581
      %v583 = vld [vmem:[#allocation2 + $0x24] sm:$0x1]
      %v584 = vsel %vm573, 0, %v583
      %585 = vst [vmem:[#allocation2 + $0x24] sm:$0x1] %v584
      %v586 = vld [vmem:[#allocation2 + $0x30] sm:$0x1]
      %v587 = vsel %vm573, 0, %v586
      %588 = vst [vmem:[#allocation2 + $0x30] sm:$0x1] %v587
      %v589 = vld [vmem:[#allocation2 + $0x3c] sm:$0x1]
      %v590 = vsel %vm573, 0, %v589
      %591 = vst [vmem:[#allocation2 + $0x3c] sm:$0x1] %v590
      %v592 = vld [vmem:[#allocation2 + $0x48] sm:$0x1]
      %v593 = vsel %vm573, 0, %v592
      %594 = vst [vmem:[#allocation2 + $0x48] sm:$0x1] %v593
      %v595 = vld [vmem:[#allocation2 + $0x54] sm:$0x1]
      %v596 = vsel %vm573, 0, %v595
      %597 = vst [vmem:[#allocation2 + $0x54] sm:$0x1] %v596
      %v598 = vld [vmem:[#allocation2 + $0x60] sm:$0x1]
      %v599 = vsel %vm573, 0, %v598
      %600 = vst [vmem:[#allocation2 + $0x60] sm:$0x1] %v599
      %v601 = vld [vmem:[#allocation2 + $0x6c] sm:$0x1]
      %v602 = vsel %vm573, 0, %v601
      %603 = vst [vmem:[#allocation2 + $0x6c] sm:$0x1] %v602
      %vm604 = vsmask.f32 7938
      %vm605 = vmand %vm571, %vm604
      %v606 = vld [vmem:[#allocation2 + $0x8] sm:$0x1]
      %v607 = vsel %vm605, 0, %v606
      %608 = vst [vmem:[#allocation2 + $0x8] sm:$0x1] %v607
      %v609 = vld [vmem:[#allocation2 + $0x14] sm:$0x1]
      %v610 = vsel %vm605, 0, %v609
      %611 = vst [vmem:[#allocation2 + $0x14] sm:$0x1] %v610
      %v612 = vld [vmem:[#allocation2 + $0x20] sm:$0x1]
      %v613 = vsel %vm605, 0, %v612
      %614 = vst [vmem:[#allocation2 + $0x20] sm:$0x1] %v613
      %v615 = vld [vmem:[#allocation2 + $0x2c] sm:$0x1]
      %v616 = vsel %vm605, 0, %v615
      %617 = vst [vmem:[#allocation2 + $0x2c] sm:$0x1] %v616
      %v618 = vld [vmem:[#allocation2 + $0x38] sm:$0x1]
      %v619 = vsel %vm605, 0, %v618
      %620 = vst [vmem:[#allocation2 + $0x38] sm:$0x1] %v619
      %v621 = vld [vmem:[#allocation2 + $0x44] sm:$0x1]
      %v622 = vsel %vm605, 0, %v621
      %623 = vst [vmem:[#allocation2 + $0x44] sm:$0x1] %v622
      %v624 = vld [vmem:[#allocation2 + $0x50] sm:$0x1]
      %v625 = vsel %vm605, 0, %v624
      %626 = vst [vmem:[#allocation2 + $0x50] sm:$0x1] %v625
      %v627 = vld [vmem:[#allocation2 + $0x5c] sm:$0x1]
      %v628 = vsel %vm605, 0, %v627
      %629 = vst [vmem:[#allocation2 + $0x5c] sm:$0x1] %v628
      %v630 = vld [vmem:[#allocation2 + $0x68] sm:$0x1]
      %v631 = vsel %vm605, 0, %v630
      %632 = vst [vmem:[#allocation2 + $0x68] sm:$0x1] %v631
      %v633 = vld [vmem:[#allocation2 + $0x74] sm:$0x1]
      %v634 = vsel %vm605, 0, %v633
      %635 = vst [vmem:[#allocation2 + $0x74] sm:$0x1] %v634
      %v637 = vunpack.c.l.b16 %v565
      %v638 = vunpack.c.h.b16 %v565
      %v639 = vpack.c.b16 %v637, %v637
      %v640 = vpack.c.b16 %v638, %v638
      %vm641 = vsmask.f32 4368
      %vm642 = vmor %vm572, %vm641
      %v644 = vshrl.u32 %v639, 16
      %v646 = vrot.slane %v644, 7
      %v647 = vshll.u32 %v639, 16
      %v649 = vor.u32 %v646, %v647
      %v650 = vrot.slane %v646, 4
      %v652 = vshrl.u32 %v640, 16
      %v654 = vrot.slane %v652, 7
      %v655 = vshll.u32 %v640, 16
      %v657 = vor.u32 %v654, %v655
      %v658 = vsel %vm642, %v650, %v657
      %v659 = vrot.slane %v654, 4
      %vm663 = vcmask 1043456
      %vm664 = vmand %vm663, %vm604
      %v665 = vld [vmem:[#allocation2] sm:$0xf]
      %v666 = vsel %vm664, %v649, %v665
      %667 = vst [vmem:[#allocation2] sm:$0xf] %v666
      %668 = vst [vmem:[#allocation2 + $0x4] sm:$0xf] %v658
      %v669 = vld [vmem:[#allocation2 + $0x8] sm:$0x1]
      %v670 = vsel %vm573, %v659, %v669
      %671 = vst [vmem:[#allocation2 + $0x8] sm:$0x1] %v670
      %v673 = vunpack.c.l.b16 %v570
      %v674 = vunpack.c.h.b16 %v570
      %v675 = vpack.c.b16 %v673, %v673
      %v676 = vpack.c.b16 %v674, %v674
      %v678 = vshrl.u32 %v675, 16
      %v680 = vrot.slane %v678, 7
      %v681 = vshll.u32 %v675, 16
      %v683 = vor.u32 %v680, %v681
      %v684 = vrot.slane %v680, 4
      %v686 = vshrl.u32 %v676, 16
      %v688 = vrot.slane %v686, 7
      %v689 = vshll.u32 %v676, 16
      %v691 = vor.u32 %v688, %v689
      %v692 = vsel %vm642, %v684, %v691
      %v693 = vrot.slane %v688, 4
      %s697 = scalar_lea.vmem [#allocation2], 108
      %v698 = vld [vmem:[%s697] sm:$0xf]
      %v699 = vsel %vm664, %v683, %v698
      %700 = vst [vmem:[%s697] sm:$0xf] %v699
      %701 = vst [vmem:[%s697 + $0x4] sm:$0xf] %v692
      %v702 = vld [vmem:[%s697 + $0x8] sm:$0x1]
      %v703 = vsel %vm573, %v693, %v702
      %704 = vst [vmem:[%s697 + $0x8] sm:$0x1] %v703
      %v713 = vunpack.c.l.b16 %v551
      %v714 = vunpack.c.h.b16 %v551
      %v715 = vunpack.c.l.b16 %v552
      %v716 = vunpack.c.h.b16 %v552
      %v717 = vunpack.c.l.b16 %v553
      %v718 = vunpack.c.h.b16 %v553
      %v719 = vunpack.c.l.b16 %v554
      %v720 = vunpack.c.h.b16 %v554
      %v721 = vunpack.c.l.b16 %v555
      %v722 = vunpack.c.h.b16 %v555
      %v723 = vunpack.c.l.b16 %v556
      %v724 = vunpack.c.h.b16 %v556
      %v725 = vunpack.c.l.b16 %v557
      %v726 = vunpack.c.h.b16 %v557
      %v727 = vunpack.c.l.b16 %v558
      %v728 = vunpack.c.h.b16 %v558
      %v729 = vpack.c.b16 %v713, %v713
      %v730 = vpack.c.b16 %v714, %v714
      %v731 = vpack.c.b16 %v715, %v715
      %v732 = vpack.c.b16 %v716, %v716
      %v733 = vpack.c.b16 %v717, %v717
      %v734 = vpack.c.b16 %v718, %v718
      %v735 = vpack.c.b16 %v719, %v719
      %v736 = vpack.c.b16 %v720, %v720
      %v737 = vpack.c.b16 %v721, %v721
      %v738 = vpack.c.b16 %v722, %v722
      %v739 = vpack.c.b16 %v723, %v723
      %v740 = vpack.c.b16 %v724, %v724
      %v741 = vpack.c.b16 %v725, %v725
      %v742 = vpack.c.b16 %v726, %v726
      %v743 = vpack.c.b16 %v727, %v727
      %v744 = vpack.c.b16 %v728, %v728
      %v746 = vshrl.u32 %v729, 16
      %v748 = vrot.slane %v746, 7
      %v749 = vshll.u32 %v729, 16
      %v751 = vor.u32 %v748, %v749
      %v752 = vrot.slane %v748, 4
      %v754 = vshrl.u32 %v730, 16
      %v756 = vrot.slane %v754, 7
      %v757 = vshll.u32 %v730, 16
      %v759 = vor.u32 %v756, %v757
      %v760 = vsel %vm642, %v752, %v759
      %v761 = vrot.slane %v756, 4
      %v763 = vshrl.u32 %v731, 16
      %v765 = vrot.slane %v763, 7
      %v766 = vshll.u32 %v731, 16
      %v768 = vor.u32 %v765, %v766
      %v769 = vrot.slane %v765, 4
      %v771 = vshrl.u32 %v732, 16
      %v773 = vrot.slane %v771, 7
      %v774 = vshll.u32 %v732, 16
      %v776 = vor.u32 %v773, %v774
      %v777 = vsel %vm642, %v769, %v776
      %v778 = vrot.slane %v773, 4
      %v780 = vshrl.u32 %v733, 16
      %v782 = vrot.slane %v780, 7
      %v783 = vshll.u32 %v733, 16
      %v785 = vor.u32 %v782, %v783
      %v786 = vrot.slane %v782, 4
      %v788 = vshrl.u32 %v734, 16
      %v790 = vrot.slane %v788, 7
      %v791 = vshll.u32 %v734, 16
      %v793 = vor.u32 %v790, %v791
      %v794 = vsel %vm642, %v786, %v793
      %v795 = vrot.slane %v790, 4
      %v797 = vshrl.u32 %v735, 16
      %v799 = vrot.slane %v797, 7
      %v800 = vshll.u32 %v735, 16
      %v802 = vor.u32 %v799, %v800
      %v803 = vrot.slane %v799, 4
      %v805 = vshrl.u32 %v736, 16
      %v807 = vrot.slane %v805, 7
      %v808 = vshll.u32 %v736, 16
      %v810 = vor.u32 %v807, %v808
      %v811 = vsel %vm642, %v803, %v810
      %v812 = vrot.slane %v807, 4
      %v814 = vshrl.u32 %v737, 16
      %v816 = vrot.slane %v814, 7
      %v817 = vshll.u32 %v737, 16
      %v819 = vor.u32 %v816, %v817
      %v820 = vrot.slane %v816, 4
      %v822 = vshrl.u32 %v738, 16
      %v824 = vrot.slane %v822, 7
      %v825 = vshll.u32 %v738, 16
      %v827 = vor.u32 %v824, %v825
      %v828 = vsel %vm642, %v820, %v827
      %v829 = vrot.slane %v824, 4
      %v831 = vshrl.u32 %v739, 16
      %v833 = vrot.slane %v831, 7
      %v834 = vshll.u32 %v739, 16
      %v836 = vor.u32 %v833, %v834
      %v837 = vrot.slane %v833, 4
      %v839 = vshrl.u32 %v740, 16
      %v841 = vrot.slane %v839, 7
      %v842 = vshll.u32 %v740, 16
      %v844 = vor.u32 %v841, %v842
      %v845 = vsel %vm642, %v837, %v844
      %v846 = vrot.slane %v841, 4
      %v848 = vshrl.u32 %v741, 16
      %v850 = vrot.slane %v848, 7
      %v851 = vshll.u32 %v741, 16
      %v853 = vor.u32 %v850, %v851
      %v854 = vrot.slane %v850, 4
      %v856 = vshrl.u32 %v742, 16
      %v858 = vrot.slane %v856, 7
      %v859 = vshll.u32 %v742, 16
      %v861 = vor.u32 %v858, %v859
      %v862 = vsel %vm642, %v854, %v861
      %v863 = vrot.slane %v858, 4
      %v865 = vshrl.u32 %v743, 16
      %v867 = vrot.slane %v865, 7
      %v868 = vshll.u32 %v743, 16
      %v870 = vor.u32 %v867, %v868
      %v871 = vrot.slane %v867, 4
      %v873 = vshrl.u32 %v744, 16
      %v875 = vrot.slane %v873, 7
      %v876 = vshll.u32 %v744, 16
      %v878 = vor.u32 %v875, %v876
      %v879 = vsel %vm642, %v871, %v878
      %v880 = vrot.slane %v875, 4
      %s905 = scalar_lea.vmem [#allocation2], 12
      %v906 = vld [vmem:[%s905] sm:$0xf]
      %v907 = vsel %vm664, %v751, %v906
      %908 = vst [vmem:[%s905] sm:$0xf] %v907
      %909 = vst [vmem:[%s905 + $0x4] sm:$0xf] %v760
      %v910 = vld [vmem:[%s905 + $0x8] sm:$0x1]
      %v911 = vsel %vm573, %v761, %v910
      %912 = vst [vmem:[%s905 + $0x8] sm:$0x1] %v911
      %v913 = vld [vmem:[%s905 + $0xc] sm:$0xf]
      %v914 = vsel %vm664, %v768, %v913
      %915 = vst [vmem:[%s905 + $0xc] sm:$0xf] %v914
      %916 = vst [vmem:[%s905 + $0x10] sm:$0xf] %v777
      %v917 = vld [vmem:[%s905 + $0x14] sm:$0x1]
      %v918 = vsel %vm573, %v778, %v917
      %919 = vst [vmem:[%s905 + $0x14] sm:$0x1] %v918
      %v920 = vld [vmem:[%s905 + $0x18] sm:$0xf]
      %v921 = vsel %vm664, %v785, %v920
      %922 = vst [vmem:[%s905 + $0x18] sm:$0xf] %v921
      %923 = vst [vmem:[%s905 + $0x1c] sm:$0xf] %v794
      %v924 = vld [vmem:[%s905 + $0x20] sm:$0x1]
      %v925 = vsel %vm573, %v795, %v924
      %926 = vst [vmem:[%s905 + $0x20] sm:$0x1] %v925
      %v927 = vld [vmem:[%s905 + $0x24] sm:$0xf]
      %v928 = vsel %vm664, %v802, %v927
      %929 = vst [vmem:[%s905 + $0x24] sm:$0xf] %v928
      %930 = vst [vmem:[%s905 + $0x28] sm:$0xf] %v811
      %v931 = vld [vmem:[%s905 + $0x2c] sm:$0x1]
      %v932 = vsel %vm573, %v812, %v931
      %933 = vst [vmem:[%s905 + $0x2c] sm:$0x1] %v932
      %v934 = vld [vmem:[%s905 + $0x30] sm:$0xf]
      %v935 = vsel %vm664, %v819, %v934
      %936 = vst [vmem:[%s905 + $0x30] sm:$0xf] %v935
      %937 = vst [vmem:[%s905 + $0x34] sm:$0xf] %v828
      %v938 = vld [vmem:[%s905 + $0x38] sm:$0x1]
      %v939 = vsel %vm573, %v829, %v938
      %940 = vst [vmem:[%s905 + $0x38] sm:$0x1] %v939
      %v941 = vld [vmem:[%s905 + $0x3c] sm:$0xf]
      %v942 = vsel %vm664, %v836, %v941
      %943 = vst [vmem:[%s905 + $0x3c] sm:$0xf] %v942
      %944 = vst [vmem:[%s905 + $0x40] sm:$0xf] %v845
      %v945 = vld [vmem:[%s905 + $0x44] sm:$0x1]
      %v946 = vsel %vm573, %v846, %v945
      %947 = vst [vmem:[%s905 + $0x44] sm:$0x1] %v946
      %v948 = vld [vmem:[%s905 + $0x48] sm:$0xf]
      %v949 = vsel %vm664, %v853, %v948
      %950 = vst [vmem:[%s905 + $0x48] sm:$0xf] %v949
      %951 = vst [vmem:[%s905 + $0x4c] sm:$0xf] %v862
      %v952 = vld [vmem:[%s905 + $0x50] sm:$0x1]
      %v953 = vsel %vm573, %v863, %v952
      %954 = vst [vmem:[%s905 + $0x50] sm:$0x1] %v953
      %v955 = vld [vmem:[%s905 + $0x54] sm:$0xf]
      %v956 = vsel %vm664, %v870, %v955
      %957 = vst [vmem:[%s905 + $0x54] sm:$0xf] %v956
      %958 = vst [vmem:[%s905 + $0x58] sm:$0xf] %v879
      %v959 = vld [vmem:[%s905 + $0x5c] sm:$0x1]
      %v960 = vsel %vm573, %v880, %v959
      %961 = vst [vmem:[%s905 + $0x5c] sm:$0x1] %v960
      %v962 = vld [vmem:[#allocation2] sm:$0xf]
      %v963 = vld [vmem:[#allocation2 + $0x4] sm:$0xf]
      %v964 = vld [vmem:[#allocation2 + $0xc] sm:$0xf]
      %v965 = vld [vmem:[#allocation2 + $0x10] sm:$0xf]
      %v966 = vld [vmem:[#allocation2 + $0x18] sm:$0xf]
      %v967 = vld [vmem:[#allocation2 + $0x1c] sm:$0xf]
      %v968 = vld [vmem:[#allocation2 + $0x24] sm:$0xf]
      %v969 = vld [vmem:[#allocation2 + $0x28] sm:$0xf]
      %v970 = vld [vmem:[#allocation2 + $0x30] sm:$0xf]
      %v971 = vld [vmem:[#allocation2 + $0x34] sm:$0xf]
      %v972 = vld [vmem:[#allocation2 + $0x3c] sm:$0xf]
      %v973 = vld [vmem:[#allocation2 + $0x40] sm:$0xf]
      %v974 = vld [vmem:[#allocation2 + $0x48] sm:$0xf]
      %v975 = vld [vmem:[#allocation2 + $0x4c] sm:$0xf]
      %v976 = vld [vmem:[#allocation2 + $0x54] sm:$0xf]
      %v977 = vld [vmem:[#allocation2 + $0x58] sm:$0xf]
      %v978 = vld [vmem:[%s4] sm:$0xf]
      %v979 = vld [vmem:[%s4 + $0x4] sm:$0xf]
      %v980 = vld [vmem:[%s4 + $0x8] sm:$0xf]
      %v981 = vld [vmem:[%s4 + $0xc] sm:$0xf]
      %v982 = vld [vmem:[%s4 + $0x10] sm:$0xf]
      %v983 = vld [vmem:[%s4 + $0x14] sm:$0xf]
      %v984 = vld [vmem:[%s4 + $0x18] sm:$0xf]
      %v985 = vld [vmem:[%s4 + $0x1c] sm:$0xf]
      %v986 = vld [vmem:[%s4 + $0x20] sm:$0xf]
      %v987 = vld [vmem:[%s4 + $0x24] sm:$0xf]
      %v988 = vld [vmem:[%s4 + $0x28] sm:$0xf]
      %v989 = vld [vmem:[%s4 + $0x2c] sm:$0xf]
      %v990 = vld [vmem:[%s4 + $0x30] sm:$0xf]
      %v991 = vld [vmem:[%s4 + $0x34] sm:$0xf]
      %v992 = vld [vmem:[%s4 + $0x38] sm:$0xf]
      %v993 = vld [vmem:[%s4 + $0x3c] sm:$0xf]
      %v994 = vld [vmem:[#allocation2 + $0x8] sm:$0x1]
      %v995 = vld [vmem:[#allocation2 + $0x14] sm:$0x1]
      %v996 = vld [vmem:[#allocation2 + $0x20] sm:$0x1]
      %v997 = vld [vmem:[#allocation2 + $0x2c] sm:$0x1]
      %v998 = vld [vmem:[#allocation2 + $0x38] sm:$0x1]
      %v999 = vld [vmem:[#allocation2 + $0x44] sm:$0x1]
      %v1000 = vld [vmem:[#allocation2 + $0x50] sm:$0x1]
      %v1001 = vld [vmem:[#allocation2 + $0x5c] sm:$0x1]
      %vm1002 = vsmask.f32 3328
      %vm1003 = vsmask.f32 7440
      %vm1004 = vmor %vm1002, %vm1003
      %v1006 = vshrl.u32 %v962, 16
      %v1008 = vrot.slane %v1006, 4
      %v1009 = vshll.u32 %v962, 16
      %v1011 = vrot.slane %v1009, 5
      %v1012 = vor.u32 %v1008, %v1011
      %v1013 = vrot.slane %v1012, 4
      %v1015 = vshll.u32 %v963, 16
      %v1017 = vrot.slane %v1015, 5
      %v1018 = vsel %vm1004, %v1013, %v1017
      %v1019 = vshrl.u32 %v963, 16
      %v1021 = vrot.slane %v1019, 4
      %v1022 = vor.u32 %v1021, %v1017
      %v1023 = vrot.slane %v1022, 4
      %v1025 = vshll.u32 %v994, 16
      %v1027 = vrot.slane %v1025, 5
      %v1028 = vsel %vm1004, %v1023, %v1027
      %v1030 = vshrl.u32 %v964, 16
      %v1032 = vrot.slane %v1030, 4
      %v1033 = vshll.u32 %v964, 16
      %v1035 = vrot.slane %v1033, 5
      %v1036 = vor.u32 %v1032, %v1035
      %v1037 = vrot.slane %v1036, 4
      %v1039 = vshll.u32 %v965, 16
      %v1041 = vrot.slane %v1039, 5
      %v1042 = vsel %vm1004, %v1037, %v1041
      %v1043 = vshrl.u32 %v965, 16
      %v1045 = vrot.slane %v1043, 4
      %v1046 = vor.u32 %v1045, %v1041
      %v1047 = vrot.slane %v1046, 4
      %v1049 = vshll.u32 %v995, 16
      %v1051 = vrot.slane %v1049, 5
      %v1052 = vsel %vm1004, %v1047, %v1051
      %v1054 = vshrl.u32 %v966, 16
      %v1056 = vrot.slane %v1054, 4
      %v1057 = vshll.u32 %v966, 16
      %v1059 = vrot.slane %v1057, 5
      %v1060 = vor.u32 %v1056, %v1059
      %v1061 = vrot.slane %v1060, 4
      %v1063 = vshll.u32 %v967, 16
      %v1065 = vrot.slane %v1063, 5
      %v1066 = vsel %vm1004, %v1061, %v1065
      %v1067 = vshrl.u32 %v967, 16
      %v1069 = vrot.slane %v1067, 4
      %v1070 = vor.u32 %v1069, %v1065
      %v1071 = vrot.slane %v1070, 4
      %v1073 = vshll.u32 %v996, 16
      %v1075 = vrot.slane %v1073, 5
      %v1076 = vsel %vm1004, %v1071, %v1075
      %v1078 = vshrl.u32 %v968, 16
      %v1080 = vrot.slane %v1078, 4
      %v1081 = vshll.u32 %v968, 16
      %v1083 = vrot.slane %v1081, 5
      %v1084 = vor.u32 %v1080, %v1083
      %v1085 = vrot.slane %v1084, 4
      %v1087 = vshll.u32 %v969, 16
      %v1089 = vrot.slane %v1087, 5
      %v1090 = vsel %vm1004, %v1085, %v1089
      %v1091 = vshrl.u32 %v969, 16
      %v1093 = vrot.slane %v1091, 4
      %v1094 = vor.u32 %v1093, %v1089
      %v1095 = vrot.slane %v1094, 4
      %v1097 = vshll.u32 %v997, 16
      %v1099 = vrot.slane %v1097, 5
      %v1100 = vsel %vm1004, %v1095, %v1099
      %v1102 = vshrl.u32 %v970, 16
      %v1104 = vrot.slane %v1102, 4
      %v1105 = vshll.u32 %v970, 16
      %v1107 = vrot.slane %v1105, 5
      %v1108 = vor.u32 %v1104, %v1107
      %v1109 = vrot.slane %v1108, 4
      %v1111 = vshll.u32 %v971, 16
      %v1113 = vrot.slane %v1111, 5
      %v1114 = vsel %vm1004, %v1109, %v1113
      %v1115 = vshrl.u32 %v971, 16
      %v1117 = vrot.slane %v1115, 4
      %v1118 = vor.u32 %v1117, %v1113
      %v1119 = vrot.slane %v1118, 4
      %v1121 = vshll.u32 %v998, 16
      %v1123 = vrot.slane %v1121, 5
      %v1124 = vsel %vm1004, %v1119, %v1123
      %v1126 = vshrl.u32 %v972, 16
      %v1128 = vrot.slane %v1126, 4
      %v1129 = vshll.u32 %v972, 16
      %v1131 = vrot.slane %v1129, 5
      %v1132 = vor.u32 %v1128, %v1131
      %v1133 = vrot.slane %v1132, 4
      %v1135 = vshll.u32 %v973, 16
      %v1137 = vrot.slane %v1135, 5
      %v1138 = vsel %vm1004, %v1133, %v1137
      %v1139 = vshrl.u32 %v973, 16
      %v1141 = vrot.slane %v1139, 4
      %v1142 = vor.u32 %v1141, %v1137
      %v1143 = vrot.slane %v1142, 4
      %v1145 = vshll.u32 %v999, 16
      %v1147 = vrot.slane %v1145, 5
      %v1148 = vsel %vm1004, %v1143, %v1147
      %v1150 = vshrl.u32 %v974, 16
      %v1152 = vrot.slane %v1150, 4
      %v1153 = vshll.u32 %v974, 16
      %v1155 = vrot.slane %v1153, 5
      %v1156 = vor.u32 %v1152, %v1155
      %v1157 = vrot.slane %v1156, 4
      %v1159 = vshll.u32 %v975, 16
      %v1161 = vrot.slane %v1159, 5
      %v1162 = vsel %vm1004, %v1157, %v1161
      %v1163 = vshrl.u32 %v975, 16
      %v1165 = vrot.slane %v1163, 4
      %v1166 = vor.u32 %v1165, %v1161
      %v1167 = vrot.slane %v1166, 4
      %v1169 = vshll.u32 %v1000, 16
      %v1171 = vrot.slane %v1169, 5
      %v1172 = vsel %vm1004, %v1167, %v1171
      %v1174 = vshrl.u32 %v976, 16
      %v1176 = vrot.slane %v1174, 4
      %v1177 = vshll.u32 %v976, 16
      %v1179 = vrot.slane %v1177, 5
      %v1180 = vor.u32 %v1176, %v1179
      %v1181 = vrot.slane %v1180, 4
      %v1183 = vshll.u32 %v977, 16
      %v1185 = vrot.slane %v1183, 5
      %v1186 = vsel %vm1004, %v1181, %v1185
      %v1187 = vshrl.u32 %v977, 16
      %v1189 = vrot.slane %v1187, 4
      %v1190 = vor.u32 %v1189, %v1185
      %v1191 = vrot.slane %v1190, 4
      %v1193 = vshll.u32 %v1001, 16
      %v1195 = vrot.slane %v1193, 5
      %v1196 = vsel %vm1004, %v1191, %v1195
      %s1197 = scalar_lea.vmem %s4, 64
      %v1198 = vld [vmem:[%s1197] sm:$0xf]
      %v1199 = vld [vmem:[%s1197 + $0x4] sm:$0xf]
      %v1200 = vld [vmem:[%s1197 + $0x8] sm:$0xf]
      %v1201 = vld [vmem:[%s1197 + $0xc] sm:$0xf]
      %v1202 = vld [vmem:[%s1197 + $0x10] sm:$0xf]
      %v1203 = vld [vmem:[%s1197 + $0x14] sm:$0xf]
      %v1204 = vld [vmem:[%s1197 + $0x18] sm:$0xf]
      %v1205 = vld [vmem:[%s1197 + $0x1c] sm:$0xf]
      %v1206 = vld [vmem:[%s1197 + $0x20] sm:$0xf]
      %v1207 = vld [vmem:[%s1197 + $0x24] sm:$0xf]
      %v1208 = vld [vmem:[%s1197 + $0x28] sm:$0xf]
      %v1209 = vld [vmem:[%s1197 + $0x2c] sm:$0xf]
      %v1210 = vld [vmem:[%s1197 + $0x30] sm:$0xf]
      %v1211 = vld [vmem:[%s1197 + $0x34] sm:$0xf]
      %v1212 = vld [vmem:[%s1197 + $0x38] sm:$0xf]
      %v1213 = vld [vmem:[%s1197 + $0x3c] sm:$0xf]
      %v1214 = vunpack.c.l.b16 %v1018
      %v1215 = vunpack.c.l.b16 %v1028
      %v1216 = vunpack.c.l.b16 %v1042
      %v1217 = vunpack.c.l.b16 %v1052
      %v1218 = vunpack.c.l.b16 %v1066
      %v1219 = vunpack.c.l.b16 %v1076
      %v1220 = vunpack.c.l.b16 %v1090
      %v1221 = vunpack.c.l.b16 %v1100
      %v1222 = vunpack.c.l.b16 %v1114
      %v1223 = vunpack.c.l.b16 %v1124
      %v1224 = vunpack.c.l.b16 %v1138
      %v1225 = vunpack.c.l.b16 %v1148
      %v1226 = vunpack.c.l.b16 %v1162
      %v1227 = vunpack.c.l.b16 %v1172
      %v1228 = vunpack.c.l.b16 %v1186
      %v1229 = vunpack.c.l.b16 %v1196
      %v1230 = vpack.c.b16 %v1215, %v1214
      %v1231 = vpack.c.b16 %v1217, %v1216
      %v1232 = vpack.c.b16 %v1219, %v1218
      %v1233 = vpack.c.b16 %v1221, %v1220
      %v1234 = vpack.c.b16 %v1223, %v1222
      %v1235 = vpack.c.b16 %v1225, %v1224
      %v1236 = vpack.c.b16 %v1227, %v1226
      %v1237 = vpack.c.b16 %v1229, %v1228
      %v1262 = vunpack.c.l.b16 %v1198
      %v1263 = vunpack.c.l.b16 %v1199
      %v1264 = vunpack.c.l.b16 %v1200
      %v1265 = vunpack.c.l.b16 %v1201
      %v1266 = vunpack.c.l.b16 %v1202
      %v1267 = vunpack.c.l.b16 %v1203
      %v1268 = vunpack.c.l.b16 %v1204
      %v1269 = vunpack.c.l.b16 %v1205
      %v1270 = vunpack.c.l.b16 %v1206
      %v1271 = vunpack.c.l.b16 %v1207
      %v1272 = vunpack.c.l.b16 %v1208
      %v1273 = vunpack.c.l.b16 %v1209
      %v1274 = vunpack.c.l.b16 %v1210
      %v1275 = vunpack.c.l.b16 %v1211
      %v1276 = vunpack.c.l.b16 %v1212
      %v1277 = vunpack.c.l.b16 %v1213
      %v1278 = vpack.c.b16 %v1263, %v1262
      %v1279 = vpack.c.b16 %v1265, %v1264
      %v1280 = vpack.c.b16 %v1267, %v1266
      %v1281 = vpack.c.b16 %v1269, %v1268
      %v1282 = vpack.c.b16 %v1271, %v1270
      %v1283 = vpack.c.b16 %v1273, %v1272
      %v1284 = vpack.c.b16 %v1275, %v1274
      %v1285 = vpack.c.b16 %v1277, %v1276
      %1294 = vmatprep.subr.bf16.mxu0 0
      %1295 = vmatpush1.bf16.msra.mxu0 %v1285
      %1296 = vmatprep.subr.bf16.mxu0 0
      %1297 = vmatpush1.bf16.msra.mxu0 %v1284
      %1298 = vmatprep.subr.bf16.mxu0 0
      %1299 = vmatpush1.bf16.msra.mxu0 %v1283
      %1300 = vmatprep.subr.bf16.mxu0 0
      %1301 = vmatpush1.bf16.msra.mxu0 %v1282
      %1302 = vmatprep.subr.bf16.mxu0 0
      %1303 = vmatpush1.bf16.msra.mxu0 %v1281
      %1304 = vmatprep.subr.bf16.mxu0 0
      %1305 = vmatpush1.bf16.msra.mxu0 %v1280
      %1306 = vmatprep.subr.bf16.mxu0 0
      %1307 = vmatpush1.bf16.msra.mxu0 %v1279
      %1308 = vmatprep.subr.bf16.mxu0 0
      %1309 = vmatpush1.bf16.msra.mxu0 %v1278
      %1310 = vmatprep.subr.bf16.mxu0 0
      %1311 = vmatpush2.bf16.msra.mxu0 0
      %1312 = vmatprep.subr.bf16.mxu0 0
      %1313 = vmatpush2.bf16.msra.mxu0 0
      %1314 = vmatprep.subr.bf16.mxu0 0
      %1315 = vmatpush2.bf16.msra.mxu0 0
      %1316 = vmatprep.subr.bf16.mxu0 0
      %1317 = vmatpush2.bf16.msra.mxu0 0
      %1318 = vmatprep.subr.bf16.mxu0 0
      %1319 = vmatpush2.bf16.msra.mxu0 0
      %1320 = vmatprep.subr.bf16.mxu0 0
      %1321 = vmatpush2.bf16.msra.mxu0 0
      %1322 = vmatprep.subr.bf16.mxu0 0
      %1323 = vmatpush2.bf16.msra.mxu0 0
      %1324 = vmatprep.subr.bf16.mxu0 0
      %1325 = vmatpush2.bf16.msra.mxu0 0
      %1326 = vmatprep.mubr.bf16.mxu0 0
      %1327 = vmatmul.mubr.bf16.gmra.mxu0 %v1230
      %v1328 = vpop.f32.mrf.mxu0
      %v1329 = vadd.f32 0.0, %v1328
      %v1330 = vpop.f32.mrf.mxu0
      %v1331 = vpop.f32.mrf.mxu0
      %v1332 = vadd.f32 0.0, %v1331
      %v1333 = vpop.f32.mrf.mxu0
      %1334 = vmatprep.mubr.bf16.mxu0 0
      %1335 = vmatmul.mubr.bf16.gmra.mxu0 %v1231
      %v1336 = vpop.f32.mrf.mxu0
      %v1337 = vadd.f32 0.0, %v1336
      %v1338 = vpop.f32.mrf.mxu0
      %v1339 = vpop.f32.mrf.mxu0
      %v1340 = vadd.f32 0.0, %v1339
      %v1341 = vpop.f32.mrf.mxu0
      %1342 = vmatprep.mubr.bf16.mxu0 0
      %1343 = vmatmul.mubr.bf16.gmra.mxu0 %v1232
      %v1344 = vpop.f32.mrf.mxu0
      %v1345 = vadd.f32 0.0, %v1344
      %v1346 = vpop.f32.mrf.mxu0
      %v1347 = vpop.f32.mrf.mxu0
      %v1348 = vadd.f32 0.0, %v1347
      %v1349 = vpop.f32.mrf.mxu0
      %1350 = vmatprep.mubr.bf16.mxu0 0
      %1351 = vmatmul.mubr.bf16.gmra.mxu0 %v1233
      %v1352 = vpop.f32.mrf.mxu0
      %v1353 = vadd.f32 0.0, %v1352
      %v1354 = vpop.f32.mrf.mxu0
      %v1355 = vpop.f32.mrf.mxu0
      %v1356 = vadd.f32 0.0, %v1355
      %v1357 = vpop.f32.mrf.mxu0
      %1358 = vmatprep.mubr.bf16.mxu0 0
      %1359 = vmatmul.mubr.bf16.gmra.mxu0 %v1234
      %v1360 = vpop.f32.mrf.mxu0
      %v1361 = vadd.f32 0.0, %v1360
      %v1362 = vpop.f32.mrf.mxu0
      %v1363 = vpop.f32.mrf.mxu0
      %v1364 = vadd.f32 0.0, %v1363
      %v1365 = vpop.f32.mrf.mxu0
      %1366 = vmatprep.mubr.bf16.mxu0 0
      %1367 = vmatmul.mubr.bf16.gmra.mxu0 %v1235
      %v1368 = vpop.f32.mrf.mxu0
      %v1369 = vadd.f32 0.0, %v1368
      %v1370 = vpop.f32.mrf.mxu0
      %v1371 = vpop.f32.mrf.mxu0
      %v1372 = vadd.f32 0.0, %v1371
      %v1373 = vpop.f32.mrf.mxu0
      %1374 = vmatprep.mubr.bf16.mxu0 0
      %1375 = vmatmul.mubr.bf16.gmra.mxu0 %v1236
      %v1376 = vpop.f32.mrf.mxu0
      %v1377 = vadd.f32 0.0, %v1376
      %v1378 = vpop.f32.mrf.mxu0
      %v1379 = vpop.f32.mrf.mxu0
      %v1380 = vadd.f32 0.0, %v1379
      %v1381 = vpop.f32.mrf.mxu0
      %1382 = vmatprep.mubr.bf16.mxu0 0
      %1383 = vmatmul.mubr.bf16.gmra.mxu0 %v1237
      %v1384 = vpop.f32.mrf.mxu0
      %v1385 = vadd.f32 0.0, %v1384
      %v1386 = vpop.f32.mrf.mxu0
      %v1387 = vpop.f32.mrf.mxu0
      %v1388 = vadd.f32 0.0, %v1387
      %v1389 = vpop.f32.mrf.mxu0
      %1390 = vdwg.mxu0
      %v1407 = vunpack.c.l.b16 %v962
      %v1408 = vunpack.c.l.b16 %v963
      %v1409 = vunpack.c.l.b16 %v964
      %v1410 = vunpack.c.l.b16 %v965
      %v1411 = vunpack.c.l.b16 %v966
      %v1412 = vunpack.c.l.b16 %v967
      %v1413 = vunpack.c.l.b16 %v968
      %v1414 = vunpack.c.l.b16 %v969
      %v1415 = vunpack.c.l.b16 %v970
      %v1416 = vunpack.c.l.b16 %v971
      %v1417 = vunpack.c.l.b16 %v972
      %v1418 = vunpack.c.l.b16 %v973
      %v1419 = vunpack.c.l.b16 %v974
      %v1420 = vunpack.c.l.b16 %v975
      %v1421 = vunpack.c.l.b16 %v976
      %v1422 = vunpack.c.l.b16 %v977
      %v1423 = vpack.c.b16 %v1408, %v1407
      %v1424 = vpack.c.b16 %v1410, %v1409
      %v1425 = vpack.c.b16 %v1412, %v1411
      %v1426 = vpack.c.b16 %v1414, %v1413
      %v1427 = vpack.c.b16 %v1416, %v1415
      %v1428 = vpack.c.b16 %v1418, %v1417
      %v1429 = vpack.c.b16 %v1420, %v1419
      %v1430 = vpack.c.b16 %v1422, %v1421
      %v1455 = vunpack.c.l.b16 %v978
      %v1456 = vunpack.c.l.b16 %v979
      %v1457 = vunpack.c.l.b16 %v980
      %v1458 = vunpack.c.l.b16 %v981
      %v1459 = vunpack.c.l.b16 %v982
      %v1460 = vunpack.c.l.b16 %v983
      %v1461 = vunpack.c.l.b16 %v984
      %v1462 = vunpack.c.l.b16 %v985
      %v1463 = vunpack.c.l.b16 %v986
      %v1464 = vunpack.c.l.b16 %v987
      %v1465 = vunpack.c.l.b16 %v988
      %v1466 = vunpack.c.l.b16 %v989
      %v1467 = vunpack.c.l.b16 %v990
      %v1468 = vunpack.c.l.b16 %v991
      %v1469 = vunpack.c.l.b16 %v992
      %v1470 = vunpack.c.l.b16 %v993
      %v1471 = vpack.c.b16 %v1456, %v1455
      %v1472 = vpack.c.b16 %v1458, %v1457
      %v1473 = vpack.c.b16 %v1460, %v1459
      %v1474 = vpack.c.b16 %v1462, %v1461
      %v1475 = vpack.c.b16 %v1464, %v1463
      %v1476 = vpack.c.b16 %v1466, %v1465
      %v1477 = vpack.c.b16 %v1468, %v1467
      %v1478 = vpack.c.b16 %v1470, %v1469
      %1487 = vmatprep.subr.bf16.mxu0 0
      %1488 = vmatpush1.bf16.msra.mxu0 %v1478
      %1489 = vmatprep.subr.bf16.mxu0 0
      %1490 = vmatpush1.bf16.msra.mxu0 %v1477
      %1491 = vmatprep.subr.bf16.mxu0 0
      %1492 = vmatpush1.bf16.msra.mxu0 %v1476
      %1493 = vmatprep.subr.bf16.mxu0 0
      %1494 = vmatpush1.bf16.msra.mxu0 %v1475
      %1495 = vmatprep.subr.bf16.mxu0 0
      %1496 = vmatpush1.bf16.msra.mxu0 %v1474
      %1497 = vmatprep.subr.bf16.mxu0 0
      %1498 = vmatpush1.bf16.msra.mxu0 %v1473
      %1499 = vmatprep.subr.bf16.mxu0 0
      %1500 = vmatpush1.bf16.msra.mxu0 %v1472
      %1501 = vmatprep.subr.bf16.mxu0 0
      %1502 = vmatpush1.bf16.msra.mxu0 %v1471
      %1503 = vmatprep.subr.bf16.mxu0 0
      %1504 = vmatpush2.bf16.msra.mxu0 0
      %1505 = vmatprep.subr.bf16.mxu0 0
      %1506 = vmatpush2.bf16.msra.mxu0 0
      %1507 = vmatprep.subr.bf16.mxu0 0
      %1508 = vmatpush2.bf16.msra.mxu0 0
      %1509 = vmatprep.subr.bf16.mxu0 0
      %1510 = vmatpush2.bf16.msra.mxu0 0
      %1511 = vmatprep.subr.bf16.mxu0 0
      %1512 = vmatpush2.bf16.msra.mxu0 0
      %1513 = vmatprep.subr.bf16.mxu0 0
      %1514 = vmatpush2.bf16.msra.mxu0 0
      %1515 = vmatprep.subr.bf16.mxu0 0
      %1516 = vmatpush2.bf16.msra.mxu0 0
      %1517 = vmatprep.subr.bf16.mxu0 0
      %1518 = vmatpush2.bf16.msra.mxu0 0
      %1519 = vmatprep.mubr.bf16.mxu0 0
      %1520 = vmatmul.mubr.bf16.gmra.mxu0 %v1423
      %v1521 = vpop.f32.mrf.mxu0
      %v1522 = vadd.f32 %v1329, %v1521
      %v1523 = vpop.f32.mrf.mxu0
      %v1524 = vpop.f32.mrf.mxu0
      %v1525 = vadd.f32 %v1332, %v1524
      %v1526 = vpop.f32.mrf.mxu0
      %1527 = vmatprep.mubr.bf16.mxu0 0
      %1528 = vmatmul.mubr.bf16.gmra.mxu0 %v1424
      %v1529 = vpop.f32.mrf.mxu0
      %v1530 = vadd.f32 %v1337, %v1529
      %v1531 = vpop.f32.mrf.mxu0
      %v1532 = vpop.f32.mrf.mxu0
      %v1533 = vadd.f32 %v1340, %v1532
      %v1534 = vpop.f32.mrf.mxu0
      %1535 = vmatprep.mubr.bf16.mxu0 0
      %1536 = vmatmul.mubr.bf16.gmra.mxu0 %v1425
      %v1537 = vpop.f32.mrf.mxu0
      %v1538 = vadd.f32 %v1345, %v1537
      %v1539 = vpop.f32.mrf.mxu0
      %v1540 = vpop.f32.mrf.mxu0
      %v1541 = vadd.f32 %v1348, %v1540
      %v1542 = vpop.f32.mrf.mxu0
      %1543 = vmatprep.mubr.bf16.mxu0 0
      %1544 = vmatmul.mubr.bf16.gmra.mxu0 %v1426
      %v1545 = vpop.f32.mrf.mxu0
      %v1546 = vadd.f32 %v1353, %v1545
      %v1547 = vpop.f32.mrf.mxu0
      %v1548 = vpop.f32.mrf.mxu0
      %v1549 = vadd.f32 %v1356, %v1548
      %v1550 = vpop.f32.mrf.mxu0
      %1551 = vmatprep.mubr.bf16.mxu0 0
      %1552 = vmatmul.mubr.bf16.gmra.mxu0 %v1427
      %v1553 = vpop.f32.mrf.mxu0
      %v1554 = vadd.f32 %v1361, %v1553
      %v1555 = vpop.f32.mrf.mxu0
      %v1556 = vpop.f32.mrf.mxu0
      %v1557 = vadd.f32 %v1364, %v1556
      %v1558 = vpop.f32.mrf.mxu0
      %1559 = vmatprep.mubr.bf16.mxu0 0
      %1560 = vmatmul.mubr.bf16.gmra.mxu0 %v1428
      %v1561 = vpop.f32.mrf.mxu0
      %v1562 = vadd.f32 %v1369, %v1561
      %v1563 = vpop.f32.mrf.mxu0
      %v1564 = vpop.f32.mrf.mxu0
      %v1565 = vadd.f32 %v1372, %v1564
      %v1566 = vpop.f32.mrf.mxu0
      %1567 = vmatprep.mubr.bf16.mxu0 0
      %1568 = vmatmul.mubr.bf16.gmra.mxu0 %v1429
      %v1569 = vpop.f32.mrf.mxu0
      %v1570 = vadd.f32 %v1377, %v1569
      %v1571 = vpop.f32.mrf.mxu0
      %v1572 = vpop.f32.mrf.mxu0
      %v1573 = vadd.f32 %v1380, %v1572
      %v1574 = vpop.f32.mrf.mxu0
      %1575 = vmatprep.mubr.bf16.mxu0 0
      %1576 = vmatmul.mubr.bf16.gmra.mxu0 %v1430
      %v1577 = vpop.f32.mrf.mxu0
      %v1578 = vadd.f32 %v1385, %v1577
      %v1579 = vpop.f32.mrf.mxu0
      %v1580 = vpop.f32.mrf.mxu0
      %v1581 = vadd.f32 %v1388, %v1580
      %v1582 = vpop.f32.mrf.mxu0
      %1583 = vdwg.mxu0
      %v1584 = vld [vmem:[#allocation2] sm:$0xe]
      %v1585 = vld [vmem:[#allocation2 + $0xc] sm:$0xe]
      %v1586 = vld [vmem:[#allocation2 + $0x18] sm:$0xe]
      %v1587 = vld [vmem:[#allocation2 + $0x24] sm:$0xe]
      %v1588 = vld [vmem:[#allocation2 + $0x30] sm:$0xe]
      %v1589 = vld [vmem:[#allocation2 + $0x3c] sm:$0xe]
      %v1590 = vld [vmem:[#allocation2 + $0x48] sm:$0xe]
      %v1591 = vld [vmem:[#allocation2 + $0x54] sm:$0xe]
      %vm1608 = vcmask 1042432
      %vm1609 = vcmask 1046532
      %vm1610 = vmor %vm1608, %vm1609
      %v1611 = vrot.slane %v1584, 5
      %v1612 = vrot.slane %v1611, 4
      %v1613 = vrot.slane %v963, 5
      %v1614 = vsel %vm1610, %v1612, %v1613
      %v1615 = vrot.slane %v1613, 4
      %v1616 = vrot.slane %v994, 5
      %v1617 = vsel %vm1610, %v1615, %v1616
      %v1618 = vrot.slane %v1585, 5
      %v1619 = vrot.slane %v1618, 4
      %v1620 = vrot.slane %v965, 5
      %v1621 = vsel %vm1610, %v1619, %v1620
      %v1622 = vrot.slane %v1620, 4
      %v1623 = vrot.slane %v995, 5
      %v1624 = vsel %vm1610, %v1622, %v1623
      %v1625 = vrot.slane %v1586, 5
      %v1626 = vrot.slane %v1625, 4
      %v1627 = vrot.slane %v967, 5
      %v1628 = vsel %vm1610, %v1626, %v1627
      %v1629 = vrot.slane %v1627, 4
      %v1630 = vrot.slane %v996, 5
      %v1631 = vsel %vm1610, %v1629, %v1630
      %v1632 = vrot.slane %v1587, 5
      %v1633 = vrot.slane %v1632, 4
      %v1634 = vrot.slane %v969, 5
      %v1635 = vsel %vm1610, %v1633, %v1634
      %v1636 = vrot.slane %v1634, 4
      %v1637 = vrot.slane %v997, 5
      %v1638 = vsel %vm1610, %v1636, %v1637
      %v1639 = vrot.slane %v1588, 5
      %v1640 = vrot.slane %v1639, 4
      %v1641 = vrot.slane %v971, 5
      %v1642 = vsel %vm1610, %v1640, %v1641
      %v1643 = vrot.slane %v1641, 4
      %v1644 = vrot.slane %v998, 5
      %v1645 = vsel %vm1610, %v1643, %v1644
      %v1646 = vrot.slane %v1589, 5
      %v1647 = vrot.slane %v1646, 4
      %v1648 = vrot.slane %v973, 5
      %v1649 = vsel %vm1610, %v1647, %v1648
      %v1650 = vrot.slane %v1648, 4
      %v1651 = vrot.slane %v999, 5
      %v1652 = vsel %vm1610, %v1650, %v1651
      %v1653 = vrot.slane %v1590, 5
      %v1654 = vrot.slane %v1653, 4
      %v1655 = vrot.slane %v975, 5
      %v1656 = vsel %vm1610, %v1654, %v1655
      %v1657 = vrot.slane %v1655, 4
      %v1658 = vrot.slane %v1000, 5
      %v1659 = vsel %vm1610, %v1657, %v1658
      %v1660 = vrot.slane %v1591, 5
      %v1661 = vrot.slane %v1660, 4
      %v1662 = vrot.slane %v977, 5
      %v1663 = vsel %vm1610, %v1661, %v1662
      %v1664 = vrot.slane %v1662, 4
      %v1665 = vrot.slane %v1001, 5
      %v1666 = vsel %vm1610, %v1664, %v1665
      %s1667 = scalar_lea.vmem %s4, 128
      %v1668 = vld [vmem:[%s1667] sm:$0xf]
      %v1669 = vld [vmem:[%s1667 + $0x4] sm:$0xf]
      %v1670 = vld [vmem:[%s1667 + $0x8] sm:$0xf]
      %v1671 = vld [vmem:[%s1667 + $0xc] sm:$0xf]
      %v1672 = vld [vmem:[%s1667 + $0x10] sm:$0xf]
      %v1673 = vld [vmem:[%s1667 + $0x14] sm:$0xf]
      %v1674 = vld [vmem:[%s1667 + $0x18] sm:$0xf]
      %v1675 = vld [vmem:[%s1667 + $0x1c] sm:$0xf]
      %v1676 = vld [vmem:[%s1667 + $0x20] sm:$0xf]
      %v1677 = vld [vmem:[%s1667 + $0x24] sm:$0xf]
      %v1678 = vld [vmem:[%s1667 + $0x28] sm:$0xf]
      %v1679 = vld [vmem:[%s1667 + $0x2c] sm:$0xf]
      %v1680 = vld [vmem:[%s1667 + $0x30] sm:$0xf]
      %v1681 = vld [vmem:[%s1667 + $0x34] sm:$0xf]
      %v1682 = vld [vmem:[%s1667 + $0x38] sm:$0xf]
      %v1683 = vld [vmem:[%s1667 + $0x3c] sm:$0xf]
      %v1684 = vunpack.c.l.b16 %v1614
      %v1685 = vunpack.c.l.b16 %v1617
      %v1686 = vunpack.c.l.b16 %v1621
      %v1687 = vunpack.c.l.b16 %v1624
      %v1688 = vunpack.c.l.b16 %v1628
      %v1689 = vunpack.c.l.b16 %v1631
      %v1690 = vunpack.c.l.b16 %v1635
      %v1691 = vunpack.c.l.b16 %v1638
      %v1692 = vunpack.c.l.b16 %v1642
      %v1693 = vunpack.c.l.b16 %v1645
      %v1694 = vunpack.c.l.b16 %v1649
      %v1695 = vunpack.c.l.b16 %v1652
      %v1696 = vunpack.c.l.b16 %v1656
      %v1697 = vunpack.c.l.b16 %v1659
      %v1698 = vunpack.c.l.b16 %v1663
      %v1699 = vunpack.c.l.b16 %v1666
      %v1700 = vpack.c.b16 %v1685, %v1684
      %v1701 = vpack.c.b16 %v1687, %v1686
      %v1702 = vpack.c.b16 %v1689, %v1688
      %v1703 = vpack.c.b16 %v1691, %v1690
      %v1704 = vpack.c.b16 %v1693, %v1692
      %v1705 = vpack.c.b16 %v1695, %v1694
      %v1706 = vpack.c.b16 %v1697, %v1696
      %v1707 = vpack.c.b16 %v1699, %v1698
      %v1732 = vunpack.c.l.b16 %v1668
      %v1733 = vunpack.c.l.b16 %v1669
      %v1734 = vunpack.c.l.b16 %v1670
      %v1735 = vunpack.c.l.b16 %v1671
      %v1736 = vunpack.c.l.b16 %v1672
      %v1737 = vunpack.c.l.b16 %v1673
      %v1738 = vunpack.c.l.b16 %v1674
      %v1739 = vunpack.c.l.b16 %v1675
      %v1740 = vunpack.c.l.b16 %v1676
      %v1741 = vunpack.c.l.b16 %v1677
      %v1742 = vunpack.c.l.b16 %v1678
      %v1743 = vunpack.c.l.b16 %v1679
      %v1744 = vunpack.c.l.b16 %v1680
      %v1745 = vunpack.c.l.b16 %v1681
      %v1746 = vunpack.c.l.b16 %v1682
      %v1747 = vunpack.c.l.b16 %v1683
      %v1748 = vpack.c.b16 %v1733, %v1732
      %v1749 = vpack.c.b16 %v1735, %v1734
      %v1750 = vpack.c.b16 %v1737, %v1736
      %v1751 = vpack.c.b16 %v1739, %v1738
      %v1752 = vpack.c.b16 %v1741, %v1740
      %v1753 = vpack.c.b16 %v1743, %v1742
      %v1754 = vpack.c.b16 %v1745, %v1744
      %v1755 = vpack.c.b16 %v1747, %v1746
      %1764 = vmatprep.subr.bf16.mxu0 0
      %1765 = vmatpush1.bf16.msra.mxu0 %v1755
      %1766 = vmatprep.subr.bf16.mxu0 0
      %1767 = vmatpush1.bf16.msra.mxu0 %v1754
      %1768 = vmatprep.subr.bf16.mxu0 0
      %1769 = vmatpush1.bf16.msra.mxu0 %v1753
      %1770 = vmatprep.subr.bf16.mxu0 0
      %1771 = vmatpush1.bf16.msra.mxu0 %v1752
      %1772 = vmatprep.subr.bf16.mxu0 0
      %1773 = vmatpush1.bf16.msra.mxu0 %v1751
      %1774 = vmatprep.subr.bf16.mxu0 0
      %1775 = vmatpush1.bf16.msra.mxu0 %v1750
      %1776 = vmatprep.subr.bf16.mxu0 0
      %1777 = vmatpush1.bf16.msra.mxu0 %v1749
      %1778 = vmatprep.subr.bf16.mxu0 0
      %1779 = vmatpush1.bf16.msra.mxu0 %v1748
      %1780 = vmatprep.subr.bf16.mxu0 0
      %1781 = vmatpush2.bf16.msra.mxu0 0
      %1782 = vmatprep.subr.bf16.mxu0 0
      %1783 = vmatpush2.bf16.msra.mxu0 0
      %1784 = vmatprep.subr.bf16.mxu0 0
      %1785 = vmatpush2.bf16.msra.mxu0 0
      %1786 = vmatprep.subr.bf16.mxu0 0
      %1787 = vmatpush2.bf16.msra.mxu0 0
      %1788 = vmatprep.subr.bf16.mxu0 0
      %1789 = vmatpush2.bf16.msra.mxu0 0
      %1790 = vmatprep.subr.bf16.mxu0 0
      %1791 = vmatpush2.bf16.msra.mxu0 0
      %1792 = vmatprep.subr.bf16.mxu0 0
      %1793 = vmatpush2.bf16.msra.mxu0 0
      %1794 = vmatprep.subr.bf16.mxu0 0
      %1795 = vmatpush2.bf16.msra.mxu0 0
      %1796 = vmatprep.mubr.bf16.mxu0 0
      %1797 = vmatmul.mubr.bf16.gmra.mxu0 %v1700
      %v1798 = vpop.f32.mrf.mxu0
      %v1799 = vadd.f32 0.0, %v1798
      %v1800 = vpop.f32.mrf.mxu0
      %v1801 = vpop.f32.mrf.mxu0
      %v1802 = vadd.f32 0.0, %v1801
      %v1803 = vpop.f32.mrf.mxu0
      %1804 = vmatprep.mubr.bf16.mxu0 0
      %1805 = vmatmul.mubr.bf16.gmra.mxu0 %v1701
      %v1806 = vpop.f32.mrf.mxu0
      %v1807 = vadd.f32 0.0, %v1806
      %v1808 = vpop.f32.mrf.mxu0
      %v1809 = vpop.f32.mrf.mxu0
      %v1810 = vadd.f32 0.0, %v1809
      %v1811 = vpop.f32.mrf.mxu0
      %1812 = vmatprep.mubr.bf16.mxu0 0
      %1813 = vmatmul.mubr.bf16.gmra.mxu0 %v1702
      %v1814 = vpop.f32.mrf.mxu0
      %v1815 = vadd.f32 0.0, %v1814
      %v1816 = vpop.f32.mrf.mxu0
      %v1817 = vpop.f32.mrf.mxu0
      %v1818 = vadd.f32 0.0, %v1817
      %v1819 = vpop.f32.mrf.mxu0
      %1820 = vmatprep.mubr.bf16.mxu0 0
      %1821 = vmatmul.mubr.bf16.gmra.mxu0 %v1703
      %v1822 = vpop.f32.mrf.mxu0
      %v1823 = vadd.f32 0.0, %v1822
      %v1824 = vpop.f32.mrf.mxu0
      %v1825 = vpop.f32.mrf.mxu0
      %v1826 = vadd.f32 0.0, %v1825
      %v1827 = vpop.f32.mrf.mxu0
      %1828 = vmatprep.mubr.bf16.mxu0 0
      %1829 = vmatmul.mubr.bf16.gmra.mxu0 %v1704
      %v1830 = vpop.f32.mrf.mxu0
      %v1831 = vadd.f32 0.0, %v1830
      %v1832 = vpop.f32.mrf.mxu0
      %v1833 = vpop.f32.mrf.mxu0
      %v1834 = vadd.f32 0.0, %v1833
      %v1835 = vpop.f32.mrf.mxu0
      %1836 = vmatprep.mubr.bf16.mxu0 0
      %1837 = vmatmul.mubr.bf16.gmra.mxu0 %v1705
      %v1838 = vpop.f32.mrf.mxu0
      %v1839 = vadd.f32 0.0, %v1838
      %v1840 = vpop.f32.mrf.mxu0
      %v1841 = vpop.f32.mrf.mxu0
      %v1842 = vadd.f32 0.0, %v1841
      %v1843 = vpop.f32.mrf.mxu0
      %1844 = vmatprep.mubr.bf16.mxu0 0
      %1845 = vmatmul.mubr.bf16.gmra.mxu0 %v1706
      %v1846 = vpop.f32.mrf.mxu0
      %v1847 = vadd.f32 0.0, %v1846
      %v1848 = vpop.f32.mrf.mxu0
      %v1849 = vpop.f32.mrf.mxu0
      %v1850 = vadd.f32 0.0, %v1849
      %v1851 = vpop.f32.mrf.mxu0
      %1852 = vmatprep.mubr.bf16.mxu0 0
      %1853 = vmatmul.mubr.bf16.gmra.mxu0 %v1707
      %v1854 = vpop.f32.mrf.mxu0
      %v1855 = vadd.f32 0.0, %v1854
      %v1856 = vpop.f32.mrf.mxu0
      %v1857 = vpop.f32.mrf.mxu0
      %v1858 = vadd.f32 0.0, %v1857
      %v1859 = vpop.f32.mrf.mxu0
      %1860 = vdwg.mxu0
      %v1861 = vadd.f32 %v1522, %v1799
      %v1862 = vadd.f32 %v1525, %v1802
      %v1863 = vadd.f32 %v1530, %v1807
      %v1864 = vadd.f32 %v1533, %v1810
      %v1865 = vadd.f32 %v1538, %v1815
      %v1866 = vadd.f32 %v1541, %v1818
      %v1867 = vadd.f32 %v1546, %v1823
      %v1868 = vadd.f32 %v1549, %v1826
      %v1869 = vadd.f32 %v1554, %v1831
      %v1870 = vadd.f32 %v1557, %v1834
      %v1871 = vadd.f32 %v1562, %v1839
      %v1872 = vadd.f32 %v1565, %v1842
      %v1873 = vadd.f32 %v1570, %v1847
      %v1874 = vadd.f32 %v1573, %v1850
      %v1875 = vadd.f32 %v1578, %v1855
      %v1876 = vadd.f32 %v1581, %v1858
      %v1877 = vld [vmem:[%s905] sm:$0xf]
      %v1878 = vld [vmem:[%s905 + $0x4] sm:$0xf]
      %v1879 = vld [vmem:[%s905 + $0xc] sm:$0xf]
      %v1880 = vld [vmem:[%s905 + $0x10] sm:$0xf]
      %v1881 = vld [vmem:[%s905 + $0x18] sm:$0xf]
      %v1882 = vld [vmem:[%s905 + $0x1c] sm:$0xf]
      %v1883 = vld [vmem:[%s905 + $0x24] sm:$0xf]
      %v1884 = vld [vmem:[%s905 + $0x28] sm:$0xf]
      %v1885 = vld [vmem:[%s905 + $0x30] sm:$0xf]
      %v1886 = vld [vmem:[%s905 + $0x34] sm:$0xf]
      %v1887 = vld [vmem:[%s905 + $0x3c] sm:$0xf]
      %v1888 = vld [vmem:[%s905 + $0x40] sm:$0xf]
      %v1889 = vld [vmem:[%s905 + $0x48] sm:$0xf]
      %v1890 = vld [vmem:[%s905 + $0x4c] sm:$0xf]
      %v1891 = vld [vmem:[%s905 + $0x54] sm:$0xf]
      %v1892 = vld [vmem:[%s905 + $0x58] sm:$0xf]
      %s1893 = scalar_lea.vmem %s4, 192
      %v1894 = vld [vmem:[%s1893] sm:$0xf]
      %v1895 = vld [vmem:[%s1893 + $0x4] sm:$0xf]
      %v1896 = vld [vmem:[%s1893 + $0x8] sm:$0xf]
      %v1897 = vld [vmem:[%s1893 + $0xc] sm:$0xf]
      %v1898 = vld [vmem:[%s1893 + $0x10] sm:$0xf]
      %v1899 = vld [vmem:[%s1893 + $0x14] sm:$0xf]
      %v1900 = vld [vmem:[%s1893 + $0x18] sm:$0xf]
      %v1901 = vld [vmem:[%s1893 + $0x1c] sm:$0xf]
      %v1902 = vld [vmem:[%s1893 + $0x20] sm:$0xf]
      %v1903 = vld [vmem:[%s1893 + $0x24] sm:$0xf]
      %v1904 = vld [vmem:[%s1893 + $0x28] sm:$0xf]
      %v1905 = vld [vmem:[%s1893 + $0x2c] sm:$0xf]
      %v1906 = vld [vmem:[%s1893 + $0x30] sm:$0xf]
      %v1907 = vld [vmem:[%s1893 + $0x34] sm:$0xf]
      %v1908 = vld [vmem:[%s1893 + $0x38] sm:$0xf]
      %v1909 = vld [vmem:[%s1893 + $0x3c] sm:$0xf]
      %v1926 = vunpack.c.l.b16 %v1877
      %v1927 = vunpack.c.l.b16 %v1878
      %v1928 = vunpack.c.l.b16 %v1879
      %v1929 = vunpack.c.l.b16 %v1880
      %v1930 = vunpack.c.l.b16 %v1881
      %v1931 = vunpack.c.l.b16 %v1882
      %v1932 = vunpack.c.l.b16 %v1883
      %v1933 = vunpack.c.l.b16 %v1884
      %v1934 = vunpack.c.l.b16 %v1885
      %v1935 = vunpack.c.l.b16 %v1886
      %v1936 = vunpack.c.l.b16 %v1887
      %v1937 = vunpack.c.l.b16 %v1888
      %v1938 = vunpack.c.l.b16 %v1889
      %v1939 = vunpack.c.l.b16 %v1890
      %v1940 = vunpack.c.l.b16 %v1891
      %v1941 = vunpack.c.l.b16 %v1892
      %v1942 = vpack.c.b16 %v1927, %v1926
      %v1943 = vpack.c.b16 %v1929, %v1928
      %v1944 = vpack.c.b16 %v1931, %v1930
      %v1945 = vpack.c.b16 %v1933, %v1932
      %v1946 = vpack.c.b16 %v1935, %v1934
      %v1947 = vpack.c.b16 %v1937, %v1936
      %v1948 = vpack.c.b16 %v1939, %v1938
      %v1949 = vpack.c.b16 %v1941, %v1940
      %v1974 = vunpack.c.l.b16 %v1894
      %v1975 = vunpack.c.l.b16 %v1895
      %v1976 = vunpack.c.l.b16 %v1896
      %v1977 = vunpack.c.l.b16 %v1897
      %v1978 = vunpack.c.l.b16 %v1898
      %v1979 = vunpack.c.l.b16 %v1899
      %v1980 = vunpack.c.l.b16 %v1900
      %v1981 = vunpack.c.l.b16 %v1901
      %v1982 = vunpack.c.l.b16 %v1902
      %v1983 = vunpack.c.l.b16 %v1903
      %v1984 = vunpack.c.l.b16 %v1904
      %v1985 = vunpack.c.l.b16 %v1905
      %v1986 = vunpack.c.l.b16 %v1906
      %v1987 = vunpack.c.l.b16 %v1907
      %v1988 = vunpack.c.l.b16 %v1908
      %v1989 = vunpack.c.l.b16 %v1909
      %v1990 = vpack.c.b16 %v1975, %v1974
      %v1991 = vpack.c.b16 %v1977, %v1976
      %v1992 = vpack.c.b16 %v1979, %v1978
      %v1993 = vpack.c.b16 %v1981, %v1980
      %v1994 = vpack.c.b16 %v1983, %v1982
      %v1995 = vpack.c.b16 %v1985, %v1984
      %v1996 = vpack.c.b16 %v1987, %v1986
      %v1997 = vpack.c.b16 %v1989, %v1988
      %2006 = vmatprep.subr.bf16.mxu0 0
      %2007 = vmatpush1.bf16.msra.mxu0 %v1997
      %2008 = vmatprep.subr.bf16.mxu0 0
      %2009 = vmatpush1.bf16.msra.mxu0 %v1996
      %2010 = vmatprep.subr.bf16.mxu0 0
      %2011 = vmatpush1.bf16.msra.mxu0 %v1995
      %2012 = vmatprep.subr.bf16.mxu0 0
      %2013 = vmatpush1.bf16.msra.mxu0 %v1994
      %2014 = vmatprep.subr.bf16.mxu0 0
      %2015 = vmatpush1.bf16.msra.mxu0 %v1993
      %2016 = vmatprep.subr.bf16.mxu0 0
      %2017 = vmatpush1.bf16.msra.mxu0 %v1992
      %2018 = vmatprep.subr.bf16.mxu0 0
      %2019 = vmatpush1.bf16.msra.mxu0 %v1991
      %2020 = vmatprep.subr.bf16.mxu0 0
      %2021 = vmatpush1.bf16.msra.mxu0 %v1990
      %2022 = vmatprep.subr.bf16.mxu0 0
      %2023 = vmatpush2.bf16.msra.mxu0 0
      %2024 = vmatprep.subr.bf16.mxu0 0
      %2025 = vmatpush2.bf16.msra.mxu0 0
      %2026 = vmatprep.subr.bf16.mxu0 0
      %2027 = vmatpush2.bf16.msra.mxu0 0
      %2028 = vmatprep.subr.bf16.mxu0 0
      %2029 = vmatpush2.bf16.msra.mxu0 0
      %2030 = vmatprep.subr.bf16.mxu0 0
      %2031 = vmatpush2.bf16.msra.mxu0 0
      %2032 = vmatprep.subr.bf16.mxu0 0
      %2033 = vmatpush2.bf16.msra.mxu0 0
      %2034 = vmatprep.subr.bf16.mxu0 0
      %2035 = vmatpush2.bf16.msra.mxu0 0
      %2036 = vmatprep.subr.bf16.mxu0 0
      %2037 = vmatpush2.bf16.msra.mxu0 0
      %2038 = vmatprep.mubr.bf16.mxu0 0
      %2039 = vmatmul.mubr.bf16.gmra.mxu0 %v1942
      %v2040 = vpop.f32.mrf.mxu0
      %v2041 = vadd.f32 0.0, %v2040
      %v2042 = vpop.f32.mrf.mxu0
      %v2043 = vpop.f32.mrf.mxu0
      %v2044 = vadd.f32 0.0, %v2043
      %v2045 = vpop.f32.mrf.mxu0
      %2046 = vmatprep.mubr.bf16.mxu0 0
      %2047 = vmatmul.mubr.bf16.gmra.mxu0 %v1943
      %v2048 = vpop.f32.mrf.mxu0
      %v2049 = vadd.f32 0.0, %v2048
      %v2050 = vpop.f32.mrf.mxu0
      %v2051 = vpop.f32.mrf.mxu0
      %v2052 = vadd.f32 0.0, %v2051
      %v2053 = vpop.f32.mrf.mxu0
      %2054 = vmatprep.mubr.bf16.mxu0 0
      %2055 = vmatmul.mubr.bf16.gmra.mxu0 %v1944
      %v2056 = vpop.f32.mrf.mxu0
      %v2057 = vadd.f32 0.0, %v2056
      %v2058 = vpop.f32.mrf.mxu0
      %v2059 = vpop.f32.mrf.mxu0
      %v2060 = vadd.f32 0.0, %v2059
      %v2061 = vpop.f32.mrf.mxu0
      %2062 = vmatprep.mubr.bf16.mxu0 0
      %2063 = vmatmul.mubr.bf16.gmra.mxu0 %v1945
      %v2064 = vpop.f32.mrf.mxu0
      %v2065 = vadd.f32 0.0, %v2064
      %v2066 = vpop.f32.mrf.mxu0
      %v2067 = vpop.f32.mrf.mxu0
      %v2068 = vadd.f32 0.0, %v2067
      %v2069 = vpop.f32.mrf.mxu0
      %2070 = vmatprep.mubr.bf16.mxu0 0
      %2071 = vmatmul.mubr.bf16.gmra.mxu0 %v1946
      %v2072 = vpop.f32.mrf.mxu0
      %v2073 = vadd.f32 0.0, %v2072
      %v2074 = vpop.f32.mrf.mxu0
      %v2075 = vpop.f32.mrf.mxu0
      %v2076 = vadd.f32 0.0, %v2075
      %v2077 = vpop.f32.mrf.mxu0
      %2078 = vmatprep.mubr.bf16.mxu0 0
      %2079 = vmatmul.mubr.bf16.gmra.mxu0 %v1947
      %v2080 = vpop.f32.mrf.mxu0
      %v2081 = vadd.f32 0.0, %v2080
      %v2082 = vpop.f32.mrf.mxu0
      %v2083 = vpop.f32.mrf.mxu0
      %v2084 = vadd.f32 0.0, %v2083
      %v2085 = vpop.f32.mrf.mxu0
      %2086 = vmatprep.mubr.bf16.mxu0 0
      %2087 = vmatmul.mubr.bf16.gmra.mxu0 %v1948
      %v2088 = vpop.f32.mrf.mxu0
      %v2089 = vadd.f32 0.0, %v2088
      %v2090 = vpop.f32.mrf.mxu0
      %v2091 = vpop.f32.mrf.mxu0
      %v2092 = vadd.f32 0.0, %v2091
      %v2093 = vpop.f32.mrf.mxu0
      %2094 = vmatprep.mubr.bf16.mxu0 0
      %2095 = vmatmul.mubr.bf16.gmra.mxu0 %v1949
      %v2096 = vpop.f32.mrf.mxu0
      %v2097 = vadd.f32 0.0, %v2096
      %v2098 = vpop.f32.mrf.mxu0
      %v2099 = vpop.f32.mrf.mxu0
      %v2100 = vadd.f32 0.0, %v2099
      %v2101 = vpop.f32.mrf.mxu0
      %2102 = vdwg.mxu0
      %v2103 = vadd.f32 %v1861, %v2041
      %v2104 = vadd.f32 %v1862, %v2044
      %v2105 = vadd.f32 %v1863, %v2049
      %v2106 = vadd.f32 %v1864, %v2052
      %v2107 = vadd.f32 %v1865, %v2057
      %v2108 = vadd.f32 %v1866, %v2060
      %v2109 = vadd.f32 %v1867, %v2065
      %v2110 = vadd.f32 %v1868, %v2068
      %v2111 = vadd.f32 %v1869, %v2073
      %v2112 = vadd.f32 %v1870, %v2076
      %v2113 = vadd.f32 %v1871, %v2081
      %v2114 = vadd.f32 %v1872, %v2084
      %v2115 = vadd.f32 %v1873, %v2089
      %v2116 = vadd.f32 %v1874, %v2092
      %v2117 = vadd.f32 %v1875, %v2097
      %v2118 = vadd.f32 %v1876, %v2100
      %v2119 = vld [vmem:[%s905] sm:$0xf]
      %v2120 = vld [vmem:[%s905 + $0x4] sm:$0xf]
      %v2121 = vld [vmem:[%s905 + $0x8] sm:$0x1]
      %v2122 = vld [vmem:[%s905 + $0xc] sm:$0xf]
      %v2123 = vld [vmem:[%s905 + $0x10] sm:$0xf]
      %v2124 = vld [vmem:[%s905 + $0x14] sm:$0x1]
      %v2125 = vld [vmem:[%s905 + $0x18] sm:$0xf]
      %v2126 = vld [vmem:[%s905 + $0x1c] sm:$0xf]
      %v2127 = vld [vmem:[%s905 + $0x20] sm:$0x1]
      %v2128 = vld [vmem:[%s905 + $0x24] sm:$0xf]
      %v2129 = vld [vmem:[%s905 + $0x28] sm:$0xf]
      %v2130 = vld [vmem:[%s905 + $0x2c] sm:$0x1]
      %v2131 = vld [vmem:[%s905 + $0x30] sm:$0xf]
      %v2132 = vld [vmem:[%s905 + $0x34] sm:$0xf]
      %v2133 = vld [vmem:[%s905 + $0x38] sm:$0x1]
      %v2134 = vld [vmem:[%s905 + $0x3c] sm:$0xf]
      %v2135 = vld [vmem:[%s905 + $0x40] sm:$0xf]
      %v2136 = vld [vmem:[%s905 + $0x44] sm:$0x1]
      %v2137 = vld [vmem:[%s905 + $0x48] sm:$0xf]
      %v2138 = vld [vmem:[%s905 + $0x4c] sm:$0xf]
      %v2139 = vld [vmem:[%s905 + $0x50] sm:$0x1]
      %v2140 = vld [vmem:[%s905 + $0x54] sm:$0xf]
      %v2141 = vld [vmem:[%s905 + $0x58] sm:$0xf]
      %v2142 = vld [vmem:[%s905 + $0x5c] sm:$0x1]
      %v2144 = vshrl.u32 %v2119, 16
      %v2146 = vrot.slane %v2144, 4
      %v2147 = vshll.u32 %v2119, 16
      %v2149 = vrot.slane %v2147, 5
      %v2150 = vor.u32 %v2146, %v2149
      %v2151 = vrot.slane %v2150, 4
      %v2153 = vshll.u32 %v2120, 16
      %v2155 = vrot.slane %v2153, 5
      %v2156 = vsel %vm1004, %v2151, %v2155
      %v2157 = vshrl.u32 %v2120, 16
      %v2159 = vrot.slane %v2157, 4
      %v2160 = vor.u32 %v2159, %v2155
      %v2161 = vrot.slane %v2160, 4
      %v2163 = vshll.u32 %v2121, 16
      %v2165 = vrot.slane %v2163, 5
      %v2166 = vsel %vm1004, %v2161, %v2165
      %v2168 = vshrl.u32 %v2122, 16
      %v2170 = vrot.slane %v2168, 4
      %v2171 = vshll.u32 %v2122, 16
      %v2173 = vrot.slane %v2171, 5
      %v2174 = vor.u32 %v2170, %v2173
      %v2175 = vrot.slane %v2174, 4
      %v2177 = vshll.u32 %v2123, 16
      %v2179 = vrot.slane %v2177, 5
      %v2180 = vsel %vm1004, %v2175, %v2179
      %v2181 = vshrl.u32 %v2123, 16
      %v2183 = vrot.slane %v2181, 4
      %v2184 = vor.u32 %v2183, %v2179
      %v2185 = vrot.slane %v2184, 4
      %v2187 = vshll.u32 %v2124, 16
      %v2189 = vrot.slane %v2187, 5
      %v2190 = vsel %vm1004, %v2185, %v2189
      %v2192 = vshrl.u32 %v2125, 16
      %v2194 = vrot.slane %v2192, 4
      %v2195 = vshll.u32 %v2125, 16
      %v2197 = vrot.slane %v2195, 5
      %v2198 = vor.u32 %v2194, %v2197
      %v2199 = vrot.slane %v2198, 4
      %v2201 = vshll.u32 %v2126, 16
      %v2203 = vrot.slane %v2201, 5
      %v2204 = vsel %vm1004, %v2199, %v2203
      %v2205 = vshrl.u32 %v2126, 16
      %v2207 = vrot.slane %v2205, 4
      %v2208 = vor.u32 %v2207, %v2203
      %v2209 = vrot.slane %v2208, 4
      %v2211 = vshll.u32 %v2127, 16
      %v2213 = vrot.slane %v2211, 5
      %v2214 = vsel %vm1004, %v2209, %v2213
      %v2216 = vshrl.u32 %v2128, 16
      %v2218 = vrot.slane %v2216, 4
      %v2219 = vshll.u32 %v2128, 16
      %v2221 = vrot.slane %v2219, 5
      %v2222 = vor.u32 %v2218, %v2221
      %v2223 = vrot.slane %v2222, 4
      %v2225 = vshll.u32 %v2129, 16
      %v2227 = vrot.slane %v2225, 5
      %v2228 = vsel %vm1004, %v2223, %v2227
      %v2229 = vshrl.u32 %v2129, 16
      %v2231 = vrot.slane %v2229, 4
      %v2232 = vor.u32 %v2231, %v2227
      %v2233 = vrot.slane %v2232, 4
      %v2235 = vshll.u32 %v2130, 16
      %v2237 = vrot.slane %v2235, 5
      %v2238 = vsel %vm1004, %v2233, %v2237
      %v2240 = vshrl.u32 %v2131, 16
      %v2242 = vrot.slane %v2240, 4
      %v2243 = vshll.u32 %v2131, 16
      %v2245 = vrot.slane %v2243, 5
      %v2246 = vor.u32 %v2242, %v2245
      %v2247 = vrot.slane %v2246, 4
      %v2249 = vshll.u32 %v2132, 16
      %v2251 = vrot.slane %v2249, 5
      %v2252 = vsel %vm1004, %v2247, %v2251
      %v2253 = vshrl.u32 %v2132, 16
      %v2255 = vrot.slane %v2253, 4
      %v2256 = vor.u32 %v2255, %v2251
      %v2257 = vrot.slane %v2256, 4
      %v2259 = vshll.u32 %v2133, 16
      %v2261 = vrot.slane %v2259, 5
      %v2262 = vsel %vm1004, %v2257, %v2261
      %v2264 = vshrl.u32 %v2134, 16
      %v2266 = vrot.slane %v2264, 4
      %v2267 = vshll.u32 %v2134, 16
      %v2269 = vrot.slane %v2267, 5
      %v2270 = vor.u32 %v2266, %v2269
      %v2271 = vrot.slane %v2270, 4
      %v2273 = vshll.u32 %v2135, 16
      %v2275 = vrot.slane %v2273, 5
      %v2276 = vsel %vm1004, %v2271, %v2275
      %v2277 = vshrl.u32 %v2135, 16
      %v2279 = vrot.slane %v2277, 4
      %v2280 = vor.u32 %v2279, %v2275
      %v2281 = vrot.slane %v2280, 4
      %v2283 = vshll.u32 %v2136, 16
      %v2285 = vrot.slane %v2283, 5
      %v2286 = vsel %vm1004, %v2281, %v2285
      %v2288 = vshrl.u32 %v2137, 16
      %v2290 = vrot.slane %v2288, 4
      %v2291 = vshll.u32 %v2137, 16
      %v2293 = vrot.slane %v2291, 5
      %v2294 = vor.u32 %v2290, %v2293
      %v2295 = vrot.slane %v2294, 4
      %v2297 = vshll.u32 %v2138, 16
      %v2299 = vrot.slane %v2297, 5
      %v2300 = vsel %vm1004, %v2295, %v2299
      %v2301 = vshrl.u32 %v2138, 16
      %v2303 = vrot.slane %v2301, 4
      %v2304 = vor.u32 %v2303, %v2299
      %v2305 = vrot.slane %v2304, 4
      %v2307 = vshll.u32 %v2139, 16
      %v2309 = vrot.slane %v2307, 5
      %v2310 = vsel %vm1004, %v2305, %v2309
      %v2312 = vshrl.u32 %v2140, 16
      %v2314 = vrot.slane %v2312, 4
      %v2315 = vshll.u32 %v2140, 16
      %v2317 = vrot.slane %v2315, 5
      %v2318 = vor.u32 %v2314, %v2317
      %v2319 = vrot.slane %v2318, 4
      %v2321 = vshll.u32 %v2141, 16
      %v2323 = vrot.slane %v2321, 5
      %v2324 = vsel %vm1004, %v2319, %v2323
      %v2325 = vshrl.u32 %v2141, 16
      %v2327 = vrot.slane %v2325, 4
      %v2328 = vor.u32 %v2327, %v2323
      %v2329 = vrot.slane %v2328, 4
      %v2331 = vshll.u32 %v2142, 16
      %v2333 = vrot.slane %v2331, 5
      %v2334 = vsel %vm1004, %v2329, %v2333
      %s2335 = scalar_lea.vmem %s4, 256
      %v2336 = vld [vmem:[%s2335] sm:$0xf]
      %v2337 = vld [vmem:[%s2335 + $0x4] sm:$0xf]
      %v2338 = vld [vmem:[%s2335 + $0x8] sm:$0xf]
      %v2339 = vld [vmem:[%s2335 + $0xc] sm:$0xf]
      %v2340 = vld [vmem:[%s2335 + $0x10] sm:$0xf]
      %v2341 = vld [vmem:[%s2335 + $0x14] sm:$0xf]
      %v2342 = vld [vmem:[%s2335 + $0x18] sm:$0xf]
      %v2343 = vld [vmem:[%s2335 + $0x1c] sm:$0xf]
      %v2344 = vld [vmem:[%s2335 + $0x20] sm:$0xf]
      %v2345 = vld [vmem:[%s2335 + $0x24] sm:$0xf]
      %v2346 = vld [vmem:[%s2335 + $0x28] sm:$0xf]
      %v2347 = vld [vmem:[%s2335 + $0x2c] sm:$0xf]
      %v2348 = vld [vmem:[%s2335 + $0x30] sm:$0xf]
      %v2349 = vld [vmem:[%s2335 + $0x34] sm:$0xf]
      %v2350 = vld [vmem:[%s2335 + $0x38] sm:$0xf]
      %v2351 = vld [vmem:[%s2335 + $0x3c] sm:$0xf]
      %v2352 = vunpack.c.l.b16 %v2156
      %v2353 = vunpack.c.l.b16 %v2166
      %v2354 = vunpack.c.l.b16 %v2180
      %v2355 = vunpack.c.l.b16 %v2190
      %v2356 = vunpack.c.l.b16 %v2204
      %v2357 = vunpack.c.l.b16 %v2214
      %v2358 = vunpack.c.l.b16 %v2228
      %v2359 = vunpack.c.l.b16 %v2238
      %v2360 = vunpack.c.l.b16 %v2252
      %v2361 = vunpack.c.l.b16 %v2262
      %v2362 = vunpack.c.l.b16 %v2276
      %v2363 = vunpack.c.l.b16 %v2286
      %v2364 = vunpack.c.l.b16 %v2300
      %v2365 = vunpack.c.l.b16 %v2310
      %v2366 = vunpack.c.l.b16 %v2324
      %v2367 = vunpack.c.l.b16 %v2334
      %v2368 = vpack.c.b16 %v2353, %v2352
      %v2369 = vpack.c.b16 %v2355, %v2354
      %v2370 = vpack.c.b16 %v2357, %v2356
      %v2371 = vpack.c.b16 %v2359, %v2358
      %v2372 = vpack.c.b16 %v2361, %v2360
      %v2373 = vpack.c.b16 %v2363, %v2362
      %v2374 = vpack.c.b16 %v2365, %v2364
      %v2375 = vpack.c.b16 %v2367, %v2366
      %v2400 = vunpack.c.l.b16 %v2336
      %v2401 = vunpack.c.l.b16 %v2337
      %v2402 = vunpack.c.l.b16 %v2338
      %v2403 = vunpack.c.l.b16 %v2339
      %v2404 = vunpack.c.l.b16 %v2340
      %v2405 = vunpack.c.l.b16 %v2341
      %v2406 = vunpack.c.l.b16 %v2342
      %v2407 = vunpack.c.l.b16 %v2343
      %v2408 = vunpack.c.l.b16 %v2344
      %v2409 = vunpack.c.l.b16 %v2345
      %v2410 = vunpack.c.l.b16 %v2346
      %v2411 = vunpack.c.l.b16 %v2347
      %v2412 = vunpack.c.l.b16 %v2348
      %v2413 = vunpack.c.l.b16 %v2349
      %v2414 = vunpack.c.l.b16 %v2350
      %v2415 = vunpack.c.l.b16 %v2351
      %v2416 = vpack.c.b16 %v2401, %v2400
      %v2417 = vpack.c.b16 %v2403, %v2402
      %v2418 = vpack.c.b16 %v2405, %v2404
      %v2419 = vpack.c.b16 %v2407, %v2406
      %v2420 = vpack.c.b16 %v2409, %v2408
      %v2421 = vpack.c.b16 %v2411, %v2410
      %v2422 = vpack.c.b16 %v2413, %v2412
      %v2423 = vpack.c.b16 %v2415, %v2414
      %2432 = vmatprep.subr.bf16.mxu0 0
      %2433 = vmatpush1.bf16.msra.mxu0 %v2423
      %2434 = vmatprep.subr.bf16.mxu0 0
      %2435 = vmatpush1.bf16.msra.mxu0 %v2422
      %2436 = vmatprep.subr.bf16.mxu0 0
      %2437 = vmatpush1.bf16.msra.mxu0 %v2421
      %2438 = vmatprep.subr.bf16.mxu0 0
      %2439 = vmatpush1.bf16.msra.mxu0 %v2420
      %2440 = vmatprep.subr.bf16.mxu0 0
      %2441 = vmatpush1.bf16.msra.mxu0 %v2419
      %2442 = vmatprep.subr.bf16.mxu0 0
      %2443 = vmatpush1.bf16.msra.mxu0 %v2418
      %2444 = vmatprep.subr.bf16.mxu0 0
      %2445 = vmatpush1.bf16.msra.mxu0 %v2417
      %2446 = vmatprep.subr.bf16.mxu0 0
      %2447 = vmatpush1.bf16.msra.mxu0 %v2416
      %2448 = vmatprep.subr.bf16.mxu0 0
      %2449 = vmatpush2.bf16.msra.mxu0 0
      %2450 = vmatprep.subr.bf16.mxu0 0
      %2451 = vmatpush2.bf16.msra.mxu0 0
      %2452 = vmatprep.subr.bf16.mxu0 0
      %2453 = vmatpush2.bf16.msra.mxu0 0
      %2454 = vmatprep.subr.bf16.mxu0 0
      %2455 = vmatpush2.bf16.msra.mxu0 0
      %2456 = vmatprep.subr.bf16.mxu0 0
      %2457 = vmatpush2.bf16.msra.mxu0 0
      %2458 = vmatprep.subr.bf16.mxu0 0
      %2459 = vmatpush2.bf16.msra.mxu0 0
      %2460 = vmatprep.subr.bf16.mxu0 0
      %2461 = vmatpush2.bf16.msra.mxu0 0
      %2462 = vmatprep.subr.bf16.mxu0 0
      %2463 = vmatpush2.bf16.msra.mxu0 0
      %2464 = vmatprep.mubr.bf16.mxu0 0
      %2465 = vmatmul.mubr.bf16.gmra.mxu0 %v2368
      %v2466 = vpop.f32.mrf.mxu0
      %v2467 = vadd.f32 0.0, %v2466
      %v2468 = vpop.f32.mrf.mxu0
      %v2469 = vpop.f32.mrf.mxu0
      %v2470 = vadd.f32 0.0, %v2469
      %v2471 = vpop.f32.mrf.mxu0
      %2472 = vmatprep.mubr.bf16.mxu0 0
      %2473 = vmatmul.mubr.bf16.gmra.mxu0 %v2369
      %v2474 = vpop.f32.mrf.mxu0
      %v2475 = vadd.f32 0.0, %v2474
      %v2476 = vpop.f32.mrf.mxu0
      %v2477 = vpop.f32.mrf.mxu0
      %v2478 = vadd.f32 0.0, %v2477
      %v2479 = vpop.f32.mrf.mxu0
      %2480 = vmatprep.mubr.bf16.mxu0 0
      %2481 = vmatmul.mubr.bf16.gmra.mxu0 %v2370
      %v2482 = vpop.f32.mrf.mxu0
      %v2483 = vadd.f32 0.0, %v2482
      %v2484 = vpop.f32.mrf.mxu0
      %v2485 = vpop.f32.mrf.mxu0
      %v2486 = vadd.f32 0.0, %v2485
      %v2487 = vpop.f32.mrf.mxu0
      %2488 = vmatprep.mubr.bf16.mxu0 0
      %2489 = vmatmul.mubr.bf16.gmra.mxu0 %v2371
      %v2490 = vpop.f32.mrf.mxu0
      %v2491 = vadd.f32 0.0, %v2490
      %v2492 = vpop.f32.mrf.mxu0
      %v2493 = vpop.f32.mrf.mxu0
      %v2494 = vadd.f32 0.0, %v2493
      %v2495 = vpop.f32.mrf.mxu0
      %2496 = vmatprep.mubr.bf16.mxu0 0
      %2497 = vmatmul.mubr.bf16.gmra.mxu0 %v2372
      %v2498 = vpop.f32.mrf.mxu0
      %v2499 = vadd.f32 0.0, %v2498
      %v2500 = vpop.f32.mrf.mxu0
      %v2501 = vpop.f32.mrf.mxu0
      %v2502 = vadd.f32 0.0, %v2501
      %v2503 = vpop.f32.mrf.mxu0
      %2504 = vmatprep.mubr.bf16.mxu0 0
      %2505 = vmatmul.mubr.bf16.gmra.mxu0 %v2373
      %v2506 = vpop.f32.mrf.mxu0
      %v2507 = vadd.f32 0.0, %v2506
      %v2508 = vpop.f32.mrf.mxu0
      %v2509 = vpop.f32.mrf.mxu0
      %v2510 = vadd.f32 0.0, %v2509
      %v2511 = vpop.f32.mrf.mxu0
      %2512 = vmatprep.mubr.bf16.mxu0 0
      %2513 = vmatmul.mubr.bf16.gmra.mxu0 %v2374
      %v2514 = vpop.f32.mrf.mxu0
      %v2515 = vadd.f32 0.0, %v2514
      %v2516 = vpop.f32.mrf.mxu0
      %v2517 = vpop.f32.mrf.mxu0
      %v2518 = vadd.f32 0.0, %v2517
      %v2519 = vpop.f32.mrf.mxu0
      %2520 = vmatprep.mubr.bf16.mxu0 0
      %2521 = vmatmul.mubr.bf16.gmra.mxu0 %v2375
      %v2522 = vpop.f32.mrf.mxu0
      %v2523 = vadd.f32 0.0, %v2522
      %v2524 = vpop.f32.mrf.mxu0
      %v2525 = vpop.f32.mrf.mxu0
      %v2526 = vadd.f32 0.0, %v2525
      %v2527 = vpop.f32.mrf.mxu0
      %2528 = vdwg.mxu0
      %v2529 = vadd.f32 %v2103, %v2467
      %v2530 = vadd.f32 %v2104, %v2470
      %v2531 = vadd.f32 %v2105, %v2475
      %v2532 = vadd.f32 %v2106, %v2478
      %v2533 = vadd.f32 %v2107, %v2483
      %v2534 = vadd.f32 %v2108, %v2486
      %v2535 = vadd.f32 %v2109, %v2491
      %v2536 = vadd.f32 %v2110, %v2494
      %v2537 = vadd.f32 %v2111, %v2499
      %v2538 = vadd.f32 %v2112, %v2502
      %v2539 = vadd.f32 %v2113, %v2507
      %v2540 = vadd.f32 %v2114, %v2510
      %v2541 = vadd.f32 %v2115, %v2515
      %v2542 = vadd.f32 %v2116, %v2518
      %v2543 = vadd.f32 %v2117, %v2523
      %v2544 = vadd.f32 %v2118, %v2526
      %v2545 = vld [vmem:[%s905] sm:$0xe]
      %v2546 = vld [vmem:[%s905 + $0xc] sm:$0xe]
      %v2547 = vld [vmem:[%s905 + $0x18] sm:$0xe]
      %v2548 = vld [vmem:[%s905 + $0x24] sm:$0xe]
      %v2549 = vld [vmem:[%s905 + $0x30] sm:$0xe]
      %v2550 = vld [vmem:[%s905 + $0x3c] sm:$0xe]
      %v2551 = vld [vmem:[%s905 + $0x48] sm:$0xe]
      %v2552 = vld [vmem:[%s905 + $0x54] sm:$0xe]
      %v2577 = vrot.slane %v2545, 5
      %v2578 = vrot.slane %v2577, 4
      %v2579 = vrot.slane %v2120, 5
      %v2580 = vsel %vm1610, %v2578, %v2579
      %v2581 = vrot.slane %v2579, 4
      %v2582 = vrot.slane %v2121, 5
      %v2583 = vsel %vm1610, %v2581, %v2582
      %v2584 = vrot.slane %v2546, 5
      %v2585 = vrot.slane %v2584, 4
      %v2586 = vrot.slane %v2123, 5
      %v2587 = vsel %vm1610, %v2585, %v2586
      %v2588 = vrot.slane %v2586, 4
      %v2589 = vrot.slane %v2124, 5
      %v2590 = vsel %vm1610, %v2588, %v2589
      %v2591 = vrot.slane %v2547, 5
      %v2592 = vrot.slane %v2591, 4
      %v2593 = vrot.slane %v2126, 5
      %v2594 = vsel %vm1610, %v2592, %v2593
      %v2595 = vrot.slane %v2593, 4
      %v2596 = vrot.slane %v2127, 5
      %v2597 = vsel %vm1610, %v2595, %v2596
      %v2598 = vrot.slane %v2548, 5
      %v2599 = vrot.slane %v2598, 4
      %v2600 = vrot.slane %v2129, 5
      %v2601 = vsel %vm1610, %v2599, %v2600
      %v2602 = vrot.slane %v2600, 4
      %v2603 = vrot.slane %v2130, 5
      %v2604 = vsel %vm1610, %v2602, %v2603
      %v2605 = vrot.slane %v2549, 5
      %v2606 = vrot.slane %v2605, 4
      %v2607 = vrot.slane %v2132, 5
      %v2608 = vsel %vm1610, %v2606, %v2607
      %v2609 = vrot.slane %v2607, 4
      %v2610 = vrot.slane %v2133, 5
      %v2611 = vsel %vm1610, %v2609, %v2610
      %v2612 = vrot.slane %v2550, 5
      %v2613 = vrot.slane %v2612, 4
      %v2614 = vrot.slane %v2135, 5
      %v2615 = vsel %vm1610, %v2613, %v2614
      %v2616 = vrot.slane %v2614, 4
      %v2617 = vrot.slane %v2136, 5
      %v2618 = vsel %vm1610, %v2616, %v2617
      %v2619 = vrot.slane %v2551, 5
      %v2620 = vrot.slane %v2619, 4
      %v2621 = vrot.slane %v2138, 5
      %v2622 = vsel %vm1610, %v2620, %v2621
      %v2623 = vrot.slane %v2621, 4
      %v2624 = vrot.slane %v2139, 5
      %v2625 = vsel %vm1610, %v2623, %v2624
      %v2626 = vrot.slane %v2552, 5
      %v2627 = vrot.slane %v2626, 4
      %v2628 = vrot.slane %v2141, 5
      %v2629 = vsel %vm1610, %v2627, %v2628
      %v2630 = vrot.slane %v2628, 4
      %v2631 = vrot.slane %v2142, 5
      %v2632 = vsel %vm1610, %v2630, %v2631
      %s2633 = scalar_lea.vmem %s4, 320
      %v2634 = vld [vmem:[%s2633] sm:$0xf]
      %v2635 = vld [vmem:[%s2633 + $0x4] sm:$0xf]
      %v2636 = vld [vmem:[%s2633 + $0x8] sm:$0xf]
      %v2637 = vld [vmem:[%s2633 + $0xc] sm:$0xf]
      %v2638 = vld [vmem:[%s2633 + $0x10] sm:$0xf]
      %v2639 = vld [vmem:[%s2633 + $0x14] sm:$0xf]
      %v2640 = vld [vmem:[%s2633 + $0x18] sm:$0xf]
      %v2641 = vld [vmem:[%s2633 + $0x1c] sm:$0xf]
      %v2642 = vld [vmem:[%s2633 + $0x20] sm:$0xf]
      %v2643 = vld [vmem:[%s2633 + $0x24] sm:$0xf]
      %v2644 = vld [vmem:[%s2633 + $0x28] sm:$0xf]
      %v2645 = vld [vmem:[%s2633 + $0x2c] sm:$0xf]
      %v2646 = vld [vmem:[%s2633 + $0x30] sm:$0xf]
      %v2647 = vld [vmem:[%s2633 + $0x34] sm:$0xf]
      %v2648 = vld [vmem:[%s2633 + $0x38] sm:$0xf]
      %v2649 = vld [vmem:[%s2633 + $0x3c] sm:$0xf]
      %v2650 = vunpack.c.l.b16 %v2580
      %v2651 = vunpack.c.l.b16 %v2583
      %v2652 = vunpack.c.l.b16 %v2587
      %v2653 = vunpack.c.l.b16 %v2590
      %v2654 = vunpack.c.l.b16 %v2594
      %v2655 = vunpack.c.l.b16 %v2597
      %v2656 = vunpack.c.l.b16 %v2601
      %v2657 = vunpack.c.l.b16 %v2604
      %v2658 = vunpack.c.l.b16 %v2608
      %v2659 = vunpack.c.l.b16 %v2611
      %v2660 = vunpack.c.l.b16 %v2615
      %v2661 = vunpack.c.l.b16 %v2618
      %v2662 = vunpack.c.l.b16 %v2622
      %v2663 = vunpack.c.l.b16 %v2625
      %v2664 = vunpack.c.l.b16 %v2629
      %v2665 = vunpack.c.l.b16 %v2632
      %v2666 = vpack.c.b16 %v2651, %v2650
      %v2667 = vpack.c.b16 %v2653, %v2652
      %v2668 = vpack.c.b16 %v2655, %v2654
      %v2669 = vpack.c.b16 %v2657, %v2656
      %v2670 = vpack.c.b16 %v2659, %v2658
      %v2671 = vpack.c.b16 %v2661, %v2660
      %v2672 = vpack.c.b16 %v2663, %v2662
      %v2673 = vpack.c.b16 %v2665, %v2664
      %v2698 = vunpack.c.l.b16 %v2634
      %v2699 = vunpack.c.l.b16 %v2635
      %v2700 = vunpack.c.l.b16 %v2636
      %v2701 = vunpack.c.l.b16 %v2637
      %v2702 = vunpack.c.l.b16 %v2638
      %v2703 = vunpack.c.l.b16 %v2639
      %v2704 = vunpack.c.l.b16 %v2640
      %v2705 = vunpack.c.l.b16 %v2641
      %v2706 = vunpack.c.l.b16 %v2642
      %v2707 = vunpack.c.l.b16 %v2643
      %v2708 = vunpack.c.l.b16 %v2644
      %v2709 = vunpack.c.l.b16 %v2645
      %v2710 = vunpack.c.l.b16 %v2646
      %v2711 = vunpack.c.l.b16 %v2647
      %v2712 = vunpack.c.l.b16 %v2648
      %v2713 = vunpack.c.l.b16 %v2649
      %v2714 = vpack.c.b16 %v2699, %v2698
      %v2715 = vpack.c.b16 %v2701, %v2700
      %v2716 = vpack.c.b16 %v2703, %v2702
      %v2717 = vpack.c.b16 %v2705, %v2704
      %v2718 = vpack.c.b16 %v2707, %v2706
      %v2719 = vpack.c.b16 %v2709, %v2708
      %v2720 = vpack.c.b16 %v2711, %v2710
      %v2721 = vpack.c.b16 %v2713, %v2712
      %2730 = vmatprep.subr.bf16.mxu0 0
      %2731 = vmatpush1.bf16.msra.mxu0 %v2721
      %2732 = vmatprep.subr.bf16.mxu0 0
      %2733 = vmatpush1.bf16.msra.mxu0 %v2720
      %2734 = vmatprep.subr.bf16.mxu0 0
      %2735 = vmatpush1.bf16.msra.mxu0 %v2719
      %2736 = vmatprep.subr.bf16.mxu0 0
      %2737 = vmatpush1.bf16.msra.mxu0 %v2718
      %2738 = vmatprep.subr.bf16.mxu0 0
      %2739 = vmatpush1.bf16.msra.mxu0 %v2717
      %2740 = vmatprep.subr.bf16.mxu0 0
      %2741 = vmatpush1.bf16.msra.mxu0 %v2716
      %2742 = vmatprep.subr.bf16.mxu0 0
      %2743 = vmatpush1.bf16.msra.mxu0 %v2715
      %2744 = vmatprep.subr.bf16.mxu0 0
      %2745 = vmatpush1.bf16.msra.mxu0 %v2714
      %2746 = vmatprep.subr.bf16.mxu0 0
      %2747 = vmatpush2.bf16.msra.mxu0 0
      %2748 = vmatprep.subr.bf16.mxu0 0
      %2749 = vmatpush2.bf16.msra.mxu0 0
      %2750 = vmatprep.subr.bf16.mxu0 0
      %2751 = vmatpush2.bf16.msra.mxu0 0
      %2752 = vmatprep.subr.bf16.mxu0 0
      %2753 = vmatpush2.bf16.msra.mxu0 0
      %2754 = vmatprep.subr.bf16.mxu0 0
      %2755 = vmatpush2.bf16.msra.mxu0 0
      %2756 = vmatprep.subr.bf16.mxu0 0
      %2757 = vmatpush2.bf16.msra.mxu0 0
      %2758 = vmatprep.subr.bf16.mxu0 0
      %2759 = vmatpush2.bf16.msra.mxu0 0
      %2760 = vmatprep.subr.bf16.mxu0 0
      %2761 = vmatpush2.bf16.msra.mxu0 0
      %2762 = vmatprep.mubr.bf16.mxu0 0
      %2763 = vmatmul.mubr.bf16.gmra.mxu0 %v2666
      %v2764 = vpop.f32.mrf.mxu0
      %v2765 = vadd.f32 0.0, %v2764
      %v2766 = vpop.f32.mrf.mxu0
      %v2767 = vpop.f32.mrf.mxu0
      %v2768 = vadd.f32 0.0, %v2767
      %v2769 = vpop.f32.mrf.mxu0
      %2770 = vmatprep.mubr.bf16.mxu0 0
      %2771 = vmatmul.mubr.bf16.gmra.mxu0 %v2667
      %v2772 = vpop.f32.mrf.mxu0
      %v2773 = vadd.f32 0.0, %v2772
      %v2774 = vpop.f32.mrf.mxu0
      %v2775 = vpop.f32.mrf.mxu0
      %v2776 = vadd.f32 0.0, %v2775
      %v2777 = vpop.f32.mrf.mxu0
      %2778 = vmatprep.mubr.bf16.mxu0 0
      %2779 = vmatmul.mubr.bf16.gmra.mxu0 %v2668
      %v2780 = vpop.f32.mrf.mxu0
      %v2781 = vadd.f32 0.0, %v2780
      %v2782 = vpop.f32.mrf.mxu0
      %v2783 = vpop.f32.mrf.mxu0
      %v2784 = vadd.f32 0.0, %v2783
      %v2785 = vpop.f32.mrf.mxu0
      %2786 = vmatprep.mubr.bf16.mxu0 0
      %2787 = vmatmul.mubr.bf16.gmra.mxu0 %v2669
      %v2788 = vpop.f32.mrf.mxu0
      %v2789 = vadd.f32 0.0, %v2788
      %v2790 = vpop.f32.mrf.mxu0
      %v2791 = vpop.f32.mrf.mxu0
      %v2792 = vadd.f32 0.0, %v2791
      %v2793 = vpop.f32.mrf.mxu0
      %2794 = vmatprep.mubr.bf16.mxu0 0
      %2795 = vmatmul.mubr.bf16.gmra.mxu0 %v2670
      %v2796 = vpop.f32.mrf.mxu0
      %v2797 = vadd.f32 0.0, %v2796
      %v2798 = vpop.f32.mrf.mxu0
      %v2799 = vpop.f32.mrf.mxu0
      %v2800 = vadd.f32 0.0, %v2799
      %v2801 = vpop.f32.mrf.mxu0
      %2802 = vmatprep.mubr.bf16.mxu0 0
      %2803 = vmatmul.mubr.bf16.gmra.mxu0 %v2671
      %v2804 = vpop.f32.mrf.mxu0
      %v2805 = vadd.f32 0.0, %v2804
      %v2806 = vpop.f32.mrf.mxu0
      %v2807 = vpop.f32.mrf.mxu0
      %v2808 = vadd.f32 0.0, %v2807
      %v2809 = vpop.f32.mrf.mxu0
      %2810 = vmatprep.mubr.bf16.mxu0 0
      %2811 = vmatmul.mubr.bf16.gmra.mxu0 %v2672
      %v2812 = vpop.f32.mrf.mxu0
      %v2813 = vadd.f32 0.0, %v2812
      %v2814 = vpop.f32.mrf.mxu0
      %v2815 = vpop.f32.mrf.mxu0
      %v2816 = vadd.f32 0.0, %v2815
      %v2817 = vpop.f32.mrf.mxu0
      %2818 = vmatprep.mubr.bf16.mxu0 0
      %2819 = vmatmul.mubr.bf16.gmra.mxu0 %v2673
      %v2820 = vpop.f32.mrf.mxu0
      %v2821 = vadd.f32 0.0, %v2820
      %v2822 = vpop.f32.mrf.mxu0
      %v2823 = vpop.f32.mrf.mxu0
      %v2824 = vadd.f32 0.0, %v2823
      %v2825 = vpop.f32.mrf.mxu0
      %2826 = vdwg.mxu0
      %v2827 = vadd.f32 %v2529, %v2765
      %v2828 = vadd.f32 %v2530, %v2768
      %v2829 = vadd.f32 %v2531, %v2773
      %v2830 = vadd.f32 %v2532, %v2776
      %v2831 = vadd.f32 %v2533, %v2781
      %v2832 = vadd.f32 %v2534, %v2784
      %v2833 = vadd.f32 %v2535, %v2789
      %v2834 = vadd.f32 %v2536, %v2792
      %v2835 = vadd.f32 %v2537, %v2797
      %v2836 = vadd.f32 %v2538, %v2800
      %v2837 = vadd.f32 %v2539, %v2805
      %v2838 = vadd.f32 %v2540, %v2808
      %v2839 = vadd.f32 %v2541, %v2813
      %v2840 = vadd.f32 %v2542, %v2816
      %v2841 = vadd.f32 %v2543, %v2821
      %v2842 = vadd.f32 %v2544, %v2824
      %s2843 = scalar_lea.vmem [#allocation2], 24
      %v2844 = vld [vmem:[%s2843] sm:$0xf]
      %v2845 = vld [vmem:[%s2843 + $0x4] sm:$0xf]
      %v2846 = vld [vmem:[%s2843 + $0xc] sm:$0xf]
      %v2847 = vld [vmem:[%s2843 + $0x10] sm:$0xf]
      %v2848 = vld [vmem:[%s2843 + $0x18] sm:$0xf]
      %v2849 = vld [vmem:[%s2843 + $0x1c] sm:$0xf]
      %v2850 = vld [vmem:[%s2843 + $0x24] sm:$0xf]
      %v2851 = vld [vmem:[%s2843 + $0x28] sm:$0xf]
      %v2852 = vld [vmem:[%s2843 + $0x30] sm:$0xf]
      %v2853 = vld [vmem:[%s2843 + $0x34] sm:$0xf]
      %v2854 = vld [vmem:[%s2843 + $0x3c] sm:$0xf]
      %v2855 = vld [vmem:[%s2843 + $0x40] sm:$0xf]
      %v2856 = vld [vmem:[%s2843 + $0x48] sm:$0xf]
      %v2857 = vld [vmem:[%s2843 + $0x4c] sm:$0xf]
      %v2858 = vld [vmem:[%s2843 + $0x54] sm:$0xf]
      %v2859 = vld [vmem:[%s2843 + $0x58] sm:$0xf]
      %s2860 = scalar_lea.vmem %s4, 384
      %v2861 = vld [vmem:[%s2860] sm:$0xf]
      %v2862 = vld [vmem:[%s2860 + $0x4] sm:$0xf]
      %v2863 = vld [vmem:[%s2860 + $0x8] sm:$0xf]
      %v2864 = vld [vmem:[%s2860 + $0xc] sm:$0xf]
      %v2865 = vld [vmem:[%s2860 + $0x10] sm:$0xf]
      %v2866 = vld [vmem:[%s2860 + $0x14] sm:$0xf]
      %v2867 = vld [vmem:[%s2860 + $0x18] sm:$0xf]
      %v2868 = vld [vmem:[%s2860 + $0x1c] sm:$0xf]
      %v2869 = vld [vmem:[%s2860 + $0x20] sm:$0xf]
      %v2870 = vld [vmem:[%s2860 + $0x24] sm:$0xf]
      %v2871 = vld [vmem:[%s2860 + $0x28] sm:$0xf]
      %v2872 = vld [vmem:[%s2860 + $0x2c] sm:$0xf]
      %v2873 = vld [vmem:[%s2860 + $0x30] sm:$0xf]
      %v2874 = vld [vmem:[%s2860 + $0x34] sm:$0xf]
      %v2875 = vld [vmem:[%s2860 + $0x38] sm:$0xf]
      %v2876 = vld [vmem:[%s2860 + $0x3c] sm:$0xf]
      %v2893 = vunpack.c.l.b16 %v2844
      %v2894 = vunpack.c.l.b16 %v2845
      %v2895 = vunpack.c.l.b16 %v2846
      %v2896 = vunpack.c.l.b16 %v2847
      %v2897 = vunpack.c.l.b16 %v2848
      %v2898 = vunpack.c.l.b16 %v2849
      %v2899 = vunpack.c.l.b16 %v2850
      %v2900 = vunpack.c.l.b16 %v2851
      %v2901 = vunpack.c.l.b16 %v2852
      %v2902 = vunpack.c.l.b16 %v2853
      %v2903 = vunpack.c.l.b16 %v2854
      %v2904 = vunpack.c.l.b16 %v2855
      %v2905 = vunpack.c.l.b16 %v2856
      %v2906 = vunpack.c.l.b16 %v2857
      %v2907 = vunpack.c.l.b16 %v2858
      %v2908 = vunpack.c.l.b16 %v2859
      %v2909 = vpack.c.b16 %v2894, %v2893
      %v2910 = vpack.c.b16 %v2896, %v2895
      %v2911 = vpack.c.b16 %v2898, %v2897
      %v2912 = vpack.c.b16 %v2900, %v2899
      %v2913 = vpack.c.b16 %v2902, %v2901
      %v2914 = vpack.c.b16 %v2904, %v2903
      %v2915 = vpack.c.b16 %v2906, %v2905
      %v2916 = vpack.c.b16 %v2908, %v2907
      %v2941 = vunpack.c.l.b16 %v2861
      %v2942 = vunpack.c.l.b16 %v2862
      %v2943 = vunpack.c.l.b16 %v2863
      %v2944 = vunpack.c.l.b16 %v2864
      %v2945 = vunpack.c.l.b16 %v2865
      %v2946 = vunpack.c.l.b16 %v2866
      %v2947 = vunpack.c.l.b16 %v2867
      %v2948 = vunpack.c.l.b16 %v2868
      %v2949 = vunpack.c.l.b16 %v2869
      %v2950 = vunpack.c.l.b16 %v2870
      %v2951 = vunpack.c.l.b16 %v2871
      %v2952 = vunpack.c.l.b16 %v2872
      %v2953 = vunpack.c.l.b16 %v2873
      %v2954 = vunpack.c.l.b16 %v2874
      %v2955 = vunpack.c.l.b16 %v2875
      %v2956 = vunpack.c.l.b16 %v2876
      %v2957 = vpack.c.b16 %v2942, %v2941
      %v2958 = vpack.c.b16 %v2944, %v2943
      %v2959 = vpack.c.b16 %v2946, %v2945
      %v2960 = vpack.c.b16 %v2948, %v2947
      %v2961 = vpack.c.b16 %v2950, %v2949
      %v2962 = vpack.c.b16 %v2952, %v2951
      %v2963 = vpack.c.b16 %v2954, %v2953
      %v2964 = vpack.c.b16 %v2956, %v2955
      %2973 = vmatprep.subr.bf16.mxu0 0
      %2974 = vmatpush1.bf16.msra.mxu0 %v2964
      %2975 = vmatprep.subr.bf16.mxu0 0
      %2976 = vmatpush1.bf16.msra.mxu0 %v2963
      %2977 = vmatprep.subr.bf16.mxu0 0
      %2978 = vmatpush1.bf16.msra.mxu0 %v2962
      %2979 = vmatprep.subr.bf16.mxu0 0
      %2980 = vmatpush1.bf16.msra.mxu0 %v2961
      %2981 = vmatprep.subr.bf16.mxu0 0
      %2982 = vmatpush1.bf16.msra.mxu0 %v2960
      %2983 = vmatprep.subr.bf16.mxu0 0
      %2984 = vmatpush1.bf16.msra.mxu0 %v2959
      %2985 = vmatprep.subr.bf16.mxu0 0
      %2986 = vmatpush1.bf16.msra.mxu0 %v2958
      %2987 = vmatprep.subr.bf16.mxu0 0
      %2988 = vmatpush1.bf16.msra.mxu0 %v2957
      %2989 = vmatprep.subr.bf16.mxu0 0
      %2990 = vmatpush2.bf16.msra.mxu0 0
      %2991 = vmatprep.subr.bf16.mxu0 0
      %2992 = vmatpush2.bf16.msra.mxu0 0
      %2993 = vmatprep.subr.bf16.mxu0 0
      %2994 = vmatpush2.bf16.msra.mxu0 0
      %2995 = vmatprep.subr.bf16.mxu0 0
      %2996 = vmatpush2.bf16.msra.mxu0 0
      %2997 = vmatprep.subr.bf16.mxu0 0
      %2998 = vmatpush2.bf16.msra.mxu0 0
      %2999 = vmatprep.subr.bf16.mxu0 0
      %3000 = vmatpush2.bf16.msra.mxu0 0
      %3001 = vmatprep.subr.bf16.mxu0 0
      %3002 = vmatpush2.bf16.msra.mxu0 0
      %3003 = vmatprep.subr.bf16.mxu0 0
      %3004 = vmatpush2.bf16.msra.mxu0 0
      %3005 = vmatprep.mubr.bf16.mxu0 0
      %3006 = vmatmul.mubr.bf16.gmra.mxu0 %v2909
      %v3007 = vpop.f32.mrf.mxu0
      %v3008 = vadd.f32 0.0, %v3007
      %v3009 = vpop.f32.mrf.mxu0
      %v3010 = vpop.f32.mrf.mxu0
      %v3011 = vadd.f32 0.0, %v3010
      %v3012 = vpop.f32.mrf.mxu0
      %3013 = vmatprep.mubr.bf16.mxu0 0
      %3014 = vmatmul.mubr.bf16.gmra.mxu0 %v2910
      %v3015 = vpop.f32.mrf.mxu0
      %v3016 = vadd.f32 0.0, %v3015
      %v3017 = vpop.f32.mrf.mxu0
      %v3018 = vpop.f32.mrf.mxu0
      %v3019 = vadd.f32 0.0, %v3018
      %v3020 = vpop.f32.mrf.mxu0
      %3021 = vmatprep.mubr.bf16.mxu0 0
      %3022 = vmatmul.mubr.bf16.gmra.mxu0 %v2911
      %v3023 = vpop.f32.mrf.mxu0
      %v3024 = vadd.f32 0.0, %v3023
      %v3025 = vpop.f32.mrf.mxu0
      %v3026 = vpop.f32.mrf.mxu0
      %v3027 = vadd.f32 0.0, %v3026
      %v3028 = vpop.f32.mrf.mxu0
      %3029 = vmatprep.mubr.bf16.mxu0 0
      %3030 = vmatmul.mubr.bf16.gmra.mxu0 %v2912
      %v3031 = vpop.f32.mrf.mxu0
      %v3032 = vadd.f32 0.0, %v3031
      %v3033 = vpop.f32.mrf.mxu0
      %v3034 = vpop.f32.mrf.mxu0
      %v3035 = vadd.f32 0.0, %v3034
      %v3036 = vpop.f32.mrf.mxu0
      %3037 = vmatprep.mubr.bf16.mxu0 0
      %3038 = vmatmul.mubr.bf16.gmra.mxu0 %v2913
      %v3039 = vpop.f32.mrf.mxu0
      %v3040 = vadd.f32 0.0, %v3039
      %v3041 = vpop.f32.mrf.mxu0
      %v3042 = vpop.f32.mrf.mxu0
      %v3043 = vadd.f32 0.0, %v3042
      %v3044 = vpop.f32.mrf.mxu0
      %3045 = vmatprep.mubr.bf16.mxu0 0
      %3046 = vmatmul.mubr.bf16.gmra.mxu0 %v2914
      %v3047 = vpop.f32.mrf.mxu0
      %v3048 = vadd.f32 0.0, %v3047
      %v3049 = vpop.f32.mrf.mxu0
      %v3050 = vpop.f32.mrf.mxu0
      %v3051 = vadd.f32 0.0, %v3050
      %v3052 = vpop.f32.mrf.mxu0
      %3053 = vmatprep.mubr.bf16.mxu0 0
      %3054 = vmatmul.mubr.bf16.gmra.mxu0 %v2915
      %v3055 = vpop.f32.mrf.mxu0
      %v3056 = vadd.f32 0.0, %v3055
      %v3057 = vpop.f32.mrf.mxu0
      %v3058 = vpop.f32.mrf.mxu0
      %v3059 = vadd.f32 0.0, %v3058
      %v3060 = vpop.f32.mrf.mxu0
      %3061 = vmatprep.mubr.bf16.mxu0 0
      %3062 = vmatmul.mubr.bf16.gmra.mxu0 %v2916
      %v3063 = vpop.f32.mrf.mxu0
      %v3064 = vadd.f32 0.0, %v3063
      %v3065 = vpop.f32.mrf.mxu0
      %v3066 = vpop.f32.mrf.mxu0
      %v3067 = vadd.f32 0.0, %v3066
      %v3068 = vpop.f32.mrf.mxu0
      %3069 = vdwg.mxu0
      %v3070 = vadd.f32 %v2827, %v3008
      %v3071 = vadd.f32 %v2828, %v3011
      %v3072 = vadd.f32 %v2829, %v3016
      %v3073 = vadd.f32 %v2830, %v3019
      %v3074 = vadd.f32 %v2831, %v3024
      %v3075 = vadd.f32 %v2832, %v3027
      %v3076 = vadd.f32 %v2833, %v3032
      %v3077 = vadd.f32 %v2834, %v3035
      %v3078 = vadd.f32 %v2835, %v3040
      %v3079 = vadd.f32 %v2836, %v3043
      %v3080 = vadd.f32 %v2837, %v3048
      %v3081 = vadd.f32 %v2838, %v3051
      %v3082 = vadd.f32 %v2839, %v3056
      %v3083 = vadd.f32 %v2840, %v3059
      %v3084 = vadd.f32 %v2841, %v3064
      %v3085 = vadd.f32 %v2842, %v3067
      %v3086 = vld [vmem:[%s2843] sm:$0xf]
      %v3087 = vld [vmem:[%s2843 + $0x4] sm:$0xf]
      %v3088 = vld [vmem:[%s2843 + $0x8] sm:$0x1]
      %v3089 = vld [vmem:[%s2843 + $0xc] sm:$0xf]
      %v3090 = vld [vmem:[%s2843 + $0x10] sm:$0xf]
      %v3091 = vld [vmem:[%s2843 + $0x14] sm:$0x1]
      %v3092 = vld [vmem:[%s2843 + $0x18] sm:$0xf]
      %v3093 = vld [vmem:[%s2843 + $0x1c] sm:$0xf]
      %v3094 = vld [vmem:[%s2843 + $0x20] sm:$0x1]
      %v3095 = vld [vmem:[%s2843 + $0x24] sm:$0xf]
      %v3096 = vld [vmem:[%s2843 + $0x28] sm:$0xf]
      %v3097 = vld [vmem:[%s2843 + $0x2c] sm:$0x1]
      %v3098 = vld [vmem:[%s2843 + $0x30] sm:$0xf]
      %v3099 = vld [vmem:[%s2843 + $0x34] sm:$0xf]
      %v3100 = vld [vmem:[%s2843 + $0x38] sm:$0x1]
      %v3101 = vld [vmem:[%s2843 + $0x3c] sm:$0xf]
      %v3102 = vld [vmem:[%s2843 + $0x40] sm:$0xf]
      %v3103 = vld [vmem:[%s2843 + $0x44] sm:$0x1]
      %v3104 = vld [vmem:[%s2843 + $0x48] sm:$0xf]
      %v3105 = vld [vmem:[%s2843 + $0x4c] sm:$0xf]
      %v3106 = vld [vmem:[%s2843 + $0x50] sm:$0x1]
      %v3107 = vld [vmem:[%s2843 + $0x54] sm:$0xf]
      %v3108 = vld [vmem:[%s2843 + $0x58] sm:$0xf]
      %v3109 = vld [vmem:[%s2843 + $0x5c] sm:$0x1]
      %v3111 = vshrl.u32 %v3086, 16
      %v3113 = vrot.slane %v3111, 4
      %v3114 = vshll.u32 %v3086, 16
      %v3116 = vrot.slane %v3114, 5
      %v3117 = vor.u32 %v3113, %v3116
      %v3118 = vrot.slane %v3117, 4
      %v3120 = vshll.u32 %v3087, 16
      %v3122 = vrot.slane %v3120, 5
      %v3123 = vsel %vm1004, %v3118, %v3122
      %v3124 = vshrl.u32 %v3087, 16
      %v3126 = vrot.slane %v3124, 4
      %v3127 = vor.u32 %v3126, %v3122
      %v3128 = vrot.slane %v3127, 4
      %v3130 = vshll.u32 %v3088, 16
      %v3132 = vrot.slane %v3130, 5
      %v3133 = vsel %vm1004, %v3128, %v3132
      %v3135 = vshrl.u32 %v3089, 16
      %v3137 = vrot.slane %v3135, 4
      %v3138 = vshll.u32 %v3089, 16
      %v3140 = vrot.slane %v3138, 5
      %v3141 = vor.u32 %v3137, %v3140
      %v3142 = vrot.slane %v3141, 4
      %v3144 = vshll.u32 %v3090, 16
      %v3146 = vrot.slane %v3144, 5
      %v3147 = vsel %vm1004, %v3142, %v3146
      %v3148 = vshrl.u32 %v3090, 16
      %v3150 = vrot.slane %v3148, 4
      %v3151 = vor.u32 %v3150, %v3146
      %v3152 = vrot.slane %v3151, 4
      %v3154 = vshll.u32 %v3091, 16
      %v3156 = vrot.slane %v3154, 5
      %v3157 = vsel %vm1004, %v3152, %v3156
      %v3159 = vshrl.u32 %v3092, 16
      %v3161 = vrot.slane %v3159, 4
      %v3162 = vshll.u32 %v3092, 16
      %v3164 = vrot.slane %v3162, 5
      %v3165 = vor.u32 %v3161, %v3164
      %v3166 = vrot.slane %v3165, 4
      %v3168 = vshll.u32 %v3093, 16
      %v3170 = vrot.slane %v3168, 5
      %v3171 = vsel %vm1004, %v3166, %v3170
      %v3172 = vshrl.u32 %v3093, 16
      %v3174 = vrot.slane %v3172, 4
      %v3175 = vor.u32 %v3174, %v3170
      %v3176 = vrot.slane %v3175, 4
      %v3178 = vshll.u32 %v3094, 16
      %v3180 = vrot.slane %v3178, 5
      %v3181 = vsel %vm1004, %v3176, %v3180
      %v3183 = vshrl.u32 %v3095, 16
      %v3185 = vrot.slane %v3183, 4
      %v3186 = vshll.u32 %v3095, 16
      %v3188 = vrot.slane %v3186, 5
      %v3189 = vor.u32 %v3185, %v3188
      %v3190 = vrot.slane %v3189, 4
      %v3192 = vshll.u32 %v3096, 16
      %v3194 = vrot.slane %v3192, 5
      %v3195 = vsel %vm1004, %v3190, %v3194
      %v3196 = vshrl.u32 %v3096, 16
      %v3198 = vrot.slane %v3196, 4
      %v3199 = vor.u32 %v3198, %v3194
      %v3200 = vrot.slane %v3199, 4
      %v3202 = vshll.u32 %v3097, 16
      %v3204 = vrot.slane %v3202, 5
      %v3205 = vsel %vm1004, %v3200, %v3204
      %v3207 = vshrl.u32 %v3098, 16
      %v3209 = vrot.slane %v3207, 4
      %v3210 = vshll.u32 %v3098, 16
      %v3212 = vrot.slane %v3210, 5
      %v3213 = vor.u32 %v3209, %v3212
      %v3214 = vrot.slane %v3213, 4
      %v3216 = vshll.u32 %v3099, 16
      %v3218 = vrot.slane %v3216, 5
      %v3219 = vsel %vm1004, %v3214, %v3218
      %v3220 = vshrl.u32 %v3099, 16
      %v3222 = vrot.slane %v3220, 4
      %v3223 = vor.u32 %v3222, %v3218
      %v3224 = vrot.slane %v3223, 4
      %v3226 = vshll.u32 %v3100, 16
      %v3228 = vrot.slane %v3226, 5
      %v3229 = vsel %vm1004, %v3224, %v3228
      %v3231 = vshrl.u32 %v3101, 16
      %v3233 = vrot.slane %v3231, 4
      %v3234 = vshll.u32 %v3101, 16
      %v3236 = vrot.slane %v3234, 5
      %v3237 = vor.u32 %v3233, %v3236
      %v3238 = vrot.slane %v3237, 4
      %v3240 = vshll.u32 %v3102, 16
      %v3242 = vrot.slane %v3240, 5
      %v3243 = vsel %vm1004, %v3238, %v3242
      %v3244 = vshrl.u32 %v3102, 16
      %v3246 = vrot.slane %v3244, 4
      %v3247 = vor.u32 %v3246, %v3242
      %v3248 = vrot.slane %v3247, 4
      %v3250 = vshll.u32 %v3103, 16
      %v3252 = vrot.slane %v3250, 5
      %v3253 = vsel %vm1004, %v3248, %v3252
      %v3255 = vshrl.u32 %v3104, 16
      %v3257 = vrot.slane %v3255, 4
      %v3258 = vshll.u32 %v3104, 16
      %v3260 = vrot.slane %v3258, 5
      %v3261 = vor.u32 %v3257, %v3260
      %v3262 = vrot.slane %v3261, 4
      %v3264 = vshll.u32 %v3105, 16
      %v3266 = vrot.slane %v3264, 5
      %v3267 = vsel %vm1004, %v3262, %v3266
      %v3268 = vshrl.u32 %v3105, 16
      %v3270 = vrot.slane %v3268, 4
      %v3271 = vor.u32 %v3270, %v3266
      %v3272 = vrot.slane %v3271, 4
      %v3274 = vshll.u32 %v3106, 16
      %v3276 = vrot.slane %v3274, 5
      %v3277 = vsel %vm1004, %v3272, %v3276
      %v3279 = vshrl.u32 %v3107, 16
      %v3281 = vrot.slane %v3279, 4
      %v3282 = vshll.u32 %v3107, 16
      %v3284 = vrot.slane %v3282, 5
      %v3285 = vor.u32 %v3281, %v3284
      %v3286 = vrot.slane %v3285, 4
      %v3288 = vshll.u32 %v3108, 16
      %v3290 = vrot.slane %v3288, 5
      %v3291 = vsel %vm1004, %v3286, %v3290
      %v3292 = vshrl.u32 %v3108, 16
      %v3294 = vrot.slane %v3292, 4
      %v3295 = vor.u32 %v3294, %v3290
      %v3296 = vrot.slane %v3295, 4
      %v3298 = vshll.u32 %v3109, 16
      %v3300 = vrot.slane %v3298, 5
      %v3301 = vsel %vm1004, %v3296, %v3300
      %s3302 = scalar_lea.vmem %s4, 448
      %v3303 = vld [vmem:[%s3302] sm:$0xf]
      %v3304 = vld [vmem:[%s3302 + $0x4] sm:$0xf]
      %v3305 = vld [vmem:[%s3302 + $0x8] sm:$0xf]
      %v3306 = vld [vmem:[%s3302 + $0xc] sm:$0xf]
      %v3307 = vld [vmem:[%s3302 + $0x10] sm:$0xf]
      %v3308 = vld [vmem:[%s3302 + $0x14] sm:$0xf]
      %v3309 = vld [vmem:[%s3302 + $0x18] sm:$0xf]
      %v3310 = vld [vmem:[%s3302 + $0x1c] sm:$0xf]
      %v3311 = vld [vmem:[%s3302 + $0x20] sm:$0xf]
      %v3312 = vld [vmem:[%s3302 + $0x24] sm:$0xf]
      %v3313 = vld [vmem:[%s3302 + $0x28] sm:$0xf]
      %v3314 = vld [vmem:[%s3302 + $0x2c] sm:$0xf]
      %v3315 = vld [vmem:[%s3302 + $0x30] sm:$0xf]
      %v3316 = vld [vmem:[%s3302 + $0x34] sm:$0xf]
      %v3317 = vld [vmem:[%s3302 + $0x38] sm:$0xf]
      %v3318 = vld [vmem:[%s3302 + $0x3c] sm:$0xf]
      %v3319 = vunpack.c.l.b16 %v3123
      %v3320 = vunpack.c.l.b16 %v3133
      %v3321 = vunpack.c.l.b16 %v3147
      %v3322 = vunpack.c.l.b16 %v3157
      %v3323 = vunpack.c.l.b16 %v3171
      %v3324 = vunpack.c.l.b16 %v3181
      %v3325 = vunpack.c.l.b16 %v3195
      %v3326 = vunpack.c.l.b16 %v3205
      %v3327 = vunpack.c.l.b16 %v3219
      %v3328 = vunpack.c.l.b16 %v3229
      %v3329 = vunpack.c.l.b16 %v3243
      %v3330 = vunpack.c.l.b16 %v3253
      %v3331 = vunpack.c.l.b16 %v3267
      %v3332 = vunpack.c.l.b16 %v3277
      %v3333 = vunpack.c.l.b16 %v3291
      %v3334 = vunpack.c.l.b16 %v3301
      %v3335 = vpack.c.b16 %v3320, %v3319
      %v3336 = vpack.c.b16 %v3322, %v3321
      %v3337 = vpack.c.b16 %v3324, %v3323
      %v3338 = vpack.c.b16 %v3326, %v3325
      %v3339 = vpack.c.b16 %v3328, %v3327
      %v3340 = vpack.c.b16 %v3330, %v3329
      %v3341 = vpack.c.b16 %v3332, %v3331
      %v3342 = vpack.c.b16 %v3334, %v3333
      %v3367 = vunpack.c.l.b16 %v3303
      %v3368 = vunpack.c.l.b16 %v3304
      %v3369 = vunpack.c.l.b16 %v3305
      %v3370 = vunpack.c.l.b16 %v3306
      %v3371 = vunpack.c.l.b16 %v3307
      %v3372 = vunpack.c.l.b16 %v3308
      %v3373 = vunpack.c.l.b16 %v3309
      %v3374 = vunpack.c.l.b16 %v3310
      %v3375 = vunpack.c.l.b16 %v3311
      %v3376 = vunpack.c.l.b16 %v3312
      %v3377 = vunpack.c.l.b16 %v3313
      %v3378 = vunpack.c.l.b16 %v3314
      %v3379 = vunpack.c.l.b16 %v3315
      %v3380 = vunpack.c.l.b16 %v3316
      %v3381 = vunpack.c.l.b16 %v3317
      %v3382 = vunpack.c.l.b16 %v3318
      %v3383 = vpack.c.b16 %v3368, %v3367
      %v3384 = vpack.c.b16 %v3370, %v3369
      %v3385 = vpack.c.b16 %v3372, %v3371
      %v3386 = vpack.c.b16 %v3374, %v3373
      %v3387 = vpack.c.b16 %v3376, %v3375
      %v3388 = vpack.c.b16 %v3378, %v3377
      %v3389 = vpack.c.b16 %v3380, %v3379
      %v3390 = vpack.c.b16 %v3382, %v3381
      %3399 = vmatprep.subr.bf16.mxu0 0
      %3400 = vmatpush1.bf16.msra.mxu0 %v3390
      %3401 = vmatprep.subr.bf16.mxu0 0
      %3402 = vmatpush1.bf16.msra.mxu0 %v3389
      %3403 = vmatprep.subr.bf16.mxu0 0
      %3404 = vmatpush1.bf16.msra.mxu0 %v3388
      %3405 = vmatprep.subr.bf16.mxu0 0
      %3406 = vmatpush1.bf16.msra.mxu0 %v3387
      %3407 = vmatprep.subr.bf16.mxu0 0
      %3408 = vmatpush1.bf16.msra.mxu0 %v3386
      %3409 = vmatprep.subr.bf16.mxu0 0
      %3410 = vmatpush1.bf16.msra.mxu0 %v3385
      %3411 = vmatprep.subr.bf16.mxu0 0
      %3412 = vmatpush1.bf16.msra.mxu0 %v3384
      %3413 = vmatprep.subr.bf16.mxu0 0
      %3414 = vmatpush1.bf16.msra.mxu0 %v3383
      %3415 = vmatprep.subr.bf16.mxu0 0
      %3416 = vmatpush2.bf16.msra.mxu0 0
      %3417 = vmatprep.subr.bf16.mxu0 0
      %3418 = vmatpush2.bf16.msra.mxu0 0
      %3419 = vmatprep.subr.bf16.mxu0 0
      %3420 = vmatpush2.bf16.msra.mxu0 0
      %3421 = vmatprep.subr.bf16.mxu0 0
      %3422 = vmatpush2.bf16.msra.mxu0 0
      %3423 = vmatprep.subr.bf16.mxu0 0
      %3424 = vmatpush2.bf16.msra.mxu0 0
      %3425 = vmatprep.subr.bf16.mxu0 0
      %3426 = vmatpush2.bf16.msra.mxu0 0
      %3427 = vmatprep.subr.bf16.mxu0 0
      %3428 = vmatpush2.bf16.msra.mxu0 0
      %3429 = vmatprep.subr.bf16.mxu0 0
      %3430 = vmatpush2.bf16.msra.mxu0 0
      %3431 = vmatprep.mubr.bf16.mxu0 0
      %3432 = vmatmul.mubr.bf16.gmra.mxu0 %v3335
      %v3433 = vpop.f32.mrf.mxu0
      %v3434 = vadd.f32 0.0, %v3433
      %v3435 = vpop.f32.mrf.mxu0
      %v3436 = vpop.f32.mrf.mxu0
      %v3437 = vadd.f32 0.0, %v3436
      %v3438 = vpop.f32.mrf.mxu0
      %3439 = vmatprep.mubr.bf16.mxu0 0
      %3440 = vmatmul.mubr.bf16.gmra.mxu0 %v3336
      %v3441 = vpop.f32.mrf.mxu0
      %v3442 = vadd.f32 0.0, %v3441
      %v3443 = vpop.f32.mrf.mxu0
      %v3444 = vpop.f32.mrf.mxu0
      %v3445 = vadd.f32 0.0, %v3444
      %v3446 = vpop.f32.mrf.mxu0
      %3447 = vmatprep.mubr.bf16.mxu0 0
      %3448 = vmatmul.mubr.bf16.gmra.mxu0 %v3337
      %v3449 = vpop.f32.mrf.mxu0
      %v3450 = vadd.f32 0.0, %v3449
      %v3451 = vpop.f32.mrf.mxu0
      %v3452 = vpop.f32.mrf.mxu0
      %v3453 = vadd.f32 0.0, %v3452
      %v3454 = vpop.f32.mrf.mxu0
      %3455 = vmatprep.mubr.bf16.mxu0 0
      %3456 = vmatmul.mubr.bf16.gmra.mxu0 %v3338
      %v3457 = vpop.f32.mrf.mxu0
      %v3458 = vadd.f32 0.0, %v3457
      %v3459 = vpop.f32.mrf.mxu0
      %v3460 = vpop.f32.mrf.mxu0
      %v3461 = vadd.f32 0.0, %v3460
      %v3462 = vpop.f32.mrf.mxu0
      %3463 = vmatprep.mubr.bf16.mxu0 0
      %3464 = vmatmul.mubr.bf16.gmra.mxu0 %v3339
      %v3465 = vpop.f32.mrf.mxu0
      %v3466 = vadd.f32 0.0, %v3465
      %v3467 = vpop.f32.mrf.mxu0
      %v3468 = vpop.f32.mrf.mxu0
      %v3469 = vadd.f32 0.0, %v3468
      %v3470 = vpop.f32.mrf.mxu0
      %3471 = vmatprep.mubr.bf16.mxu0 0
      %3472 = vmatmul.mubr.bf16.gmra.mxu0 %v3340
      %v3473 = vpop.f32.mrf.mxu0
      %v3474 = vadd.f32 0.0, %v3473
      %v3475 = vpop.f32.mrf.mxu0
      %v3476 = vpop.f32.mrf.mxu0
      %v3477 = vadd.f32 0.0, %v3476
      %v3478 = vpop.f32.mrf.mxu0
      %3479 = vmatprep.mubr.bf16.mxu0 0
      %3480 = vmatmul.mubr.bf16.gmra.mxu0 %v3341
      %v3481 = vpop.f32.mrf.mxu0
      %v3482 = vadd.f32 0.0, %v3481
      %v3483 = vpop.f32.mrf.mxu0
      %v3484 = vpop.f32.mrf.mxu0
      %v3485 = vadd.f32 0.0, %v3484
      %v3486 = vpop.f32.mrf.mxu0
      %3487 = vmatprep.mubr.bf16.mxu0 0
      %3488 = vmatmul.mubr.bf16.gmra.mxu0 %v3342
      %v3489 = vpop.f32.mrf.mxu0
      %v3490 = vadd.f32 0.0, %v3489
      %v3491 = vpop.f32.mrf.mxu0
      %v3492 = vpop.f32.mrf.mxu0
      %v3493 = vadd.f32 0.0, %v3492
      %v3494 = vpop.f32.mrf.mxu0
      %3495 = vdwg.mxu0
      %v3496 = vadd.f32 %v3070, %v3434
      %v3497 = vadd.f32 %v3071, %v3437
      %v3498 = vadd.f32 %v3072, %v3442
      %v3499 = vadd.f32 %v3073, %v3445
      %v3500 = vadd.f32 %v3074, %v3450
      %v3501 = vadd.f32 %v3075, %v3453
      %v3502 = vadd.f32 %v3076, %v3458
      %v3503 = vadd.f32 %v3077, %v3461
      %v3504 = vadd.f32 %v3078, %v3466
      %v3505 = vadd.f32 %v3079, %v3469
      %v3506 = vadd.f32 %v3080, %v3474
      %v3507 = vadd.f32 %v3081, %v3477
      %v3508 = vadd.f32 %v3082, %v3482
      %v3509 = vadd.f32 %v3083, %v3485
      %v3510 = vadd.f32 %v3084, %v3490
      %v3511 = vadd.f32 %v3085, %v3493
      %v3512 = vld [vmem:[%s2843] sm:$0xe]
      %v3513 = vld [vmem:[%s2843 + $0xc] sm:$0xe]
      %v3514 = vld [vmem:[%s2843 + $0x18] sm:$0xe]
      %v3515 = vld [vmem:[%s2843 + $0x24] sm:$0xe]
      %v3516 = vld [vmem:[%s2843 + $0x30] sm:$0xe]
      %v3517 = vld [vmem:[%s2843 + $0x3c] sm:$0xe]
      %v3518 = vld [vmem:[%s2843 + $0x48] sm:$0xe]
      %v3519 = vld [vmem:[%s2843 + $0x54] sm:$0xe]
      %v3544 = vrot.slane %v3512, 5
      %v3545 = vrot.slane %v3544, 4
      %v3546 = vrot.slane %v3087, 5
      %v3547 = vsel %vm1610, %v3545, %v3546
      %v3548 = vrot.slane %v3546, 4
      %v3549 = vrot.slane %v3088, 5
      %v3550 = vsel %vm1610, %v3548, %v3549
      %v3551 = vrot.slane %v3513, 5
      %v3552 = vrot.slane %v3551, 4
      %v3553 = vrot.slane %v3090, 5
      %v3554 = vsel %vm1610, %v3552, %v3553
      %v3555 = vrot.slane %v3553, 4
      %v3556 = vrot.slane %v3091, 5
      %v3557 = vsel %vm1610, %v3555, %v3556
      %v3558 = vrot.slane %v3514, 5
      %v3559 = vrot.slane %v3558, 4
      %v3560 = vrot.slane %v3093, 5
      %v3561 = vsel %vm1610, %v3559, %v3560
      %v3562 = vrot.slane %v3560, 4
      %v3563 = vrot.slane %v3094, 5
      %v3564 = vsel %vm1610, %v3562, %v3563
      %v3565 = vrot.slane %v3515, 5
      %v3566 = vrot.slane %v3565, 4
      %v3567 = vrot.slane %v3096, 5
      %v3568 = vsel %vm1610, %v3566, %v3567
      %v3569 = vrot.slane %v3567, 4
      %v3570 = vrot.slane %v3097, 5
      %v3571 = vsel %vm1610, %v3569, %v3570
      %v3572 = vrot.slane %v3516, 5
      %v3573 = vrot.slane %v3572, 4
      %v3574 = vrot.slane %v3099, 5
      %v3575 = vsel %vm1610, %v3573, %v3574
      %v3576 = vrot.slane %v3574, 4
      %v3577 = vrot.slane %v3100, 5
      %v3578 = vsel %vm1610, %v3576, %v3577
      %v3579 = vrot.slane %v3517, 5
      %v3580 = vrot.slane %v3579, 4
      %v3581 = vrot.slane %v3102, 5
      %v3582 = vsel %vm1610, %v3580, %v3581
      %v3583 = vrot.slane %v3581, 4
      %v3584 = vrot.slane %v3103, 5
      %v3585 = vsel %vm1610, %v3583, %v3584
      %v3586 = vrot.slane %v3518, 5
      %v3587 = vrot.slane %v3586, 4
      %v3588 = vrot.slane %v3105, 5
      %v3589 = vsel %vm1610, %v3587, %v3588
      %v3590 = vrot.slane %v3588, 4
      %v3591 = vrot.slane %v3106, 5
      %v3592 = vsel %vm1610, %v3590, %v3591
      %v3593 = vrot.slane %v3519, 5
      %v3594 = vrot.slane %v3593, 4
      %v3595 = vrot.slane %v3108, 5
      %v3596 = vsel %vm1610, %v3594, %v3595
      %v3597 = vrot.slane %v3595, 4
      %v3598 = vrot.slane %v3109, 5
      %v3599 = vsel %vm1610, %v3597, %v3598
      %s3600 = scalar_lea.vmem %s4, 512
      %v3601 = vld [vmem:[%s3600] sm:$0xf]
      %v3602 = vld [vmem:[%s3600 + $0x4] sm:$0xf]
      %v3603 = vld [vmem:[%s3600 + $0x8] sm:$0xf]
      %v3604 = vld [vmem:[%s3600 + $0xc] sm:$0xf]
      %v3605 = vld [vmem:[%s3600 + $0x10] sm:$0xf]
      %v3606 = vld [vmem:[%s3600 + $0x14] sm:$0xf]
      %v3607 = vld [vmem:[%s3600 + $0x18] sm:$0xf]
      %v3608 = vld [vmem:[%s3600 + $0x1c] sm:$0xf]
      %v3609 = vld [vmem:[%s3600 + $0x20] sm:$0xf]
      %v3610 = vld [vmem:[%s3600 + $0x24] sm:$0xf]
      %v3611 = vld [vmem:[%s3600 + $0x28] sm:$0xf]
      %v3612 = vld [vmem:[%s3600 + $0x2c] sm:$0xf]
      %v3613 = vld [vmem:[%s3600 + $0x30] sm:$0xf]
      %v3614 = vld [vmem:[%s3600 + $0x34] sm:$0xf]
      %v3615 = vld [vmem:[%s3600 + $0x38] sm:$0xf]
      %v3616 = vld [vmem:[%s3600 + $0x3c] sm:$0xf]
      %v3617 = vunpack.c.l.b16 %v3547
      %v3618 = vunpack.c.l.b16 %v3550
      %v3619 = vunpack.c.l.b16 %v3554
      %v3620 = vunpack.c.l.b16 %v3557
      %v3621 = vunpack.c.l.b16 %v3561
      %v3622 = vunpack.c.l.b16 %v3564
      %v3623 = vunpack.c.l.b16 %v3568
      %v3624 = vunpack.c.l.b16 %v3571
      %v3625 = vunpack.c.l.b16 %v3575
      %v3626 = vunpack.c.l.b16 %v3578
      %v3627 = vunpack.c.l.b16 %v3582
      %v3628 = vunpack.c.l.b16 %v3585
      %v3629 = vunpack.c.l.b16 %v3589
      %v3630 = vunpack.c.l.b16 %v3592
      %v3631 = vunpack.c.l.b16 %v3596
      %v3632 = vunpack.c.l.b16 %v3599
      %v3633 = vpack.c.b16 %v3618, %v3617
      %v3634 = vpack.c.b16 %v3620, %v3619
      %v3635 = vpack.c.b16 %v3622, %v3621
      %v3636 = vpack.c.b16 %v3624, %v3623
      %v3637 = vpack.c.b16 %v3626, %v3625
      %v3638 = vpack.c.b16 %v3628, %v3627
      %v3639 = vpack.c.b16 %v3630, %v3629
      %v3640 = vpack.c.b16 %v3632, %v3631
      %v3665 = vunpack.c.l.b16 %v3601
      %v3666 = vunpack.c.l.b16 %v3602
      %v3667 = vunpack.c.l.b16 %v3603
      %v3668 = vunpack.c.l.b16 %v3604
      %v3669 = vunpack.c.l.b16 %v3605
      %v3670 = vunpack.c.l.b16 %v3606
      %v3671 = vunpack.c.l.b16 %v3607
      %v3672 = vunpack.c.l.b16 %v3608
      %v3673 = vunpack.c.l.b16 %v3609
      %v3674 = vunpack.c.l.b16 %v3610
      %v3675 = vunpack.c.l.b16 %v3611
      %v3676 = vunpack.c.l.b16 %v3612
      %v3677 = vunpack.c.l.b16 %v3613
      %v3678 = vunpack.c.l.b16 %v3614
      %v3679 = vunpack.c.l.b16 %v3615
      %v3680 = vunpack.c.l.b16 %v3616
      %v3681 = vpack.c.b16 %v3666, %v3665
      %v3682 = vpack.c.b16 %v3668, %v3667
      %v3683 = vpack.c.b16 %v3670, %v3669
      %v3684 = vpack.c.b16 %v3672, %v3671
      %v3685 = vpack.c.b16 %v3674, %v3673
      %v3686 = vpack.c.b16 %v3676, %v3675
      %v3687 = vpack.c.b16 %v3678, %v3677
      %v3688 = vpack.c.b16 %v3680, %v3679
      %3697 = vmatprep.subr.bf16.mxu0 0
      %3698 = vmatpush1.bf16.msra.mxu0 %v3688
      %3699 = vmatprep.subr.bf16.mxu0 0
      %3700 = vmatpush1.bf16.msra.mxu0 %v3687
      %3701 = vmatprep.subr.bf16.mxu0 0
      %3702 = vmatpush1.bf16.msra.mxu0 %v3686
      %3703 = vmatprep.subr.bf16.mxu0 0
      %3704 = vmatpush1.bf16.msra.mxu0 %v3685
      %3705 = vmatprep.subr.bf16.mxu0 0
      %3706 = vmatpush1.bf16.msra.mxu0 %v3684
      %3707 = vmatprep.subr.bf16.mxu0 0
      %3708 = vmatpush1.bf16.msra.mxu0 %v3683
      %3709 = vmatprep.subr.bf16.mxu0 0
      %3710 = vmatpush1.bf16.msra.mxu0 %v3682
      %3711 = vmatprep.subr.bf16.mxu0 0
      %3712 = vmatpush1.bf16.msra.mxu0 %v3681
      %3713 = vmatprep.subr.bf16.mxu0 0
      %3714 = vmatpush2.bf16.msra.mxu0 0
      %3715 = vmatprep.subr.bf16.mxu0 0
      %3716 = vmatpush2.bf16.msra.mxu0 0
      %3717 = vmatprep.subr.bf16.mxu0 0
      %3718 = vmatpush2.bf16.msra.mxu0 0
      %3719 = vmatprep.subr.bf16.mxu0 0
      %3720 = vmatpush2.bf16.msra.mxu0 0
      %3721 = vmatprep.subr.bf16.mxu0 0
      %3722 = vmatpush2.bf16.msra.mxu0 0
      %3723 = vmatprep.subr.bf16.mxu0 0
      %3724 = vmatpush2.bf16.msra.mxu0 0
      %3725 = vmatprep.subr.bf16.mxu0 0
      %3726 = vmatpush2.bf16.msra.mxu0 0
      %3727 = vmatprep.subr.bf16.mxu0 0
      %3728 = vmatpush2.bf16.msra.mxu0 0
      %3729 = vmatprep.mubr.bf16.mxu0 0
      %3730 = vmatmul.mubr.bf16.gmra.mxu0 %v3633
      %v3731 = vpop.f32.mrf.mxu0
      %v3732 = vadd.f32 0.0, %v3731
      %v3733 = vpop.f32.mrf.mxu0
      %v3734 = vpop.f32.mrf.mxu0
      %v3735 = vadd.f32 0.0, %v3734
      %v3736 = vpop.f32.mrf.mxu0
      %3737 = vmatprep.mubr.bf16.mxu0 0
      %3738 = vmatmul.mubr.bf16.gmra.mxu0 %v3634
      %v3739 = vpop.f32.mrf.mxu0
      %v3740 = vadd.f32 0.0, %v3739
      %v3741 = vpop.f32.mrf.mxu0
      %v3742 = vpop.f32.mrf.mxu0
      %v3743 = vadd.f32 0.0, %v3742
      %v3744 = vpop.f32.mrf.mxu0
      %3745 = vmatprep.mubr.bf16.mxu0 0
      %3746 = vmatmul.mubr.bf16.gmra.mxu0 %v3635
      %v3747 = vpop.f32.mrf.mxu0
      %v3748 = vadd.f32 0.0, %v3747
      %v3749 = vpop.f32.mrf.mxu0
      %v3750 = vpop.f32.mrf.mxu0
      %v3751 = vadd.f32 0.0, %v3750
      %v3752 = vpop.f32.mrf.mxu0
      %3753 = vmatprep.mubr.bf16.mxu0 0
      %3754 = vmatmul.mubr.bf16.gmra.mxu0 %v3636
      %v3755 = vpop.f32.mrf.mxu0
      %v3756 = vadd.f32 0.0, %v3755
      %v3757 = vpop.f32.mrf.mxu0
      %v3758 = vpop.f32.mrf.mxu0
      %v3759 = vadd.f32 0.0, %v3758
      %v3760 = vpop.f32.mrf.mxu0
      %3761 = vmatprep.mubr.bf16.mxu0 0
      %3762 = vmatmul.mubr.bf16.gmra.mxu0 %v3637
      %v3763 = vpop.f32.mrf.mxu0
      %v3764 = vadd.f32 0.0, %v3763
      %v3765 = vpop.f32.mrf.mxu0
      %v3766 = vpop.f32.mrf.mxu0
      %v3767 = vadd.f32 0.0, %v3766
      %v3768 = vpop.f32.mrf.mxu0
      %3769 = vmatprep.mubr.bf16.mxu0 0
      %3770 = vmatmul.mubr.bf16.gmra.mxu0 %v3638
      %v3771 = vpop.f32.mrf.mxu0
      %v3772 = vadd.f32 0.0, %v3771
      %v3773 = vpop.f32.mrf.mxu0
      %v3774 = vpop.f32.mrf.mxu0
      %v3775 = vadd.f32 0.0, %v3774
      %v3776 = vpop.f32.mrf.mxu0
      %3777 = vmatprep.mubr.bf16.mxu0 0
      %3778 = vmatmul.mubr.bf16.gmra.mxu0 %v3639
      %v3779 = vpop.f32.mrf.mxu0
      %v3780 = vadd.f32 0.0, %v3779
      %v3781 = vpop.f32.mrf.mxu0
      %v3782 = vpop.f32.mrf.mxu0
      %v3783 = vadd.f32 0.0, %v3782
      %v3784 = vpop.f32.mrf.mxu0
      %3785 = vmatprep.mubr.bf16.mxu0 0
      %3786 = vmatmul.mubr.bf16.gmra.mxu0 %v3640
      %v3787 = vpop.f32.mrf.mxu0
      %v3788 = vadd.f32 0.0, %v3787
      %v3789 = vpop.f32.mrf.mxu0
      %v3790 = vpop.f32.mrf.mxu0
      %v3791 = vadd.f32 0.0, %v3790
      %v3792 = vpop.f32.mrf.mxu0
      %3793 = vdwg.mxu0
      %v3794 = vadd.f32 %v3496, %v3732
      %v3795 = vadd.f32 %v3497, %v3735
      %v3796 = vadd.f32 %v3498, %v3740
      %v3797 = vadd.f32 %v3499, %v3743
      %v3798 = vadd.f32 %v3500, %v3748
      %v3799 = vadd.f32 %v3501, %v3751
      %v3800 = vadd.f32 %v3502, %v3756
      %v3801 = vadd.f32 %v3503, %v3759
      %v3802 = vadd.f32 %v3504, %v3764
      %v3803 = vadd.f32 %v3505, %v3767
      %v3804 = vadd.f32 %v3506, %v3772
      %v3805 = vadd.f32 %v3507, %v3775
      %v3806 = vadd.f32 %v3508, %v3780
      %v3807 = vadd.f32 %v3509, %v3783
      %v3808 = vadd.f32 %v3510, %v3788
      %v3809 = vadd.f32 %v3511, %v3791
      %v3810 = vpack.c.bf16 %v3795, %v3794
      %v3811 = vpack.c.bf16 %v3797, %v3796
      %v3812 = vpack.c.bf16 %v3799, %v3798
      %v3813 = vpack.c.bf16 %v3801, %v3800
      %v3814 = vpack.c.bf16 %v3803, %v3802
      %v3815 = vpack.c.bf16 %v3805, %v3804
      %v3816 = vpack.c.bf16 %v3807, %v3806
      %v3817 = vpack.c.bf16 %v3809, %v3808
      %v3826 = vunpack.c.l.b16 %v3810
      %v3827 = vunpack.c.h.b16 %v3810
      %v3828 = vunpack.c.l.b16 %v3811
      %v3829 = vunpack.c.h.b16 %v3811
      %v3830 = vunpack.c.l.b16 %v3812
      %v3831 = vunpack.c.h.b16 %v3812
      %v3832 = vunpack.c.l.b16 %v3813
      %v3833 = vunpack.c.h.b16 %v3813
      %v3834 = vunpack.c.l.b16 %v3814
      %v3835 = vunpack.c.h.b16 %v3814
      %v3836 = vunpack.c.l.b16 %v3815
      %v3837 = vunpack.c.h.b16 %v3815
      %v3838 = vunpack.c.l.b16 %v3816
      %v3839 = vunpack.c.h.b16 %v3816
      %v3840 = vunpack.c.l.b16 %v3817
      %v3841 = vunpack.c.h.b16 %v3817
      %v3842 = vpack.c.b16 %v3826, %v3826
      %v3843 = vpack.c.b16 %v3827, %v3827
      %v3844 = vpack.c.b16 %v3828, %v3828
      %v3845 = vpack.c.b16 %v3829, %v3829
      %v3846 = vpack.c.b16 %v3830, %v3830
      %v3847 = vpack.c.b16 %v3831, %v3831
      %v3848 = vpack.c.b16 %v3832, %v3832
      %v3849 = vpack.c.b16 %v3833, %v3833
      %v3850 = vpack.c.b16 %v3834, %v3834
      %v3851 = vpack.c.b16 %v3835, %v3835
      %v3852 = vpack.c.b16 %v3836, %v3836
      %v3853 = vpack.c.b16 %v3837, %v3837
      %v3854 = vpack.c.b16 %v3838, %v3838
      %v3855 = vpack.c.b16 %v3839, %v3839
      %v3856 = vpack.c.b16 %v3840, %v3840
      %v3857 = vpack.c.b16 %v3841, %v3841
      %3874 = vst [vmem:[%s431] sm:$0xf] %v3842
      %3875 = vst [vmem:[%s431 + $0x4] sm:$0xf] %v3843
      %3876 = vst [vmem:[%s431 + $0x8] sm:$0xf] %v3844
      %3877 = vst [vmem:[%s431 + $0xc] sm:$0xf] %v3845
      %3878 = vst [vmem:[%s431 + $0x10] sm:$0xf] %v3846
      %3879 = vst [vmem:[%s431 + $0x14] sm:$0xf] %v3847
      %3880 = vst [vmem:[%s431 + $0x18] sm:$0xf] %v3848
      %3881 = vst [vmem:[%s431 + $0x1c] sm:$0xf] %v3849
      %3882 = vst [vmem:[%s431 + $0x20] sm:$0xf] %v3850
      %3883 = vst [vmem:[%s431 + $0x24] sm:$0xf] %v3851
      %3884 = vst [vmem:[%s431 + $0x28] sm:$0xf] %v3852
      %3885 = vst [vmem:[%s431 + $0x2c] sm:$0xf] %v3853
      %3886 = vst [vmem:[%s431 + $0x30] sm:$0xf] %v3854
      %3887 = vst [vmem:[%s431 + $0x34] sm:$0xf] %v3855
      %3888 = vst [vmem:[%s431 + $0x38] sm:$0xf] %v3856
      %3889 = vst [vmem:[%s431 + $0x3c] sm:$0xf] %v3857
      %v3890 = vadd.f32 %v3794, %v3795
      %v3891 = vadd.f32 %v3890, %v3796
      %v3892 = vadd.f32 %v3891, %v3797
      %v3893 = vadd.f32 %v3892, %v3798
      %v3894 = vadd.f32 %v3893, %v3799
      %v3895 = vadd.f32 %v3894, %v3800
      %v3896 = vadd.f32 %v3895, %v3801
      %v3897 = vadd.f32 %v3896, %v3802
      %v3898 = vadd.f32 %v3897, %v3803
      %v3899 = vadd.f32 %v3898, %v3804
      %v3900 = vadd.f32 %v3899, %v3805
      %v3901 = vadd.f32 %v3900, %v3806
      %v3902 = vadd.f32 %v3901, %v3807
      %v3903 = vadd.f32 %v3902, %v3808
      %v3904 = vadd.f32 %v3903, %v3809
      %v3905 = vrot.slane %v3904, 4
      %v3906 = vadd.f32 %v3904, %v3905
      %v3907 = vrot.slane %v3906, 2
      %v3908 = vadd.f32 %v3906, %v3907
      %v3909 = vrot.slane %v3908, 1
      %v3910 = vadd.f32 %v3908, %v3909
      %v3911 = vmul.f32 %v3794, %v3794
      %v3912 = vmul.f32 %v3795, %v3795
      %v3913 = vmul.f32 %v3796, %v3796
      %v3914 = vmul.f32 %v3797, %v3797
      %v3915 = vmul.f32 %v3798, %v3798
      %v3916 = vmul.f32 %v3799, %v3799
      %v3917 = vmul.f32 %v3800, %v3800
      %v3918 = vmul.f32 %v3801, %v3801
      %v3919 = vmul.f32 %v3802, %v3802
      %v3920 = vmul.f32 %v3803, %v3803
      %v3921 = vmul.f32 %v3804, %v3804
      %v3922 = vmul.f32 %v3805, %v3805
      %v3923 = vmul.f32 %v3806, %v3806
      %v3924 = vmul.f32 %v3807, %v3807
      %v3925 = vmul.f32 %v3808, %v3808
      %v3926 = vmul.f32 %v3809, %v3809
      %v3927 = vadd.f32 %v3911, %v3912
      %v3928 = vadd.f32 %v3927, %v3913
      %v3929 = vadd.f32 %v3928, %v3914
      %v3930 = vadd.f32 %v3929, %v3915
      %v3931 = vadd.f32 %v3930, %v3916
      %v3932 = vadd.f32 %v3931, %v3917
      %v3933 = vadd.f32 %v3932, %v3918
      %v3934 = vadd.f32 %v3933, %v3919
      %v3935 = vadd.f32 %v3934, %v3920
      %v3936 = vadd.f32 %v3935, %v3921
      %v3937 = vadd.f32 %v3936, %v3922
      %v3938 = vadd.f32 %v3937, %v3923
      %v3939 = vadd.f32 %v3938, %v3924
      %v3940 = vadd.f32 %v3939, %v3925
      %v3941 = vadd.f32 %v3940, %v3926
      %v3942 = vrot.slane %v3941, 4
      %v3943 = vadd.f32 %v3941, %v3942
      %v3944 = vrot.slane %v3943, 2
      %v3945 = vadd.f32 %v3943, %v3944
      %v3946 = vrot.slane %v3945, 1
      %v3947 = vadd.f32 %v3945, %v3946
      %vm3948 = vcmask 1040384
      %v3949 = vsel %vm3948, %v3910, %v3947
      %3950 = vst [vmem:[%s440] sm:$0x3] %v3949
      %s3951 = smul.u32 8, %s23
      %p3952 = scmp.lt.s32.totalorder %s22, 1
      %s3953 = scalar_select %p3952, %s22, 1
      %p3954 = scmp.lt.s32.totalorder %s3951, 15
      %s3955 = scalar_select %p3954, %s3951, 15
      %s3956 = smul.addr %s3955, 2
      %s3957 = smul.addr %s3953, 32
      %s3958 = sadd.s32 %s3956, %s3957
      %s3959 = smul.addr %s3958, 4
      %s3960 = scalar_lea.vmem %s5, %s3959
      %p3961 = scmp.lt.s32.totalorder %s22, 1
      %s3962 = scalar_select %p3961, %s22, 1
      %p3963 = scmp.lt.s32.totalorder %s23, 1
      %s3964 = scalar_select %p3963, %s23, 1
      %s3965 = smul.addr %s3962, 2
      %s3966 = sadd.s32 %s3964, %s3965
      %s3967 = smul.addr %s3966, 2
      %s3968 = scalar_lea.vmem %s6, %s3967
      // Predicated region
      $region41: #{double_conv.4} parent=39 // pred_check
        %p3969 = pneg %p192
      $region42: #{double_conv.4} parent=39 // pred_check_branch
        %3971 = sbr.rel (%p3969) target = $region44
      $region43: #{double_conv.4} parent=39 // pred_region
        %s3972 = smul.u32 8, %s23
      $region44: #{double_conv.4} parent=39 // pred_fallthru
        _
      // Predicated region
      $region45: #{double_conv.4} parent=39 // pred_check
        %p3973 = pneg %p220
      $region46: #{double_conv.4} parent=39 // pred_check_branch
        %3975 = sbr.rel (%p3973) target = $region48
      $region47: #{double_conv.4} parent=39 // pred_region
        _
      $region48: #{double_conv.4} parent=39 // pred_fallthru
        _
    $region40: #{double_conv.4} parent=5 // pred_fallthru
      _
    %p3976 = scmp.le.s32.totalorder 2, %s13
    // Predicated region
    $region49: #{double_conv.4} parent=5 // pred_check
      %p3977 = pneg %p3976
    $region50: #{double_conv.4} parent=5 // pred_check_branch
      %3979 = sbr.rel (%p3977) target = $region52
    $region51: #{double_conv.4} parent=5 // pred_region
      %s3980 = ssub.s32 %s13, 2
      // Predicated region
      $region53: #{double_conv.4} parent=51 // pred_check
        %p3981 = pneg %p198
      $region54: #{double_conv.4} parent=51 // pred_check_branch
        %3983 = sbr.rel (%p3981) target = $region56
      $region55: #{double_conv.4} parent=51 // pred_region
        %s3984 = smul.u32 8, %s25
        %p3985 = scmp.lt.s32.totalorder %s24, 1
        %s3986 = scalar_select %p3985, %s24, 1
        %p3987 = scmp.lt.s32.totalorder %s3984, 15
        %s3988 = scalar_select %p3987, %s3984, 15
        %s3989 = smul.addr %s3988, 2
        %s3990 = smul.addr %s3986, 32
        %s3991 = sadd.s32 %s3989, %s3990
        %s3992 = smul.addr %s3991, 4
        %s3993 = scalar_lea.vmem %s5, %s3992
      $region56: #{double_conv.4} parent=51 // pred_fallthru
        _
      // Predicated region
      $region57: #{double_conv.4} parent=51 // pred_check
        %p3994 = pneg %p226
      $region58: #{double_conv.4} parent=51 // pred_check_branch
        %3996 = sbr.rel (%p3994) target = $region60
      $region59: #{double_conv.4} parent=51 // pred_region
        %p3997 = scmp.lt.s32.totalorder %s24, 1
        %s3998 = scalar_select %p3997, %s24, 1
        %p3999 = scmp.lt.s32.totalorder %s25, 1
        %s4000 = scalar_select %p3999, %s25, 1
        %s4001 = smul.addr %s3998, 2
        %s4002 = sadd.s32 %s4000, %s4001
        %s4003 = smul.addr %s4002, 2
        %s4004 = scalar_lea.vmem %s6, %s4003
      $region60: #{double_conv.4} parent=51 // pred_fallthru
        _
    $region52: #{double_conv.4} parent=5 // pred_fallthru
      _
  $region6: #{double_conv.4} parent=0 // loop_footer
    %s17 = sadd.s32 1, %s13
  $region7: #{double_conv.4} parent=0 // loop_footer_branch
    %12 = sbr.rel target = $region3
  $region8: #{double_conv.4} parent=0 // loop_exit
    _

</llo_original>
